<compile_context>
chip_gen: v7x
topology: tpu7x:2x2x1
jax: 0.10.0
libtpu: 0.0.40
codegen_flags: <defaults>
</compile_context>

<pallas_src>
import jax
import jax.numpy as jnp
from jax.experimental import pallas as pl
from jax.experimental.pallas import tpu as pltpu


# ----------------------------------------------------------------------------
# Fused forward kernel: one batch element per grid step, everything in VMEM.
# ----------------------------------------------------------------------------
def colorize_kernel(x_ref, w1_ref, b1_ref, w2_ref, b2_ref, wtp_ref, btp_ref,
                    w3t_ref, b3_ref,
                    o_ref,
                    xpad_ref, pad1_ref, col_ref, fpad_ref, dpar_ref):
    f32 = jnp.float32
    bf16 = jnp.bfloat16

    H = x_ref.shape[1]
    W = x_ref.shape[2]
    Hf, Wf = H // 2, W // 2
    HW = H * W
    HWf = Hf * Wf

    # ---- zero only the constant 1-wide halos (interiors fully overwritten below) ---
    def zero_ring(ref, r, c, ch):
        ref[0:1, :, :] = jnp.zeros((1, c, ch), f32)
        ref[r - 1:r, :, :] = jnp.zeros((1, c, ch), f32)
        ref[:, 0:1, :] = jnp.zeros((r, 1, ch), f32)
        ref[:, c - 1:c, :] = jnp.zeros((r, 1, ch), f32)

    zero_ring(xpad_ref, H + 2, W + 2, 64)
    zero_ring(pad1_ref, H + 2, W + 2, 64)
    fpad_ref[Hf:Hf + 1, :, :] = jnp.zeros((1, Wf + 1, 128), f32)
    fpad_ref[:, Wf:Wf + 1, :] = jnp.zeros((Hf + 1, 1, 128), f32)
    dpar_ref[:, 0:1, :, :] = jnp.zeros((4, 1, Wf + 2, 64), f32)
    dpar_ref[:, Hf + 1:Hf + 2, :, :] = jnp.zeros((4, 1, Wf + 2, 64), f32)
    dpar_ref[:, :, 0:1, :] = jnp.zeros((4, Hf + 2, 1, 64), f32)
    dpar_ref[:, :, Wf + 1:Wf + 2, :] = jnp.zeros((4, Hf + 2, 1, 64), f32)

    # ---------------- conv1: 1 -> 64, 'same' (Cin=1 => VPU broadcast FMA) ----------
    # lane-broadcast the grayscale to 64 channels ONCE; taps are then cheap
    # sublane-shifted slices of the same buffer.
    xpad_ref[1:H + 1, 1:W + 1, :] = jnp.broadcast_to(x_ref[0][:, :, None], (H, W, 64))

    # accumulate directly into pad1's interior (no separate acc temp / extra copy)
    pad1_ref[1:H + 1, 1:W + 1, :] = jnp.broadcast_to(b1_ref[...], (H, W, 64))
    for kh in range(3):
        for kw in range(3):
            t = kh * 3 + kw
            pad1_ref[1:H + 1, 1:W + 1, :] += (
                xpad_ref[kh:kh + H, kw:kw + W, :] * w1_ref[t])

    # ---------------- conv2: 64 -> 128, 'same', ReLU, fused 2x2 max-pool -----------
    # ReLU of conv1 is folded into the im2col reads (halo is 0; max(0,0)=0).
    def conv1_tap(t):
        kh, kw = divmod(t, 3)
        return jnp.maximum(pad1_ref[kh:kh + H, kw:kw + W, :], 0.0).reshape(HW, 64)

    # adjacent-tap pairs -> 128-lane-aligned, unmasked stores (last tap stays 64-wide)
    for t0 in (0, 2, 4, 6):
        col_ref[:, t0 * 64:(t0 + 2) * 64] = jnp.concatenate(
            [conv1_tap(t0), conv1_tap(t0 + 1)], axis=-1).astype(bf16)
    col_ref[:, 512:576] = conv1_tap(8).astype(bf16)

    h2 = jnp.dot(col_ref[...], w2_ref[...], preferred_element_type=f32)   # (HW, 128)
    h2 = jnp.maximum(h2 + b2_ref[...], 0.0)
    h2 = h2.reshape(Hf, 2, Wf, 2, 128)
    h2 = jnp.maximum(h2[:, 0], h2[:, 1])                                  # row pool
    feat = jnp.maximum(h2[:, :, 0], h2[:, :, 1])                          # (Hf, Wf, 128)
    fpad_ref[0:Hf, 0:Wf, :] = feat

    # ---------------- ConvTranspose2d 128 -> 64 (k=3, s=2, p=1, op=1), ReLU --------
    # Merged polyphase decomposition: ONE (HWf,512)@(512,256) MXU matmul against a
    # block-structured weight built on the wrapper side (no multiplies vs inserted
    # zeros, full 256-wide MXU output).  The input slab [f(r,c)|f(r,c+1)|f(r+1,c)|
    # f(r+1,c+1)] reuses the first HWf rows of the (now dead) conv2 im2col scratch.
    col_ref[0:HWf, 0:128] = fpad_ref[0:Hf, 0:Wf, :].reshape(HWf, 128).astype(bf16)
    col_ref[0:HWf, 128:256] = fpad_ref[0:Hf, 1:Wf + 1, :].reshape(HWf, 128).astype(bf16)
    col_ref[0:HWf, 256:384] = fpad_ref[1:Hf + 1, 0:Wf, :].reshape(HWf, 128).astype(bf16)
    col_ref[0:HWf, 384:512] = fpad_ref[1:Hf + 1, 1:Wf + 1, :].reshape(HWf, 128).astype(bf16)

    d = jnp.dot(col_ref[0:HWf, 0:512], wtp_ref[...],
                preferred_element_type=f32)                               # (HWf, 256)
    d = jnp.maximum(d + btp_ref[...], 0.0)

    # scatter the 4 output parities (P = 2*row_parity + col_parity) into zero-padded
    # half-res maps (the 1-px halo implements conv3's 'same' padding).
    for P in range(4):
        dpar_ref[P, 1:Hf + 1, 1:Wf + 1, :] = d[:, P * 64:(P + 1) * 64].reshape(Hf, Wf, 64)

    # ---------------- conv3: 64 -> 2, 'same', Tanh (polyphase pixel order) ---------
    def conv3_tap(q, p, t):
        dy, dx = divmod(t, 3)
        rp, ro = (q + dy - 1) % 2, (q + dy - 1) // 2
        cp, co = (p + dx - 1) % 2, (p + dx - 1) // 2
        k = rp * 2 + cp
        return dpar_ref[k, 1 + ro:1 + ro + Hf, 1 + co:1 + co + Wf, :].reshape(HWf, 64)

    for q in range(2):               # output row parity
        for p in range(2):           # output col parity
            P = q * 2 + p
            r0, r1 = P * HWf, (P + 1) * HWf
            for t0 in (0, 2, 4, 6):  # adjacent-tap pairs -> aligned 128-wide stores
                col_ref[r0:r1, t0 * 64:(t0 + 2) * 64] = jnp.concatenate(
                    [conv3_tap(q, p, t0), conv3_tap(q, p, t0 + 1)], axis=-1).astype(bf16)
            col_ref[r0:r1, 512:576] = conv3_tap(q, p, 8).astype(bf16)

    # (2,576) x (HW,576) contracting on the 576 axis: the standard q@k^T contraction,
    # lowered on the MXU without materializing a transpose of the bf16 slab; result is
    # (2, H*W) with pixels dense on the lane axis -> unmasked output store.
    ab_t = jax.lax.dot_general(w3t_ref[...], col_ref[...],
                               dimension_numbers=(((1,), (1,)), ((), ())),
                               preferred_element_type=f32)                # (2, HW)
    o_ref[0] = jnp.tanh(ab_t + b3_ref[...]).astype(o_ref.dtype)


# ----------------------------------------------------------------------------
# Parameters (deterministic, PyTorch-layout weights, PyTorch-style uniform init)
# ----------------------------------------------------------------------------
def init_params(key):
    def u(k, shape, fan_in):
        bound = 1.0 / jnp.sqrt(jnp.float32(fan_in))
        return jax.random.uniform(k, shape, jnp.float32, -bound, bound)

    ks = jax.random.split(key, 8)
    return {
        "conv1_w": u(ks[0], (64, 1, 3, 3), 1 * 9),      # Conv2d(1, 64, 3)
        "conv1_b": u(ks[1], (64,), 1 * 9),
        "conv2_w": u(ks[2], (128, 64, 3, 3), 64 * 9),   # Conv2d(64, 128, 3)
        "conv2_b": u(ks[3], (128,), 64 * 9),
        "convt_w": u(ks[4], (128, 64, 3, 3), 128 * 9),  # ConvTranspose2d(128, 64, 3)
        "convt_b": u(ks[5], (64,), 128 * 9),
        "conv3_w": u(ks[6], (2, 64, 3, 3), 64 * 9),     # Conv2d(64, 2, 3)
        "conv3_b": u(ks[7], (2,), 64 * 9),
    }


# ----------------------------------------------------------------------------
# Forward pass (mirrors ColorizationNet.forward); NCHW in, NCHW out.
# ----------------------------------------------------------------------------
@jax.jit
def colorization_net(params, x_nchw):
    N, C, H, W = x_nchw.shape
    assert C == 1 and H % 2 == 0 and W % 2 == 0
    Hf, Wf = H // 2, W // 2
    f32, bf16 = jnp.float32, jnp.bfloat16

    x = x_nchw[:, 0, :, :].astype(f32)                                    # (N, H, W)

    # conv1: (64,1,3,3) -> (9, 64), tap-major rows
    w1 = jnp.transpose(params["conv1_w"], (2, 3, 1, 0)).reshape(9, 64)
    b1 = params["conv1_b"].reshape(1, 64)
    # conv2: (128,64,3,3) -> (576, 128) bf16, rows ordered (tap, cin)
    w2 = jnp.transpose(params["conv2_w"], (2, 3, 1, 0)).reshape(576, 128).astype(bf16)
    b2 = params["conv2_b"].reshape(1, 128)

    # Merged polyphase ConvTranspose weight: row blocks = [f00 | f01 | f10 | f11]
    # (4 x 128 Cin taps), column blocks = 4 output parities x 64 Cout
    # (P = 2*row_parity + col_parity), zero-filled for taps a parity does not use.
    wt = params["convt_w"]                                  # (Cin=128, Cout=64, kh, kw)
    z = jnp.zeros((128, 64), f32)

    def pcol(r00, r01, r10, r11):
        return jnp.concatenate([r00, r01, r10, r11], axis=0)             # (512, 64)

    wtp = jnp.concatenate([
        pcol(wt[:, :, 1, 1], z, z, z),                                    # even/even
        pcol(wt[:, :, 1, 2], wt[:, :, 1, 0], z, z),                       # even/odd
        pcol(wt[:, :, 2, 1], z, wt[:, :, 0, 1], z),                       # odd/even
        pcol(wt[:, :, 2, 2], wt[:, :, 2, 0], wt[:, :, 0, 2], wt[:, :, 0, 0]),  # odd/odd
    ], axis=1).astype(bf16)                                               # (512, 256)
    btp = jnp.tile(params["convt_b"], 4).reshape(1, 256)

    # conv3: (2,64,3,3) -> (2, 576) bf16, columns ordered (tap, cin)
    w3t = jnp.transpose(params["conv3_w"], (0, 2, 3, 1)).reshape(2, 576).astype(bf16)
    b3 = params["conv3_b"].reshape(2, 1)

    # explicit VMEM budget: scratch + f32 temps + headroom (capped for v7x's 64 MiB)
    scratch_bytes = (2 * (H + 2) * (W + 2) * 64 * 4          # xpad + pad1
                     + H * W * 576 * 2                       # im2col / deconv slab
                     + (Hf + 1) * (Wf + 1) * 128 * 4         # fpad
                     + 4 * (Hf + 2) * (Wf + 2) * 64 * 4)     # dpar
    vmem_limit = int(min(max(scratch_bytes + 1024 * H * W + (8 << 20), 32 << 20),
                         64 << 20))

    flops = 2 * N * H * W * (9 * 64 + 576 * 128 + (512 * 256) // 4 + 576 * 2)
    bytes_accessed = (x.size * 4 + w1.size * 4 + w2.size * 2 + wtp.size * 2
                      + w3t.size * 2 + N * 2 * H * W * 4)

    out = pl.pallas_call(
        colorize_kernel,
        out_shape=jax.ShapeDtypeStruct((N, 2, H * W), jnp.float32),
        grid=(N,),
        in_specs=[
            pl.BlockSpec((1, H, W), lambda n: (n, 0, 0)),     # x (channel-squeezed)
            pl.BlockSpec((9, 64), lambda n: (0, 0)),          # w1
            pl.BlockSpec((1, 64), lambda n: (0, 0)),          # b1
            pl.BlockSpec((576, 128), lambda n: (0, 0)),       # w2
            pl.BlockSpec((1, 128), lambda n: (0, 0)),         # b2
            pl.BlockSpec((512, 256), lambda n: (0, 0)),       # merged deconv weight
            pl.BlockSpec((1, 256), lambda n: (0, 0)),         # merged deconv bias
            pl.BlockSpec((2, 576), lambda n: (0, 0)),         # w3t
            pl.BlockSpec((2, 1), lambda n: (0, 0)),           # b3
        ],
        out_specs=pl.BlockSpec((1, 2, H * W), lambda n: (n, 0, 0)),
        scratch_shapes=[
            pltpu.VMEM((H + 2, W + 2, 64), jnp.float32),      # lane-broadcast padded input
            pltpu.VMEM((H + 2, W + 2, 64), jnp.float32),      # padded conv1 accumulator
            pltpu.VMEM((H * W, 576), jnp.bfloat16),           # shared im2col / deconv slab
            pltpu.VMEM((Hf + 1, Wf + 1, 128), jnp.float32),   # padded pooled features
            pltpu.VMEM((4, Hf + 2, Wf + 2, 64), jnp.float32), # padded deconv parity maps
        ],
        compiler_params=pltpu.CompilerParams(
            dimension_semantics=("parallel",),
            vmem_limit_bytes=vmem_limit),
        cost_estimate=pl.CostEstimate(
            flops=flops, transcendentals=2 * N * H * W, bytes_accessed=bytes_accessed),
    )(x, w1, b1, w2, b2, wtp, btp, w3t, b3)

    # Un-permute the parity-major pixel order -> NCHW (tiny XLA transform on the
    # final 2-channel output only).
    y = out.reshape(N, 2, 2, 2, Hf, Wf)              # (N, c, q, p, m, n)
    y = jnp.transpose(y, (0, 1, 4, 2, 5, 3))         # (N, c, m, q, n, p)
    return y.reshape(N, 2, H, W)                     # row = 2m+q, col = 2n+p


# ----------------------------------------------------------------------------
# Pure-XLA reference (for a loose-tolerance numerical sanity check)
# ----------------------------------------------------------------------------
def reference_forward(params, x_nchw):
    dn = ("NCHW", "OIHW", "NCHW")
    h = x_nchw.astype(jnp.float32)
    h = jax.lax.conv_general_dilated(h, params["conv1_w"], (1, 1), ((1, 1), (1, 1)),
                                     dimension_numbers=dn)
    h = jax.nn.relu(h + params["conv1_b"][None, :, None, None])
    h = jax.lax.conv_general_dilated(h, params["conv2_w"], (1, 1), ((1, 1), (1, 1)),
                                     dimension_numbers=dn)
    h = jax.nn.relu(h + params["conv2_b"][None, :, None, None])
    h = jax.lax.reduce_window(h, -jnp.inf, jax.lax.max, (1, 1, 2, 2), (1, 1, 2, 2),
                              "VALID")
    # ConvTranspose2d(k=3,s=2,p=1,op=1) == conv over 2x-dilated input, pad (1,2),
    # with the kernel spatially flipped and in/out channels swapped.
    wt = jnp.transpose(params["convt_w"], (1, 0, 2, 3))[:, :, ::-1, ::-1]
    h = jax.lax.conv_general_dilated(h, wt, (1, 1), ((1, 2), (1, 2)),
                                     lhs_dilation=(2, 2), dimension_numbers=dn)
    h = jax.nn.relu(h + params["convt_b"][None, :, None, None])
    h = jax.lax.conv_general_dilated(h, params["conv3_w"], (1, 1), ((1, 1), (1, 1)),
                                     dimension_numbers=dn)
    return jnp.tanh(h + params["conv3_b"][None, :, None, None])


if __name__ == "__main__":
    key = jax.random.PRNGKey(0)
    pkey, xkey = jax.random.split(key)
    params = init_params(pkey)

    # grayscale input, NCHW like PyTorch: (batch=2, channels=1, 16, 16)
    x = jax.random.normal(xkey, (2, 1, 16, 16), jnp.float32)

    out = jax.block_until_ready(colorization_net(params, x))

    assert out.shape == (2, 2, 16, 16), out.shape
    assert bool(jnp.all(jnp.isfinite(out)))
    assert bool(jnp.all(jnp.abs(out) <= 1.0))        # tanh output range

    ref = reference_forward(params, x)
    max_err = float(jnp.max(jnp.abs(out - ref)))
    assert max_err < 5e-2, f"kernel/reference mismatch: max |err| = {max_err}"

    print("KERNEL_OK")
</pallas_src>

<mosaic_0001>
module attributes {stable_mosaic.version = 11 : i64} {
  func.func @colorize_kernel(%arg0: i32, %arg1: memref<1x16x16xf32, #tpu.memory_space<vmem>>, %arg2: memref<9x64xf32, #tpu.memory_space<vmem>>, %arg3: memref<1x64xf32, #tpu.memory_space<vmem>>, %arg4: memref<576x128xbf16, #tpu.memory_space<vmem>>, %arg5: memref<1x128xf32, #tpu.memory_space<vmem>>, %arg6: memref<512x256xbf16, #tpu.memory_space<vmem>>, %arg7: memref<1x256xf32, #tpu.memory_space<vmem>>, %arg8: memref<2x576xbf16, #tpu.memory_space<vmem>>, %arg9: memref<2x1xf32, #tpu.memory_space<vmem>>, %arg10: memref<1x2x256xf32, #tpu.memory_space<vmem>>, %arg11: memref<18x18x64xf32, #tpu.memory_space<vmem>>, %arg12: memref<18x18x64xf32, #tpu.memory_space<vmem>>, %arg13: memref<256x576xbf16, #tpu.memory_space<vmem>>, %arg14: memref<9x9x128xf32, #tpu.memory_space<vmem>>, %arg15: memref<4x10x10x64xf32, #tpu.memory_space<vmem>>) attributes {dimension_semantics = [#tpu.dimension_semantics<parallel>], iteration_bounds = array<i64: 2>, scalar_prefetch = 0 : i64, scratch_operands = 5 : i64, tpu.core_type = #tpu.core_type<tc>, window_params = [{transform_indices = @transform_0, window_bounds = array<i64: 1, 16, 16>}, {pipeline_mode = #tpu.pipeline_mode<synchronous>, transform_indices = @transform_1, window_bounds = array<i64: 9, 64>}, {pipeline_mode = #tpu.pipeline_mode<synchronous>, transform_indices = @transform_2, window_bounds = array<i64: 1, 64>}, {pipeline_mode = #tpu.pipeline_mode<synchronous>, transform_indices = @transform_3, window_bounds = array<i64: 576, 128>}, {pipeline_mode = #tpu.pipeline_mode<synchronous>, transform_indices = @transform_4, window_bounds = array<i64: 1, 128>}, {pipeline_mode = #tpu.pipeline_mode<synchronous>, transform_indices = @transform_5, window_bounds = array<i64: 512, 256>}, {pipeline_mode = #tpu.pipeline_mode<synchronous>, transform_indices = @transform_6, window_bounds = array<i64: 1, 256>}, {pipeline_mode = #tpu.pipeline_mode<synchronous>, transform_indices = @transform_7, window_bounds = array<i64: 2, 576>}, {pipeline_mode = #tpu.pipeline_mode<synchronous>, transform_indices = @transform_8, window_bounds = array<i64: 2, 1>}, {transform_indices = @transform_9, window_bounds = array<i64: 1, 2, 256>}]} {
    %cst = arith.constant 0.000000e+00 : f32
    %0 = vector.broadcast %cst : f32 to vector<1x18x64xf32>
    %c0 = arith.constant 0 : index
    %c0_0 = arith.constant 0 : index
    %c0_1 = arith.constant 0 : index
    %1 = vector.load %arg11[%c0, %c0_0, %c0_1] : memref<18x18x64xf32, #tpu.memory_space<vmem>>, vector<1x18x64xf32>
    tpu.vector_store %arg11[%c0, %c0_0, %c0_1], %0 {strides = array<i32>} : memref<18x18x64xf32, #tpu.memory_space<vmem>>, vector<1x18x64xf32>,
    %cst_2 = arith.constant 0.000000e+00 : f32
    %2 = vector.broadcast %cst_2 : f32 to vector<1x18x64xf32>
    %c17 = arith.constant 17 : index
    %c0_3 = arith.constant 0 : index
    %c0_4 = arith.constant 0 : index
    %3 = vector.load %arg11[%c17, %c0_3, %c0_4] : memref<18x18x64xf32, #tpu.memory_space<vmem>>, vector<1x18x64xf32>
    tpu.vector_store %arg11[%c17, %c0_3, %c0_4], %2 {strides = array<i32>} : memref<18x18x64xf32, #tpu.memory_space<vmem>>, vector<1x18x64xf32>,
    %cst_5 = arith.constant 0.000000e+00 : f32
    %4 = vector.broadcast %cst_5 : f32 to vector<18x1x64xf32>
    %c0_6 = arith.constant 0 : index
    %c0_7 = arith.constant 0 : index
    %c0_8 = arith.constant 0 : index
    %5 = vector.load %arg11[%c0_6, %c0_7, %c0_8] : memref<18x18x64xf32, #tpu.memory_space<vmem>>, vector<18x1x64xf32>
    tpu.vector_store %arg11[%c0_6, %c0_7, %c0_8], %4 {strides = array<i32>} : memref<18x18x64xf32, #tpu.memory_space<vmem>>, vector<18x1x64xf32>,
    %cst_9 = arith.constant 0.000000e+00 : f32
    %6 = vector.broadcast %cst_9 : f32 to vector<18x1x64xf32>
    %c0_10 = arith.constant 0 : index
    %c17_11 = arith.constant 17 : index
    %c0_12 = arith.constant 0 : index
    %7 = vector.load %arg11[%c0_10, %c17_11, %c0_12] : memref<18x18x64xf32, #tpu.memory_space<vmem>>, vector<18x1x64xf32>
    tpu.vector_store %arg11[%c0_10, %c17_11, %c0_12], %6 {strides = array<i32>} : memref<18x18x64xf32, #tpu.memory_space<vmem>>, vector<18x1x64xf32>,
    %cst_13 = arith.constant 0.000000e+00 : f32
    %8 = vector.broadcast %cst_13 : f32 to vector<1x18x64xf32>
    %c0_14 = arith.constant 0 : index
    %c0_15 = arith.constant 0 : index
    %c0_16 = arith.constant 0 : index
    %9 = vector.load %arg12[%c0_14, %c0_15, %c0_16] : memref<18x18x64xf32, #tpu.memory_space<vmem>>, vector<1x18x64xf32>
    tpu.vector_store %arg12[%c0_14, %c0_15, %c0_16], %8 {strides = array<i32>} : memref<18x18x64xf32, #tpu.memory_space<vmem>>, vector<1x18x64xf32>,
    %cst_17 = arith.constant 0.000000e+00 : f32
    %10 = vector.broadcast %cst_17 : f32 to vector<1x18x64xf32>
    %c17_18 = arith.constant 17 : index
    %c0_19 = arith.constant 0 : index
    %c0_20 = arith.constant 0 : index
    %11 = vector.load %arg12[%c17_18, %c0_19, %c0_20] : memref<18x18x64xf32, #tpu.memory_space<vmem>>, vector<1x18x64xf32>
    tpu.vector_store %arg12[%c17_18, %c0_19, %c0_20], %10 {strides = array<i32>} : memref<18x18x64xf32, #tpu.memory_space<vmem>>, vector<1x18x64xf32>,
    %cst_21 = arith.constant 0.000000e+00 : f32
    %12 = vector.broadcast %cst_21 : f32 to vector<18x1x64xf32>
    %c0_22 = arith.constant 0 : index
    %c0_23 = arith.constant 0 : index
    %c0_24 = arith.constant 0 : index
    %13 = vector.load %arg12[%c0_22, %c0_23, %c0_24] : memref<18x18x64xf32, #tpu.memory_space<vmem>>, vector<18x1x64xf32>
    tpu.vector_store %arg12[%c0_22, %c0_23, %c0_24], %12 {strides = array<i32>} : memref<18x18x64xf32, #tpu.memory_space<vmem>>, vector<18x1x64xf32>,
    %cst_25 = arith.constant 0.000000e+00 : f32
    %14 = vector.broadcast %cst_25 : f32 to vector<18x1x64xf32>
    %c0_26 = arith.constant 0 : index
    %c17_27 = arith.constant 17 : index
    %c0_28 = arith.constant 0 : index
    %15 = vector.load %arg12[%c0_26, %c17_27, %c0_28] : memref<18x18x64xf32, #tpu.memory_space<vmem>>, vector<18x1x64xf32>
    tpu.vector_store %arg12[%c0_26, %c17_27, %c0_28], %14 {strides = array<i32>} : memref<18x18x64xf32, #tpu.memory_space<vmem>>, vector<18x1x64xf32>,
    %cst_29 = arith.constant 0.000000e+00 : f32
    %16 = vector.broadcast %cst_29 : f32 to vector<1x9x128xf32>
    %c8 = arith.constant 8 : index
    %c0_30 = arith.constant 0 : index
    %c0_31 = arith.constant 0 : index
    %17 = vector.load %arg14[%c8, %c0_30, %c0_31] : memref<9x9x128xf32, #tpu.memory_space<vmem>>, vector<1x9x128xf32>
    tpu.vector_store %arg14[%c8, %c0_30, %c0_31], %16 {strides = array<i32>} : memref<9x9x128xf32, #tpu.memory_space<vmem>>, vector<1x9x128xf32>,
    %cst_32 = arith.constant 0.000000e+00 : f32
    %18 = vector.broadcast %cst_32 : f32 to vector<9x1x128xf32>
    %c0_33 = arith.constant 0 : index
    %c8_34 = arith.constant 8 : index
    %c0_35 = arith.constant 0 : index
    %19 = vector.load %arg14[%c0_33, %c8_34, %c0_35] : memref<9x9x128xf32, #tpu.memory_space<vmem>>, vector<9x1x128xf32>
    tpu.vector_store %arg14[%c0_33, %c8_34, %c0_35], %18 {strides = array<i32>} : memref<9x9x128xf32, #tpu.memory_space<vmem>>, vector<9x1x128xf32>,
    %cst_36 = arith.constant 0.000000e+00 : f32
    %20 = vector.broadcast %cst_36 : f32 to vector<4x1x10x64xf32>
    %c0_37 = arith.constant 0 : index
    %c0_38 = arith.constant 0 : index
    %c0_39 = arith.constant 0 : index
    %c0_40 = arith.constant 0 : index
    %21 = vector.load %arg15[%c0_37, %c0_38, %c0_39, %c0_40] : memref<4x10x10x64xf32, #tpu.memory_space<vmem>>, vector<4x1x10x64xf32>
    tpu.vector_store %arg15[%c0_37, %c0_38, %c0_39, %c0_40], %20 {strides = array<i32>} : memref<4x10x10x64xf32, #tpu.memory_space<vmem>>, vector<4x1x10x64xf32>,
    %cst_41 = arith.constant 0.000000e+00 : f32
    %22 = vector.broadcast %cst_41 : f32 to vector<4x1x10x64xf32>
    %c0_42 = arith.constant 0 : index
    %c9 = arith.constant 9 : index
    %c0_43 = arith.constant 0 : index
    %c0_44 = arith.constant 0 : index
    %23 = vector.load %arg15[%c0_42, %c9, %c0_43, %c0_44] : memref<4x10x10x64xf32, #tpu.memory_space<vmem>>, vector<4x1x10x64xf32>
    tpu.vector_store %arg15[%c0_42, %c9, %c0_43, %c0_44], %22 {strides = array<i32>} : memref<4x10x10x64xf32, #tpu.memory_space<vmem>>, vector<4x1x10x64xf32>,
    %cst_45 = arith.constant 0.000000e+00 : f32
    %24 = vector.broadcast %cst_45 : f32 to vector<4x10x1x64xf32>
    %c0_46 = arith.constant 0 : index
    %c0_47 = arith.constant 0 : index
    %c0_48 = arith.constant 0 : index
    %c0_49 = arith.constant 0 : index
    %25 = vector.load %arg15[%c0_46, %c0_47, %c0_48, %c0_49] : memref<4x10x10x64xf32, #tpu.memory_space<vmem>>, vector<4x10x1x64xf32>
    tpu.vector_store %arg15[%c0_46, %c0_47, %c0_48, %c0_49], %24 {strides = array<i32>} : memref<4x10x10x64xf32, #tpu.memory_space<vmem>>, vector<4x10x1x64xf32>,
    %cst_50 = arith.constant 0.000000e+00 : f32
    %26 = vector.broadcast %cst_50 : f32 to vector<4x10x1x64xf32>
    %c0_51 = arith.constant 0 : index
    %c0_52 = arith.constant 0 : index
    %c9_53 = arith.constant 9 : index
    %c0_54 = arith.constant 0 : index
    %27 = vector.load %arg15[%c0_51, %c0_52, %c9_53, %c0_54] : memref<4x10x10x64xf32, #tpu.memory_space<vmem>>, vector<4x10x1x64xf32>
    tpu.vector_store %arg15[%c0_51, %c0_52, %c9_53, %c0_54], %26 {strides = array<i32>} : memref<4x10x10x64xf32, #tpu.memory_space<vmem>>, vector<4x10x1x64xf32>,
    %c0_55 = arith.constant 0 : index
    %c0_56 = arith.constant 0 : index
    %c0_57 = arith.constant 0 : index
    %28 = vector.load %arg1[%c0_55, %c0_56, %c0_57] : memref<1x16x16xf32, #tpu.memory_space<vmem>>, vector<1x16x16xf32>
    %29 = vector.shape_cast %28 : vector<1x16x16xf32> to vector<16x16xf32>
    %30 = vector.shape_cast %29 : vector<16x16xf32> to vector<16x16x1xf32>
    %31 = vector.shape_cast %30 : vector<16x16x1xf32> to vector<16x16x1xf32>
    %32 = vector.broadcast %31 : vector<16x16x1xf32> to vector<16x16x64xf32>
    %c1 = arith.constant 1 : index
    %c1_58 = arith.constant 1 : index
    %c0_59 = arith.constant 0 : index
    %33 = vector.load %arg11[%c1, %c1_58, %c0_59] : memref<18x18x64xf32, #tpu.memory_space<vmem>>, vector<16x16x64xf32>
    tpu.vector_store %arg11[%c1, %c1_58, %c0_59], %32 {strides = array<i32>} : memref<18x18x64xf32, #tpu.memory_space<vmem>>, vector<16x16x64xf32>,
    %c0_60 = arith.constant 0 : index
    %c0_61 = arith.constant 0 : index
    %34 = vector.load %arg3[%c0_60, %c0_61] : memref<1x64xf32, #tpu.memory_space<vmem>>, vector<1x64xf32>
    %35 = vector.shape_cast %34 : vector<1x64xf32> to vector<1x1x64xf32>
    %36 = vector.broadcast %35 : vector<1x1x64xf32> to vector<16x16x64xf32>
    %c1_62 = arith.constant 1 : index
    %c1_63 = arith.constant 1 : index
    %c0_64 = arith.constant 0 : index
    %37 = vector.load %arg12[%c1_62, %c1_63, %c0_64] : memref<18x18x64xf32, #tpu.memory_space<vmem>>, vector<16x16x64xf32>
    tpu.vector_store %arg12[%c1_62, %c1_63, %c0_64], %36 {strides = array<i32>} : memref<18x18x64xf32, #tpu.memory_space<vmem>>, vector<16x16x64xf32>,
    %c1_65 = arith.constant 1 : index
    %c1_66 = arith.constant 1 : index
    %c0_67 = arith.constant 0 : index
    %38 = vector.load %arg12[%c1_65, %c1_66, %c0_67] : memref<18x18x64xf32, #tpu.memory_space<vmem>>, vector<16x16x64xf32>
    %c0_68 = arith.constant 0 : index
    %c0_69 = arith.constant 0 : index
    %c0_70 = arith.constant 0 : index
    %39 = vector.load %arg11[%c0_68, %c0_69, %c0_70] : memref<18x18x64xf32, #tpu.memory_space<vmem>>, vector<16x16x64xf32>
    %c0_71 = arith.constant 0 : index
    %c0_72 = arith.constant 0 : index
    %40 = vector.load %arg2[%c0_71, %c0_72] : memref<9x64xf32, #tpu.memory_space<vmem>>, vector<1x64xf32>
    %41 = vector.shape_cast %40 : vector<1x64xf32> to vector<64xf32>
    %42 = vector.shape_cast %41 : vector<64xf32> to vector<1x1x64xf32>
    %43 = vector.broadcast %42 : vector<1x1x64xf32> to vector<16x16x64xf32>
    %44 = arith.mulf %39, %43 : vector<16x16x64xf32>
    %45 = arith.addf %38, %44 : vector<16x16x64xf32>
    %c1_73 = arith.constant 1 : index
    %c1_74 = arith.constant 1 : index
    %c0_75 = arith.constant 0 : index
    %46 = vector.load %arg12[%c1_73, %c1_74, %c0_75] : memref<18x18x64xf32, #tpu.memory_space<vmem>>, vector<16x16x64xf32>
    tpu.vector_store %arg12[%c1_73, %c1_74, %c0_75], %45 {strides = array<i32>} : memref<18x18x64xf32, #tpu.memory_space<vmem>>, vector<16x16x64xf32>,
    %c1_76 = arith.constant 1 : index
    %c1_77 = arith.constant 1 : index
    %c0_78 = arith.constant 0 : index
    %47 = vector.load %arg12[%c1_76, %c1_77, %c0_78] : memref<18x18x64xf32, #tpu.memory_space<vmem>>, vector<16x16x64xf32>
    %c0_79 = arith.constant 0 : index
    %c1_80 = arith.constant 1 : index
    %c0_81 = arith.constant 0 : index
    %48 = vector.load %arg11[%c0_79, %c1_80, %c0_81] : memref<18x18x64xf32, #tpu.memory_space<vmem>>, vector<16x16x64xf32>
    %c1_82 = arith.constant 1 : index
    %c0_83 = arith.constant 0 : index
    %49 = vector.load %arg2[%c1_82, %c0_83] : memref<9x64xf32, #tpu.memory_space<vmem>>, vector<1x64xf32>
    %50 = vector.shape_cast %49 : vector<1x64xf32> to vector<64xf32>
    %51 = vector.shape_cast %50 : vector<64xf32> to vector<1x1x64xf32>
    %52 = vector.broadcast %51 : vector<1x1x64xf32> to vector<16x16x64xf32>
    %53 = arith.mulf %48, %52 : vector<16x16x64xf32>
    %54 = arith.addf %47, %53 : vector<16x16x64xf32>
    %c1_84 = arith.constant 1 : index
    %c1_85 = arith.constant 1 : index
    %c0_86 = arith.constant 0 : index
    %55 = vector.load %arg12[%c1_84, %c1_85, %c0_86] : memref<18x18x64xf32, #tpu.memory_space<vmem>>, vector<16x16x64xf32>
    tpu.vector_store %arg12[%c1_84, %c1_85, %c0_86], %54 {strides = array<i32>} : memref<18x18x64xf32, #tpu.memory_space<vmem>>, vector<16x16x64xf32>,
    %c1_87 = arith.constant 1 : index
    %c1_88 = arith.constant 1 : index
    %c0_89 = arith.constant 0 : index
    %56 = vector.load %arg12[%c1_87, %c1_88, %c0_89] : memref<18x18x64xf32, #tpu.memory_space<vmem>>, vector<16x16x64xf32>
    %c0_90 = arith.constant 0 : index
    %c2 = arith.constant 2 : index
    %c0_91 = arith.constant 0 : index
    %57 = vector.load %arg11[%c0_90, %c2, %c0_91] : memref<18x18x64xf32, #tpu.memory_space<vmem>>, vector<16x16x64xf32>
    %c2_92 = arith.constant 2 : index
    %c0_93 = arith.constant 0 : index
    %58 = vector.load %arg2[%c2_92, %c0_93] : memref<9x64xf32, #tpu.memory_space<vmem>>, vector<1x64xf32>
    %59 = vector.shape_cast %58 : vector<1x64xf32> to vector<64xf32>
    %60 = vector.shape_cast %59 : vector<64xf32> to vector<1x1x64xf32>
    %61 = vector.broadcast %60 : vector<1x1x64xf32> to vector<16x16x64xf32>
    %62 = arith.mulf %57, %61 : vector<16x16x64xf32>
    %63 = arith.addf %56, %62 : vector<16x16x64xf32>
    %c1_94 = arith.constant 1 : index
    %c1_95 = arith.constant 1 : index
    %c0_96 = arith.constant 0 : index
    %64 = vector.load %arg12[%c1_94, %c1_95, %c0_96] : memref<18x18x64xf32, #tpu.memory_space<vmem>>, vector<16x16x64xf32>
    tpu.vector_store %arg12[%c1_94, %c1_95, %c0_96], %63 {strides = array<i32>} : memref<18x18x64xf32, #tpu.memory_space<vmem>>, vector<16x16x64xf32>,
    %c1_97 = arith.constant 1 : index
    %c1_98 = arith.constant 1 : index
    %c0_99 = arith.constant 0 : index
    %65 = vector.load %arg12[%c1_97, %c1_98, %c0_99] : memref<18x18x64xf32, #tpu.memory_space<vmem>>, vector<16x16x64xf32>
    %c1_100 = arith.constant 1 : index
    %c0_101 = arith.constant 0 : index
    %c0_102 = arith.constant 0 : index
    %66 = vector.load %arg11[%c1_100, %c0_101, %c0_102] : memref<18x18x64xf32, #tpu.memory_space<vmem>>, vector<16x16x64xf32>
    %c3 = arith.constant 3 : index
    %c0_103 = arith.constant 0 : index
    %67 = vector.load %arg2[%c3, %c0_103] : memref<9x64xf32, #tpu.memory_space<vmem>>, vector<1x64xf32>
    %68 = vector.shape_cast %67 : vector<1x64xf32> to vector<64xf32>
    %69 = vector.shape_cast %68 : vector<64xf32> to vector<1x1x64xf32>
    %70 = vector.broadcast %69 : vector<1x1x64xf32> to vector<16x16x64xf32>
    %71 = arith.mulf %66, %70 : vector<16x16x64xf32>
    %72 = arith.addf %65, %71 : vector<16x16x64xf32>
    %c1_104 = arith.constant 1 : index
    %c1_105 = arith.constant 1 : index
    %c0_106 = arith.constant 0 : index
    %73 = vector.load %arg12[%c1_104, %c1_105, %c0_106] : memref<18x18x64xf32, #tpu.memory_space<vmem>>, vector<16x16x64xf32>
    tpu.vector_store %arg12[%c1_104, %c1_105, %c0_106], %72 {strides = array<i32>} : memref<18x18x64xf32, #tpu.memory_space<vmem>>, vector<16x16x64xf32>,
    %c1_107 = arith.constant 1 : index
    %c1_108 = arith.constant 1 : index
    %c0_109 = arith.constant 0 : index
    %74 = vector.load %arg12[%c1_107, %c1_108, %c0_109] : memref<18x18x64xf32, #tpu.memory_space<vmem>>, vector<16x16x64xf32>
    %c1_110 = arith.constant 1 : index
    %c1_111 = arith.constant 1 : index
    %c0_112 = arith.constant 0 : index
    %75 = vector.load %arg11[%c1_110, %c1_111, %c0_112] : memref<18x18x64xf32, #tpu.memory_space<vmem>>, vector<16x16x64xf32>
    %c4 = arith.constant 4 : index
    %c0_113 = arith.constant 0 : index
    %76 = vector.load %arg2[%c4, %c0_113] : memref<9x64xf32, #tpu.memory_space<vmem>>, vector<1x64xf32>
    %77 = vector.shape_cast %76 : vector<1x64xf32> to vector<64xf32>
    %78 = vector.shape_cast %77 : vector<64xf32> to vector<1x1x64xf32>
    %79 = vector.broadcast %78 : vector<1x1x64xf32> to vector<16x16x64xf32>
    %80 = arith.mulf %75, %79 : vector<16x16x64xf32>
    %81 = arith.addf %74, %80 : vector<16x16x64xf32>
    %c1_114 = arith.constant 1 : index
    %c1_115 = arith.constant 1 : index
    %c0_116 = arith.constant 0 : index
    %82 = vector.load %arg12[%c1_114, %c1_115, %c0_116] : memref<18x18x64xf32, #tpu.memory_space<vmem>>, vector<16x16x64xf32>
    tpu.vector_store %arg12[%c1_114, %c1_115, %c0_116], %81 {strides = array<i32>} : memref<18x18x64xf32, #tpu.memory_space<vmem>>, vector<16x16x64xf32>,
    %c1_117 = arith.constant 1 : index
    %c1_118 = arith.constant 1 : index
    %c0_119 = arith.constant 0 : index
    %83 = vector.load %arg12[%c1_117, %c1_118, %c0_119] : memref<18x18x64xf32, #tpu.memory_space<vmem>>, vector<16x16x64xf32>
    %c1_120 = arith.constant 1 : index
    %c2_121 = arith.constant 2 : index
    %c0_122 = arith.constant 0 : index
    %84 = vector.load %arg11[%c1_120, %c2_121, %c0_122] : memref<18x18x64xf32, #tpu.memory_space<vmem>>, vector<16x16x64xf32>
    %c5 = arith.constant 5 : index
    %c0_123 = arith.constant 0 : index
    %85 = vector.load %arg2[%c5, %c0_123] : memref<9x64xf32, #tpu.memory_space<vmem>>, vector<1x64xf32>
    %86 = vector.shape_cast %85 : vector<1x64xf32> to vector<64xf32>
    %87 = vector.shape_cast %86 : vector<64xf32> to vector<1x1x64xf32>
    %88 = vector.broadcast %87 : vector<1x1x64xf32> to vector<16x16x64xf32>
    %89 = arith.mulf %84, %88 : vector<16x16x64xf32>
    %90 = arith.addf %83, %89 : vector<16x16x64xf32>
    %c1_124 = arith.constant 1 : index
    %c1_125 = arith.constant 1 : index
    %c0_126 = arith.constant 0 : index
    %91 = vector.load %arg12[%c1_124, %c1_125, %c0_126] : memref<18x18x64xf32, #tpu.memory_space<vmem>>, vector<16x16x64xf32>
    tpu.vector_store %arg12[%c1_124, %c1_125, %c0_126], %90 {strides = array<i32>} : memref<18x18x64xf32, #tpu.memory_space<vmem>>, vector<16x16x64xf32>,
    %c1_127 = arith.constant 1 : index
    %c1_128 = arith.constant 1 : index
    %c0_129 = arith.constant 0 : index
    %92 = vector.load %arg12[%c1_127, %c1_128, %c0_129] : memref<18x18x64xf32, #tpu.memory_space<vmem>>, vector<16x16x64xf32>
    %c2_130 = arith.constant 2 : index
    %c0_131 = arith.constant 0 : index
    %c0_132 = arith.constant 0 : index
    %93 = vector.load %arg11[%c2_130, %c0_131, %c0_132] : memref<18x18x64xf32, #tpu.memory_space<vmem>>, vector<16x16x64xf32>
    %c6 = arith.constant 6 : index
    %c0_133 = arith.constant 0 : index
    %94 = vector.load %arg2[%c6, %c0_133] : memref<9x64xf32, #tpu.memory_space<vmem>>, vector<1x64xf32>
    %95 = vector.shape_cast %94 : vector<1x64xf32> to vector<64xf32>
    %96 = vector.shape_cast %95 : vector<64xf32> to vector<1x1x64xf32>
    %97 = vector.broadcast %96 : vector<1x1x64xf32> to vector<16x16x64xf32>
    %98 = arith.mulf %93, %97 : vector<16x16x64xf32>
    %99 = arith.addf %92, %98 : vector<16x16x64xf32>
    %c1_134 = arith.constant 1 : index
    %c1_135 = arith.constant 1 : index
    %c0_136 = arith.constant 0 : index
    %100 = vector.load %arg12[%c1_134, %c1_135, %c0_136] : memref<18x18x64xf32, #tpu.memory_space<vmem>>, vector<16x16x64xf32>
    tpu.vector_store %arg12[%c1_134, %c1_135, %c0_136], %99 {strides = array<i32>} : memref<18x18x64xf32, #tpu.memory_space<vmem>>, vector<16x16x64xf32>,
    %c1_137 = arith.constant 1 : index
    %c1_138 = arith.constant 1 : index
    %c0_139 = arith.constant 0 : index
    %101 = vector.load %arg12[%c1_137, %c1_138, %c0_139] : memref<18x18x64xf32, #tpu.memory_space<vmem>>, vector<16x16x64xf32>
    %c2_140 = arith.constant 2 : index
    %c1_141 = arith.constant 1 : index
    %c0_142 = arith.constant 0 : index
    %102 = vector.load %arg11[%c2_140, %c1_141, %c0_142] : memref<18x18x64xf32, #tpu.memory_space<vmem>>, vector<16x16x64xf32>
    %c7 = arith.constant 7 : index
    %c0_143 = arith.constant 0 : index
    %103 = vector.load %arg2[%c7, %c0_143] : memref<9x64xf32, #tpu.memory_space<vmem>>, vector<1x64xf32>
    %104 = vector.shape_cast %103 : vector<1x64xf32> to vector<64xf32>
    %105 = vector.shape_cast %104 : vector<64xf32> to vector<1x1x64xf32>
    %106 = vector.broadcast %105 : vector<1x1x64xf32> to vector<16x16x64xf32>
    %107 = arith.mulf %102, %106 : vector<16x16x64xf32>
    %108 = arith.addf %101, %107 : vector<16x16x64xf32>
    %c1_144 = arith.constant 1 : index
    %c1_145 = arith.constant 1 : index
    %c0_146 = arith.constant 0 : index
    %109 = vector.load %arg12[%c1_144, %c1_145, %c0_146] : memref<18x18x64xf32, #tpu.memory_space<vmem>>, vector<16x16x64xf32>
    tpu.vector_store %arg12[%c1_144, %c1_145, %c0_146], %108 {strides = array<i32>} : memref<18x18x64xf32, #tpu.memory_space<vmem>>, vector<16x16x64xf32>,
    %c1_147 = arith.constant 1 : index
    %c1_148 = arith.constant 1 : index
    %c0_149 = arith.constant 0 : index
    %110 = vector.load %arg12[%c1_147, %c1_148, %c0_149] : memref<18x18x64xf32, #tpu.memory_space<vmem>>, vector<16x16x64xf32>
    %c2_150 = arith.constant 2 : index
    %c2_151 = arith.constant 2 : index
    %c0_152 = arith.constant 0 : index
    %111 = vector.load %arg11[%c2_150, %c2_151, %c0_152] : memref<18x18x64xf32, #tpu.memory_space<vmem>>, vector<16x16x64xf32>
    %c8_153 = arith.constant 8 : index
    %c0_154 = arith.constant 0 : index
    %112 = vector.load %arg2[%c8_153, %c0_154] : memref<9x64xf32, #tpu.memory_space<vmem>>, vector<1x64xf32>
    %113 = vector.shape_cast %112 : vector<1x64xf32> to vector<64xf32>
    %114 = vector.shape_cast %113 : vector<64xf32> to vector<1x1x64xf32>
    %115 = vector.broadcast %114 : vector<1x1x64xf32> to vector<16x16x64xf32>
    %116 = arith.mulf %111, %115 : vector<16x16x64xf32>
    %117 = arith.addf %110, %116 : vector<16x16x64xf32>
    %c1_155 = arith.constant 1 : index
    %c1_156 = arith.constant 1 : index
    %c0_157 = arith.constant 0 : index
    %118 = vector.load %arg12[%c1_155, %c1_156, %c0_157] : memref<18x18x64xf32, #tpu.memory_space<vmem>>, vector<16x16x64xf32>
    tpu.vector_store %arg12[%c1_155, %c1_156, %c0_157], %117 {strides = array<i32>} : memref<18x18x64xf32, #tpu.memory_space<vmem>>, vector<16x16x64xf32>,
    %c0_158 = arith.constant 0 : index
    %c0_159 = arith.constant 0 : index
    %c0_160 = arith.constant 0 : index
    %119 = vector.load %arg12[%c0_158, %c0_159, %c0_160] : memref<18x18x64xf32, #tpu.memory_space<vmem>>, vector<16x16x64xf32>
    %cst_161 = arith.constant 0.000000e+00 : f32
    %120 = vector.broadcast %cst_161 : f32 to vector<16x16x64xf32>
    %121 = arith.maximumf %119, %120 : vector<16x16x64xf32>
    %122 = vector.shape_cast %121 : vector<16x16x64xf32> to vector<256x64xf32>
    %c0_162 = arith.constant 0 : index
    %c1_163 = arith.constant 1 : index
    %c0_164 = arith.constant 0 : index
    %123 = vector.load %arg12[%c0_162, %c1_163, %c0_164] : memref<18x18x64xf32, #tpu.memory_space<vmem>>, vector<16x16x64xf32>
    %cst_165 = arith.constant 0.000000e+00 : f32
    %124 = vector.broadcast %cst_165 : f32 to vector<16x16x64xf32>
    %125 = arith.maximumf %123, %124 : vector<16x16x64xf32>
    %126 = vector.shape_cast %125 : vector<16x16x64xf32> to vector<256x64xf32>
    %127 = tpu.concatenate %122, %126 in 1 : vector<256x64xf32>, vector<256x64xf32> -> vector<256x128xf32>
    %128 = arith.truncf %127 : vector<256x128xf32> to vector<256x128xbf16>
    %c0_166 = arith.constant 0 : index
    %c0_167 = arith.constant 0 : index
    %129 = vector.load %arg13[%c0_166, %c0_167] : memref<256x576xbf16, #tpu.memory_space<vmem>>, vector<256x128xbf16>
    tpu.vector_store %arg13[%c0_166, %c0_167], %128 {strides = array<i32>} : memref<256x576xbf16, #tpu.memory_space<vmem>>, vector<256x128xbf16>,
    %c0_168 = arith.constant 0 : index
    %c2_169 = arith.constant 2 : index
    %c0_170 = arith.constant 0 : index
    %130 = vector.load %arg12[%c0_168, %c2_169, %c0_170] : memref<18x18x64xf32, #tpu.memory_space<vmem>>, vector<16x16x64xf32>
    %cst_171 = arith.constant 0.000000e+00 : f32
    %131 = vector.broadcast %cst_171 : f32 to vector<16x16x64xf32>
    %132 = arith.maximumf %130, %131 : vector<16x16x64xf32>
    %133 = vector.shape_cast %132 : vector<16x16x64xf32> to vector<256x64xf32>
    %c1_172 = arith.constant 1 : index
    %c0_173 = arith.constant 0 : index
    %c0_174 = arith.constant 0 : index
    %134 = vector.load %arg12[%c1_172, %c0_173, %c0_174] : memref<18x18x64xf32, #tpu.memory_space<vmem>>, vector<16x16x64xf32>
    %cst_175 = arith.constant 0.000000e+00 : f32
    %135 = vector.broadcast %cst_175 : f32 to vector<16x16x64xf32>
    %136 = arith.maximumf %134, %135 : vector<16x16x64xf32>
    %137 = vector.shape_cast %136 : vector<16x16x64xf32> to vector<256x64xf32>
    %138 = tpu.concatenate %133, %137 in 1 : vector<256x64xf32>, vector<256x64xf32> -> vector<256x128xf32>
    %139 = arith.truncf %138 : vector<256x128xf32> to vector<256x128xbf16>
    %c0_176 = arith.constant 0 : index
    %c128 = arith.constant 128 : index
    %140 = vector.load %arg13[%c0_176, %c128] : memref<256x576xbf16, #tpu.memory_space<vmem>>, vector<256x128xbf16>
    tpu.vector_store %arg13[%c0_176, %c128], %139 {strides = array<i32>} : memref<256x576xbf16, #tpu.memory_space<vmem>>, vector<256x128xbf16>,
    %c1_177 = arith.constant 1 : index
    %c1_178 = arith.constant 1 : index
    %c0_179 = arith.constant 0 : index
    %141 = vector.load %arg12[%c1_177, %c1_178, %c0_179] : memref<18x18x64xf32, #tpu.memory_space<vmem>>, vector<16x16x64xf32>
    %cst_180 = arith.constant 0.000000e+00 : f32
    %142 = vector.broadcast %cst_180 : f32 to vector<16x16x64xf32>
    %143 = arith.maximumf %141, %142 : vector<16x16x64xf32>
    %144 = vector.shape_cast %143 : vector<16x16x64xf32> to vector<256x64xf32>
    %c1_181 = arith.constant 1 : index
    %c2_182 = arith.constant 2 : index
    %c0_183 = arith.constant 0 : index
    %145 = vector.load %arg12[%c1_181, %c2_182, %c0_183] : memref<18x18x64xf32, #tpu.memory_space<vmem>>, vector<16x16x64xf32>
    %cst_184 = arith.constant 0.000000e+00 : f32
    %146 = vector.broadcast %cst_184 : f32 to vector<16x16x64xf32>
    %147 = arith.maximumf %145, %146 : vector<16x16x64xf32>
    %148 = vector.shape_cast %147 : vector<16x16x64xf32> to vector<256x64xf32>
    %149 = tpu.concatenate %144, %148 in 1 : vector<256x64xf32>, vector<256x64xf32> -> vector<256x128xf32>
    %150 = arith.truncf %149 : vector<256x128xf32> to vector<256x128xbf16>
    %c0_185 = arith.constant 0 : index
    %c256 = arith.constant 256 : index
    %151 = vector.load %arg13[%c0_185, %c256] : memref<256x576xbf16, #tpu.memory_space<vmem>>, vector<256x128xbf16>
    tpu.vector_store %arg13[%c0_185, %c256], %150 {strides = array<i32>} : memref<256x576xbf16, #tpu.memory_space<vmem>>, vector<256x128xbf16>,
    %c2_186 = arith.constant 2 : index
    %c0_187 = arith.constant 0 : index
    %c0_188 = arith.constant 0 : index
    %152 = vector.load %arg12[%c2_186, %c0_187, %c0_188] : memref<18x18x64xf32, #tpu.memory_space<vmem>>, vector<16x16x64xf32>
    %cst_189 = arith.constant 0.000000e+00 : f32
    %153 = vector.broadcast %cst_189 : f32 to vector<16x16x64xf32>
    %154 = arith.maximumf %152, %153 : vector<16x16x64xf32>
    %155 = vector.shape_cast %154 : vector<16x16x64xf32> to vector<256x64xf32>
    %c2_190 = arith.constant 2 : index
    %c1_191 = arith.constant 1 : index
    %c0_192 = arith.constant 0 : index
    %156 = vector.load %arg12[%c2_190, %c1_191, %c0_192] : memref<18x18x64xf32, #tpu.memory_space<vmem>>, vector<16x16x64xf32>
    %cst_193 = arith.constant 0.000000e+00 : f32
    %157 = vector.broadcast %cst_193 : f32 to vector<16x16x64xf32>
    %158 = arith.maximumf %156, %157 : vector<16x16x64xf32>
    %159 = vector.shape_cast %158 : vector<16x16x64xf32> to vector<256x64xf32>
    %160 = tpu.concatenate %155, %159 in 1 : vector<256x64xf32>, vector<256x64xf32> -> vector<256x128xf32>
    %161 = arith.truncf %160 : vector<256x128xf32> to vector<256x128xbf16>
    %c0_194 = arith.constant 0 : index
    %c384 = arith.constant 384 : index
    %162 = vector.load %arg13[%c0_194, %c384] : memref<256x576xbf16, #tpu.memory_space<vmem>>, vector<256x128xbf16>
    tpu.vector_store %arg13[%c0_194, %c384], %161 {strides = array<i32>} : memref<256x576xbf16, #tpu.memory_space<vmem>>, vector<256x128xbf16>,
    %c2_195 = arith.constant 2 : index
    %c2_196 = arith.constant 2 : index
    %c0_197 = arith.constant 0 : index
    %163 = vector.load %arg12[%c2_195, %c2_196, %c0_197] : memref<18x18x64xf32, #tpu.memory_space<vmem>>, vector<16x16x64xf32>
    %cst_198 = arith.constant 0.000000e+00 : f32
    %164 = vector.broadcast %cst_198 : f32 to vector<16x16x64xf32>
    %165 = arith.maximumf %163, %164 : vector<16x16x64xf32>
    %166 = vector.shape_cast %165 : vector<16x16x64xf32> to vector<256x64xf32>
    %167 = arith.truncf %166 : vector<256x64xf32> to vector<256x64xbf16>
    %c0_199 = arith.constant 0 : index
    %c512 = arith.constant 512 : index
    %168 = vector.load %arg13[%c0_199, %c512] : memref<256x576xbf16, #tpu.memory_space<vmem>>, vector<256x64xbf16>
    tpu.vector_store %arg13[%c0_199, %c512], %167 {strides = array<i32>} : memref<256x576xbf16, #tpu.memory_space<vmem>>, vector<256x64xbf16>,
    %c0_200 = arith.constant 0 : index
    %c0_201 = arith.constant 0 : index
    %169 = vector.load %arg13[%c0_200, %c0_201] : memref<256x576xbf16, #tpu.memory_space<vmem>>, vector<256x576xbf16>
    %c0_202 = arith.constant 0 : index
    %c0_203 = arith.constant 0 : index
    %170 = vector.load %arg4[%c0_202, %c0_203] : memref<576x128xbf16, #tpu.memory_space<vmem>>, vector<576x128xbf16>
    %cst_204 = arith.constant dense<0.000000e+00> : vector<256x128xf32>
    %171 = tpu.matmul %169, %170, %cst_204 {dimension_numbers = #tpu.dot_dimension_numbers<[1], [0], [0], [1], [0, 0, 1, 1], [], []>} : vector<256x576xbf16>, vector<576x128xbf16>, vector<256x128xf32> -> vector<256x128xf32>
    %c0_205 = arith.constant 0 : index
    %c0_206 = arith.constant 0 : index
    %172 = vector.load %arg5[%c0_205, %c0_206] : memref<1x128xf32, #tpu.memory_space<vmem>>, vector<1x128xf32>
    %173 = vector.broadcast %172 : vector<1x128xf32> to vector<256x128xf32>
    %174 = arith.addf %171, %173 : vector<256x128xf32>
    %cst_207 = arith.constant 0.000000e+00 : f32
    %175 = vector.broadcast %cst_207 : f32 to vector<256x128xf32>
    %176 = arith.maximumf %174, %175 : vector<256x128xf32>
    %177 = vector.shape_cast %176 : vector<256x128xf32> to vector<8x2x8x2x128xf32>
    %178 = vector.extract_strided_slice %177 {offsets = [0, 0, 0, 0, 0], sizes = [8, 1, 8, 2, 128], strides = [1, 1, 1, 1, 1]} : vector<8x2x8x2x128xf32> to vector<8x1x8x2x128xf32>
    %179 = vector.shape_cast %178 : vector<8x1x8x2x128xf32> to vector<8x8x2x128xf32>
    %180 = vector.extract_strided_slice %177 {offsets = [0, 1, 0, 0, 0], sizes = [8, 1, 8, 2, 128], strides = [1, 1, 1, 1, 1]} : vector<8x2x8x2x128xf32> to vector<8x1x8x2x128xf32>
    %181 = vector.shape_cast %180 : vector<8x1x8x2x128xf32> to vector<8x8x2x128xf32>
    %182 = arith.maximumf %179, %181 : vector<8x8x2x128xf32>
    %183 = vector.extract_strided_slice %182 {offsets = [0, 0, 0, 0], sizes = [8, 8, 1, 128], strides = [1, 1, 1, 1]} : vector<8x8x2x128xf32> to vector<8x8x1x128xf32>
    %184 = vector.shape_cast %183 : vector<8x8x1x128xf32> to vector<8x8x128xf32>
    %185 = vector.extract_strided_slice %182 {offsets = [0, 0, 1, 0], sizes = [8, 8, 1, 128], strides = [1, 1, 1, 1]} : vector<8x8x2x128xf32> to vector<8x8x1x128xf32>
    %186 = vector.shape_cast %185 : vector<8x8x1x128xf32> to vector<8x8x128xf32>
    %187 = arith.maximumf %184, %186 : vector<8x8x128xf32>
    %c0_208 = arith.constant 0 : index
    %c0_209 = arith.constant 0 : index
    %c0_210 = arith.constant 0 : index
    %188 = vector.load %arg14[%c0_208, %c0_209, %c0_210] : memref<9x9x128xf32, #tpu.memory_space<vmem>>, vector<8x8x128xf32>
    tpu.vector_store %arg14[%c0_208, %c0_209, %c0_210], %187 {strides = array<i32>} : memref<9x9x128xf32, #tpu.memory_space<vmem>>, vector<8x8x128xf32>,
    %c0_211 = arith.constant 0 : index
    %c0_212 = arith.constant 0 : index
    %c0_213 = arith.constant 0 : index
    %189 = vector.load %arg14[%c0_211, %c0_212, %c0_213] : memref<9x9x128xf32, #tpu.memory_space<vmem>>, vector<8x8x128xf32>
    %190 = vector.shape_cast %189 : vector<8x8x128xf32> to vector<64x128xf32>
    %191 = arith.truncf %190 : vector<64x128xf32> to vector<64x128xbf16>
    %c0_214 = arith.constant 0 : index
    %c0_215 = arith.constant 0 : index
    %192 = vector.load %arg13[%c0_214, %c0_215] : memref<256x576xbf16, #tpu.memory_space<vmem>>, vector<64x128xbf16>
    tpu.vector_store %arg13[%c0_214, %c0_215], %191 {strides = array<i32>} : memref<256x576xbf16, #tpu.memory_space<vmem>>, vector<64x128xbf16>,
    %c0_216 = arith.constant 0 : index
    %c1_217 = arith.constant 1 : index
    %c0_218 = arith.constant 0 : index
    %193 = vector.load %arg14[%c0_216, %c1_217, %c0_218] : memref<9x9x128xf32, #tpu.memory_space<vmem>>, vector<8x8x128xf32>
    %194 = vector.shape_cast %193 : vector<8x8x128xf32> to vector<64x128xf32>
    %195 = arith.truncf %194 : vector<64x128xf32> to vector<64x128xbf16>
    %c0_219 = arith.constant 0 : index
    %c128_220 = arith.constant 128 : index
    %196 = vector.load %arg13[%c0_219, %c128_220] : memref<256x576xbf16, #tpu.memory_space<vmem>>, vector<64x128xbf16>
    tpu.vector_store %arg13[%c0_219, %c128_220], %195 {strides = array<i32>} : memref<256x576xbf16, #tpu.memory_space<vmem>>, vector<64x128xbf16>,
    %c1_221 = arith.constant 1 : index
    %c0_222 = arith.constant 0 : index
    %c0_223 = arith.constant 0 : index
    %197 = vector.load %arg14[%c1_221, %c0_222, %c0_223] : memref<9x9x128xf32, #tpu.memory_space<vmem>>, vector<8x8x128xf32>
    %198 = vector.shape_cast %197 : vector<8x8x128xf32> to vector<64x128xf32>
    %199 = arith.truncf %198 : vector<64x128xf32> to vector<64x128xbf16>
    %c0_224 = arith.constant 0 : index
    %c256_225 = arith.constant 256 : index
    %200 = vector.load %arg13[%c0_224, %c256_225] : memref<256x576xbf16, #tpu.memory_space<vmem>>, vector<64x128xbf16>
    tpu.vector_store %arg13[%c0_224, %c256_225], %199 {strides = array<i32>} : memref<256x576xbf16, #tpu.memory_space<vmem>>, vector<64x128xbf16>,
    %c1_226 = arith.constant 1 : index
    %c1_227 = arith.constant 1 : index
    %c0_228 = arith.constant 0 : index
    %201 = vector.load %arg14[%c1_226, %c1_227, %c0_228] : memref<9x9x128xf32, #tpu.memory_space<vmem>>, vector<8x8x128xf32>
    %202 = vector.shape_cast %201 : vector<8x8x128xf32> to vector<64x128xf32>
    %203 = arith.truncf %202 : vector<64x128xf32> to vector<64x128xbf16>
    %c0_229 = arith.constant 0 : index
    %c384_230 = arith.constant 384 : index
    %204 = vector.load %arg13[%c0_229, %c384_230] : memref<256x576xbf16, #tpu.memory_space<vmem>>, vector<64x128xbf16>
    tpu.vector_store %arg13[%c0_229, %c384_230], %203 {strides = array<i32>} : memref<256x576xbf16, #tpu.memory_space<vmem>>, vector<64x128xbf16>,
    %c0_231 = arith.constant 0 : index
    %c0_232 = arith.constant 0 : index
    %205 = vector.load %arg13[%c0_231, %c0_232] : memref<256x576xbf16, #tpu.memory_space<vmem>>, vector<64x512xbf16>
    %c0_233 = arith.constant 0 : index
    %c0_234 = arith.constant 0 : index
    %206 = vector.load %arg6[%c0_233, %c0_234] : memref<512x256xbf16, #tpu.memory_space<vmem>>, vector<512x256xbf16>
    %cst_235 = arith.constant dense<0.000000e+00> : vector<64x256xf32>
    %207 = tpu.matmul %205, %206, %cst_235 {dimension_numbers = #tpu.dot_dimension_numbers<[1], [0], [0], [1], [0, 0, 1, 1], [], []>} : vector<64x512xbf16>, vector<512x256xbf16>, vector<64x256xf32> -> vector<64x256xf32>
    %c0_236 = arith.constant 0 : index
    %c0_237 = arith.constant 0 : index
    %208 = vector.load %arg7[%c0_236, %c0_237] : memref<1x256xf32, #tpu.memory_space<vmem>>, vector<1x256xf32>
    %209 = vector.broadcast %208 : vector<1x256xf32> to vector<64x256xf32>
    %210 = arith.addf %207, %209 : vector<64x256xf32>
    %cst_238 = arith.constant 0.000000e+00 : f32
    %211 = vector.broadcast %cst_238 : f32 to vector<64x256xf32>
    %212 = arith.maximumf %210, %211 : vector<64x256xf32>
    %213 = vector.extract_strided_slice %212 {offsets = [0, 0], sizes = [64, 64], strides = [1, 1]} : vector<64x256xf32> to vector<64x64xf32>
    %214 = vector.shape_cast %213 : vector<64x64xf32> to vector<8x8x64xf32>
    %c0_239 = arith.constant 0 : index
    %c1_240 = arith.constant 1 : index
    %c1_241 = arith.constant 1 : index
    %c0_242 = arith.constant 0 : index
    %215 = vector.load %arg15[%c0_239, %c1_240, %c1_241, %c0_242] : memref<4x10x10x64xf32, #tpu.memory_space<vmem>>, vector<1x8x8x64xf32>
    %216 = vector.shape_cast %215 : vector<1x8x8x64xf32> to vector<8x8x64xf32>
    %217 = vector.shape_cast %214 : vector<8x8x64xf32> to vector<1x8x8x64xf32>
    tpu.vector_store %arg15[%c0_239, %c1_240, %c1_241, %c0_242], %217 {strides = array<i32>} : memref<4x10x10x64xf32, #tpu.memory_space<vmem>>, vector<1x8x8x64xf32>,
    %218 = vector.extract_strided_slice %212 {offsets = [0, 64], sizes = [64, 64], strides = [1, 1]} : vector<64x256xf32> to vector<64x64xf32>
    %219 = vector.shape_cast %218 : vector<64x64xf32> to vector<8x8x64xf32>
    %c1_243 = arith.constant 1 : index
    %c1_244 = arith.constant 1 : index
    %c1_245 = arith.constant 1 : index
    %c0_246 = arith.constant 0 : index
    %220 = vector.load %arg15[%c1_243, %c1_244, %c1_245, %c0_246] : memref<4x10x10x64xf32, #tpu.memory_space<vmem>>, vector<1x8x8x64xf32>
    %221 = vector.shape_cast %220 : vector<1x8x8x64xf32> to vector<8x8x64xf32>
    %222 = vector.shape_cast %219 : vector<8x8x64xf32> to vector<1x8x8x64xf32>
    tpu.vector_store %arg15[%c1_243, %c1_244, %c1_245, %c0_246], %222 {strides = array<i32>} : memref<4x10x10x64xf32, #tpu.memory_space<vmem>>, vector<1x8x8x64xf32>,
    %223 = vector.extract_strided_slice %212 {offsets = [0, 128], sizes = [64, 64], strides = [1, 1]} : vector<64x256xf32> to vector<64x64xf32>
    %224 = vector.shape_cast %223 : vector<64x64xf32> to vector<8x8x64xf32>
    %c2_247 = arith.constant 2 : index
    %c1_248 = arith.constant 1 : index
    %c1_249 = arith.constant 1 : index
    %c0_250 = arith.constant 0 : index
    %225 = vector.load %arg15[%c2_247, %c1_248, %c1_249, %c0_250] : memref<4x10x10x64xf32, #tpu.memory_space<vmem>>, vector<1x8x8x64xf32>
    %226 = vector.shape_cast %225 : vector<1x8x8x64xf32> to vector<8x8x64xf32>
    %227 = vector.shape_cast %224 : vector<8x8x64xf32> to vector<1x8x8x64xf32>
    tpu.vector_store %arg15[%c2_247, %c1_248, %c1_249, %c0_250], %227 {strides = array<i32>} : memref<4x10x10x64xf32, #tpu.memory_space<vmem>>, vector<1x8x8x64xf32>,
    %228 = vector.extract_strided_slice %212 {offsets = [0, 192], sizes = [64, 64], strides = [1, 1]} : vector<64x256xf32> to vector<64x64xf32>
    %229 = vector.shape_cast %228 : vector<64x64xf32> to vector<8x8x64xf32>
    %c3_251 = arith.constant 3 : index
    %c1_252 = arith.constant 1 : index
    %c1_253 = arith.constant 1 : index
    %c0_254 = arith.constant 0 : index
    %230 = vector.load %arg15[%c3_251, %c1_252, %c1_253, %c0_254] : memref<4x10x10x64xf32, #tpu.memory_space<vmem>>, vector<1x8x8x64xf32>
    %231 = vector.shape_cast %230 : vector<1x8x8x64xf32> to vector<8x8x64xf32>
    %232 = vector.shape_cast %229 : vector<8x8x64xf32> to vector<1x8x8x64xf32>
    tpu.vector_store %arg15[%c3_251, %c1_252, %c1_253, %c0_254], %232 {strides = array<i32>} : memref<4x10x10x64xf32, #tpu.memory_space<vmem>>, vector<1x8x8x64xf32>,
    %c3_255 = arith.constant 3 : index
    %c0_256 = arith.constant 0 : index
    %c0_257 = arith.constant 0 : index
    %c0_258 = arith.constant 0 : index
    %233 = vector.load %arg15[%c3_255, %c0_256, %c0_257, %c0_258] : memref<4x10x10x64xf32, #tpu.memory_space<vmem>>, vector<1x8x8x64xf32>
    %234 = vector.shape_cast %233 : vector<1x8x8x64xf32> to vector<8x8x64xf32>
    %235 = vector.shape_cast %234 : vector<8x8x64xf32> to vector<64x64xf32>
    %c2_259 = arith.constant 2 : index
    %c0_260 = arith.constant 0 : index
    %c1_261 = arith.constant 1 : index
    %c0_262 = arith.constant 0 : index
    %236 = vector.load %arg15[%c2_259, %c0_260, %c1_261, %c0_262] : memref<4x10x10x64xf32, #tpu.memory_space<vmem>>, vector<1x8x8x64xf32>
    %237 = vector.shape_cast %236 : vector<1x8x8x64xf32> to vector<8x8x64xf32>
    %238 = vector.shape_cast %237 : vector<8x8x64xf32> to vector<64x64xf32>
    %239 = tpu.concatenate %235, %238 in 1 : vector<64x64xf32>, vector<64x64xf32> -> vector<64x128xf32>
    %240 = arith.truncf %239 : vector<64x128xf32> to vector<64x128xbf16>
    %c0_263 = arith.constant 0 : index
    %c0_264 = arith.constant 0 : index
    %241 = vector.load %arg13[%c0_263, %c0_264] : memref<256x576xbf16, #tpu.memory_space<vmem>>, vector<64x128xbf16>
    tpu.vector_store %arg13[%c0_263, %c0_264], %240 {strides = array<i32>} : memref<256x576xbf16, #tpu.memory_space<vmem>>, vector<64x128xbf16>,
    %c3_265 = arith.constant 3 : index
    %c0_266 = arith.constant 0 : index
    %c1_267 = arith.constant 1 : index
    %c0_268 = arith.constant 0 : index
    %242 = vector.load %arg15[%c3_265, %c0_266, %c1_267, %c0_268] : memref<4x10x10x64xf32, #tpu.memory_space<vmem>>, vector<1x8x8x64xf32>
    %243 = vector.shape_cast %242 : vector<1x8x8x64xf32> to vector<8x8x64xf32>
    %244 = vector.shape_cast %243 : vector<8x8x64xf32> to vector<64x64xf32>
    %c1_269 = arith.constant 1 : index
    %c1_270 = arith.constant 1 : index
    %c0_271 = arith.constant 0 : index
    %c0_272 = arith.constant 0 : index
    %245 = vector.load %arg15[%c1_269, %c1_270, %c0_271, %c0_272] : memref<4x10x10x64xf32, #tpu.memory_space<vmem>>, vector<1x8x8x64xf32>
    %246 = vector.shape_cast %245 : vector<1x8x8x64xf32> to vector<8x8x64xf32>
    %247 = vector.shape_cast %246 : vector<8x8x64xf32> to vector<64x64xf32>
    %248 = tpu.concatenate %244, %247 in 1 : vector<64x64xf32>, vector<64x64xf32> -> vector<64x128xf32>
    %249 = arith.truncf %248 : vector<64x128xf32> to vector<64x128xbf16>
    %c0_273 = arith.constant 0 : index
    %c128_274 = arith.constant 128 : index
    %250 = vector.load %arg13[%c0_273, %c128_274] : memref<256x576xbf16, #tpu.memory_space<vmem>>, vector<64x128xbf16>
    tpu.vector_store %arg13[%c0_273, %c128_274], %249 {strides = array<i32>} : memref<256x576xbf16, #tpu.memory_space<vmem>>, vector<64x128xbf16>,
    %c0_275 = arith.constant 0 : index
    %c1_276 = arith.constant 1 : index
    %c1_277 = arith.constant 1 : index
    %c0_278 = arith.constant 0 : index
    %251 = vector.load %arg15[%c0_275, %c1_276, %c1_277, %c0_278] : memref<4x10x10x64xf32, #tpu.memory_space<vmem>>, vector<1x8x8x64xf32>
    %252 = vector.shape_cast %251 : vector<1x8x8x64xf32> to vector<8x8x64xf32>
    %253 = vector.shape_cast %252 : vector<8x8x64xf32> to vector<64x64xf32>
    %c1_279 = arith.constant 1 : index
    %c1_280 = arith.constant 1 : index
    %c1_281 = arith.constant 1 : index
    %c0_282 = arith.constant 0 : index
    %254 = vector.load %arg15[%c1_279, %c1_280, %c1_281, %c0_282] : memref<4x10x10x64xf32, #tpu.memory_space<vmem>>, vector<1x8x8x64xf32>
    %255 = vector.shape_cast %254 : vector<1x8x8x64xf32> to vector<8x8x64xf32>
    %256 = vector.shape_cast %255 : vector<8x8x64xf32> to vector<64x64xf32>
    %257 = tpu.concatenate %253, %256 in 1 : vector<64x64xf32>, vector<64x64xf32> -> vector<64x128xf32>
    %258 = arith.truncf %257 : vector<64x128xf32> to vector<64x128xbf16>
    %c0_283 = arith.constant 0 : index
    %c256_284 = arith.constant 256 : index
    %259 = vector.load %arg13[%c0_283, %c256_284] : memref<256x576xbf16, #tpu.memory_space<vmem>>, vector<64x128xbf16>
    tpu.vector_store %arg13[%c0_283, %c256_284], %258 {strides = array<i32>} : memref<256x576xbf16, #tpu.memory_space<vmem>>, vector<64x128xbf16>,
    %c3_285 = arith.constant 3 : index
    %c1_286 = arith.constant 1 : index
    %c0_287 = arith.constant 0 : index
    %c0_288 = arith.constant 0 : index
    %260 = vector.load %arg15[%c3_285, %c1_286, %c0_287, %c0_288] : memref<4x10x10x64xf32, #tpu.memory_space<vmem>>, vector<1x8x8x64xf32>
    %261 = vector.shape_cast %260 : vector<1x8x8x64xf32> to vector<8x8x64xf32>
    %262 = vector.shape_cast %261 : vector<8x8x64xf32> to vector<64x64xf32>
    %c2_289 = arith.constant 2 : index
    %c1_290 = arith.constant 1 : index
    %c1_291 = arith.constant 1 : index
    %c0_292 = arith.constant 0 : index
    %263 = vector.load %arg15[%c2_289, %c1_290, %c1_291, %c0_292] : memref<4x10x10x64xf32, #tpu.memory_space<vmem>>, vector<1x8x8x64xf32>
    %264 = vector.shape_cast %263 : vector<1x8x8x64xf32> to vector<8x8x64xf32>
    %265 = vector.shape_cast %264 : vector<8x8x64xf32> to vector<64x64xf32>
    %266 = tpu.concatenate %262, %265 in 1 : vector<64x64xf32>, vector<64x64xf32> -> vector<64x128xf32>
    %267 = arith.truncf %266 : vector<64x128xf32> to vector<64x128xbf16>
    %c0_293 = arith.constant 0 : index
    %c384_294 = arith.constant 384 : index
    %268 = vector.load %arg13[%c0_293, %c384_294] : memref<256x576xbf16, #tpu.memory_space<vmem>>, vector<64x128xbf16>
    tpu.vector_store %arg13[%c0_293, %c384_294], %267 {strides = array<i32>} : memref<256x576xbf16, #tpu.memory_space<vmem>>, vector<64x128xbf16>,
    %c3_295 = arith.constant 3 : index
    %c1_296 = arith.constant 1 : index
    %c1_297 = arith.constant 1 : index
    %c0_298 = arith.constant 0 : index
    %269 = vector.load %arg15[%c3_295, %c1_296, %c1_297, %c0_298] : memref<4x10x10x64xf32, #tpu.memory_space<vmem>>, vector<1x8x8x64xf32>
    %270 = vector.shape_cast %269 : vector<1x8x8x64xf32> to vector<8x8x64xf32>
    %271 = vector.shape_cast %270 : vector<8x8x64xf32> to vector<64x64xf32>
    %272 = arith.truncf %271 : vector<64x64xf32> to vector<64x64xbf16>
    %c0_299 = arith.constant 0 : index
    %c512_300 = arith.constant 512 : index
    %273 = vector.load %arg13[%c0_299, %c512_300] : memref<256x576xbf16, #tpu.memory_space<vmem>>, vector<64x64xbf16>
    tpu.vector_store %arg13[%c0_299, %c512_300], %272 {strides = array<i32>} : memref<256x576xbf16, #tpu.memory_space<vmem>>, vector<64x64xbf16>,
    %c2_301 = arith.constant 2 : index
    %c0_302 = arith.constant 0 : index
    %c1_303 = arith.constant 1 : index
    %c0_304 = arith.constant 0 : index
    %274 = vector.load %arg15[%c2_301, %c0_302, %c1_303, %c0_304] : memref<4x10x10x64xf32, #tpu.memory_space<vmem>>, vector<1x8x8x64xf32>
    %275 = vector.shape_cast %274 : vector<1x8x8x64xf32> to vector<8x8x64xf32>
    %276 = vector.shape_cast %275 : vector<8x8x64xf32> to vector<64x64xf32>
    %c3_305 = arith.constant 3 : index
    %c0_306 = arith.constant 0 : index
    %c1_307 = arith.constant 1 : index
    %c0_308 = arith.constant 0 : index
    %277 = vector.load %arg15[%c3_305, %c0_306, %c1_307, %c0_308] : memref<4x10x10x64xf32, #tpu.memory_space<vmem>>, vector<1x8x8x64xf32>
    %278 = vector.shape_cast %277 : vector<1x8x8x64xf32> to vector<8x8x64xf32>
    %279 = vector.shape_cast %278 : vector<8x8x64xf32> to vector<64x64xf32>
    %280 = tpu.concatenate %276, %279 in 1 : vector<64x64xf32>, vector<64x64xf32> -> vector<64x128xf32>
    %281 = arith.truncf %280 : vector<64x128xf32> to vector<64x128xbf16>
    %c64 = arith.constant 64 : index
    %c0_309 = arith.constant 0 : index
    %282 = vector.load %arg13[%c64, %c0_309] : memref<256x576xbf16, #tpu.memory_space<vmem>>, vector<64x128xbf16>
    tpu.vector_store %arg13[%c64, %c0_309], %281 {strides = array<i32>} : memref<256x576xbf16, #tpu.memory_space<vmem>>, vector<64x128xbf16>,
    %c2_310 = arith.constant 2 : index
    %c0_311 = arith.constant 0 : index
    %c2_312 = arith.constant 2 : index
    %c0_313 = arith.constant 0 : index
    %283 = vector.load %arg15[%c2_310, %c0_311, %c2_312, %c0_313] : memref<4x10x10x64xf32, #tpu.memory_space<vmem>>, vector<1x8x8x64xf32>
    %284 = vector.shape_cast %283 : vector<1x8x8x64xf32> to vector<8x8x64xf32>
    %285 = vector.shape_cast %284 : vector<8x8x64xf32> to vector<64x64xf32>
    %c0_314 = arith.constant 0 : index
    %c1_315 = arith.constant 1 : index
    %c1_316 = arith.constant 1 : index
    %c0_317 = arith.constant 0 : index
    %286 = vector.load %arg15[%c0_314, %c1_315, %c1_316, %c0_317] : memref<4x10x10x64xf32, #tpu.memory_space<vmem>>, vector<1x8x8x64xf32>
    %287 = vector.shape_cast %286 : vector<1x8x8x64xf32> to vector<8x8x64xf32>
    %288 = vector.shape_cast %287 : vector<8x8x64xf32> to vector<64x64xf32>
    %289 = tpu.concatenate %285, %288 in 1 : vector<64x64xf32>, vector<64x64xf32> -> vector<64x128xf32>
    %290 = arith.truncf %289 : vector<64x128xf32> to vector<64x128xbf16>
    %c64_318 = arith.constant 64 : index
    %c128_319 = arith.constant 128 : index
    %291 = vector.load %arg13[%c64_318, %c128_319] : memref<256x576xbf16, #tpu.memory_space<vmem>>, vector<64x128xbf16>
    tpu.vector_store %arg13[%c64_318, %c128_319], %290 {strides = array<i32>} : memref<256x576xbf16, #tpu.memory_space<vmem>>, vector<64x128xbf16>,
    %c1_320 = arith.constant 1 : index
    %c1_321 = arith.constant 1 : index
    %c1_322 = arith.constant 1 : index
    %c0_323 = arith.constant 0 : index
    %292 = vector.load %arg15[%c1_320, %c1_321, %c1_322, %c0_323] : memref<4x10x10x64xf32, #tpu.memory_space<vmem>>, vector<1x8x8x64xf32>
    %293 = vector.shape_cast %292 : vector<1x8x8x64xf32> to vector<8x8x64xf32>
    %294 = vector.shape_cast %293 : vector<8x8x64xf32> to vector<64x64xf32>
    %c0_324 = arith.constant 0 : index
    %c1_325 = arith.constant 1 : index
    %c2_326 = arith.constant 2 : index
    %c0_327 = arith.constant 0 : index
    %295 = vector.load %arg15[%c0_324, %c1_325, %c2_326, %c0_327] : memref<4x10x10x64xf32, #tpu.memory_space<vmem>>, vector<1x8x8x64xf32>
    %296 = vector.shape_cast %295 : vector<1x8x8x64xf32> to vector<8x8x64xf32>
    %297 = vector.shape_cast %296 : vector<8x8x64xf32> to vector<64x64xf32>
    %298 = tpu.concatenate %294, %297 in 1 : vector<64x64xf32>, vector<64x64xf32> -> vector<64x128xf32>
    %299 = arith.truncf %298 : vector<64x128xf32> to vector<64x128xbf16>
    %c64_328 = arith.constant 64 : index
    %c256_329 = arith.constant 256 : index
    %300 = vector.load %arg13[%c64_328, %c256_329] : memref<256x576xbf16, #tpu.memory_space<vmem>>, vector<64x128xbf16>
    tpu.vector_store %arg13[%c64_328, %c256_329], %299 {strides = array<i32>} : memref<256x576xbf16, #tpu.memory_space<vmem>>, vector<64x128xbf16>,
    %c2_330 = arith.constant 2 : index
    %c1_331 = arith.constant 1 : index
    %c1_332 = arith.constant 1 : index
    %c0_333 = arith.constant 0 : index
    %301 = vector.load %arg15[%c2_330, %c1_331, %c1_332, %c0_333] : memref<4x10x10x64xf32, #tpu.memory_space<vmem>>, vector<1x8x8x64xf32>
    %302 = vector.shape_cast %301 : vector<1x8x8x64xf32> to vector<8x8x64xf32>
    %303 = vector.shape_cast %302 : vector<8x8x64xf32> to vector<64x64xf32>
    %c3_334 = arith.constant 3 : index
    %c1_335 = arith.constant 1 : index
    %c1_336 = arith.constant 1 : index
    %c0_337 = arith.constant 0 : index
    %304 = vector.load %arg15[%c3_334, %c1_335, %c1_336, %c0_337] : memref<4x10x10x64xf32, #tpu.memory_space<vmem>>, vector<1x8x8x64xf32>
    %305 = vector.shape_cast %304 : vector<1x8x8x64xf32> to vector<8x8x64xf32>
    %306 = vector.shape_cast %305 : vector<8x8x64xf32> to vector<64x64xf32>
    %307 = tpu.concatenate %303, %306 in 1 : vector<64x64xf32>, vector<64x64xf32> -> vector<64x128xf32>
    %308 = arith.truncf %307 : vector<64x128xf32> to vector<64x128xbf16>
    %c64_338 = arith.constant 64 : index
    %c384_339 = arith.constant 384 : index
    %309 = vector.load %arg13[%c64_338, %c384_339] : memref<256x576xbf16, #tpu.memory_space<vmem>>, vector<64x128xbf16>
    tpu.vector_store %arg13[%c64_338, %c384_339], %308 {strides = array<i32>} : memref<256x576xbf16, #tpu.memory_space<vmem>>, vector<64x128xbf16>,
    %c2_340 = arith.constant 2 : index
    %c1_341 = arith.constant 1 : index
    %c2_342 = arith.constant 2 : index
    %c0_343 = arith.constant 0 : index
    %310 = vector.load %arg15[%c2_340, %c1_341, %c2_342, %c0_343] : memref<4x10x10x64xf32, #tpu.memory_space<vmem>>, vector<1x8x8x64xf32>
    %311 = vector.shape_cast %310 : vector<1x8x8x64xf32> to vector<8x8x64xf32>
    %312 = vector.shape_cast %311 : vector<8x8x64xf32> to vector<64x64xf32>
    %313 = arith.truncf %312 : vector<64x64xf32> to vector<64x64xbf16>
    %c64_344 = arith.constant 64 : index
    %c512_345 = arith.constant 512 : index
    %314 = vector.load %arg13[%c64_344, %c512_345] : memref<256x576xbf16, #tpu.memory_space<vmem>>, vector<64x64xbf16>
    tpu.vector_store %arg13[%c64_344, %c512_345], %313 {strides = array<i32>} : memref<256x576xbf16, #tpu.memory_space<vmem>>, vector<64x64xbf16>,
    %c1_346 = arith.constant 1 : index
    %c1_347 = arith.constant 1 : index
    %c0_348 = arith.constant 0 : index
    %c0_349 = arith.constant 0 : index
    %315 = vector.load %arg15[%c1_346, %c1_347, %c0_348, %c0_349] : memref<4x10x10x64xf32, #tpu.memory_space<vmem>>, vector<1x8x8x64xf32>
    %316 = vector.shape_cast %315 : vector<1x8x8x64xf32> to vector<8x8x64xf32>
    %317 = vector.shape_cast %316 : vector<8x8x64xf32> to vector<64x64xf32>
    %c0_350 = arith.constant 0 : index
    %c1_351 = arith.constant 1 : index
    %c1_352 = arith.constant 1 : index
    %c0_353 = arith.constant 0 : index
    %318 = vector.load %arg15[%c0_350, %c1_351, %c1_352, %c0_353] : memref<4x10x10x64xf32, #tpu.memory_space<vmem>>, vector<1x8x8x64xf32>
    %319 = vector.shape_cast %318 : vector<1x8x8x64xf32> to vector<8x8x64xf32>
    %320 = vector.shape_cast %319 : vector<8x8x64xf32> to vector<64x64xf32>
    %321 = tpu.concatenate %317, %320 in 1 : vector<64x64xf32>, vector<64x64xf32> -> vector<64x128xf32>
    %322 = arith.truncf %321 : vector<64x128xf32> to vector<64x128xbf16>
    %c128_354 = arith.constant 128 : index
    %c0_355 = arith.constant 0 : index
    %323 = vector.load %arg13[%c128_354, %c0_355] : memref<256x576xbf16, #tpu.memory_space<vmem>>, vector<64x128xbf16>
    tpu.vector_store %arg13[%c128_354, %c0_355], %322 {strides = array<i32>} : memref<256x576xbf16, #tpu.memory_space<vmem>>, vector<64x128xbf16>,
    %c1_356 = arith.constant 1 : index
    %c1_357 = arith.constant 1 : index
    %c1_358 = arith.constant 1 : index
    %c0_359 = arith.constant 0 : index
    %324 = vector.load %arg15[%c1_356, %c1_357, %c1_358, %c0_359] : memref<4x10x10x64xf32, #tpu.memory_space<vmem>>, vector<1x8x8x64xf32>
    %325 = vector.shape_cast %324 : vector<1x8x8x64xf32> to vector<8x8x64xf32>
    %326 = vector.shape_cast %325 : vector<8x8x64xf32> to vector<64x64xf32>
    %c3_360 = arith.constant 3 : index
    %c1_361 = arith.constant 1 : index
    %c0_362 = arith.constant 0 : index
    %c0_363 = arith.constant 0 : index
    %327 = vector.load %arg15[%c3_360, %c1_361, %c0_362, %c0_363] : memref<4x10x10x64xf32, #tpu.memory_space<vmem>>, vector<1x8x8x64xf32>
    %328 = vector.shape_cast %327 : vector<1x8x8x64xf32> to vector<8x8x64xf32>
    %329 = vector.shape_cast %328 : vector<8x8x64xf32> to vector<64x64xf32>
    %330 = tpu.concatenate %326, %329 in 1 : vector<64x64xf32>, vector<64x64xf32> -> vector<64x128xf32>
    %331 = arith.truncf %330 : vector<64x128xf32> to vector<64x128xbf16>
    %c128_364 = arith.constant 128 : index
    %c128_365 = arith.constant 128 : index
    %332 = vector.load %arg13[%c128_364, %c128_365] : memref<256x576xbf16, #tpu.memory_space<vmem>>, vector<64x128xbf16>
    tpu.vector_store %arg13[%c128_364, %c128_365], %331 {strides = array<i32>} : memref<256x576xbf16, #tpu.memory_space<vmem>>, vector<64x128xbf16>,
    %c2_366 = arith.constant 2 : index
    %c1_367 = arith.constant 1 : index
    %c1_368 = arith.constant 1 : index
    %c0_369 = arith.constant 0 : index
    %333 = vector.load %arg15[%c2_366, %c1_367, %c1_368, %c0_369] : memref<4x10x10x64xf32, #tpu.memory_space<vmem>>, vector<1x8x8x64xf32>
    %334 = vector.shape_cast %333 : vector<1x8x8x64xf32> to vector<8x8x64xf32>
    %335 = vector.shape_cast %334 : vector<8x8x64xf32> to vector<64x64xf32>
    %c3_370 = arith.constant 3 : index
    %c1_371 = arith.constant 1 : index
    %c1_372 = arith.constant 1 : index
    %c0_373 = arith.constant 0 : index
    %336 = vector.load %arg15[%c3_370, %c1_371, %c1_372, %c0_373] : memref<4x10x10x64xf32, #tpu.memory_space<vmem>>, vector<1x8x8x64xf32>
    %337 = vector.shape_cast %336 : vector<1x8x8x64xf32> to vector<8x8x64xf32>
    %338 = vector.shape_cast %337 : vector<8x8x64xf32> to vector<64x64xf32>
    %339 = tpu.concatenate %335, %338 in 1 : vector<64x64xf32>, vector<64x64xf32> -> vector<64x128xf32>
    %340 = arith.truncf %339 : vector<64x128xf32> to vector<64x128xbf16>
    %c128_374 = arith.constant 128 : index
    %c256_375 = arith.constant 256 : index
    %341 = vector.load %arg13[%c128_374, %c256_375] : memref<256x576xbf16, #tpu.memory_space<vmem>>, vector<64x128xbf16>
    tpu.vector_store %arg13[%c128_374, %c256_375], %340 {strides = array<i32>} : memref<256x576xbf16, #tpu.memory_space<vmem>>, vector<64x128xbf16>,
    %c1_376 = arith.constant 1 : index
    %c2_377 = arith.constant 2 : index
    %c0_378 = arith.constant 0 : index
    %c0_379 = arith.constant 0 : index
    %342 = vector.load %arg15[%c1_376, %c2_377, %c0_378, %c0_379] : memref<4x10x10x64xf32, #tpu.memory_space<vmem>>, vector<1x8x8x64xf32>
    %343 = vector.shape_cast %342 : vector<1x8x8x64xf32> to vector<8x8x64xf32>
    %344 = vector.shape_cast %343 : vector<8x8x64xf32> to vector<64x64xf32>
    %c0_380 = arith.constant 0 : index
    %c2_381 = arith.constant 2 : index
    %c1_382 = arith.constant 1 : index
    %c0_383 = arith.constant 0 : index
    %345 = vector.load %arg15[%c0_380, %c2_381, %c1_382, %c0_383] : memref<4x10x10x64xf32, #tpu.memory_space<vmem>>, vector<1x8x8x64xf32>
    %346 = vector.shape_cast %345 : vector<1x8x8x64xf32> to vector<8x8x64xf32>
    %347 = vector.shape_cast %346 : vector<8x8x64xf32> to vector<64x64xf32>
    %348 = tpu.concatenate %344, %347 in 1 : vector<64x64xf32>, vector<64x64xf32> -> vector<64x128xf32>
    %349 = arith.truncf %348 : vector<64x128xf32> to vector<64x128xbf16>
    %c128_384 = arith.constant 128 : index
    %c384_385 = arith.constant 384 : index
    %350 = vector.load %arg13[%c128_384, %c384_385] : memref<256x576xbf16, #tpu.memory_space<vmem>>, vector<64x128xbf16>
    tpu.vector_store %arg13[%c128_384, %c384_385], %349 {strides = array<i32>} : memref<256x576xbf16, #tpu.memory_space<vmem>>, vector<64x128xbf16>,
    %c1_386 = arith.constant 1 : index
    %c2_387 = arith.constant 2 : index
    %c1_388 = arith.constant 1 : index
    %c0_389 = arith.constant 0 : index
    %351 = vector.load %arg15[%c1_386, %c2_387, %c1_388, %c0_389] : memref<4x10x10x64xf32, #tpu.memory_space<vmem>>, vector<1x8x8x64xf32>
    %352 = vector.shape_cast %351 : vector<1x8x8x64xf32> to vector<8x8x64xf32>
    %353 = vector.shape_cast %352 : vector<8x8x64xf32> to vector<64x64xf32>
    %354 = arith.truncf %353 : vector<64x64xf32> to vector<64x64xbf16>
    %c128_390 = arith.constant 128 : index
    %c512_391 = arith.constant 512 : index
    %355 = vector.load %arg13[%c128_390, %c512_391] : memref<256x576xbf16, #tpu.memory_space<vmem>>, vector<64x64xbf16>
    tpu.vector_store %arg13[%c128_390, %c512_391], %354 {strides = array<i32>} : memref<256x576xbf16, #tpu.memory_space<vmem>>, vector<64x64xbf16>,
    %c0_392 = arith.constant 0 : index
    %c1_393 = arith.constant 1 : index
    %c1_394 = arith.constant 1 : index
    %c0_395 = arith.constant 0 : index
    %356 = vector.load %arg15[%c0_392, %c1_393, %c1_394, %c0_395] : memref<4x10x10x64xf32, #tpu.memory_space<vmem>>, vector<1x8x8x64xf32>
    %357 = vector.shape_cast %356 : vector<1x8x8x64xf32> to vector<8x8x64xf32>
    %358 = vector.shape_cast %357 : vector<8x8x64xf32> to vector<64x64xf32>
    %c1_396 = arith.constant 1 : index
    %c1_397 = arith.constant 1 : index
    %c1_398 = arith.constant 1 : index
    %c0_399 = arith.constant 0 : index
    %359 = vector.load %arg15[%c1_396, %c1_397, %c1_398, %c0_399] : memref<4x10x10x64xf32, #tpu.memory_space<vmem>>, vector<1x8x8x64xf32>
    %360 = vector.shape_cast %359 : vector<1x8x8x64xf32> to vector<8x8x64xf32>
    %361 = vector.shape_cast %360 : vector<8x8x64xf32> to vector<64x64xf32>
    %362 = tpu.concatenate %358, %361 in 1 : vector<64x64xf32>, vector<64x64xf32> -> vector<64x128xf32>
    %363 = arith.truncf %362 : vector<64x128xf32> to vector<64x128xbf16>
    %c192 = arith.constant 192 : index
    %c0_400 = arith.constant 0 : index
    %364 = vector.load %arg13[%c192, %c0_400] : memref<256x576xbf16, #tpu.memory_space<vmem>>, vector<64x128xbf16>
    tpu.vector_store %arg13[%c192, %c0_400], %363 {strides = array<i32>} : memref<256x576xbf16, #tpu.memory_space<vmem>>, vector<64x128xbf16>,
    %c0_401 = arith.constant 0 : index
    %c1_402 = arith.constant 1 : index
    %c2_403 = arith.constant 2 : index
    %c0_404 = arith.constant 0 : index
    %365 = vector.load %arg15[%c0_401, %c1_402, %c2_403, %c0_404] : memref<4x10x10x64xf32, #tpu.memory_space<vmem>>, vector<1x8x8x64xf32>
    %366 = vector.shape_cast %365 : vector<1x8x8x64xf32> to vector<8x8x64xf32>
    %367 = vector.shape_cast %366 : vector<8x8x64xf32> to vector<64x64xf32>
    %c2_405 = arith.constant 2 : index
    %c1_406 = arith.constant 1 : index
    %c1_407 = arith.constant 1 : index
    %c0_408 = arith.constant 0 : index
    %368 = vector.load %arg15[%c2_405, %c1_406, %c1_407, %c0_408] : memref<4x10x10x64xf32, #tpu.memory_space<vmem>>, vector<1x8x8x64xf32>
    %369 = vector.shape_cast %368 : vector<1x8x8x64xf32> to vector<8x8x64xf32>
    %370 = vector.shape_cast %369 : vector<8x8x64xf32> to vector<64x64xf32>
    %371 = tpu.concatenate %367, %370 in 1 : vector<64x64xf32>, vector<64x64xf32> -> vector<64x128xf32>
    %372 = arith.truncf %371 : vector<64x128xf32> to vector<64x128xbf16>
    %c192_409 = arith.constant 192 : index
    %c128_410 = arith.constant 128 : index
    %373 = vector.load %arg13[%c192_409, %c128_410] : memref<256x576xbf16, #tpu.memory_space<vmem>>, vector<64x128xbf16>
    tpu.vector_store %arg13[%c192_409, %c128_410], %372 {strides = array<i32>} : memref<256x576xbf16, #tpu.memory_space<vmem>>, vector<64x128xbf16>,
    %c3_411 = arith.constant 3 : index
    %c1_412 = arith.constant 1 : index
    %c1_413 = arith.constant 1 : index
    %c0_414 = arith.constant 0 : index
    %374 = vector.load %arg15[%c3_411, %c1_412, %c1_413, %c0_414] : memref<4x10x10x64xf32, #tpu.memory_space<vmem>>, vector<1x8x8x64xf32>
    %375 = vector.shape_cast %374 : vector<1x8x8x64xf32> to vector<8x8x64xf32>
    %376 = vector.shape_cast %375 : vector<8x8x64xf32> to vector<64x64xf32>
    %c2_415 = arith.constant 2 : index
    %c1_416 = arith.constant 1 : index
    %c2_417 = arith.constant 2 : index
    %c0_418 = arith.constant 0 : index
    %377 = vector.load %arg15[%c2_415, %c1_416, %c2_417, %c0_418] : memref<4x10x10x64xf32, #tpu.memory_space<vmem>>, vector<1x8x8x64xf32>
    %378 = vector.shape_cast %377 : vector<1x8x8x64xf32> to vector<8x8x64xf32>
    %379 = vector.shape_cast %378 : vector<8x8x64xf32> to vector<64x64xf32>
    %380 = tpu.concatenate %376, %379 in 1 : vector<64x64xf32>, vector<64x64xf32> -> vector<64x128xf32>
    %381 = arith.truncf %380 : vector<64x128xf32> to vector<64x128xbf16>
    %c192_419 = arith.constant 192 : index
    %c256_420 = arith.constant 256 : index
    %382 = vector.load %arg13[%c192_419, %c256_420] : memref<256x576xbf16, #tpu.memory_space<vmem>>, vector<64x128xbf16>
    tpu.vector_store %arg13[%c192_419, %c256_420], %381 {strides = array<i32>} : memref<256x576xbf16, #tpu.memory_space<vmem>>, vector<64x128xbf16>,
    %c0_421 = arith.constant 0 : index
    %c2_422 = arith.constant 2 : index
    %c1_423 = arith.constant 1 : index
    %c0_424 = arith.constant 0 : index
    %383 = vector.load %arg15[%c0_421, %c2_422, %c1_423, %c0_424] : memref<4x10x10x64xf32, #tpu.memory_space<vmem>>, vector<1x8x8x64xf32>
    %384 = vector.shape_cast %383 : vector<1x8x8x64xf32> to vector<8x8x64xf32>
    %385 = vector.shape_cast %384 : vector<8x8x64xf32> to vector<64x64xf32>
    %c1_425 = arith.constant 1 : index
    %c2_426 = arith.constant 2 : index
    %c1_427 = arith.constant 1 : index
    %c0_428 = arith.constant 0 : index
    %386 = vector.load %arg15[%c1_425, %c2_426, %c1_427, %c0_428] : memref<4x10x10x64xf32, #tpu.memory_space<vmem>>, vector<1x8x8x64xf32>
    %387 = vector.shape_cast %386 : vector<1x8x8x64xf32> to vector<8x8x64xf32>
    %388 = vector.shape_cast %387 : vector<8x8x64xf32> to vector<64x64xf32>
    %389 = tpu.concatenate %385, %388 in 1 : vector<64x64xf32>, vector<64x64xf32> -> vector<64x128xf32>
    %390 = arith.truncf %389 : vector<64x128xf32> to vector<64x128xbf16>
    %c192_429 = arith.constant 192 : index
    %c384_430 = arith.constant 384 : index
    %391 = vector.load %arg13[%c192_429, %c384_430] : memref<256x576xbf16, #tpu.memory_space<vmem>>, vector<64x128xbf16>
    tpu.vector_store %arg13[%c192_429, %c384_430], %390 {strides = array<i32>} : memref<256x576xbf16, #tpu.memory_space<vmem>>, vector<64x128xbf16>,
    %c0_431 = arith.constant 0 : index
    %c2_432 = arith.constant 2 : index
    %c2_433 = arith.constant 2 : index
    %c0_434 = arith.constant 0 : index
    %392 = vector.load %arg15[%c0_431, %c2_432, %c2_433, %c0_434] : memref<4x10x10x64xf32, #tpu.memory_space<vmem>>, vector<1x8x8x64xf32>
    %393 = vector.shape_cast %392 : vector<1x8x8x64xf32> to vector<8x8x64xf32>
    %394 = vector.shape_cast %393 : vector<8x8x64xf32> to vector<64x64xf32>
    %395 = arith.truncf %394 : vector<64x64xf32> to vector<64x64xbf16>
    %c192_435 = arith.constant 192 : index
    %c512_436 = arith.constant 512 : index
    %396 = vector.load %arg13[%c192_435, %c512_436] : memref<256x576xbf16, #tpu.memory_space<vmem>>, vector<64x64xbf16>
    tpu.vector_store %arg13[%c192_435, %c512_436], %395 {strides = array<i32>} : memref<256x576xbf16, #tpu.memory_space<vmem>>, vector<64x64xbf16>,
    %c0_437 = arith.constant 0 : index
    %c0_438 = arith.constant 0 : index
    %397 = vector.load %arg8[%c0_437, %c0_438] : memref<2x576xbf16, #tpu.memory_space<vmem>>, vector<2x576xbf16>
    %c0_439 = arith.constant 0 : index
    %c0_440 = arith.constant 0 : index
    %398 = vector.load %arg13[%c0_439, %c0_440] : memref<256x576xbf16, #tpu.memory_space<vmem>>, vector<256x576xbf16>
    %cst_441 = arith.constant dense<0.000000e+00> : vector<2x256xf32>
    %399 = tpu.matmul %397, %398, %cst_441 {dimension_numbers = #tpu.dot_dimension_numbers<[1], [1], [0], [0], [0, 0, 1, 0], [], []>} : vector<2x576xbf16>, vector<256x576xbf16>, vector<2x256xf32> -> vector<2x256xf32>
    %c0_442 = arith.constant 0 : index
    %c0_443 = arith.constant 0 : index
    %400 = vector.load %arg9[%c0_442, %c0_443] : memref<2x1xf32, #tpu.memory_space<vmem>>, vector<2x1xf32>
    %401 = vector.broadcast %400 : vector<2x1xf32> to vector<2x256xf32>
    %402 = arith.addf %399, %401 : vector<2x256xf32>
    %403 = math.tanh %402 : vector<2x256xf32>
    %c0_444 = arith.constant 0 : index
    %c0_445 = arith.constant 0 : index
    %c0_446 = arith.constant 0 : index
    %404 = vector.load %arg10[%c0_444, %c0_445, %c0_446] : memref<1x2x256xf32, #tpu.memory_space<vmem>>, vector<1x2x256xf32>
    %405 = vector.shape_cast %404 : vector<1x2x256xf32> to vector<2x256xf32>
    %406 = vector.shape_cast %403 : vector<2x256xf32> to vector<1x2x256xf32>
    tpu.vector_store %arg10[%c0_444, %c0_445, %c0_446], %406 {strides = array<i32>} : memref<1x2x256xf32, #tpu.memory_space<vmem>>, vector<1x2x256xf32>,
    return
  }
  func.func @transform_0(%arg0: i32) -> (i32, i32, i32) {
    %c0_i32 = arith.constant 0 : i32
    %c0_i32_0 = arith.constant 0 : i32
    %c0_i32_1 = arith.constant 0 : i32
    return %arg0, %c0_i32, %c0_i32_0 : i32, i32, i32
  }
  func.func @transform_1(%arg0: i32) -> (i32, i32) {
    %c0_i32 = arith.constant 0 : i32
    %c0_i32_0 = arith.constant 0 : i32
    %c0_i32_1 = arith.constant 0 : i32
    return %c0_i32, %c0_i32_0 : i32, i32
  }
  func.func @transform_2(%arg0: i32) -> (i32, i32) {
    %c0_i32 = arith.constant 0 : i32
    %c0_i32_0 = arith.constant 0 : i32
    %c0_i32_1 = arith.constant 0 : i32
    return %c0_i32, %c0_i32_0 : i32, i32
  }
  func.func @transform_3(%arg0: i32) -> (i32, i32) {
    %c0_i32 = arith.constant 0 : i32
    %c0_i32_0 = arith.constant 0 : i32
    %c0_i32_1 = arith.constant 0 : i32
    return %c0_i32, %c0_i32_0 : i32, i32
  }
  func.func @transform_4(%arg0: i32) -> (i32, i32) {
    %c0_i32 = arith.constant 0 : i32
    %c0_i32_0 = arith.constant 0 : i32
    %c0_i32_1 = arith.constant 0 : i32
    return %c0_i32, %c0_i32_0 : i32, i32
  }
  func.func @transform_5(%arg0: i32) -> (i32, i32) {
    %c0_i32 = arith.constant 0 : i32
    %c0_i32_0 = arith.constant 0 : i32
    %c0_i32_1 = arith.constant 0 : i32
    return %c0_i32, %c0_i32_0 : i32, i32
  }
  func.func @transform_6(%arg0: i32) -> (i32, i32) {
    %c0_i32 = arith.constant 0 : i32
    %c0_i32_0 = arith.constant 0 : i32
    %c0_i32_1 = arith.constant 0 : i32
    return %c0_i32, %c0_i32_0 : i32, i32
  }
  func.func @transform_7(%arg0: i32) -> (i32, i32) {
    %c0_i32 = arith.constant 0 : i32
    %c0_i32_0 = arith.constant 0 : i32
    %c0_i32_1 = arith.constant 0 : i32
    return %c0_i32, %c0_i32_0 : i32, i32
  }
  func.func @transform_8(%arg0: i32) -> (i32, i32) {
    %c0_i32 = arith.constant 0 : i32
    %c0_i32_0 = arith.constant 0 : i32
    %c0_i32_1 = arith.constant 0 : i32
    return %c0_i32, %c0_i32_0 : i32, i32
  }
  func.func @transform_9(%arg0: i32) -> (i32, i32, i32) {
    %c0_i32 = arith.constant 0 : i32
    %c0_i32_0 = arith.constant 0 : i32
    %c0_i32_1 = arith.constant 0 : i32
    return %arg0, %c0_i32, %c0_i32_0 : i32, i32, i32
  }
}

</mosaic_0001>

<llo_original>
// kernel: tile.8
$region0: #{tile.8}
  #allocation0 [shape = 's32[1]{0}', space=sflag, size = 0x4, scoped, tag = 'scoped memory for tile.8']
  %s0 = inlined_call_operand.vmem [shape: f32[64], index: 0, kind: input, shape index: {}]
  %s1 = inlined_call_operand.vmem [shape: f32[4,64], index: 1, kind: output, shape index: {}]
  // Predicated region
  $region2: #{tile.8} parent=0 // pred_check
    _
  $region3: #{tile.8} parent=0 // pred_check_branch
    %3 = sbr.rel (0) target = $region5
  $region4: #{tile.8} parent=0 // pred_region
    _
  $region5: #{tile.8} parent=0 // pred_fallthru
    _
  %v4 = vld [vmem:[%s0] ss:$0 sm:$0xff]
  %5 = vst [vmem:[%s1] sm:$0xf] %v4

// kernel: tile.9
$region0: #{tile.9}
  %s0 = inlined_call_operand.vmem [shape: f32[4,64], index: 0, kind: input, shape index: {}]
  %s1 = inlined_call_operand.vmem [shape: f32[1,256], index: 1, kind: output, shape index: {}]
  $region1: #{tile.9} parent=0
    #allocation0 [shape = 'u8[8192]{0}', space=vmem, size = 0x2000, scoped, tag = 'scoped mem for output reshape']
    #allocation1 [shape = 'u8[4096]{0}', space=vmem, size = 0x1000, scoped, tag = 'scoped mem for input reshape']
    %s3 = sshllo.u32 0, 4
    %v4 = vld [vmem:[%s0] sm:%s3]
    %5 = vst [vmem:[#allocation1] sm:%s3] %v4
    %s6 = smov 3
    %v7 = vld [vmem:[#allocation1] ss:$2 sm:%s6]
    %vm8 = vcmask 523264
    %9 = vst.msk [vmem:[#allocation0] ss:$8 sm:$0x3] %vm8, %v7
    %s10 = scalar_lea.vmem [#allocation1], 1
    %s11 = smov 3
    %v12 = vld [vmem:[%s10] ss:$2 sm:%s11]
    %13 = vrot.lane.b32.xlu0 %v12, 64
    %v14 = vpop.permute.xlu0 %13
    %vm15 = vcmask 1048064
    %16 = vst.msk [vmem:[#allocation0] ss:$8 sm:$0x3] %vm15, %v14
    %s18 = sshllo.u32 0, 1
    %v20 = vld [vmem:[#allocation0] sm:%s18]
    %s21 = sshllo.u32 0, 1
    %22 = vst [vmem:[%s1] sm:%s21] %v20
    %s23 = scalar_lea.vmem [#allocation0], 8
    %v24 = vld [vmem:[%s23] sm:%s18]
    %s25 = sshllo.u32 0, 1
    %s26 = scalar_lea.vmem %s1, 1
    %27 = vst [vmem:[%s26] sm:%s25] %v24

// kernel: colorization_net.1
$region0: #{colorization_net.1}
  #allocation0 [shape = 'u32[]', space=smem, size = 0x4, offset = 0x4, fixed_abs, tag = 'smem constant byte address 0x4 - core index']
  #allocation1 [shape = 'u32[144,128]{1,0:T(1,128)}', space=vmem, size = 0x12000, scoped, tag = 'internal scratch']
  #allocation2 [shape = 'f32[18,18,64]{2,1,0:T(8,128)}', space=vmem, size = 0x36000, scoped, tag = 'scratch operand']
  #allocation3 [shape = 'f32[18,18,64]{2,1,0:T(8,128)}', space=vmem, size = 0x36000, scoped, tag = 'scratch operand']
  #allocation4 [shape = 'bf16[256,576]{1,0:T(16,128)(2,1)}', space=vmem, size = 0x50000, scoped, tag = 'scratch operand']
  #allocation5 [shape = 'f32[9,9,128]{2,1,0:T(8,128)}', space=vmem, size = 0x12000, scoped, tag = 'scratch operand']
  #allocation6 [shape = 'f32[4,10,10,64]{3,2,1,0:T(8,128)}', space=vmem, size = 0x50000, scoped, tag = 'scratch operand']
  %s0 = inlined_call_operand.vmem [shape: f32[2,16,16], index: 0, kind: input, shape index: {}]
  %s1 = inlined_call_operand.vmem [shape: f32[9,64], index: 1, kind: input, shape index: {}]
  %s2 = inlined_call_operand.vmem [shape: f32[1,64], index: 2, kind: input, shape index: {}]
  %s3 = inlined_call_operand.vmem [shape: bf16[576,128], index: 3, kind: input, shape index: {}]
  %s4 = inlined_call_operand.vmem [shape: f32[1,128], index: 4, kind: input, shape index: {}]
  %s5 = inlined_call_operand.vmem [shape: bf16[512,256], index: 5, kind: input, shape index: {}]
  %s6 = inlined_call_operand.vmem [shape: f32[1,256], index: 6, kind: input, shape index: {}]
  %s7 = inlined_call_operand.vmem [shape: bf16[2,576], index: 7, kind: input, shape index: {}]
  %s8 = inlined_call_operand.vmem [shape: f32[2,1], index: 8, kind: input, shape index: {}]
  %s9 = inlined_call_operand.vmem [shape: f32[2,2,256], index: 9, kind: output, shape index: {}]
  %s10 = sld [smem:[#allocation0]]
  $region69: #{colorization_net.1} parent=0
    _
  %s12 = ssub.s32 1, %s10
  %s13 = scalar_select 0, %s12, %s10
  loop: start=0, step=1, limit=4
  $region2: #{colorization_net.1} parent=0 // loop_pre_header
    _
  $region3: #{colorization_net.1} parent=0 // loop_header
    %s15 = sphi 0, %s19
    %p16 = scmp.ge.s32.totalorder %s15, 4
    %s25 = sphi 0, %s27
    %s28 = sphi 0, %s25
    %s29 = sphi 0, %s28
    %s45 = sphi 0, %s29
    %s49 = sphi 0, %s49
    %s51 = sphi 0, %s49
    %s52 = sphi 0, %s51
    %s66 = sphi 0, %s52
    %s70 = sphi 0, %s70
    %s72 = sphi 0, %s70
    %s73 = sphi 0, %s72
    %s87 = sphi 0, %s73
    %s91 = sphi 0, %s91
    %s93 = sphi 0, %s91
    %s94 = sphi 0, %s93
    %s108 = sphi 0, %s94
    %s112 = sphi 0, %s112
    %s114 = sphi 0, %s112
    %s115 = sphi 0, %s114
    %s129 = sphi 0, %s115
    %s133 = sphi 0, %s133
    %s135 = sphi 0, %s133
    %s136 = sphi 0, %s135
    %s150 = sphi 0, %s136
    %s154 = sphi 0, %s154
    %s156 = sphi 0, %s154
    %s157 = sphi 0, %s156
    %s171 = sphi 0, %s157
    %s175 = sphi 0, %s175
    %s177 = sphi 0, %s175
    %s178 = sphi 0, %s177
    %s192 = sphi 0, %s178
    %s196 = sphi 0, %s196
    %s198 = sphi 0, %s196
    %s199 = sphi 0, %s198
    %s213 = sphi 0, %s199
    %s219 = sphi 0, %s221
    %s222 = sphi 0, %s219
    %s223 = sphi 0, %s222
    %s239 = sphi 0, %s223
  $region4: #{colorization_net.1} parent=0 // loop_header_branch
    %18 = sbr.rel (%p16) target = $region8
  $region5: #{colorization_net.1} parent=0 // loop_body
    %s20 = ssub.s32 %s15, 1
    %s21 = ssub.s32 %s15, 2
    %s22 = sadd.s32 %s15, 1
    %s23 = ssub.s32 %s15, %s22
    %p24 = scmp.eq.s32.totalorder %s23, 0
    %s26 = sadd.s32 %s25, 1
    %s27 = scalar_select %p24, %s25, %s26
    %p30 = pneg %p24
    %p31 = scmp.eq.s32.totalorder %s15, 1
    %p32 = por %p30, %p31
    %p33 = scmp.ne.s32.totalorder %s25, %s28
    %p34 = scmp.eq.s32.totalorder %s15, 0
    %p35 = por %p33, %p34
    %p36 = scmp.ne.s32.totalorder %s25, %s28
    %p37 = scmp.eq.s32.totalorder %s20, 1
    %p38 = por %p36, %p37
    %p39 = scmp.ne.s32.totalorder %s28, %s29
    %p40 = scmp.eq.s32.totalorder %s20, 0
    %p41 = por %p39, %p40
    %p42 = scmp.ne.s32.totalorder %s28, %s29
    %p43 = scmp.eq.s32.totalorder %s21, 1
    %p44 = por %p42, %p43
    %p46 = scmp.ne.s32.totalorder %s29, %s45
    %p47 = scmp.eq.s32.totalorder %s21, 0
    %p48 = por %p46, %p47
    %s50 = sadd.s32 %s49, 1
    %p53 = scmp.eq.s32.totalorder %s15, 1
    %p54 = scmp.ne.s32.totalorder %s49, %s51
    %p55 = scmp.eq.s32.totalorder %s15, 0
    %p56 = por %p54, %p55
    %p57 = scmp.ne.s32.totalorder %s49, %s51
    %p58 = scmp.eq.s32.totalorder %s20, 1
    %p59 = por %p57, %p58
    %p60 = scmp.ne.s32.totalorder %s51, %s52
    %p61 = scmp.eq.s32.totalorder %s20, 0
    %p62 = por %p60, %p61
    %p63 = scmp.ne.s32.totalorder %s51, %s52
    %p64 = scmp.eq.s32.totalorder %s21, 1
    %p65 = por %p63, %p64
    %p67 = scmp.ne.s32.totalorder %s52, %s66
    %p68 = scmp.eq.s32.totalorder %s21, 0
    %p69 = por %p67, %p68
    %s71 = sadd.s32 %s70, 1
    %p74 = scmp.eq.s32.totalorder %s15, 1
    %p75 = scmp.ne.s32.totalorder %s70, %s72
    %p76 = scmp.eq.s32.totalorder %s15, 0
    %p77 = por %p75, %p76
    %p78 = scmp.ne.s32.totalorder %s70, %s72
    %p79 = scmp.eq.s32.totalorder %s20, 1
    %p80 = por %p78, %p79
    %p81 = scmp.ne.s32.totalorder %s72, %s73
    %p82 = scmp.eq.s32.totalorder %s20, 0
    %p83 = por %p81, %p82
    %p84 = scmp.ne.s32.totalorder %s72, %s73
    %p85 = scmp.eq.s32.totalorder %s21, 1
    %p86 = por %p84, %p85
    %p88 = scmp.ne.s32.totalorder %s73, %s87
    %p89 = scmp.eq.s32.totalorder %s21, 0
    %p90 = por %p88, %p89
    %s92 = sadd.s32 %s91, 1
    %p95 = scmp.eq.s32.totalorder %s15, 1
    %p96 = scmp.ne.s32.totalorder %s91, %s93
    %p97 = scmp.eq.s32.totalorder %s15, 0
    %p98 = por %p96, %p97
    %p99 = scmp.ne.s32.totalorder %s91, %s93
    %p100 = scmp.eq.s32.totalorder %s20, 1
    %p101 = por %p99, %p100
    %p102 = scmp.ne.s32.totalorder %s93, %s94
    %p103 = scmp.eq.s32.totalorder %s20, 0
    %p104 = por %p102, %p103
    %p105 = scmp.ne.s32.totalorder %s93, %s94
    %p106 = scmp.eq.s32.totalorder %s21, 1
    %p107 = por %p105, %p106
    %p109 = scmp.ne.s32.totalorder %s94, %s108
    %p110 = scmp.eq.s32.totalorder %s21, 0
    %p111 = por %p109, %p110
    %s113 = sadd.s32 %s112, 1
    %p116 = scmp.eq.s32.totalorder %s15, 1
    %p117 = scmp.ne.s32.totalorder %s112, %s114
    %p118 = scmp.eq.s32.totalorder %s15, 0
    %p119 = por %p117, %p118
    %p120 = scmp.ne.s32.totalorder %s112, %s114
    %p121 = scmp.eq.s32.totalorder %s20, 1
    %p122 = por %p120, %p121
    %p123 = scmp.ne.s32.totalorder %s114, %s115
    %p124 = scmp.eq.s32.totalorder %s20, 0
    %p125 = por %p123, %p124
    %p126 = scmp.ne.s32.totalorder %s114, %s115
    %p127 = scmp.eq.s32.totalorder %s21, 1
    %p128 = por %p126, %p127
    %p130 = scmp.ne.s32.totalorder %s115, %s129
    %p131 = scmp.eq.s32.totalorder %s21, 0
    %p132 = por %p130, %p131
    %s134 = sadd.s32 %s133, 1
    %p137 = scmp.eq.s32.totalorder %s15, 1
    %p138 = scmp.ne.s32.totalorder %s133, %s135
    %p139 = scmp.eq.s32.totalorder %s15, 0
    %p140 = por %p138, %p139
    %p141 = scmp.ne.s32.totalorder %s133, %s135
    %p142 = scmp.eq.s32.totalorder %s20, 1
    %p143 = por %p141, %p142
    %p144 = scmp.ne.s32.totalorder %s135, %s136
    %p145 = scmp.eq.s32.totalorder %s20, 0
    %p146 = por %p144, %p145
    %p147 = scmp.ne.s32.totalorder %s135, %s136
    %p148 = scmp.eq.s32.totalorder %s21, 1
    %p149 = por %p147, %p148
    %p151 = scmp.ne.s32.totalorder %s136, %s150
    %p152 = scmp.eq.s32.totalorder %s21, 0
    %p153 = por %p151, %p152
    %s155 = sadd.s32 %s154, 1
    %p158 = scmp.eq.s32.totalorder %s15, 1
    %p159 = scmp.ne.s32.totalorder %s154, %s156
    %p160 = scmp.eq.s32.totalorder %s15, 0
    %p161 = por %p159, %p160
    %p162 = scmp.ne.s32.totalorder %s154, %s156
    %p163 = scmp.eq.s32.totalorder %s20, 1
    %p164 = por %p162, %p163
    %p165 = scmp.ne.s32.totalorder %s156, %s157
    %p166 = scmp.eq.s32.totalorder %s20, 0
    %p167 = por %p165, %p166
    %p168 = scmp.ne.s32.totalorder %s156, %s157
    %p169 = scmp.eq.s32.totalorder %s21, 1
    %p170 = por %p168, %p169
    %p172 = scmp.ne.s32.totalorder %s157, %s171
    %p173 = scmp.eq.s32.totalorder %s21, 0
    %p174 = por %p172, %p173
    %s176 = sadd.s32 %s175, 1
    %p179 = scmp.eq.s32.totalorder %s15, 1
    %p180 = scmp.ne.s32.totalorder %s175, %s177
    %p181 = scmp.eq.s32.totalorder %s15, 0
    %p182 = por %p180, %p181
    %p183 = scmp.ne.s32.totalorder %s175, %s177
    %p184 = scmp.eq.s32.totalorder %s20, 1
    %p185 = por %p183, %p184
    %p186 = scmp.ne.s32.totalorder %s177, %s178
    %p187 = scmp.eq.s32.totalorder %s20, 0
    %p188 = por %p186, %p187
    %p189 = scmp.ne.s32.totalorder %s177, %s178
    %p190 = scmp.eq.s32.totalorder %s21, 1
    %p191 = por %p189, %p190
    %p193 = scmp.ne.s32.totalorder %s178, %s192
    %p194 = scmp.eq.s32.totalorder %s21, 0
    %p195 = por %p193, %p194
    %s197 = sadd.s32 %s196, 1
    %p200 = scmp.eq.s32.totalorder %s15, 1
    %p201 = scmp.ne.s32.totalorder %s196, %s198
    %p202 = scmp.eq.s32.totalorder %s15, 0
    %p203 = por %p201, %p202
    %p204 = scmp.ne.s32.totalorder %s196, %s198
    %p205 = scmp.eq.s32.totalorder %s20, 1
    %p206 = por %p204, %p205
    %p207 = scmp.ne.s32.totalorder %s198, %s199
    %p208 = scmp.eq.s32.totalorder %s20, 0
    %p209 = por %p207, %p208
    %p210 = scmp.ne.s32.totalorder %s198, %s199
    %p211 = scmp.eq.s32.totalorder %s21, 1
    %p212 = por %p210, %p211
    %p214 = scmp.ne.s32.totalorder %s199, %s213
    %p215 = scmp.eq.s32.totalorder %s21, 0
    %p216 = por %p214, %p215
    %s217 = ssub.s32 %s15, %s22
    %p218 = scmp.eq.s32.totalorder %s217, 0
    %s220 = sadd.s32 %s219, 1
    %s221 = scalar_select %p218, %s219, %s220
    %p224 = pneg %p218
    %p225 = scmp.eq.s32.totalorder %s15, 1
    %p226 = por %p224, %p225
    %p227 = scmp.ne.s32.totalorder %s219, %s222
    %p228 = scmp.eq.s32.totalorder %s15, 0
    %p229 = por %p227, %p228
    %p230 = scmp.ne.s32.totalorder %s219, %s222
    %p231 = scmp.eq.s32.totalorder %s20, 1
    %p232 = por %p230, %p231
    %p233 = scmp.ne.s32.totalorder %s222, %s223
    %p234 = scmp.eq.s32.totalorder %s20, 0
    %p235 = por %p233, %p234
    %p236 = scmp.ne.s32.totalorder %s222, %s223
    %p237 = scmp.eq.s32.totalorder %s21, 1
    %p238 = por %p236, %p237
    %p240 = scmp.ne.s32.totalorder %s223, %s239
    %p241 = scmp.eq.s32.totalorder %s21, 0
    %p242 = por %p240, %p241
    %p243 = scmp.le.s32.totalorder 1, %s15
    %p244 = scmp.lt.s32.totalorder %s15, 3
    %p245 = pnand %p243, %p244
    %p246 = pneg %p245
    // Predicated region
    $region9: #{colorization_net.1} parent=5 // pred_check
      _
    $region10: #{colorization_net.1} parent=5 // pred_check_branch
      %248 = sbr.rel (%p245) target = $region12
    $region11: #{colorization_net.1} parent=5 // pred_region
      %s249 = ssub.s32 %s15, 1
      // Predicated region
      $region13: #{colorization_net.1} parent=11 // pred_check
        %p250 = pneg %p62
      $region14: #{colorization_net.1} parent=11 // pred_check_branch
        %252 = sbr.rel (%p250) target = $region16
      $region15: #{colorization_net.1} parent=11 // pred_region
        _
      $region16: #{colorization_net.1} parent=11 // pred_fallthru
        _
      // Predicated region
      $region17: #{colorization_net.1} parent=11 // pred_check
        %p253 = pneg %p83
      $region18: #{colorization_net.1} parent=11 // pred_check_branch
        %255 = sbr.rel (%p253) target = $region20
      $region19: #{colorization_net.1} parent=11 // pred_region
        _
      $region20: #{colorization_net.1} parent=11 // pred_fallthru
        _
      // Predicated region
      $region21: #{colorization_net.1} parent=11 // pred_check
        %p256 = pneg %p104
      $region22: #{colorization_net.1} parent=11 // pred_check_branch
        %258 = sbr.rel (%p256) target = $region24
      $region23: #{colorization_net.1} parent=11 // pred_region
        _
      $region24: #{colorization_net.1} parent=11 // pred_fallthru
        _
      // Predicated region
      $region25: #{colorization_net.1} parent=11 // pred_check
        %p259 = pneg %p125
      $region26: #{colorization_net.1} parent=11 // pred_check_branch
        %261 = sbr.rel (%p259) target = $region28
      $region27: #{colorization_net.1} parent=11 // pred_region
        _
      $region28: #{colorization_net.1} parent=11 // pred_fallthru
        _
      // Predicated region
      $region29: #{colorization_net.1} parent=11 // pred_check
        %p262 = pneg %p146
      $region30: #{colorization_net.1} parent=11 // pred_check_branch
        %264 = sbr.rel (%p262) target = $region32
      $region31: #{colorization_net.1} parent=11 // pred_region
        _
      $region32: #{colorization_net.1} parent=11 // pred_fallthru
        _
      // Predicated region
      $region33: #{colorization_net.1} parent=11 // pred_check
        %p265 = pneg %p167
      $region34: #{colorization_net.1} parent=11 // pred_check_branch
        %267 = sbr.rel (%p265) target = $region36
      $region35: #{colorization_net.1} parent=11 // pred_region
        _
      $region36: #{colorization_net.1} parent=11 // pred_fallthru
        _
      // Predicated region
      $region37: #{colorization_net.1} parent=11 // pred_check
        %p268 = pneg %p188
      $region38: #{colorization_net.1} parent=11 // pred_check_branch
        %270 = sbr.rel (%p268) target = $region40
      $region39: #{colorization_net.1} parent=11 // pred_region
        _
      $region40: #{colorization_net.1} parent=11 // pred_fallthru
        _
      // Predicated region
      $region41: #{colorization_net.1} parent=11 // pred_check
        %p271 = pneg %p209
      $region42: #{colorization_net.1} parent=11 // pred_check_branch
        %273 = sbr.rel (%p271) target = $region44
      $region43: #{colorization_net.1} parent=11 // pred_region
        _
      $region44: #{colorization_net.1} parent=11 // pred_fallthru
        _
    $region12: #{colorization_net.1} parent=5 // pred_fallthru
      _
    %p274 = scmp.lt.s32.totalorder %s15, 2
    // Predicated region
    $region45: #{colorization_net.1} parent=5 // pred_check
      %p275 = pneg %p274
    $region46: #{colorization_net.1} parent=5 // pred_check_branch
      %277 = sbr.rel (%p275) target = $region48
    $region47: #{colorization_net.1} parent=5 // pred_region
      // Predicated region
      $region49: #{colorization_net.1} parent=47 // pred_check
        %p278 = pneg %p35
      $region50: #{colorization_net.1} parent=47 // pred_check_branch
        %280 = sbr.rel (%p278) target = $region52
      $region51: #{colorization_net.1} parent=47 // pred_region
        %p281 = scmp.lt.s32.totalorder %s15, 1
        %s282 = scalar_select %p281, %s15, 1
        %s283 = smul.addr %s282, 2
        %s284 = smul.addr %s283, 8
        %s285 = scalar_lea.vmem %s0, %s284
      $region52: #{colorization_net.1} parent=47 // pred_fallthru
        _
    $region48: #{colorization_net.1} parent=5 // pred_fallthru
      _
    %p286 = scmp.le.s32.totalorder 1, %s15
    %p287 = scmp.lt.s32.totalorder %s15, 3
    %p288 = pnand %p286, %p287
    %p289 = pneg %p288
    // Predicated region
    $region53: #{colorization_net.1} parent=5 // pred_check
      _
    $region54: #{colorization_net.1} parent=5 // pred_check_branch
      %291 = sbr.rel (%p288) target = $region56
    $region55: #{colorization_net.1} parent=5 // pred_region
      %s292 = ssub.s32 %s15, 1
      %p293 = scmp.lt.s32.totalorder %s20, 1
      %s294 = scalar_select %p293, %s20, 1
      %s295 = smul.addr %s294, 2
      %s296 = smul.addr %s295, 8
      %s297 = scalar_lea.vmem %s0, %s296
      %p298 = pneg %p41
      %p299 = pneg %p38
      %p300 = pneg %p62
      %p301 = pneg %p59
      %p302 = pneg %p83
      %p303 = pneg %p80
      %p304 = pneg %p104
      %p305 = pneg %p101
      %p306 = pneg %p125
      %p307 = pneg %p122
      %p308 = pneg %p146
      %p309 = pneg %p143
      %p310 = pneg %p167
      %p311 = pneg %p164
      %p312 = pneg %p188
      %p313 = pneg %p185
      %p314 = pneg %p209
      %p315 = pneg %p206
      %p316 = pneg %p235
      %p317 = pneg %p232
      %p318 = scmp.lt.s32.totalorder %s20, 1
      %s319 = scalar_select %p318, %s20, 1
      %s320 = smul.addr %s319, 2
      %s321 = smul.addr %s320, 2
      %s322 = scalar_lea.vmem %s9, %s321
      %p323 = scmp.lt.s32.totalorder %s20, 1
      %s324 = scalar_select %p323, %s20, 1
      %s325 = smul.addr %s324, 2
      %s326 = smul.addr %s325, 8
      %s327 = scalar_lea.vmem %s0, %s326
      %p328 = scmp.lt.s32.totalorder %s20, 1
      %s329 = scalar_select %p328, %s20, 1
      %s330 = smul.addr %s329, 2
      %s331 = smul.addr %s330, 2
      %s332 = scalar_lea.vmem %s9, %s331
      %vm334 = vcmask 523264
      %335 = vst.msk [vmem:[#allocation2] sm:$0xff] %vm334, 0.0
      %336 = vst.msk [vmem:[#allocation2 + $0x8] sm:$0xff] %vm334, 0.0
      %vm337 = vcmask 517120
      %338 = vst.msk [vmem:[#allocation2 + $0x10] sm:$0x3] %vm337, 0.0
      %s339 = scalar_lea.vmem [#allocation2], 408
      %340 = vst.msk [vmem:[%s339] sm:$0xff] %vm334, 0.0
      %341 = vst.msk [vmem:[%s339 + $0x8] sm:$0xff] %vm334, 0.0
      %342 = vst.msk [vmem:[%s339 + $0x10] sm:$0x3] %vm337, 0.0
      %vm343 = vcmask 516096
      %344 = vst.msk [vmem:[#allocation2] sm:$0x1] %vm343, 0.0
      %345 = vst.msk [vmem:[#allocation2 + $0x18] sm:$0x1] %vm343, 0.0
      %346 = vst.msk [vmem:[#allocation2 + $0x30] sm:$0x1] %vm343, 0.0
      %347 = vst.msk [vmem:[#allocation2 + $0x48] sm:$0x1] %vm343, 0.0
      %348 = vst.msk [vmem:[#allocation2 + $0x60] sm:$0x1] %vm343, 0.0
      %349 = vst.msk [vmem:[#allocation2 + $0x78] sm:$0x1] %vm343, 0.0
      %350 = vst.msk [vmem:[#allocation2 + $0x90] sm:$0x1] %vm343, 0.0
      %351 = vst.msk [vmem:[#allocation2 + $0xa8] sm:$0x1] %vm343, 0.0
      %352 = vst.msk [vmem:[#allocation2 + $0xc0] sm:$0x1] %vm343, 0.0
      %353 = vst.msk [vmem:[#allocation2 + $0xd8] sm:$0x1] %vm343, 0.0
      %354 = vst.msk [vmem:[#allocation2 + $0xf0] sm:$0x1] %vm343, 0.0
      %355 = vst.msk [vmem:[#allocation2 + $0x108] sm:$0x1] %vm343, 0.0
      %356 = vst.msk [vmem:[#allocation2 + $0x120] sm:$0x1] %vm343, 0.0
      %357 = vst.msk [vmem:[#allocation2 + $0x138] sm:$0x1] %vm343, 0.0
      %358 = vst.msk [vmem:[#allocation2 + $0x150] sm:$0x1] %vm343, 0.0
      %359 = vst.msk [vmem:[#allocation2 + $0x168] sm:$0x1] %vm343, 0.0
      %360 = vst.msk [vmem:[#allocation2 + $0x180] sm:$0x1] %vm343, 0.0
      %361 = vst.msk [vmem:[#allocation2 + $0x198] sm:$0x1] %vm343, 0.0
      %362 = vst.msk [vmem:[#allocation2 + $0x11] sm:$0x1] %vm343, 0.0
      %363 = vst.msk [vmem:[#allocation2 + $0x29] sm:$0x1] %vm343, 0.0
      %364 = vst.msk [vmem:[#allocation2 + $0x41] sm:$0x1] %vm343, 0.0
      %365 = vst.msk [vmem:[#allocation2 + $0x59] sm:$0x1] %vm343, 0.0
      %366 = vst.msk [vmem:[#allocation2 + $0x71] sm:$0x1] %vm343, 0.0
      %367 = vst.msk [vmem:[#allocation2 + $0x89] sm:$0x1] %vm343, 0.0
      %368 = vst.msk [vmem:[#allocation2 + $0xa1] sm:$0x1] %vm343, 0.0
      %369 = vst.msk [vmem:[#allocation2 + $0xb9] sm:$0x1] %vm343, 0.0
      %370 = vst.msk [vmem:[#allocation2 + $0xd1] sm:$0x1] %vm343, 0.0
      %371 = vst.msk [vmem:[#allocation2 + $0xe9] sm:$0x1] %vm343, 0.0
      %372 = vst.msk [vmem:[#allocation2 + $0x101] sm:$0x1] %vm343, 0.0
      %373 = vst.msk [vmem:[#allocation2 + $0x119] sm:$0x1] %vm343, 0.0
      %374 = vst.msk [vmem:[#allocation2 + $0x131] sm:$0x1] %vm343, 0.0
      %375 = vst.msk [vmem:[#allocation2 + $0x149] sm:$0x1] %vm343, 0.0
      %376 = vst.msk [vmem:[#allocation2 + $0x161] sm:$0x1] %vm343, 0.0
      %377 = vst.msk [vmem:[#allocation2 + $0x179] sm:$0x1] %vm343, 0.0
      %378 = vst.msk [vmem:[#allocation2 + $0x191] sm:$0x1] %vm343, 0.0
      %379 = vst.msk [vmem:[#allocation2 + $0x1a9] sm:$0x1] %vm343, 0.0
      %380 = vst.msk [vmem:[#allocation3] sm:$0xff] %vm334, 0.0
      %381 = vst.msk [vmem:[#allocation3 + $0x8] sm:$0xff] %vm334, 0.0
      %382 = vst.msk [vmem:[#allocation3 + $0x10] sm:$0x3] %vm337, 0.0
      %s383 = scalar_lea.vmem [#allocation3], 408
      %384 = vst.msk [vmem:[%s383] sm:$0xff] %vm334, 0.0
      %385 = vst.msk [vmem:[%s383 + $0x8] sm:$0xff] %vm334, 0.0
      %386 = vst.msk [vmem:[%s383 + $0x10] sm:$0x3] %vm337, 0.0
      %387 = vst.msk [vmem:[#allocation3] sm:$0x1] %vm343, 0.0
      %388 = vst.msk [vmem:[#allocation3 + $0x18] sm:$0x1] %vm343, 0.0
      %389 = vst.msk [vmem:[#allocation3 + $0x30] sm:$0x1] %vm343, 0.0
      %390 = vst.msk [vmem:[#allocation3 + $0x48] sm:$0x1] %vm343, 0.0
      %391 = vst.msk [vmem:[#allocation3 + $0x60] sm:$0x1] %vm343, 0.0
      %392 = vst.msk [vmem:[#allocation3 + $0x78] sm:$0x1] %vm343, 0.0
      %393 = vst.msk [vmem:[#allocation3 + $0x90] sm:$0x1] %vm343, 0.0
      %394 = vst.msk [vmem:[#allocation3 + $0xa8] sm:$0x1] %vm343, 0.0
      %395 = vst.msk [vmem:[#allocation3 + $0xc0] sm:$0x1] %vm343, 0.0
      %396 = vst.msk [vmem:[#allocation3 + $0xd8] sm:$0x1] %vm343, 0.0
      %397 = vst.msk [vmem:[#allocation3 + $0xf0] sm:$0x1] %vm343, 0.0
      %398 = vst.msk [vmem:[#allocation3 + $0x108] sm:$0x1] %vm343, 0.0
      %399 = vst.msk [vmem:[#allocation3 + $0x120] sm:$0x1] %vm343, 0.0
      %400 = vst.msk [vmem:[#allocation3 + $0x138] sm:$0x1] %vm343, 0.0
      %401 = vst.msk [vmem:[#allocation3 + $0x150] sm:$0x1] %vm343, 0.0
      %402 = vst.msk [vmem:[#allocation3 + $0x168] sm:$0x1] %vm343, 0.0
      %403 = vst.msk [vmem:[#allocation3 + $0x180] sm:$0x1] %vm343, 0.0
      %404 = vst.msk [vmem:[#allocation3 + $0x198] sm:$0x1] %vm343, 0.0
      %405 = vst.msk [vmem:[#allocation3 + $0x11] sm:$0x1] %vm343, 0.0
      %406 = vst.msk [vmem:[#allocation3 + $0x29] sm:$0x1] %vm343, 0.0
      %407 = vst.msk [vmem:[#allocation3 + $0x41] sm:$0x1] %vm343, 0.0
      %408 = vst.msk [vmem:[#allocation3 + $0x59] sm:$0x1] %vm343, 0.0
      %409 = vst.msk [vmem:[#allocation3 + $0x71] sm:$0x1] %vm343, 0.0
      %410 = vst.msk [vmem:[#allocation3 + $0x89] sm:$0x1] %vm343, 0.0
      %411 = vst.msk [vmem:[#allocation3 + $0xa1] sm:$0x1] %vm343, 0.0
      %412 = vst.msk [vmem:[#allocation3 + $0xb9] sm:$0x1] %vm343, 0.0
      %413 = vst.msk [vmem:[#allocation3 + $0xd1] sm:$0x1] %vm343, 0.0
      %414 = vst.msk [vmem:[#allocation3 + $0xe9] sm:$0x1] %vm343, 0.0
      %415 = vst.msk [vmem:[#allocation3 + $0x101] sm:$0x1] %vm343, 0.0
      %416 = vst.msk [vmem:[#allocation3 + $0x119] sm:$0x1] %vm343, 0.0
      %417 = vst.msk [vmem:[#allocation3 + $0x131] sm:$0x1] %vm343, 0.0
      %418 = vst.msk [vmem:[#allocation3 + $0x149] sm:$0x1] %vm343, 0.0
      %419 = vst.msk [vmem:[#allocation3 + $0x161] sm:$0x1] %vm343, 0.0
      %420 = vst.msk [vmem:[#allocation3 + $0x179] sm:$0x1] %vm343, 0.0
      %421 = vst.msk [vmem:[#allocation3 + $0x191] sm:$0x1] %vm343, 0.0
      %422 = vst.msk [vmem:[#allocation3 + $0x1a9] sm:$0x1] %vm343, 0.0
      %s423 = scalar_lea.vmem [#allocation5], 128
      %424 = vst [vmem:[%s423] sm:$0xff] 0.0
      %425 = vst [vmem:[%s423 + $0x8] sm:$0x1] 0.0
      %426 = vst [vmem:[#allocation5 + $0x8] sm:$0x1] 0.0
      %427 = vst [vmem:[#allocation5 + $0x18] sm:$0x1] 0.0
      %428 = vst [vmem:[#allocation5 + $0x28] sm:$0x1] 0.0
      %429 = vst [vmem:[#allocation5 + $0x38] sm:$0x1] 0.0
      %430 = vst [vmem:[#allocation5 + $0x48] sm:$0x1] 0.0
      %431 = vst [vmem:[#allocation5 + $0x58] sm:$0x1] 0.0
      %432 = vst [vmem:[#allocation5 + $0x68] sm:$0x1] 0.0
      %433 = vst [vmem:[#allocation5 + $0x78] sm:$0x1] 0.0
      %434 = vst [vmem:[#allocation5 + $0x88] sm:$0x1] 0.0
      %435 = vst.msk [vmem:[#allocation6] sm:$0xff] %vm334, 0.0
      %436 = vst.msk [vmem:[#allocation6 + $0x8] sm:$0x3] %vm337, 0.0
      %437 = vst.msk [vmem:[#allocation6 + $0xa0] sm:$0xff] %vm334, 0.0
      %438 = vst.msk [vmem:[#allocation6 + $0xa8] sm:$0x3] %vm337, 0.0
      %439 = vst.msk [vmem:[#allocation6 + $0x140] sm:$0xff] %vm334, 0.0
      %440 = vst.msk [vmem:[#allocation6 + $0x148] sm:$0x3] %vm337, 0.0
      %441 = vst.msk [vmem:[#allocation6 + $0x1e0] sm:$0xff] %vm334, 0.0
      %442 = vst.msk [vmem:[#allocation6 + $0x1e8] sm:$0x3] %vm337, 0.0
      %s443 = scalar_lea.vmem [#allocation6], 144
      %444 = vst.msk [vmem:[%s443] sm:$0xff] %vm334, 0.0
      %445 = vst.msk [vmem:[%s443 + $0x8] sm:$0x3] %vm337, 0.0
      %446 = vst.msk [vmem:[%s443 + $0xa0] sm:$0xff] %vm334, 0.0
      %447 = vst.msk [vmem:[%s443 + $0xa8] sm:$0x3] %vm337, 0.0
      %448 = vst.msk [vmem:[%s443 + $0x140] sm:$0xff] %vm334, 0.0
      %449 = vst.msk [vmem:[%s443 + $0x148] sm:$0x3] %vm337, 0.0
      %450 = vst.msk [vmem:[%s443 + $0x1e0] sm:$0xff] %vm334, 0.0
      %451 = vst.msk [vmem:[%s443 + $0x1e8] sm:$0x3] %vm337, 0.0
      %452 = vst.msk [vmem:[#allocation6] sm:$0x1] %vm343, 0.0
      %453 = vst.msk [vmem:[#allocation6 + $0x10] sm:$0x1] %vm343, 0.0
      %454 = vst.msk [vmem:[#allocation6 + $0x20] sm:$0x1] %vm343, 0.0
      %455 = vst.msk [vmem:[#allocation6 + $0x30] sm:$0x1] %vm343, 0.0
      %456 = vst.msk [vmem:[#allocation6 + $0x40] sm:$0x1] %vm343, 0.0
      %457 = vst.msk [vmem:[#allocation6 + $0x50] sm:$0x1] %vm343, 0.0
      %458 = vst.msk [vmem:[#allocation6 + $0x60] sm:$0x1] %vm343, 0.0
      %459 = vst.msk [vmem:[#allocation6 + $0x70] sm:$0x1] %vm343, 0.0
      %460 = vst.msk [vmem:[#allocation6 + $0x80] sm:$0x1] %vm343, 0.0
      %461 = vst.msk [vmem:[#allocation6 + $0x90] sm:$0x1] %vm343, 0.0
      %462 = vst.msk [vmem:[#allocation6 + $0xa0] sm:$0x1] %vm343, 0.0
      %463 = vst.msk [vmem:[#allocation6 + $0xb0] sm:$0x1] %vm343, 0.0
      %464 = vst.msk [vmem:[#allocation6 + $0xc0] sm:$0x1] %vm343, 0.0
      %465 = vst.msk [vmem:[#allocation6 + $0xd0] sm:$0x1] %vm343, 0.0
      %466 = vst.msk [vmem:[#allocation6 + $0xe0] sm:$0x1] %vm343, 0.0
      %467 = vst.msk [vmem:[#allocation6 + $0xf0] sm:$0x1] %vm343, 0.0
      %468 = vst.msk [vmem:[#allocation6 + $0x100] sm:$0x1] %vm343, 0.0
      %469 = vst.msk [vmem:[#allocation6 + $0x110] sm:$0x1] %vm343, 0.0
      %470 = vst.msk [vmem:[#allocation6 + $0x120] sm:$0x1] %vm343, 0.0
      %471 = vst.msk [vmem:[#allocation6 + $0x130] sm:$0x1] %vm343, 0.0
      %472 = vst.msk [vmem:[#allocation6 + $0x140] sm:$0x1] %vm343, 0.0
      %473 = vst.msk [vmem:[#allocation6 + $0x150] sm:$0x1] %vm343, 0.0
      %474 = vst.msk [vmem:[#allocation6 + $0x160] sm:$0x1] %vm343, 0.0
      %475 = vst.msk [vmem:[#allocation6 + $0x170] sm:$0x1] %vm343, 0.0
      %476 = vst.msk [vmem:[#allocation6 + $0x180] sm:$0x1] %vm343, 0.0
      %477 = vst.msk [vmem:[#allocation6 + $0x190] sm:$0x1] %vm343, 0.0
      %478 = vst.msk [vmem:[#allocation6 + $0x1a0] sm:$0x1] %vm343, 0.0
      %479 = vst.msk [vmem:[#allocation6 + $0x1b0] sm:$0x1] %vm343, 0.0
      %480 = vst.msk [vmem:[#allocation6 + $0x1c0] sm:$0x1] %vm343, 0.0
      %481 = vst.msk [vmem:[#allocation6 + $0x1d0] sm:$0x1] %vm343, 0.0
      %482 = vst.msk [vmem:[#allocation6 + $0x1e0] sm:$0x1] %vm343, 0.0
      %483 = vst.msk [vmem:[#allocation6 + $0x1f0] sm:$0x1] %vm343, 0.0
      %484 = vst.msk [vmem:[#allocation6 + $0x200] sm:$0x1] %vm343, 0.0
      %485 = vst.msk [vmem:[#allocation6 + $0x210] sm:$0x1] %vm343, 0.0
      %486 = vst.msk [vmem:[#allocation6 + $0x220] sm:$0x1] %vm343, 0.0
      %487 = vst.msk [vmem:[#allocation6 + $0x230] sm:$0x1] %vm343, 0.0
      %488 = vst.msk [vmem:[#allocation6 + $0x240] sm:$0x1] %vm343, 0.0
      %489 = vst.msk [vmem:[#allocation6 + $0x250] sm:$0x1] %vm343, 0.0
      %490 = vst.msk [vmem:[#allocation6 + $0x260] sm:$0x1] %vm343, 0.0
      %491 = vst.msk [vmem:[#allocation6 + $0x270] sm:$0x1] %vm343, 0.0
      %492 = vst.msk [vmem:[#allocation6 + $0x9] sm:$0x1] %vm343, 0.0
      %493 = vst.msk [vmem:[#allocation6 + $0x19] sm:$0x1] %vm343, 0.0
      %494 = vst.msk [vmem:[#allocation6 + $0x29] sm:$0x1] %vm343, 0.0
      %495 = vst.msk [vmem:[#allocation6 + $0x39] sm:$0x1] %vm343, 0.0
      %496 = vst.msk [vmem:[#allocation6 + $0x49] sm:$0x1] %vm343, 0.0
      %497 = vst.msk [vmem:[#allocation6 + $0x59] sm:$0x1] %vm343, 0.0
      %498 = vst.msk [vmem:[#allocation6 + $0x69] sm:$0x1] %vm343, 0.0
      %499 = vst.msk [vmem:[#allocation6 + $0x79] sm:$0x1] %vm343, 0.0
      %500 = vst.msk [vmem:[#allocation6 + $0x89] sm:$0x1] %vm343, 0.0
      %501 = vst.msk [vmem:[#allocation6 + $0x99] sm:$0x1] %vm343, 0.0
      %502 = vst.msk [vmem:[#allocation6 + $0xa9] sm:$0x1] %vm343, 0.0
      %503 = vst.msk [vmem:[#allocation6 + $0xb9] sm:$0x1] %vm343, 0.0
      %504 = vst.msk [vmem:[#allocation6 + $0xc9] sm:$0x1] %vm343, 0.0
      %505 = vst.msk [vmem:[#allocation6 + $0xd9] sm:$0x1] %vm343, 0.0
      %506 = vst.msk [vmem:[#allocation6 + $0xe9] sm:$0x1] %vm343, 0.0
      %507 = vst.msk [vmem:[#allocation6 + $0xf9] sm:$0x1] %vm343, 0.0
      %508 = vst.msk [vmem:[#allocation6 + $0x109] sm:$0x1] %vm343, 0.0
      %509 = vst.msk [vmem:[#allocation6 + $0x119] sm:$0x1] %vm343, 0.0
      %510 = vst.msk [vmem:[#allocation6 + $0x129] sm:$0x1] %vm343, 0.0
      %511 = vst.msk [vmem:[#allocation6 + $0x139] sm:$0x1] %vm343, 0.0
      %512 = vst.msk [vmem:[#allocation6 + $0x149] sm:$0x1] %vm343, 0.0
      %513 = vst.msk [vmem:[#allocation6 + $0x159] sm:$0x1] %vm343, 0.0
      %514 = vst.msk [vmem:[#allocation6 + $0x169] sm:$0x1] %vm343, 0.0
      %515 = vst.msk [vmem:[#allocation6 + $0x179] sm:$0x1] %vm343, 0.0
      %516 = vst.msk [vmem:[#allocation6 + $0x189] sm:$0x1] %vm343, 0.0
      %517 = vst.msk [vmem:[#allocation6 + $0x199] sm:$0x1] %vm343, 0.0
      %518 = vst.msk [vmem:[#allocation6 + $0x1a9] sm:$0x1] %vm343, 0.0
      %519 = vst.msk [vmem:[#allocation6 + $0x1b9] sm:$0x1] %vm343, 0.0
      %520 = vst.msk [vmem:[#allocation6 + $0x1c9] sm:$0x1] %vm343, 0.0
      %521 = vst.msk [vmem:[#allocation6 + $0x1d9] sm:$0x1] %vm343, 0.0
      %522 = vst.msk [vmem:[#allocation6 + $0x1e9] sm:$0x1] %vm343, 0.0
      %523 = vst.msk [vmem:[#allocation6 + $0x1f9] sm:$0x1] %vm343, 0.0
      %524 = vst.msk [vmem:[#allocation6 + $0x209] sm:$0x1] %vm343, 0.0
      %525 = vst.msk [vmem:[#allocation6 + $0x219] sm:$0x1] %vm343, 0.0
      %526 = vst.msk [vmem:[#allocation6 + $0x229] sm:$0x1] %vm343, 0.0
      %527 = vst.msk [vmem:[#allocation6 + $0x239] sm:$0x1] %vm343, 0.0
      %528 = vst.msk [vmem:[#allocation6 + $0x249] sm:$0x1] %vm343, 0.0
      %529 = vst.msk [vmem:[#allocation6 + $0x259] sm:$0x1] %vm343, 0.0
      %530 = vst.msk [vmem:[#allocation6 + $0x269] sm:$0x1] %vm343, 0.0
      %531 = vst.msk [vmem:[#allocation6 + $0x279] sm:$0x1] %vm343, 0.0
      %v532 = vld [vmem:[%s327] sm:$0xff]
      %v533 = vld [vmem:[%s327 + $0x8] sm:$0xff]
      %v534 = vlaneseq
      %v535 = vshrl.u32 %v534, 7
      %v536 = vsub.s32 0, %v535
      %v537 = vrot.slane %v532, %v536
      %539 = vbcast.lane.b32.xlu0 %v537, 256
      %v540 = vpop.permute.xlu0 %539
      %s542 = sor.u32 256, 8
      %543 = vbcast.lane.b32.xlu0 %v537, %s542
      %v544 = vpop.permute.xlu0 %543
      %v545 = vlaneseq
      %v546 = vshrl.u32 %v545, 7
      %v547 = vsub.s32 1, %v546
      %v548 = vrot.slane %v532, %v547
      %550 = vbcast.lane.b32.xlu0 %v548, 256
      %v551 = vpop.permute.xlu0 %550
      %s553 = sor.u32 256, 8
      %554 = vbcast.lane.b32.xlu0 %v548, %s553
      %v555 = vpop.permute.xlu0 %554
      %v556 = vlaneseq
      %v557 = vshrl.u32 %v556, 7
      %v558 = vsub.s32 2, %v557
      %v559 = vrot.slane %v532, %v558
      %561 = vbcast.lane.b32.xlu0 %v559, 256
      %v562 = vpop.permute.xlu0 %561
      %s564 = sor.u32 256, 8
      %565 = vbcast.lane.b32.xlu0 %v559, %s564
      %v566 = vpop.permute.xlu0 %565
      %v567 = vlaneseq
      %v568 = vshrl.u32 %v567, 7
      %v569 = vsub.s32 3, %v568
      %v570 = vrot.slane %v532, %v569
      %572 = vbcast.lane.b32.xlu0 %v570, 256
      %v573 = vpop.permute.xlu0 %572
      %s575 = sor.u32 256, 8
      %576 = vbcast.lane.b32.xlu0 %v570, %s575
      %v577 = vpop.permute.xlu0 %576
      %v578 = vlaneseq
      %v579 = vshrl.u32 %v578, 7
      %v580 = vsub.s32 4, %v579
      %v581 = vrot.slane %v532, %v580
      %583 = vbcast.lane.b32.xlu0 %v581, 256
      %v584 = vpop.permute.xlu0 %583
      %s586 = sor.u32 256, 8
      %587 = vbcast.lane.b32.xlu0 %v581, %s586
      %v588 = vpop.permute.xlu0 %587
      %v589 = vlaneseq
      %v590 = vshrl.u32 %v589, 7
      %v591 = vsub.s32 5, %v590
      %v592 = vrot.slane %v532, %v591
      %594 = vbcast.lane.b32.xlu0 %v592, 256
      %v595 = vpop.permute.xlu0 %594
      %s597 = sor.u32 256, 8
      %598 = vbcast.lane.b32.xlu0 %v592, %s597
      %v599 = vpop.permute.xlu0 %598
      %v600 = vlaneseq
      %v601 = vshrl.u32 %v600, 7
      %v602 = vsub.s32 6, %v601
      %v603 = vrot.slane %v532, %v602
      %605 = vbcast.lane.b32.xlu0 %v603, 256
      %v606 = vpop.permute.xlu0 %605
      %s608 = sor.u32 256, 8
      %609 = vbcast.lane.b32.xlu0 %v603, %s608
      %v610 = vpop.permute.xlu0 %609
      %v611 = vlaneseq
      %v612 = vshrl.u32 %v611, 7
      %v613 = vsub.s32 7, %v612
      %v614 = vrot.slane %v532, %v613
      %616 = vbcast.lane.b32.xlu0 %v614, 256
      %v617 = vpop.permute.xlu0 %616
      %s619 = sor.u32 256, 8
      %620 = vbcast.lane.b32.xlu0 %v614, %s619
      %v621 = vpop.permute.xlu0 %620
      %v622 = vlaneseq
      %v623 = vshrl.u32 %v622, 7
      %v624 = vsub.s32 0, %v623
      %v625 = vrot.slane %v533, %v624
      %627 = vbcast.lane.b32.xlu0 %v625, 256
      %v628 = vpop.permute.xlu0 %627
      %s630 = sor.u32 256, 8
      %631 = vbcast.lane.b32.xlu0 %v625, %s630
      %v632 = vpop.permute.xlu0 %631
      %v633 = vlaneseq
      %v634 = vshrl.u32 %v633, 7
      %v635 = vsub.s32 1, %v634
      %v636 = vrot.slane %v533, %v635
      %638 = vbcast.lane.b32.xlu0 %v636, 256
      %v639 = vpop.permute.xlu0 %638
      %s641 = sor.u32 256, 8
      %642 = vbcast.lane.b32.xlu0 %v636, %s641
      %v643 = vpop.permute.xlu0 %642
      %v644 = vlaneseq
      %v645 = vshrl.u32 %v644, 7
      %v646 = vsub.s32 2, %v645
      %v647 = vrot.slane %v533, %v646
      %649 = vbcast.lane.b32.xlu0 %v647, 256
      %v650 = vpop.permute.xlu0 %649
      %s652 = sor.u32 256, 8
      %653 = vbcast.lane.b32.xlu0 %v647, %s652
      %v654 = vpop.permute.xlu0 %653
      %v655 = vlaneseq
      %v656 = vshrl.u32 %v655, 7
      %v657 = vsub.s32 3, %v656
      %v658 = vrot.slane %v533, %v657
      %660 = vbcast.lane.b32.xlu0 %v658, 256
      %v661 = vpop.permute.xlu0 %660
      %s663 = sor.u32 256, 8
      %664 = vbcast.lane.b32.xlu0 %v658, %s663
      %v665 = vpop.permute.xlu0 %664
      %v666 = vlaneseq
      %v667 = vshrl.u32 %v666, 7
      %v668 = vsub.s32 4, %v667
      %v669 = vrot.slane %v533, %v668
      %671 = vbcast.lane.b32.xlu0 %v669, 256
      %v672 = vpop.permute.xlu0 %671
      %s674 = sor.u32 256, 8
      %675 = vbcast.lane.b32.xlu0 %v669, %s674
      %v676 = vpop.permute.xlu0 %675
      %v677 = vlaneseq
      %v678 = vshrl.u32 %v677, 7
      %v679 = vsub.s32 5, %v678
      %v680 = vrot.slane %v533, %v679
      %682 = vbcast.lane.b32.xlu0 %v680, 256
      %v683 = vpop.permute.xlu0 %682
      %s685 = sor.u32 256, 8
      %686 = vbcast.lane.b32.xlu0 %v680, %s685
      %v687 = vpop.permute.xlu0 %686
      %v688 = vlaneseq
      %v689 = vshrl.u32 %v688, 7
      %v690 = vsub.s32 6, %v689
      %v691 = vrot.slane %v533, %v690
      %693 = vbcast.lane.b32.xlu0 %v691, 256
      %v694 = vpop.permute.xlu0 %693
      %s696 = sor.u32 256, 8
      %697 = vbcast.lane.b32.xlu0 %v691, %s696
      %v698 = vpop.permute.xlu0 %697
      %v699 = vlaneseq
      %v700 = vshrl.u32 %v699, 7
      %v701 = vsub.s32 7, %v700
      %v702 = vrot.slane %v533, %v701
      %704 = vbcast.lane.b32.xlu0 %v702, 256
      %v705 = vpop.permute.xlu0 %704
      %s707 = sor.u32 256, 8
      %708 = vbcast.lane.b32.xlu0 %v702, %s707
      %v709 = vpop.permute.xlu0 %708
      %s710 = scalar_lea.vmem [#allocation2], 24
      %711 = vst.msk [vmem:[%s710 + $0x1] sm:$0xff] %vm334, %v540
      %712 = vst.msk [vmem:[%s710 + $0x9] sm:$0xff] %vm334, %v544
      %713 = vst.msk [vmem:[%s710 + $0x19] sm:$0xff] %vm334, %v551
      %714 = vst.msk [vmem:[%s710 + $0x21] sm:$0xff] %vm334, %v555
      %715 = vst.msk [vmem:[%s710 + $0x31] sm:$0xff] %vm334, %v562
      %716 = vst.msk [vmem:[%s710 + $0x39] sm:$0xff] %vm334, %v566
      %717 = vst.msk [vmem:[%s710 + $0x49] sm:$0xff] %vm334, %v573
      %718 = vst.msk [vmem:[%s710 + $0x51] sm:$0xff] %vm334, %v577
      %719 = vst.msk [vmem:[%s710 + $0x61] sm:$0xff] %vm334, %v584
      %720 = vst.msk [vmem:[%s710 + $0x69] sm:$0xff] %vm334, %v588
      %721 = vst.msk [vmem:[%s710 + $0x79] sm:$0xff] %vm334, %v595
      %722 = vst.msk [vmem:[%s710 + $0x81] sm:$0xff] %vm334, %v599
      %723 = vst.msk [vmem:[%s710 + $0x91] sm:$0xff] %vm334, %v606
      %724 = vst.msk [vmem:[%s710 + $0x99] sm:$0xff] %vm334, %v610
      %725 = vst.msk [vmem:[%s710 + $0xa9] sm:$0xff] %vm334, %v617
      %726 = vst.msk [vmem:[%s710 + $0xb1] sm:$0xff] %vm334, %v621
      %727 = vst.msk [vmem:[%s710 + $0xc1] sm:$0xff] %vm334, %v628
      %728 = vst.msk [vmem:[%s710 + $0xc9] sm:$0xff] %vm334, %v632
      %729 = vst.msk [vmem:[%s710 + $0xd9] sm:$0xff] %vm334, %v639
      %730 = vst.msk [vmem:[%s710 + $0xe1] sm:$0xff] %vm334, %v643
      %731 = vst.msk [vmem:[%s710 + $0xf1] sm:$0xff] %vm334, %v650
      %732 = vst.msk [vmem:[%s710 + $0xf9] sm:$0xff] %vm334, %v654
      %733 = vst.msk [vmem:[%s710 + $0x109] sm:$0xff] %vm334, %v661
      %734 = vst.msk [vmem:[%s710 + $0x111] sm:$0xff] %vm334, %v665
      %735 = vst.msk [vmem:[%s710 + $0x121] sm:$0xff] %vm334, %v672
      %736 = vst.msk [vmem:[%s710 + $0x129] sm:$0xff] %vm334, %v676
      %737 = vst.msk [vmem:[%s710 + $0x139] sm:$0xff] %vm334, %v683
      %738 = vst.msk [vmem:[%s710 + $0x141] sm:$0xff] %vm334, %v687
      %739 = vst.msk [vmem:[%s710 + $0x151] sm:$0xff] %vm334, %v694
      %740 = vst.msk [vmem:[%s710 + $0x159] sm:$0xff] %vm334, %v698
      %741 = vst.msk [vmem:[%s710 + $0x169] sm:$0xff] %vm334, %v705
      %742 = vst.msk [vmem:[%s710 + $0x171] sm:$0xff] %vm334, %v709
      %v743 = vld [vmem:[%s2] sm:$0x1]
      %v745 = vlaneseq
      %v746 = vshrl.u32 %v745, 7
      %v747 = vsub.s32 0, %v746
      %v748 = vrot.slane %v743, %v747
      %s750 = scalar_lea.vmem [#allocation3], 24
      %751 = vst.msk [vmem:[%s750 + $0x1] sm:$0xff] %vm334, %v748
      %752 = vst.msk [vmem:[%s750 + $0x9] sm:$0xff] %vm334, %v748
      %753 = vst.msk [vmem:[%s750 + $0x19] sm:$0xff] %vm334, %v748
      %754 = vst.msk [vmem:[%s750 + $0x21] sm:$0xff] %vm334, %v748
      %755 = vst.msk [vmem:[%s750 + $0x31] sm:$0xff] %vm334, %v748
      %756 = vst.msk [vmem:[%s750 + $0x39] sm:$0xff] %vm334, %v748
      %757 = vst.msk [vmem:[%s750 + $0x49] sm:$0xff] %vm334, %v748
      %758 = vst.msk [vmem:[%s750 + $0x51] sm:$0xff] %vm334, %v748
      %759 = vst.msk [vmem:[%s750 + $0x61] sm:$0xff] %vm334, %v748
      %760 = vst.msk [vmem:[%s750 + $0x69] sm:$0xff] %vm334, %v748
      %761 = vst.msk [vmem:[%s750 + $0x79] sm:$0xff] %vm334, %v748
      %762 = vst.msk [vmem:[%s750 + $0x81] sm:$0xff] %vm334, %v748
      %763 = vst.msk [vmem:[%s750 + $0x91] sm:$0xff] %vm334, %v748
      %764 = vst.msk [vmem:[%s750 + $0x99] sm:$0xff] %vm334, %v748
      %765 = vst.msk [vmem:[%s750 + $0xa9] sm:$0xff] %vm334, %v748
      %766 = vst.msk [vmem:[%s750 + $0xb1] sm:$0xff] %vm334, %v748
      %767 = vst.msk [vmem:[%s750 + $0xc1] sm:$0xff] %vm334, %v748
      %768 = vst.msk [vmem:[%s750 + $0xc9] sm:$0xff] %vm334, %v748
      %769 = vst.msk [vmem:[%s750 + $0xd9] sm:$0xff] %vm334, %v748
      %770 = vst.msk [vmem:[%s750 + $0xe1] sm:$0xff] %vm334, %v748
      %771 = vst.msk [vmem:[%s750 + $0xf1] sm:$0xff] %vm334, %v748
      %772 = vst.msk [vmem:[%s750 + $0xf9] sm:$0xff] %vm334, %v748
      %773 = vst.msk [vmem:[%s750 + $0x109] sm:$0xff] %vm334, %v748
      %774 = vst.msk [vmem:[%s750 + $0x111] sm:$0xff] %vm334, %v748
      %775 = vst.msk [vmem:[%s750 + $0x121] sm:$0xff] %vm334, %v748
      %776 = vst.msk [vmem:[%s750 + $0x129] sm:$0xff] %vm334, %v748
      %777 = vst.msk [vmem:[%s750 + $0x139] sm:$0xff] %vm334, %v748
      %778 = vst.msk [vmem:[%s750 + $0x141] sm:$0xff] %vm334, %v748
      %779 = vst.msk [vmem:[%s750 + $0x151] sm:$0xff] %vm334, %v748
      %780 = vst.msk [vmem:[%s750 + $0x159] sm:$0xff] %vm334, %v748
      %781 = vst.msk [vmem:[%s750 + $0x169] sm:$0xff] %vm334, %v748
      %782 = vst.msk [vmem:[%s750 + $0x171] sm:$0xff] %vm334, %v748
      %v783 = vld [vmem:[%s750 + $0x1] sm:$0xff]
      %v784 = vld [vmem:[%s750 + $0x9] sm:$0xff]
      %v785 = vld [vmem:[%s750 + $0x19] sm:$0xff]
      %v786 = vld [vmem:[%s750 + $0x21] sm:$0xff]
      %v787 = vld [vmem:[%s750 + $0x31] sm:$0xff]
      %v788 = vld [vmem:[%s750 + $0x39] sm:$0xff]
      %v789 = vld [vmem:[%s750 + $0x49] sm:$0xff]
      %v790 = vld [vmem:[%s750 + $0x51] sm:$0xff]
      %v791 = vld [vmem:[%s750 + $0x61] sm:$0xff]
      %v792 = vld [vmem:[%s750 + $0x69] sm:$0xff]
      %v793 = vld [vmem:[%s750 + $0x79] sm:$0xff]
      %v794 = vld [vmem:[%s750 + $0x81] sm:$0xff]
      %v795 = vld [vmem:[%s750 + $0x91] sm:$0xff]
      %v796 = vld [vmem:[%s750 + $0x99] sm:$0xff]
      %v797 = vld [vmem:[%s750 + $0xa9] sm:$0xff]
      %v798 = vld [vmem:[%s750 + $0xb1] sm:$0xff]
      %v799 = vld [vmem:[%s750 + $0xc1] sm:$0xff]
      %v800 = vld [vmem:[%s750 + $0xc9] sm:$0xff]
      %v801 = vld [vmem:[%s750 + $0xd9] sm:$0xff]
      %v802 = vld [vmem:[%s750 + $0xe1] sm:$0xff]
      %v803 = vld [vmem:[%s750 + $0xf1] sm:$0xff]
      %v804 = vld [vmem:[%s750 + $0xf9] sm:$0xff]
      %v805 = vld [vmem:[%s750 + $0x109] sm:$0xff]
      %v806 = vld [vmem:[%s750 + $0x111] sm:$0xff]
      %v807 = vld [vmem:[%s750 + $0x121] sm:$0xff]
      %v808 = vld [vmem:[%s750 + $0x129] sm:$0xff]
      %v809 = vld [vmem:[%s750 + $0x139] sm:$0xff]
      %v810 = vld [vmem:[%s750 + $0x141] sm:$0xff]
      %v811 = vld [vmem:[%s750 + $0x151] sm:$0xff]
      %v812 = vld [vmem:[%s750 + $0x159] sm:$0xff]
      %v813 = vld [vmem:[%s750 + $0x169] sm:$0xff]
      %v814 = vld [vmem:[%s750 + $0x171] sm:$0xff]
      %v815 = vld [vmem:[#allocation2] sm:$0xff]
      %v816 = vld [vmem:[#allocation2 + $0x8] sm:$0xff]
      %v817 = vld [vmem:[#allocation2 + $0x18] sm:$0xff]
      %v818 = vld [vmem:[#allocation2 + $0x20] sm:$0xff]
      %v819 = vld [vmem:[#allocation2 + $0x30] sm:$0xff]
      %v820 = vld [vmem:[#allocation2 + $0x38] sm:$0xff]
      %v821 = vld [vmem:[#allocation2 + $0x48] sm:$0xff]
      %v822 = vld [vmem:[#allocation2 + $0x50] sm:$0xff]
      %v823 = vld [vmem:[#allocation2 + $0x60] sm:$0xff]
      %v824 = vld [vmem:[#allocation2 + $0x68] sm:$0xff]
      %v825 = vld [vmem:[#allocation2 + $0x78] sm:$0xff]
      %v826 = vld [vmem:[#allocation2 + $0x80] sm:$0xff]
      %v827 = vld [vmem:[#allocation2 + $0x90] sm:$0xff]
      %v828 = vld [vmem:[#allocation2 + $0x98] sm:$0xff]
      %v829 = vld [vmem:[#allocation2 + $0xa8] sm:$0xff]
      %v830 = vld [vmem:[#allocation2 + $0xb0] sm:$0xff]
      %v831 = vld [vmem:[#allocation2 + $0xc0] sm:$0xff]
      %v832 = vld [vmem:[#allocation2 + $0xc8] sm:$0xff]
      %v833 = vld [vmem:[#allocation2 + $0xd8] sm:$0xff]
      %v834 = vld [vmem:[#allocation2 + $0xe0] sm:$0xff]
      %v835 = vld [vmem:[#allocation2 + $0xf0] sm:$0xff]
      %v836 = vld [vmem:[#allocation2 + $0xf8] sm:$0xff]
      %v837 = vld [vmem:[#allocation2 + $0x108] sm:$0xff]
      %v838 = vld [vmem:[#allocation2 + $0x110] sm:$0xff]
      %v839 = vld [vmem:[#allocation2 + $0x120] sm:$0xff]
      %v840 = vld [vmem:[#allocation2 + $0x128] sm:$0xff]
      %v841 = vld [vmem:[#allocation2 + $0x138] sm:$0xff]
      %v842 = vld [vmem:[#allocation2 + $0x140] sm:$0xff]
      %v843 = vld [vmem:[#allocation2 + $0x150] sm:$0xff]
      %v844 = vld [vmem:[#allocation2 + $0x158] sm:$0xff]
      %v845 = vld [vmem:[#allocation2 + $0x168] sm:$0xff]
      %v846 = vld [vmem:[#allocation2 + $0x170] sm:$0xff]
      %v847 = vld [vmem:[%s1] sm:$0x1]
      %v848 = vlaneseq
      %v849 = vshrl.u32 %v848, 7
      %v850 = vsub.s32 0, %v849
      %v851 = vrot.slane %v847, %v850
      %v852 = vmul.f32 %v815, %v851
      %v853 = vmul.f32 %v816, %v851
      %v854 = vmul.f32 %v817, %v851
      %v855 = vmul.f32 %v818, %v851
      %v856 = vmul.f32 %v819, %v851
      %v857 = vmul.f32 %v820, %v851
      %v858 = vmul.f32 %v821, %v851
      %v859 = vmul.f32 %v822, %v851
      %v860 = vmul.f32 %v823, %v851
      %v861 = vmul.f32 %v824, %v851
      %v862 = vmul.f32 %v825, %v851
      %v863 = vmul.f32 %v826, %v851
      %v864 = vmul.f32 %v827, %v851
      %v865 = vmul.f32 %v828, %v851
      %v866 = vmul.f32 %v829, %v851
      %v867 = vmul.f32 %v830, %v851
      %v868 = vmul.f32 %v831, %v851
      %v869 = vmul.f32 %v832, %v851
      %v870 = vmul.f32 %v833, %v851
      %v871 = vmul.f32 %v834, %v851
      %v872 = vmul.f32 %v835, %v851
      %v873 = vmul.f32 %v836, %v851
      %v874 = vmul.f32 %v837, %v851
      %v875 = vmul.f32 %v838, %v851
      %v876 = vmul.f32 %v839, %v851
      %v877 = vmul.f32 %v840, %v851
      %v878 = vmul.f32 %v841, %v851
      %v879 = vmul.f32 %v842, %v851
      %v880 = vmul.f32 %v843, %v851
      %v881 = vmul.f32 %v844, %v851
      %v882 = vmul.f32 %v845, %v851
      %v883 = vmul.f32 %v846, %v851
      %v884 = vadd.f32 %v783, %v852
      %v885 = vadd.f32 %v784, %v853
      %v886 = vadd.f32 %v785, %v854
      %v887 = vadd.f32 %v786, %v855
      %v888 = vadd.f32 %v787, %v856
      %v889 = vadd.f32 %v788, %v857
      %v890 = vadd.f32 %v789, %v858
      %v891 = vadd.f32 %v790, %v859
      %v892 = vadd.f32 %v791, %v860
      %v893 = vadd.f32 %v792, %v861
      %v894 = vadd.f32 %v793, %v862
      %v895 = vadd.f32 %v794, %v863
      %v896 = vadd.f32 %v795, %v864
      %v897 = vadd.f32 %v796, %v865
      %v898 = vadd.f32 %v797, %v866
      %v899 = vadd.f32 %v798, %v867
      %v900 = vadd.f32 %v799, %v868
      %v901 = vadd.f32 %v800, %v869
      %v902 = vadd.f32 %v801, %v870
      %v903 = vadd.f32 %v802, %v871
      %v904 = vadd.f32 %v803, %v872
      %v905 = vadd.f32 %v804, %v873
      %v906 = vadd.f32 %v805, %v874
      %v907 = vadd.f32 %v806, %v875
      %v908 = vadd.f32 %v807, %v876
      %v909 = vadd.f32 %v808, %v877
      %v910 = vadd.f32 %v809, %v878
      %v911 = vadd.f32 %v810, %v879
      %v912 = vadd.f32 %v811, %v880
      %v913 = vadd.f32 %v812, %v881
      %v914 = vadd.f32 %v813, %v882
      %v915 = vadd.f32 %v814, %v883
      %916 = vst.msk [vmem:[%s750 + $0x1] sm:$0xff] %vm334, %v884
      %917 = vst.msk [vmem:[%s750 + $0x9] sm:$0xff] %vm334, %v885
      %918 = vst.msk [vmem:[%s750 + $0x19] sm:$0xff] %vm334, %v886
      %919 = vst.msk [vmem:[%s750 + $0x21] sm:$0xff] %vm334, %v887
      %920 = vst.msk [vmem:[%s750 + $0x31] sm:$0xff] %vm334, %v888
      %921 = vst.msk [vmem:[%s750 + $0x39] sm:$0xff] %vm334, %v889
      %922 = vst.msk [vmem:[%s750 + $0x49] sm:$0xff] %vm334, %v890
      %923 = vst.msk [vmem:[%s750 + $0x51] sm:$0xff] %vm334, %v891
      %924 = vst.msk [vmem:[%s750 + $0x61] sm:$0xff] %vm334, %v892
      %925 = vst.msk [vmem:[%s750 + $0x69] sm:$0xff] %vm334, %v893
      %926 = vst.msk [vmem:[%s750 + $0x79] sm:$0xff] %vm334, %v894
      %927 = vst.msk [vmem:[%s750 + $0x81] sm:$0xff] %vm334, %v895
      %928 = vst.msk [vmem:[%s750 + $0x91] sm:$0xff] %vm334, %v896
      %929 = vst.msk [vmem:[%s750 + $0x99] sm:$0xff] %vm334, %v897
      %930 = vst.msk [vmem:[%s750 + $0xa9] sm:$0xff] %vm334, %v898
      %931 = vst.msk [vmem:[%s750 + $0xb1] sm:$0xff] %vm334, %v899
      %932 = vst.msk [vmem:[%s750 + $0xc1] sm:$0xff] %vm334, %v900
      %933 = vst.msk [vmem:[%s750 + $0xc9] sm:$0xff] %vm334, %v901
      %934 = vst.msk [vmem:[%s750 + $0xd9] sm:$0xff] %vm334, %v902
      %935 = vst.msk [vmem:[%s750 + $0xe1] sm:$0xff] %vm334, %v903
      %936 = vst.msk [vmem:[%s750 + $0xf1] sm:$0xff] %vm334, %v904
      %937 = vst.msk [vmem:[%s750 + $0xf9] sm:$0xff] %vm334, %v905
      %938 = vst.msk [vmem:[%s750 + $0x109] sm:$0xff] %vm334, %v906
      %939 = vst.msk [vmem:[%s750 + $0x111] sm:$0xff] %vm334, %v907
      %940 = vst.msk [vmem:[%s750 + $0x121] sm:$0xff] %vm334, %v908
      %941 = vst.msk [vmem:[%s750 + $0x129] sm:$0xff] %vm334, %v909
      %942 = vst.msk [vmem:[%s750 + $0x139] sm:$0xff] %vm334, %v910
      %943 = vst.msk [vmem:[%s750 + $0x141] sm:$0xff] %vm334, %v911
      %944 = vst.msk [vmem:[%s750 + $0x151] sm:$0xff] %vm334, %v912
      %945 = vst.msk [vmem:[%s750 + $0x159] sm:$0xff] %vm334, %v913
      %946 = vst.msk [vmem:[%s750 + $0x169] sm:$0xff] %vm334, %v914
      %947 = vst.msk [vmem:[%s750 + $0x171] sm:$0xff] %vm334, %v915
      %v948 = vld [vmem:[%s750 + $0x1] sm:$0xff]
      %v949 = vld [vmem:[%s750 + $0x9] sm:$0xff]
      %v950 = vld [vmem:[%s750 + $0x19] sm:$0xff]
      %v951 = vld [vmem:[%s750 + $0x21] sm:$0xff]
      %v952 = vld [vmem:[%s750 + $0x31] sm:$0xff]
      %v953 = vld [vmem:[%s750 + $0x39] sm:$0xff]
      %v954 = vld [vmem:[%s750 + $0x49] sm:$0xff]
      %v955 = vld [vmem:[%s750 + $0x51] sm:$0xff]
      %v956 = vld [vmem:[%s750 + $0x61] sm:$0xff]
      %v957 = vld [vmem:[%s750 + $0x69] sm:$0xff]
      %v958 = vld [vmem:[%s750 + $0x79] sm:$0xff]
      %v959 = vld [vmem:[%s750 + $0x81] sm:$0xff]
      %v960 = vld [vmem:[%s750 + $0x91] sm:$0xff]
      %v961 = vld [vmem:[%s750 + $0x99] sm:$0xff]
      %v962 = vld [vmem:[%s750 + $0xa9] sm:$0xff]
      %v963 = vld [vmem:[%s750 + $0xb1] sm:$0xff]
      %v964 = vld [vmem:[%s750 + $0xc1] sm:$0xff]
      %v965 = vld [vmem:[%s750 + $0xc9] sm:$0xff]
      %v966 = vld [vmem:[%s750 + $0xd9] sm:$0xff]
      %v967 = vld [vmem:[%s750 + $0xe1] sm:$0xff]
      %v968 = vld [vmem:[%s750 + $0xf1] sm:$0xff]
      %v969 = vld [vmem:[%s750 + $0xf9] sm:$0xff]
      %v970 = vld [vmem:[%s750 + $0x109] sm:$0xff]
      %v971 = vld [vmem:[%s750 + $0x111] sm:$0xff]
      %v972 = vld [vmem:[%s750 + $0x121] sm:$0xff]
      %v973 = vld [vmem:[%s750 + $0x129] sm:$0xff]
      %v974 = vld [vmem:[%s750 + $0x139] sm:$0xff]
      %v975 = vld [vmem:[%s750 + $0x141] sm:$0xff]
      %v976 = vld [vmem:[%s750 + $0x151] sm:$0xff]
      %v977 = vld [vmem:[%s750 + $0x159] sm:$0xff]
      %v978 = vld [vmem:[%s750 + $0x169] sm:$0xff]
      %v979 = vld [vmem:[%s750 + $0x171] sm:$0xff]
      %v980 = vld [vmem:[#allocation2 + $0x1] sm:$0xff]
      %v981 = vld [vmem:[#allocation2 + $0x9] sm:$0xff]
      %v982 = vld [vmem:[#allocation2 + $0x19] sm:$0xff]
      %v983 = vld [vmem:[#allocation2 + $0x21] sm:$0xff]
      %v984 = vld [vmem:[#allocation2 + $0x31] sm:$0xff]
      %v985 = vld [vmem:[#allocation2 + $0x39] sm:$0xff]
      %v986 = vld [vmem:[#allocation2 + $0x49] sm:$0xff]
      %v987 = vld [vmem:[#allocation2 + $0x51] sm:$0xff]
      %v988 = vld [vmem:[#allocation2 + $0x61] sm:$0xff]
      %v989 = vld [vmem:[#allocation2 + $0x69] sm:$0xff]
      %v990 = vld [vmem:[#allocation2 + $0x79] sm:$0xff]
      %v991 = vld [vmem:[#allocation2 + $0x81] sm:$0xff]
      %v992 = vld [vmem:[#allocation2 + $0x91] sm:$0xff]
      %v993 = vld [vmem:[#allocation2 + $0x99] sm:$0xff]
      %v994 = vld [vmem:[#allocation2 + $0xa9] sm:$0xff]
      %v995 = vld [vmem:[#allocation2 + $0xb1] sm:$0xff]
      %v996 = vld [vmem:[#allocation2 + $0xc1] sm:$0xff]
      %v997 = vld [vmem:[#allocation2 + $0xc9] sm:$0xff]
      %v998 = vld [vmem:[#allocation2 + $0xd9] sm:$0xff]
      %v999 = vld [vmem:[#allocation2 + $0xe1] sm:$0xff]
      %v1000 = vld [vmem:[#allocation2 + $0xf1] sm:$0xff]
      %v1001 = vld [vmem:[#allocation2 + $0xf9] sm:$0xff]
      %v1002 = vld [vmem:[#allocation2 + $0x109] sm:$0xff]
      %v1003 = vld [vmem:[#allocation2 + $0x111] sm:$0xff]
      %v1004 = vld [vmem:[#allocation2 + $0x121] sm:$0xff]
      %v1005 = vld [vmem:[#allocation2 + $0x129] sm:$0xff]
      %v1006 = vld [vmem:[#allocation2 + $0x139] sm:$0xff]
      %v1007 = vld [vmem:[#allocation2 + $0x141] sm:$0xff]
      %v1008 = vld [vmem:[#allocation2 + $0x151] sm:$0xff]
      %v1009 = vld [vmem:[#allocation2 + $0x159] sm:$0xff]
      %v1010 = vld [vmem:[#allocation2 + $0x169] sm:$0xff]
      %v1011 = vld [vmem:[#allocation2 + $0x171] sm:$0xff]
      %v1012 = vld [vmem:[%s1 + $0x1] sm:$0x1]
      %v1013 = vlaneseq
      %v1014 = vshrl.u32 %v1013, 7
      %v1015 = vsub.s32 0, %v1014
      %v1016 = vrot.slane %v1012, %v1015
      %v1017 = vmul.f32 %v980, %v1016
      %v1018 = vmul.f32 %v981, %v1016
      %v1019 = vmul.f32 %v982, %v1016
      %v1020 = vmul.f32 %v983, %v1016
      %v1021 = vmul.f32 %v984, %v1016
      %v1022 = vmul.f32 %v985, %v1016
      %v1023 = vmul.f32 %v986, %v1016
      %v1024 = vmul.f32 %v987, %v1016
      %v1025 = vmul.f32 %v988, %v1016
      %v1026 = vmul.f32 %v989, %v1016
      %v1027 = vmul.f32 %v990, %v1016
      %v1028 = vmul.f32 %v991, %v1016
      %v1029 = vmul.f32 %v992, %v1016
      %v1030 = vmul.f32 %v993, %v1016
      %v1031 = vmul.f32 %v994, %v1016
      %v1032 = vmul.f32 %v995, %v1016
      %v1033 = vmul.f32 %v996, %v1016
      %v1034 = vmul.f32 %v997, %v1016
      %v1035 = vmul.f32 %v998, %v1016
      %v1036 = vmul.f32 %v999, %v1016
      %v1037 = vmul.f32 %v1000, %v1016
      %v1038 = vmul.f32 %v1001, %v1016
      %v1039 = vmul.f32 %v1002, %v1016
      %v1040 = vmul.f32 %v1003, %v1016
      %v1041 = vmul.f32 %v1004, %v1016
      %v1042 = vmul.f32 %v1005, %v1016
      %v1043 = vmul.f32 %v1006, %v1016
      %v1044 = vmul.f32 %v1007, %v1016
      %v1045 = vmul.f32 %v1008, %v1016
      %v1046 = vmul.f32 %v1009, %v1016
      %v1047 = vmul.f32 %v1010, %v1016
      %v1048 = vmul.f32 %v1011, %v1016
      %v1049 = vadd.f32 %v948, %v1017
      %v1050 = vadd.f32 %v949, %v1018
      %v1051 = vadd.f32 %v950, %v1019
      %v1052 = vadd.f32 %v951, %v1020
      %v1053 = vadd.f32 %v952, %v1021
      %v1054 = vadd.f32 %v953, %v1022
      %v1055 = vadd.f32 %v954, %v1023
      %v1056 = vadd.f32 %v955, %v1024
      %v1057 = vadd.f32 %v956, %v1025
      %v1058 = vadd.f32 %v957, %v1026
      %v1059 = vadd.f32 %v958, %v1027
      %v1060 = vadd.f32 %v959, %v1028
      %v1061 = vadd.f32 %v960, %v1029
      %v1062 = vadd.f32 %v961, %v1030
      %v1063 = vadd.f32 %v962, %v1031
      %v1064 = vadd.f32 %v963, %v1032
      %v1065 = vadd.f32 %v964, %v1033
      %v1066 = vadd.f32 %v965, %v1034
      %v1067 = vadd.f32 %v966, %v1035
      %v1068 = vadd.f32 %v967, %v1036
      %v1069 = vadd.f32 %v968, %v1037
      %v1070 = vadd.f32 %v969, %v1038
      %v1071 = vadd.f32 %v970, %v1039
      %v1072 = vadd.f32 %v971, %v1040
      %v1073 = vadd.f32 %v972, %v1041
      %v1074 = vadd.f32 %v973, %v1042
      %v1075 = vadd.f32 %v974, %v1043
      %v1076 = vadd.f32 %v975, %v1044
      %v1077 = vadd.f32 %v976, %v1045
      %v1078 = vadd.f32 %v977, %v1046
      %v1079 = vadd.f32 %v978, %v1047
      %v1080 = vadd.f32 %v979, %v1048
      %1081 = vst.msk [vmem:[%s750 + $0x1] sm:$0xff] %vm334, %v1049
      %1082 = vst.msk [vmem:[%s750 + $0x9] sm:$0xff] %vm334, %v1050
      %1083 = vst.msk [vmem:[%s750 + $0x19] sm:$0xff] %vm334, %v1051
      %1084 = vst.msk [vmem:[%s750 + $0x21] sm:$0xff] %vm334, %v1052
      %1085 = vst.msk [vmem:[%s750 + $0x31] sm:$0xff] %vm334, %v1053
      %1086 = vst.msk [vmem:[%s750 + $0x39] sm:$0xff] %vm334, %v1054
      %1087 = vst.msk [vmem:[%s750 + $0x49] sm:$0xff] %vm334, %v1055
      %1088 = vst.msk [vmem:[%s750 + $0x51] sm:$0xff] %vm334, %v1056
      %1089 = vst.msk [vmem:[%s750 + $0x61] sm:$0xff] %vm334, %v1057
      %1090 = vst.msk [vmem:[%s750 + $0x69] sm:$0xff] %vm334, %v1058
      %1091 = vst.msk [vmem:[%s750 + $0x79] sm:$0xff] %vm334, %v1059
      %1092 = vst.msk [vmem:[%s750 + $0x81] sm:$0xff] %vm334, %v1060
      %1093 = vst.msk [vmem:[%s750 + $0x91] sm:$0xff] %vm334, %v1061
      %1094 = vst.msk [vmem:[%s750 + $0x99] sm:$0xff] %vm334, %v1062
      %1095 = vst.msk [vmem:[%s750 + $0xa9] sm:$0xff] %vm334, %v1063
      %1096 = vst.msk [vmem:[%s750 + $0xb1] sm:$0xff] %vm334, %v1064
      %1097 = vst.msk [vmem:[%s750 + $0xc1] sm:$0xff] %vm334, %v1065
      %1098 = vst.msk [vmem:[%s750 + $0xc9] sm:$0xff] %vm334, %v1066
      %1099 = vst.msk [vmem:[%s750 + $0xd9] sm:$0xff] %vm334, %v1067
      %1100 = vst.msk [vmem:[%s750 + $0xe1] sm:$0xff] %vm334, %v1068
      %1101 = vst.msk [vmem:[%s750 + $0xf1] sm:$0xff] %vm334, %v1069
      %1102 = vst.msk [vmem:[%s750 + $0xf9] sm:$0xff] %vm334, %v1070
      %1103 = vst.msk [vmem:[%s750 + $0x109] sm:$0xff] %vm334, %v1071
      %1104 = vst.msk [vmem:[%s750 + $0x111] sm:$0xff] %vm334, %v1072
      %1105 = vst.msk [vmem:[%s750 + $0x121] sm:$0xff] %vm334, %v1073
      %1106 = vst.msk [vmem:[%s750 + $0x129] sm:$0xff] %vm334, %v1074
      %1107 = vst.msk [vmem:[%s750 + $0x139] sm:$0xff] %vm334, %v1075
      %1108 = vst.msk [vmem:[%s750 + $0x141] sm:$0xff] %vm334, %v1076
      %1109 = vst.msk [vmem:[%s750 + $0x151] sm:$0xff] %vm334, %v1077
      %1110 = vst.msk [vmem:[%s750 + $0x159] sm:$0xff] %vm334, %v1078
      %1111 = vst.msk [vmem:[%s750 + $0x169] sm:$0xff] %vm334, %v1079
      %1112 = vst.msk [vmem:[%s750 + $0x171] sm:$0xff] %vm334, %v1080
      %v1113 = vld [vmem:[%s750 + $0x1] sm:$0xff]
      %v1114 = vld [vmem:[%s750 + $0x9] sm:$0xff]
      %v1115 = vld [vmem:[%s750 + $0x19] sm:$0xff]
      %v1116 = vld [vmem:[%s750 + $0x21] sm:$0xff]
      %v1117 = vld [vmem:[%s750 + $0x31] sm:$0xff]
      %v1118 = vld [vmem:[%s750 + $0x39] sm:$0xff]
      %v1119 = vld [vmem:[%s750 + $0x49] sm:$0xff]
      %v1120 = vld [vmem:[%s750 + $0x51] sm:$0xff]
      %v1121 = vld [vmem:[%s750 + $0x61] sm:$0xff]
      %v1122 = vld [vmem:[%s750 + $0x69] sm:$0xff]
      %v1123 = vld [vmem:[%s750 + $0x79] sm:$0xff]
      %v1124 = vld [vmem:[%s750 + $0x81] sm:$0xff]
      %v1125 = vld [vmem:[%s750 + $0x91] sm:$0xff]
      %v1126 = vld [vmem:[%s750 + $0x99] sm:$0xff]
      %v1127 = vld [vmem:[%s750 + $0xa9] sm:$0xff]
      %v1128 = vld [vmem:[%s750 + $0xb1] sm:$0xff]
      %v1129 = vld [vmem:[%s750 + $0xc1] sm:$0xff]
      %v1130 = vld [vmem:[%s750 + $0xc9] sm:$0xff]
      %v1131 = vld [vmem:[%s750 + $0xd9] sm:$0xff]
      %v1132 = vld [vmem:[%s750 + $0xe1] sm:$0xff]
      %v1133 = vld [vmem:[%s750 + $0xf1] sm:$0xff]
      %v1134 = vld [vmem:[%s750 + $0xf9] sm:$0xff]
      %v1135 = vld [vmem:[%s750 + $0x109] sm:$0xff]
      %v1136 = vld [vmem:[%s750 + $0x111] sm:$0xff]
      %v1137 = vld [vmem:[%s750 + $0x121] sm:$0xff]
      %v1138 = vld [vmem:[%s750 + $0x129] sm:$0xff]
      %v1139 = vld [vmem:[%s750 + $0x139] sm:$0xff]
      %v1140 = vld [vmem:[%s750 + $0x141] sm:$0xff]
      %v1141 = vld [vmem:[%s750 + $0x151] sm:$0xff]
      %v1142 = vld [vmem:[%s750 + $0x159] sm:$0xff]
      %v1143 = vld [vmem:[%s750 + $0x169] sm:$0xff]
      %v1144 = vld [vmem:[%s750 + $0x171] sm:$0xff]
      %v1145 = vld [vmem:[#allocation2 + $0x2] sm:$0xff]
      %v1146 = vld [vmem:[#allocation2 + $0xa] sm:$0xff]
      %v1147 = vld [vmem:[#allocation2 + $0x1a] sm:$0xff]
      %v1148 = vld [vmem:[#allocation2 + $0x22] sm:$0xff]
      %v1149 = vld [vmem:[#allocation2 + $0x32] sm:$0xff]
      %v1150 = vld [vmem:[#allocation2 + $0x3a] sm:$0xff]
      %v1151 = vld [vmem:[#allocation2 + $0x4a] sm:$0xff]
      %v1152 = vld [vmem:[#allocation2 + $0x52] sm:$0xff]
      %v1153 = vld [vmem:[#allocation2 + $0x62] sm:$0xff]
      %v1154 = vld [vmem:[#allocation2 + $0x6a] sm:$0xff]
      %v1155 = vld [vmem:[#allocation2 + $0x7a] sm:$0xff]
      %v1156 = vld [vmem:[#allocation2 + $0x82] sm:$0xff]
      %v1157 = vld [vmem:[#allocation2 + $0x92] sm:$0xff]
      %v1158 = vld [vmem:[#allocation2 + $0x9a] sm:$0xff]
      %v1159 = vld [vmem:[#allocation2 + $0xaa] sm:$0xff]
      %v1160 = vld [vmem:[#allocation2 + $0xb2] sm:$0xff]
      %v1161 = vld [vmem:[#allocation2 + $0xc2] sm:$0xff]
      %v1162 = vld [vmem:[#allocation2 + $0xca] sm:$0xff]
      %v1163 = vld [vmem:[#allocation2 + $0xda] sm:$0xff]
      %v1164 = vld [vmem:[#allocation2 + $0xe2] sm:$0xff]
      %v1165 = vld [vmem:[#allocation2 + $0xf2] sm:$0xff]
      %v1166 = vld [vmem:[#allocation2 + $0xfa] sm:$0xff]
      %v1167 = vld [vmem:[#allocation2 + $0x10a] sm:$0xff]
      %v1168 = vld [vmem:[#allocation2 + $0x112] sm:$0xff]
      %v1169 = vld [vmem:[#allocation2 + $0x122] sm:$0xff]
      %v1170 = vld [vmem:[#allocation2 + $0x12a] sm:$0xff]
      %v1171 = vld [vmem:[#allocation2 + $0x13a] sm:$0xff]
      %v1172 = vld [vmem:[#allocation2 + $0x142] sm:$0xff]
      %v1173 = vld [vmem:[#allocation2 + $0x152] sm:$0xff]
      %v1174 = vld [vmem:[#allocation2 + $0x15a] sm:$0xff]
      %v1175 = vld [vmem:[#allocation2 + $0x16a] sm:$0xff]
      %v1176 = vld [vmem:[#allocation2 + $0x172] sm:$0xff]
      %v1177 = vld [vmem:[%s1 + $0x2] sm:$0x1]
      %v1178 = vlaneseq
      %v1179 = vshrl.u32 %v1178, 7
      %v1180 = vsub.s32 0, %v1179
      %v1181 = vrot.slane %v1177, %v1180
      %v1182 = vmul.f32 %v1145, %v1181
      %v1183 = vmul.f32 %v1146, %v1181
      %v1184 = vmul.f32 %v1147, %v1181
      %v1185 = vmul.f32 %v1148, %v1181
      %v1186 = vmul.f32 %v1149, %v1181
      %v1187 = vmul.f32 %v1150, %v1181
      %v1188 = vmul.f32 %v1151, %v1181
      %v1189 = vmul.f32 %v1152, %v1181
      %v1190 = vmul.f32 %v1153, %v1181
      %v1191 = vmul.f32 %v1154, %v1181
      %v1192 = vmul.f32 %v1155, %v1181
      %v1193 = vmul.f32 %v1156, %v1181
      %v1194 = vmul.f32 %v1157, %v1181
      %v1195 = vmul.f32 %v1158, %v1181
      %v1196 = vmul.f32 %v1159, %v1181
      %v1197 = vmul.f32 %v1160, %v1181
      %v1198 = vmul.f32 %v1161, %v1181
      %v1199 = vmul.f32 %v1162, %v1181
      %v1200 = vmul.f32 %v1163, %v1181
      %v1201 = vmul.f32 %v1164, %v1181
      %v1202 = vmul.f32 %v1165, %v1181
      %v1203 = vmul.f32 %v1166, %v1181
      %v1204 = vmul.f32 %v1167, %v1181
      %v1205 = vmul.f32 %v1168, %v1181
      %v1206 = vmul.f32 %v1169, %v1181
      %v1207 = vmul.f32 %v1170, %v1181
      %v1208 = vmul.f32 %v1171, %v1181
      %v1209 = vmul.f32 %v1172, %v1181
      %v1210 = vmul.f32 %v1173, %v1181
      %v1211 = vmul.f32 %v1174, %v1181
      %v1212 = vmul.f32 %v1175, %v1181
      %v1213 = vmul.f32 %v1176, %v1181
      %v1214 = vadd.f32 %v1113, %v1182
      %v1215 = vadd.f32 %v1114, %v1183
      %v1216 = vadd.f32 %v1115, %v1184
      %v1217 = vadd.f32 %v1116, %v1185
      %v1218 = vadd.f32 %v1117, %v1186
      %v1219 = vadd.f32 %v1118, %v1187
      %v1220 = vadd.f32 %v1119, %v1188
      %v1221 = vadd.f32 %v1120, %v1189
      %v1222 = vadd.f32 %v1121, %v1190
      %v1223 = vadd.f32 %v1122, %v1191
      %v1224 = vadd.f32 %v1123, %v1192
      %v1225 = vadd.f32 %v1124, %v1193
      %v1226 = vadd.f32 %v1125, %v1194
      %v1227 = vadd.f32 %v1126, %v1195
      %v1228 = vadd.f32 %v1127, %v1196
      %v1229 = vadd.f32 %v1128, %v1197
      %v1230 = vadd.f32 %v1129, %v1198
      %v1231 = vadd.f32 %v1130, %v1199
      %v1232 = vadd.f32 %v1131, %v1200
      %v1233 = vadd.f32 %v1132, %v1201
      %v1234 = vadd.f32 %v1133, %v1202
      %v1235 = vadd.f32 %v1134, %v1203
      %v1236 = vadd.f32 %v1135, %v1204
      %v1237 = vadd.f32 %v1136, %v1205
      %v1238 = vadd.f32 %v1137, %v1206
      %v1239 = vadd.f32 %v1138, %v1207
      %v1240 = vadd.f32 %v1139, %v1208
      %v1241 = vadd.f32 %v1140, %v1209
      %v1242 = vadd.f32 %v1141, %v1210
      %v1243 = vadd.f32 %v1142, %v1211
      %v1244 = vadd.f32 %v1143, %v1212
      %v1245 = vadd.f32 %v1144, %v1213
      %1246 = vst.msk [vmem:[%s750 + $0x1] sm:$0xff] %vm334, %v1214
      %1247 = vst.msk [vmem:[%s750 + $0x9] sm:$0xff] %vm334, %v1215
      %1248 = vst.msk [vmem:[%s750 + $0x19] sm:$0xff] %vm334, %v1216
      %1249 = vst.msk [vmem:[%s750 + $0x21] sm:$0xff] %vm334, %v1217
      %1250 = vst.msk [vmem:[%s750 + $0x31] sm:$0xff] %vm334, %v1218
      %1251 = vst.msk [vmem:[%s750 + $0x39] sm:$0xff] %vm334, %v1219
      %1252 = vst.msk [vmem:[%s750 + $0x49] sm:$0xff] %vm334, %v1220
      %1253 = vst.msk [vmem:[%s750 + $0x51] sm:$0xff] %vm334, %v1221
      %1254 = vst.msk [vmem:[%s750 + $0x61] sm:$0xff] %vm334, %v1222
      %1255 = vst.msk [vmem:[%s750 + $0x69] sm:$0xff] %vm334, %v1223
      %1256 = vst.msk [vmem:[%s750 + $0x79] sm:$0xff] %vm334, %v1224
      %1257 = vst.msk [vmem:[%s750 + $0x81] sm:$0xff] %vm334, %v1225
      %1258 = vst.msk [vmem:[%s750 + $0x91] sm:$0xff] %vm334, %v1226
      %1259 = vst.msk [vmem:[%s750 + $0x99] sm:$0xff] %vm334, %v1227
      %1260 = vst.msk [vmem:[%s750 + $0xa9] sm:$0xff] %vm334, %v1228
      %1261 = vst.msk [vmem:[%s750 + $0xb1] sm:$0xff] %vm334, %v1229
      %1262 = vst.msk [vmem:[%s750 + $0xc1] sm:$0xff] %vm334, %v1230
      %1263 = vst.msk [vmem:[%s750 + $0xc9] sm:$0xff] %vm334, %v1231
      %1264 = vst.msk [vmem:[%s750 + $0xd9] sm:$0xff] %vm334, %v1232
      %1265 = vst.msk [vmem:[%s750 + $0xe1] sm:$0xff] %vm334, %v1233
      %1266 = vst.msk [vmem:[%s750 + $0xf1] sm:$0xff] %vm334, %v1234
      %1267 = vst.msk [vmem:[%s750 + $0xf9] sm:$0xff] %vm334, %v1235
      %1268 = vst.msk [vmem:[%s750 + $0x109] sm:$0xff] %vm334, %v1236
      %1269 = vst.msk [vmem:[%s750 + $0x111] sm:$0xff] %vm334, %v1237
      %1270 = vst.msk [vmem:[%s750 + $0x121] sm:$0xff] %vm334, %v1238
      %1271 = vst.msk [vmem:[%s750 + $0x129] sm:$0xff] %vm334, %v1239
      %1272 = vst.msk [vmem:[%s750 + $0x139] sm:$0xff] %vm334, %v1240
      %1273 = vst.msk [vmem:[%s750 + $0x141] sm:$0xff] %vm334, %v1241
      %1274 = vst.msk [vmem:[%s750 + $0x151] sm:$0xff] %vm334, %v1242
      %1275 = vst.msk [vmem:[%s750 + $0x159] sm:$0xff] %vm334, %v1243
      %1276 = vst.msk [vmem:[%s750 + $0x169] sm:$0xff] %vm334, %v1244
      %1277 = vst.msk [vmem:[%s750 + $0x171] sm:$0xff] %vm334, %v1245
      %v1278 = vld [vmem:[%s750 + $0x1] sm:$0xff]
      %v1279 = vld [vmem:[%s750 + $0x9] sm:$0xff]
      %v1280 = vld [vmem:[%s750 + $0x19] sm:$0xff]
      %v1281 = vld [vmem:[%s750 + $0x21] sm:$0xff]
      %v1282 = vld [vmem:[%s750 + $0x31] sm:$0xff]
      %v1283 = vld [vmem:[%s750 + $0x39] sm:$0xff]
      %v1284 = vld [vmem:[%s750 + $0x49] sm:$0xff]
      %v1285 = vld [vmem:[%s750 + $0x51] sm:$0xff]
      %v1286 = vld [vmem:[%s750 + $0x61] sm:$0xff]
      %v1287 = vld [vmem:[%s750 + $0x69] sm:$0xff]
      %v1288 = vld [vmem:[%s750 + $0x79] sm:$0xff]
      %v1289 = vld [vmem:[%s750 + $0x81] sm:$0xff]
      %v1290 = vld [vmem:[%s750 + $0x91] sm:$0xff]
      %v1291 = vld [vmem:[%s750 + $0x99] sm:$0xff]
      %v1292 = vld [vmem:[%s750 + $0xa9] sm:$0xff]
      %v1293 = vld [vmem:[%s750 + $0xb1] sm:$0xff]
      %v1294 = vld [vmem:[%s750 + $0xc1] sm:$0xff]
      %v1295 = vld [vmem:[%s750 + $0xc9] sm:$0xff]
      %v1296 = vld [vmem:[%s750 + $0xd9] sm:$0xff]
      %v1297 = vld [vmem:[%s750 + $0xe1] sm:$0xff]
      %v1298 = vld [vmem:[%s750 + $0xf1] sm:$0xff]
      %v1299 = vld [vmem:[%s750 + $0xf9] sm:$0xff]
      %v1300 = vld [vmem:[%s750 + $0x109] sm:$0xff]
      %v1301 = vld [vmem:[%s750 + $0x111] sm:$0xff]
      %v1302 = vld [vmem:[%s750 + $0x121] sm:$0xff]
      %v1303 = vld [vmem:[%s750 + $0x129] sm:$0xff]
      %v1304 = vld [vmem:[%s750 + $0x139] sm:$0xff]
      %v1305 = vld [vmem:[%s750 + $0x141] sm:$0xff]
      %v1306 = vld [vmem:[%s750 + $0x151] sm:$0xff]
      %v1307 = vld [vmem:[%s750 + $0x159] sm:$0xff]
      %v1308 = vld [vmem:[%s750 + $0x169] sm:$0xff]
      %v1309 = vld [vmem:[%s750 + $0x171] sm:$0xff]
      %v1310 = vld [vmem:[%s710] sm:$0xff]
      %v1311 = vld [vmem:[%s710 + $0x8] sm:$0xff]
      %v1312 = vld [vmem:[%s710 + $0x18] sm:$0xff]
      %v1313 = vld [vmem:[%s710 + $0x20] sm:$0xff]
      %v1314 = vld [vmem:[%s710 + $0x30] sm:$0xff]
      %v1315 = vld [vmem:[%s710 + $0x38] sm:$0xff]
      %v1316 = vld [vmem:[%s710 + $0x48] sm:$0xff]
      %v1317 = vld [vmem:[%s710 + $0x50] sm:$0xff]
      %v1318 = vld [vmem:[%s710 + $0x60] sm:$0xff]
      %v1319 = vld [vmem:[%s710 + $0x68] sm:$0xff]
      %v1320 = vld [vmem:[%s710 + $0x78] sm:$0xff]
      %v1321 = vld [vmem:[%s710 + $0x80] sm:$0xff]
      %v1322 = vld [vmem:[%s710 + $0x90] sm:$0xff]
      %v1323 = vld [vmem:[%s710 + $0x98] sm:$0xff]
      %v1324 = vld [vmem:[%s710 + $0xa8] sm:$0xff]
      %v1325 = vld [vmem:[%s710 + $0xb0] sm:$0xff]
      %v1326 = vld [vmem:[%s710 + $0xc0] sm:$0xff]
      %v1327 = vld [vmem:[%s710 + $0xc8] sm:$0xff]
      %v1328 = vld [vmem:[%s710 + $0xd8] sm:$0xff]
      %v1329 = vld [vmem:[%s710 + $0xe0] sm:$0xff]
      %v1330 = vld [vmem:[%s710 + $0xf0] sm:$0xff]
      %v1331 = vld [vmem:[%s710 + $0xf8] sm:$0xff]
      %v1332 = vld [vmem:[%s710 + $0x108] sm:$0xff]
      %v1333 = vld [vmem:[%s710 + $0x110] sm:$0xff]
      %v1334 = vld [vmem:[%s710 + $0x120] sm:$0xff]
      %v1335 = vld [vmem:[%s710 + $0x128] sm:$0xff]
      %v1336 = vld [vmem:[%s710 + $0x138] sm:$0xff]
      %v1337 = vld [vmem:[%s710 + $0x140] sm:$0xff]
      %v1338 = vld [vmem:[%s710 + $0x150] sm:$0xff]
      %v1339 = vld [vmem:[%s710 + $0x158] sm:$0xff]
      %v1340 = vld [vmem:[%s710 + $0x168] sm:$0xff]
      %v1341 = vld [vmem:[%s710 + $0x170] sm:$0xff]
      %v1342 = vld [vmem:[%s1 + $0x3] sm:$0x1]
      %v1343 = vlaneseq
      %v1344 = vshrl.u32 %v1343, 7
      %v1345 = vsub.s32 0, %v1344
      %v1346 = vrot.slane %v1342, %v1345
      %v1347 = vmul.f32 %v1310, %v1346
      %v1348 = vmul.f32 %v1311, %v1346
      %v1349 = vmul.f32 %v1312, %v1346
      %v1350 = vmul.f32 %v1313, %v1346
      %v1351 = vmul.f32 %v1314, %v1346
      %v1352 = vmul.f32 %v1315, %v1346
      %v1353 = vmul.f32 %v1316, %v1346
      %v1354 = vmul.f32 %v1317, %v1346
      %v1355 = vmul.f32 %v1318, %v1346
      %v1356 = vmul.f32 %v1319, %v1346
      %v1357 = vmul.f32 %v1320, %v1346
      %v1358 = vmul.f32 %v1321, %v1346
      %v1359 = vmul.f32 %v1322, %v1346
      %v1360 = vmul.f32 %v1323, %v1346
      %v1361 = vmul.f32 %v1324, %v1346
      %v1362 = vmul.f32 %v1325, %v1346
      %v1363 = vmul.f32 %v1326, %v1346
      %v1364 = vmul.f32 %v1327, %v1346
      %v1365 = vmul.f32 %v1328, %v1346
      %v1366 = vmul.f32 %v1329, %v1346
      %v1367 = vmul.f32 %v1330, %v1346
      %v1368 = vmul.f32 %v1331, %v1346
      %v1369 = vmul.f32 %v1332, %v1346
      %v1370 = vmul.f32 %v1333, %v1346
      %v1371 = vmul.f32 %v1334, %v1346
      %v1372 = vmul.f32 %v1335, %v1346
      %v1373 = vmul.f32 %v1336, %v1346
      %v1374 = vmul.f32 %v1337, %v1346
      %v1375 = vmul.f32 %v1338, %v1346
      %v1376 = vmul.f32 %v1339, %v1346
      %v1377 = vmul.f32 %v1340, %v1346
      %v1378 = vmul.f32 %v1341, %v1346
      %v1379 = vadd.f32 %v1278, %v1347
      %v1380 = vadd.f32 %v1279, %v1348
      %v1381 = vadd.f32 %v1280, %v1349
      %v1382 = vadd.f32 %v1281, %v1350
      %v1383 = vadd.f32 %v1282, %v1351
      %v1384 = vadd.f32 %v1283, %v1352
      %v1385 = vadd.f32 %v1284, %v1353
      %v1386 = vadd.f32 %v1285, %v1354
      %v1387 = vadd.f32 %v1286, %v1355
      %v1388 = vadd.f32 %v1287, %v1356
      %v1389 = vadd.f32 %v1288, %v1357
      %v1390 = vadd.f32 %v1289, %v1358
      %v1391 = vadd.f32 %v1290, %v1359
      %v1392 = vadd.f32 %v1291, %v1360
      %v1393 = vadd.f32 %v1292, %v1361
      %v1394 = vadd.f32 %v1293, %v1362
      %v1395 = vadd.f32 %v1294, %v1363
      %v1396 = vadd.f32 %v1295, %v1364
      %v1397 = vadd.f32 %v1296, %v1365
      %v1398 = vadd.f32 %v1297, %v1366
      %v1399 = vadd.f32 %v1298, %v1367
      %v1400 = vadd.f32 %v1299, %v1368
      %v1401 = vadd.f32 %v1300, %v1369
      %v1402 = vadd.f32 %v1301, %v1370
      %v1403 = vadd.f32 %v1302, %v1371
      %v1404 = vadd.f32 %v1303, %v1372
      %v1405 = vadd.f32 %v1304, %v1373
      %v1406 = vadd.f32 %v1305, %v1374
      %v1407 = vadd.f32 %v1306, %v1375
      %v1408 = vadd.f32 %v1307, %v1376
      %v1409 = vadd.f32 %v1308, %v1377
      %v1410 = vadd.f32 %v1309, %v1378
      %1411 = vst.msk [vmem:[%s750 + $0x1] sm:$0xff] %vm334, %v1379
      %1412 = vst.msk [vmem:[%s750 + $0x9] sm:$0xff] %vm334, %v1380
      %1413 = vst.msk [vmem:[%s750 + $0x19] sm:$0xff] %vm334, %v1381
      %1414 = vst.msk [vmem:[%s750 + $0x21] sm:$0xff] %vm334, %v1382
      %1415 = vst.msk [vmem:[%s750 + $0x31] sm:$0xff] %vm334, %v1383
      %1416 = vst.msk [vmem:[%s750 + $0x39] sm:$0xff] %vm334, %v1384
      %1417 = vst.msk [vmem:[%s750 + $0x49] sm:$0xff] %vm334, %v1385
      %1418 = vst.msk [vmem:[%s750 + $0x51] sm:$0xff] %vm334, %v1386
      %1419 = vst.msk [vmem:[%s750 + $0x61] sm:$0xff] %vm334, %v1387
      %1420 = vst.msk [vmem:[%s750 + $0x69] sm:$0xff] %vm334, %v1388
      %1421 = vst.msk [vmem:[%s750 + $0x79] sm:$0xff] %vm334, %v1389
      %1422 = vst.msk [vmem:[%s750 + $0x81] sm:$0xff] %vm334, %v1390
      %1423 = vst.msk [vmem:[%s750 + $0x91] sm:$0xff] %vm334, %v1391
      %1424 = vst.msk [vmem:[%s750 + $0x99] sm:$0xff] %vm334, %v1392
      %1425 = vst.msk [vmem:[%s750 + $0xa9] sm:$0xff] %vm334, %v1393
      %1426 = vst.msk [vmem:[%s750 + $0xb1] sm:$0xff] %vm334, %v1394
      %1427 = vst.msk [vmem:[%s750 + $0xc1] sm:$0xff] %vm334, %v1395
      %1428 = vst.msk [vmem:[%s750 + $0xc9] sm:$0xff] %vm334, %v1396
      %1429 = vst.msk [vmem:[%s750 + $0xd9] sm:$0xff] %vm334, %v1397
      %1430 = vst.msk [vmem:[%s750 + $0xe1] sm:$0xff] %vm334, %v1398
      %1431 = vst.msk [vmem:[%s750 + $0xf1] sm:$0xff] %vm334, %v1399
      %1432 = vst.msk [vmem:[%s750 + $0xf9] sm:$0xff] %vm334, %v1400
      %1433 = vst.msk [vmem:[%s750 + $0x109] sm:$0xff] %vm334, %v1401
      %1434 = vst.msk [vmem:[%s750 + $0x111] sm:$0xff] %vm334, %v1402
      %1435 = vst.msk [vmem:[%s750 + $0x121] sm:$0xff] %vm334, %v1403
      %1436 = vst.msk [vmem:[%s750 + $0x129] sm:$0xff] %vm334, %v1404
      %1437 = vst.msk [vmem:[%s750 + $0x139] sm:$0xff] %vm334, %v1405
      %1438 = vst.msk [vmem:[%s750 + $0x141] sm:$0xff] %vm334, %v1406
      %1439 = vst.msk [vmem:[%s750 + $0x151] sm:$0xff] %vm334, %v1407
      %1440 = vst.msk [vmem:[%s750 + $0x159] sm:$0xff] %vm334, %v1408
      %1441 = vst.msk [vmem:[%s750 + $0x169] sm:$0xff] %vm334, %v1409
      %1442 = vst.msk [vmem:[%s750 + $0x171] sm:$0xff] %vm334, %v1410
      %v1443 = vld [vmem:[%s750 + $0x1] sm:$0xff]
      %v1444 = vld [vmem:[%s750 + $0x9] sm:$0xff]
      %v1445 = vld [vmem:[%s750 + $0x19] sm:$0xff]
      %v1446 = vld [vmem:[%s750 + $0x21] sm:$0xff]
      %v1447 = vld [vmem:[%s750 + $0x31] sm:$0xff]
      %v1448 = vld [vmem:[%s750 + $0x39] sm:$0xff]
      %v1449 = vld [vmem:[%s750 + $0x49] sm:$0xff]
      %v1450 = vld [vmem:[%s750 + $0x51] sm:$0xff]
      %v1451 = vld [vmem:[%s750 + $0x61] sm:$0xff]
      %v1452 = vld [vmem:[%s750 + $0x69] sm:$0xff]
      %v1453 = vld [vmem:[%s750 + $0x79] sm:$0xff]
      %v1454 = vld [vmem:[%s750 + $0x81] sm:$0xff]
      %v1455 = vld [vmem:[%s750 + $0x91] sm:$0xff]
      %v1456 = vld [vmem:[%s750 + $0x99] sm:$0xff]
      %v1457 = vld [vmem:[%s750 + $0xa9] sm:$0xff]
      %v1458 = vld [vmem:[%s750 + $0xb1] sm:$0xff]
      %v1459 = vld [vmem:[%s750 + $0xc1] sm:$0xff]
      %v1460 = vld [vmem:[%s750 + $0xc9] sm:$0xff]
      %v1461 = vld [vmem:[%s750 + $0xd9] sm:$0xff]
      %v1462 = vld [vmem:[%s750 + $0xe1] sm:$0xff]
      %v1463 = vld [vmem:[%s750 + $0xf1] sm:$0xff]
      %v1464 = vld [vmem:[%s750 + $0xf9] sm:$0xff]
      %v1465 = vld [vmem:[%s750 + $0x109] sm:$0xff]
      %v1466 = vld [vmem:[%s750 + $0x111] sm:$0xff]
      %v1467 = vld [vmem:[%s750 + $0x121] sm:$0xff]
      %v1468 = vld [vmem:[%s750 + $0x129] sm:$0xff]
      %v1469 = vld [vmem:[%s750 + $0x139] sm:$0xff]
      %v1470 = vld [vmem:[%s750 + $0x141] sm:$0xff]
      %v1471 = vld [vmem:[%s750 + $0x151] sm:$0xff]
      %v1472 = vld [vmem:[%s750 + $0x159] sm:$0xff]
      %v1473 = vld [vmem:[%s750 + $0x169] sm:$0xff]
      %v1474 = vld [vmem:[%s750 + $0x171] sm:$0xff]
      %v1475 = vld [vmem:[%s710 + $0x1] sm:$0xff]
      %v1476 = vld [vmem:[%s710 + $0x9] sm:$0xff]
      %v1477 = vld [vmem:[%s710 + $0x19] sm:$0xff]
      %v1478 = vld [vmem:[%s710 + $0x21] sm:$0xff]
      %v1479 = vld [vmem:[%s710 + $0x31] sm:$0xff]
      %v1480 = vld [vmem:[%s710 + $0x39] sm:$0xff]
      %v1481 = vld [vmem:[%s710 + $0x49] sm:$0xff]
      %v1482 = vld [vmem:[%s710 + $0x51] sm:$0xff]
      %v1483 = vld [vmem:[%s710 + $0x61] sm:$0xff]
      %v1484 = vld [vmem:[%s710 + $0x69] sm:$0xff]
      %v1485 = vld [vmem:[%s710 + $0x79] sm:$0xff]
      %v1486 = vld [vmem:[%s710 + $0x81] sm:$0xff]
      %v1487 = vld [vmem:[%s710 + $0x91] sm:$0xff]
      %v1488 = vld [vmem:[%s710 + $0x99] sm:$0xff]
      %v1489 = vld [vmem:[%s710 + $0xa9] sm:$0xff]
      %v1490 = vld [vmem:[%s710 + $0xb1] sm:$0xff]
      %v1491 = vld [vmem:[%s710 + $0xc1] sm:$0xff]
      %v1492 = vld [vmem:[%s710 + $0xc9] sm:$0xff]
      %v1493 = vld [vmem:[%s710 + $0xd9] sm:$0xff]
      %v1494 = vld [vmem:[%s710 + $0xe1] sm:$0xff]
      %v1495 = vld [vmem:[%s710 + $0xf1] sm:$0xff]
      %v1496 = vld [vmem:[%s710 + $0xf9] sm:$0xff]
      %v1497 = vld [vmem:[%s710 + $0x109] sm:$0xff]
      %v1498 = vld [vmem:[%s710 + $0x111] sm:$0xff]
      %v1499 = vld [vmem:[%s710 + $0x121] sm:$0xff]
      %v1500 = vld [vmem:[%s710 + $0x129] sm:$0xff]
      %v1501 = vld [vmem:[%s710 + $0x139] sm:$0xff]
      %v1502 = vld [vmem:[%s710 + $0x141] sm:$0xff]
      %v1503 = vld [vmem:[%s710 + $0x151] sm:$0xff]
      %v1504 = vld [vmem:[%s710 + $0x159] sm:$0xff]
      %v1505 = vld [vmem:[%s710 + $0x169] sm:$0xff]
      %v1506 = vld [vmem:[%s710 + $0x171] sm:$0xff]
      %v1507 = vld [vmem:[%s1 + $0x4] sm:$0x1]
      %v1508 = vlaneseq
      %v1509 = vshrl.u32 %v1508, 7
      %v1510 = vsub.s32 0, %v1509
      %v1511 = vrot.slane %v1507, %v1510
      %v1512 = vmul.f32 %v1475, %v1511
      %v1513 = vmul.f32 %v1476, %v1511
      %v1514 = vmul.f32 %v1477, %v1511
      %v1515 = vmul.f32 %v1478, %v1511
      %v1516 = vmul.f32 %v1479, %v1511
      %v1517 = vmul.f32 %v1480, %v1511
      %v1518 = vmul.f32 %v1481, %v1511
      %v1519 = vmul.f32 %v1482, %v1511
      %v1520 = vmul.f32 %v1483, %v1511
      %v1521 = vmul.f32 %v1484, %v1511
      %v1522 = vmul.f32 %v1485, %v1511
      %v1523 = vmul.f32 %v1486, %v1511
      %v1524 = vmul.f32 %v1487, %v1511
      %v1525 = vmul.f32 %v1488, %v1511
      %v1526 = vmul.f32 %v1489, %v1511
      %v1527 = vmul.f32 %v1490, %v1511
      %v1528 = vmul.f32 %v1491, %v1511
      %v1529 = vmul.f32 %v1492, %v1511
      %v1530 = vmul.f32 %v1493, %v1511
      %v1531 = vmul.f32 %v1494, %v1511
      %v1532 = vmul.f32 %v1495, %v1511
      %v1533 = vmul.f32 %v1496, %v1511
      %v1534 = vmul.f32 %v1497, %v1511
      %v1535 = vmul.f32 %v1498, %v1511
      %v1536 = vmul.f32 %v1499, %v1511
      %v1537 = vmul.f32 %v1500, %v1511
      %v1538 = vmul.f32 %v1501, %v1511
      %v1539 = vmul.f32 %v1502, %v1511
      %v1540 = vmul.f32 %v1503, %v1511
      %v1541 = vmul.f32 %v1504, %v1511
      %v1542 = vmul.f32 %v1505, %v1511
      %v1543 = vmul.f32 %v1506, %v1511
      %v1544 = vadd.f32 %v1443, %v1512
      %v1545 = vadd.f32 %v1444, %v1513
      %v1546 = vadd.f32 %v1445, %v1514
      %v1547 = vadd.f32 %v1446, %v1515
      %v1548 = vadd.f32 %v1447, %v1516
      %v1549 = vadd.f32 %v1448, %v1517
      %v1550 = vadd.f32 %v1449, %v1518
      %v1551 = vadd.f32 %v1450, %v1519
      %v1552 = vadd.f32 %v1451, %v1520
      %v1553 = vadd.f32 %v1452, %v1521
      %v1554 = vadd.f32 %v1453, %v1522
      %v1555 = vadd.f32 %v1454, %v1523
      %v1556 = vadd.f32 %v1455, %v1524
      %v1557 = vadd.f32 %v1456, %v1525
      %v1558 = vadd.f32 %v1457, %v1526
      %v1559 = vadd.f32 %v1458, %v1527
      %v1560 = vadd.f32 %v1459, %v1528
      %v1561 = vadd.f32 %v1460, %v1529
      %v1562 = vadd.f32 %v1461, %v1530
      %v1563 = vadd.f32 %v1462, %v1531
      %v1564 = vadd.f32 %v1463, %v1532
      %v1565 = vadd.f32 %v1464, %v1533
      %v1566 = vadd.f32 %v1465, %v1534
      %v1567 = vadd.f32 %v1466, %v1535
      %v1568 = vadd.f32 %v1467, %v1536
      %v1569 = vadd.f32 %v1468, %v1537
      %v1570 = vadd.f32 %v1469, %v1538
      %v1571 = vadd.f32 %v1470, %v1539
      %v1572 = vadd.f32 %v1471, %v1540
      %v1573 = vadd.f32 %v1472, %v1541
      %v1574 = vadd.f32 %v1473, %v1542
      %v1575 = vadd.f32 %v1474, %v1543
      %1576 = vst.msk [vmem:[%s750 + $0x1] sm:$0xff] %vm334, %v1544
      %1577 = vst.msk [vmem:[%s750 + $0x9] sm:$0xff] %vm334, %v1545
      %1578 = vst.msk [vmem:[%s750 + $0x19] sm:$0xff] %vm334, %v1546
      %1579 = vst.msk [vmem:[%s750 + $0x21] sm:$0xff] %vm334, %v1547
      %1580 = vst.msk [vmem:[%s750 + $0x31] sm:$0xff] %vm334, %v1548
      %1581 = vst.msk [vmem:[%s750 + $0x39] sm:$0xff] %vm334, %v1549
      %1582 = vst.msk [vmem:[%s750 + $0x49] sm:$0xff] %vm334, %v1550
      %1583 = vst.msk [vmem:[%s750 + $0x51] sm:$0xff] %vm334, %v1551
      %1584 = vst.msk [vmem:[%s750 + $0x61] sm:$0xff] %vm334, %v1552
      %1585 = vst.msk [vmem:[%s750 + $0x69] sm:$0xff] %vm334, %v1553
      %1586 = vst.msk [vmem:[%s750 + $0x79] sm:$0xff] %vm334, %v1554
      %1587 = vst.msk [vmem:[%s750 + $0x81] sm:$0xff] %vm334, %v1555
      %1588 = vst.msk [vmem:[%s750 + $0x91] sm:$0xff] %vm334, %v1556
      %1589 = vst.msk [vmem:[%s750 + $0x99] sm:$0xff] %vm334, %v1557
      %1590 = vst.msk [vmem:[%s750 + $0xa9] sm:$0xff] %vm334, %v1558
      %1591 = vst.msk [vmem:[%s750 + $0xb1] sm:$0xff] %vm334, %v1559
      %1592 = vst.msk [vmem:[%s750 + $0xc1] sm:$0xff] %vm334, %v1560
      %1593 = vst.msk [vmem:[%s750 + $0xc9] sm:$0xff] %vm334, %v1561
      %1594 = vst.msk [vmem:[%s750 + $0xd9] sm:$0xff] %vm334, %v1562
      %1595 = vst.msk [vmem:[%s750 + $0xe1] sm:$0xff] %vm334, %v1563
      %1596 = vst.msk [vmem:[%s750 + $0xf1] sm:$0xff] %vm334, %v1564
      %1597 = vst.msk [vmem:[%s750 + $0xf9] sm:$0xff] %vm334, %v1565
      %1598 = vst.msk [vmem:[%s750 + $0x109] sm:$0xff] %vm334, %v1566
      %1599 = vst.msk [vmem:[%s750 + $0x111] sm:$0xff] %vm334, %v1567
      %1600 = vst.msk [vmem:[%s750 + $0x121] sm:$0xff] %vm334, %v1568
      %1601 = vst.msk [vmem:[%s750 + $0x129] sm:$0xff] %vm334, %v1569
      %1602 = vst.msk [vmem:[%s750 + $0x139] sm:$0xff] %vm334, %v1570
      %1603 = vst.msk [vmem:[%s750 + $0x141] sm:$0xff] %vm334, %v1571
      %1604 = vst.msk [vmem:[%s750 + $0x151] sm:$0xff] %vm334, %v1572
      %1605 = vst.msk [vmem:[%s750 + $0x159] sm:$0xff] %vm334, %v1573
      %1606 = vst.msk [vmem:[%s750 + $0x169] sm:$0xff] %vm334, %v1574
      %1607 = vst.msk [vmem:[%s750 + $0x171] sm:$0xff] %vm334, %v1575
      %v1608 = vld [vmem:[%s750 + $0x1] sm:$0xff]
      %v1609 = vld [vmem:[%s750 + $0x9] sm:$0xff]
      %v1610 = vld [vmem:[%s750 + $0x19] sm:$0xff]
      %v1611 = vld [vmem:[%s750 + $0x21] sm:$0xff]
      %v1612 = vld [vmem:[%s750 + $0x31] sm:$0xff]
      %v1613 = vld [vmem:[%s750 + $0x39] sm:$0xff]
      %v1614 = vld [vmem:[%s750 + $0x49] sm:$0xff]
      %v1615 = vld [vmem:[%s750 + $0x51] sm:$0xff]
      %v1616 = vld [vmem:[%s750 + $0x61] sm:$0xff]
      %v1617 = vld [vmem:[%s750 + $0x69] sm:$0xff]
      %v1618 = vld [vmem:[%s750 + $0x79] sm:$0xff]
      %v1619 = vld [vmem:[%s750 + $0x81] sm:$0xff]
      %v1620 = vld [vmem:[%s750 + $0x91] sm:$0xff]
      %v1621 = vld [vmem:[%s750 + $0x99] sm:$0xff]
      %v1622 = vld [vmem:[%s750 + $0xa9] sm:$0xff]
      %v1623 = vld [vmem:[%s750 + $0xb1] sm:$0xff]
      %v1624 = vld [vmem:[%s750 + $0xc1] sm:$0xff]
      %v1625 = vld [vmem:[%s750 + $0xc9] sm:$0xff]
      %v1626 = vld [vmem:[%s750 + $0xd9] sm:$0xff]
      %v1627 = vld [vmem:[%s750 + $0xe1] sm:$0xff]
      %v1628 = vld [vmem:[%s750 + $0xf1] sm:$0xff]
      %v1629 = vld [vmem:[%s750 + $0xf9] sm:$0xff]
      %v1630 = vld [vmem:[%s750 + $0x109] sm:$0xff]
      %v1631 = vld [vmem:[%s750 + $0x111] sm:$0xff]
      %v1632 = vld [vmem:[%s750 + $0x121] sm:$0xff]
      %v1633 = vld [vmem:[%s750 + $0x129] sm:$0xff]
      %v1634 = vld [vmem:[%s750 + $0x139] sm:$0xff]
      %v1635 = vld [vmem:[%s750 + $0x141] sm:$0xff]
      %v1636 = vld [vmem:[%s750 + $0x151] sm:$0xff]
      %v1637 = vld [vmem:[%s750 + $0x159] sm:$0xff]
      %v1638 = vld [vmem:[%s750 + $0x169] sm:$0xff]
      %v1639 = vld [vmem:[%s750 + $0x171] sm:$0xff]
      %v1640 = vld [vmem:[%s710 + $0x2] sm:$0xff]
      %v1641 = vld [vmem:[%s710 + $0xa] sm:$0xff]
      %v1642 = vld [vmem:[%s710 + $0x1a] sm:$0xff]
      %v1643 = vld [vmem:[%s710 + $0x22] sm:$0xff]
      %v1644 = vld [vmem:[%s710 + $0x32] sm:$0xff]
      %v1645 = vld [vmem:[%s710 + $0x3a] sm:$0xff]
      %v1646 = vld [vmem:[%s710 + $0x4a] sm:$0xff]
      %v1647 = vld [vmem:[%s710 + $0x52] sm:$0xff]
      %v1648 = vld [vmem:[%s710 + $0x62] sm:$0xff]
      %v1649 = vld [vmem:[%s710 + $0x6a] sm:$0xff]
      %v1650 = vld [vmem:[%s710 + $0x7a] sm:$0xff]
      %v1651 = vld [vmem:[%s710 + $0x82] sm:$0xff]
      %v1652 = vld [vmem:[%s710 + $0x92] sm:$0xff]
      %v1653 = vld [vmem:[%s710 + $0x9a] sm:$0xff]
      %v1654 = vld [vmem:[%s710 + $0xaa] sm:$0xff]
      %v1655 = vld [vmem:[%s710 + $0xb2] sm:$0xff]
      %v1656 = vld [vmem:[%s710 + $0xc2] sm:$0xff]
      %v1657 = vld [vmem:[%s710 + $0xca] sm:$0xff]
      %v1658 = vld [vmem:[%s710 + $0xda] sm:$0xff]
      %v1659 = vld [vmem:[%s710 + $0xe2] sm:$0xff]
      %v1660 = vld [vmem:[%s710 + $0xf2] sm:$0xff]
      %v1661 = vld [vmem:[%s710 + $0xfa] sm:$0xff]
      %v1662 = vld [vmem:[%s710 + $0x10a] sm:$0xff]
      %v1663 = vld [vmem:[%s710 + $0x112] sm:$0xff]
      %v1664 = vld [vmem:[%s710 + $0x122] sm:$0xff]
      %v1665 = vld [vmem:[%s710 + $0x12a] sm:$0xff]
      %v1666 = vld [vmem:[%s710 + $0x13a] sm:$0xff]
      %v1667 = vld [vmem:[%s710 + $0x142] sm:$0xff]
      %v1668 = vld [vmem:[%s710 + $0x152] sm:$0xff]
      %v1669 = vld [vmem:[%s710 + $0x15a] sm:$0xff]
      %v1670 = vld [vmem:[%s710 + $0x16a] sm:$0xff]
      %v1671 = vld [vmem:[%s710 + $0x172] sm:$0xff]
      %v1672 = vld [vmem:[%s1 + $0x5] sm:$0x1]
      %v1673 = vlaneseq
      %v1674 = vshrl.u32 %v1673, 7
      %v1675 = vsub.s32 0, %v1674
      %v1676 = vrot.slane %v1672, %v1675
      %v1677 = vmul.f32 %v1640, %v1676
      %v1678 = vmul.f32 %v1641, %v1676
      %v1679 = vmul.f32 %v1642, %v1676
      %v1680 = vmul.f32 %v1643, %v1676
      %v1681 = vmul.f32 %v1644, %v1676
      %v1682 = vmul.f32 %v1645, %v1676
      %v1683 = vmul.f32 %v1646, %v1676
      %v1684 = vmul.f32 %v1647, %v1676
      %v1685 = vmul.f32 %v1648, %v1676
      %v1686 = vmul.f32 %v1649, %v1676
      %v1687 = vmul.f32 %v1650, %v1676
      %v1688 = vmul.f32 %v1651, %v1676
      %v1689 = vmul.f32 %v1652, %v1676
      %v1690 = vmul.f32 %v1653, %v1676
      %v1691 = vmul.f32 %v1654, %v1676
      %v1692 = vmul.f32 %v1655, %v1676
      %v1693 = vmul.f32 %v1656, %v1676
      %v1694 = vmul.f32 %v1657, %v1676
      %v1695 = vmul.f32 %v1658, %v1676
      %v1696 = vmul.f32 %v1659, %v1676
      %v1697 = vmul.f32 %v1660, %v1676
      %v1698 = vmul.f32 %v1661, %v1676
      %v1699 = vmul.f32 %v1662, %v1676
      %v1700 = vmul.f32 %v1663, %v1676
      %v1701 = vmul.f32 %v1664, %v1676
      %v1702 = vmul.f32 %v1665, %v1676
      %v1703 = vmul.f32 %v1666, %v1676
      %v1704 = vmul.f32 %v1667, %v1676
      %v1705 = vmul.f32 %v1668, %v1676
      %v1706 = vmul.f32 %v1669, %v1676
      %v1707 = vmul.f32 %v1670, %v1676
      %v1708 = vmul.f32 %v1671, %v1676
      %v1709 = vadd.f32 %v1608, %v1677
      %v1710 = vadd.f32 %v1609, %v1678
      %v1711 = vadd.f32 %v1610, %v1679
      %v1712 = vadd.f32 %v1611, %v1680
      %v1713 = vadd.f32 %v1612, %v1681
      %v1714 = vadd.f32 %v1613, %v1682
      %v1715 = vadd.f32 %v1614, %v1683
      %v1716 = vadd.f32 %v1615, %v1684
      %v1717 = vadd.f32 %v1616, %v1685
      %v1718 = vadd.f32 %v1617, %v1686
      %v1719 = vadd.f32 %v1618, %v1687
      %v1720 = vadd.f32 %v1619, %v1688
      %v1721 = vadd.f32 %v1620, %v1689
      %v1722 = vadd.f32 %v1621, %v1690
      %v1723 = vadd.f32 %v1622, %v1691
      %v1724 = vadd.f32 %v1623, %v1692
      %v1725 = vadd.f32 %v1624, %v1693
      %v1726 = vadd.f32 %v1625, %v1694
      %v1727 = vadd.f32 %v1626, %v1695
      %v1728 = vadd.f32 %v1627, %v1696
      %v1729 = vadd.f32 %v1628, %v1697
      %v1730 = vadd.f32 %v1629, %v1698
      %v1731 = vadd.f32 %v1630, %v1699
      %v1732 = vadd.f32 %v1631, %v1700
      %v1733 = vadd.f32 %v1632, %v1701
      %v1734 = vadd.f32 %v1633, %v1702
      %v1735 = vadd.f32 %v1634, %v1703
      %v1736 = vadd.f32 %v1635, %v1704
      %v1737 = vadd.f32 %v1636, %v1705
      %v1738 = vadd.f32 %v1637, %v1706
      %v1739 = vadd.f32 %v1638, %v1707
      %v1740 = vadd.f32 %v1639, %v1708
      %1741 = vst.msk [vmem:[%s750 + $0x1] sm:$0xff] %vm334, %v1709
      %1742 = vst.msk [vmem:[%s750 + $0x9] sm:$0xff] %vm334, %v1710
      %1743 = vst.msk [vmem:[%s750 + $0x19] sm:$0xff] %vm334, %v1711
      %1744 = vst.msk [vmem:[%s750 + $0x21] sm:$0xff] %vm334, %v1712
      %1745 = vst.msk [vmem:[%s750 + $0x31] sm:$0xff] %vm334, %v1713
      %1746 = vst.msk [vmem:[%s750 + $0x39] sm:$0xff] %vm334, %v1714
      %1747 = vst.msk [vmem:[%s750 + $0x49] sm:$0xff] %vm334, %v1715
      %1748 = vst.msk [vmem:[%s750 + $0x51] sm:$0xff] %vm334, %v1716
      %1749 = vst.msk [vmem:[%s750 + $0x61] sm:$0xff] %vm334, %v1717
      %1750 = vst.msk [vmem:[%s750 + $0x69] sm:$0xff] %vm334, %v1718
      %1751 = vst.msk [vmem:[%s750 + $0x79] sm:$0xff] %vm334, %v1719
      %1752 = vst.msk [vmem:[%s750 + $0x81] sm:$0xff] %vm334, %v1720
      %1753 = vst.msk [vmem:[%s750 + $0x91] sm:$0xff] %vm334, %v1721
      %1754 = vst.msk [vmem:[%s750 + $0x99] sm:$0xff] %vm334, %v1722
      %1755 = vst.msk [vmem:[%s750 + $0xa9] sm:$0xff] %vm334, %v1723
      %1756 = vst.msk [vmem:[%s750 + $0xb1] sm:$0xff] %vm334, %v1724
      %1757 = vst.msk [vmem:[%s750 + $0xc1] sm:$0xff] %vm334, %v1725
      %1758 = vst.msk [vmem:[%s750 + $0xc9] sm:$0xff] %vm334, %v1726
      %1759 = vst.msk [vmem:[%s750 + $0xd9] sm:$0xff] %vm334, %v1727
      %1760 = vst.msk [vmem:[%s750 + $0xe1] sm:$0xff] %vm334, %v1728
      %1761 = vst.msk [vmem:[%s750 + $0xf1] sm:$0xff] %vm334, %v1729
      %1762 = vst.msk [vmem:[%s750 + $0xf9] sm:$0xff] %vm334, %v1730
      %1763 = vst.msk [vmem:[%s750 + $0x109] sm:$0xff] %vm334, %v1731
      %1764 = vst.msk [vmem:[%s750 + $0x111] sm:$0xff] %vm334, %v1732
      %1765 = vst.msk [vmem:[%s750 + $0x121] sm:$0xff] %vm334, %v1733
      %1766 = vst.msk [vmem:[%s750 + $0x129] sm:$0xff] %vm334, %v1734
      %1767 = vst.msk [vmem:[%s750 + $0x139] sm:$0xff] %vm334, %v1735
      %1768 = vst.msk [vmem:[%s750 + $0x141] sm:$0xff] %vm334, %v1736
      %1769 = vst.msk [vmem:[%s750 + $0x151] sm:$0xff] %vm334, %v1737
      %1770 = vst.msk [vmem:[%s750 + $0x159] sm:$0xff] %vm334, %v1738
      %1771 = vst.msk [vmem:[%s750 + $0x169] sm:$0xff] %vm334, %v1739
      %1772 = vst.msk [vmem:[%s750 + $0x171] sm:$0xff] %vm334, %v1740
      %v1773 = vld [vmem:[%s750 + $0x1] sm:$0xff]
      %v1774 = vld [vmem:[%s750 + $0x9] sm:$0xff]
      %v1775 = vld [vmem:[%s750 + $0x19] sm:$0xff]
      %v1776 = vld [vmem:[%s750 + $0x21] sm:$0xff]
      %v1777 = vld [vmem:[%s750 + $0x31] sm:$0xff]
      %v1778 = vld [vmem:[%s750 + $0x39] sm:$0xff]
      %v1779 = vld [vmem:[%s750 + $0x49] sm:$0xff]
      %v1780 = vld [vmem:[%s750 + $0x51] sm:$0xff]
      %v1781 = vld [vmem:[%s750 + $0x61] sm:$0xff]
      %v1782 = vld [vmem:[%s750 + $0x69] sm:$0xff]
      %v1783 = vld [vmem:[%s750 + $0x79] sm:$0xff]
      %v1784 = vld [vmem:[%s750 + $0x81] sm:$0xff]
      %v1785 = vld [vmem:[%s750 + $0x91] sm:$0xff]
      %v1786 = vld [vmem:[%s750 + $0x99] sm:$0xff]
      %v1787 = vld [vmem:[%s750 + $0xa9] sm:$0xff]
      %v1788 = vld [vmem:[%s750 + $0xb1] sm:$0xff]
      %v1789 = vld [vmem:[%s750 + $0xc1] sm:$0xff]
      %v1790 = vld [vmem:[%s750 + $0xc9] sm:$0xff]
      %v1791 = vld [vmem:[%s750 + $0xd9] sm:$0xff]
      %v1792 = vld [vmem:[%s750 + $0xe1] sm:$0xff]
      %v1793 = vld [vmem:[%s750 + $0xf1] sm:$0xff]
      %v1794 = vld [vmem:[%s750 + $0xf9] sm:$0xff]
      %v1795 = vld [vmem:[%s750 + $0x109] sm:$0xff]
      %v1796 = vld [vmem:[%s750 + $0x111] sm:$0xff]
      %v1797 = vld [vmem:[%s750 + $0x121] sm:$0xff]
      %v1798 = vld [vmem:[%s750 + $0x129] sm:$0xff]
      %v1799 = vld [vmem:[%s750 + $0x139] sm:$0xff]
      %v1800 = vld [vmem:[%s750 + $0x141] sm:$0xff]
      %v1801 = vld [vmem:[%s750 + $0x151] sm:$0xff]
      %v1802 = vld [vmem:[%s750 + $0x159] sm:$0xff]
      %v1803 = vld [vmem:[%s750 + $0x169] sm:$0xff]
      %v1804 = vld [vmem:[%s750 + $0x171] sm:$0xff]
      %s1805 = scalar_lea.vmem [#allocation2], 48
      %v1806 = vld [vmem:[%s1805] sm:$0xff]
      %v1807 = vld [vmem:[%s1805 + $0x8] sm:$0xff]
      %v1808 = vld [vmem:[%s1805 + $0x18] sm:$0xff]
      %v1809 = vld [vmem:[%s1805 + $0x20] sm:$0xff]
      %v1810 = vld [vmem:[%s1805 + $0x30] sm:$0xff]
      %v1811 = vld [vmem:[%s1805 + $0x38] sm:$0xff]
      %v1812 = vld [vmem:[%s1805 + $0x48] sm:$0xff]
      %v1813 = vld [vmem:[%s1805 + $0x50] sm:$0xff]
      %v1814 = vld [vmem:[%s1805 + $0x60] sm:$0xff]
      %v1815 = vld [vmem:[%s1805 + $0x68] sm:$0xff]
      %v1816 = vld [vmem:[%s1805 + $0x78] sm:$0xff]
      %v1817 = vld [vmem:[%s1805 + $0x80] sm:$0xff]
      %v1818 = vld [vmem:[%s1805 + $0x90] sm:$0xff]
      %v1819 = vld [vmem:[%s1805 + $0x98] sm:$0xff]
      %v1820 = vld [vmem:[%s1805 + $0xa8] sm:$0xff]
      %v1821 = vld [vmem:[%s1805 + $0xb0] sm:$0xff]
      %v1822 = vld [vmem:[%s1805 + $0xc0] sm:$0xff]
      %v1823 = vld [vmem:[%s1805 + $0xc8] sm:$0xff]
      %v1824 = vld [vmem:[%s1805 + $0xd8] sm:$0xff]
      %v1825 = vld [vmem:[%s1805 + $0xe0] sm:$0xff]
      %v1826 = vld [vmem:[%s1805 + $0xf0] sm:$0xff]
      %v1827 = vld [vmem:[%s1805 + $0xf8] sm:$0xff]
      %v1828 = vld [vmem:[%s1805 + $0x108] sm:$0xff]
      %v1829 = vld [vmem:[%s1805 + $0x110] sm:$0xff]
      %v1830 = vld [vmem:[%s1805 + $0x120] sm:$0xff]
      %v1831 = vld [vmem:[%s1805 + $0x128] sm:$0xff]
      %v1832 = vld [vmem:[%s1805 + $0x138] sm:$0xff]
      %v1833 = vld [vmem:[%s1805 + $0x140] sm:$0xff]
      %v1834 = vld [vmem:[%s1805 + $0x150] sm:$0xff]
      %v1835 = vld [vmem:[%s1805 + $0x158] sm:$0xff]
      %v1836 = vld [vmem:[%s1805 + $0x168] sm:$0xff]
      %v1837 = vld [vmem:[%s1805 + $0x170] sm:$0xff]
      %v1838 = vld [vmem:[%s1 + $0x6] sm:$0x1]
      %v1839 = vlaneseq
      %v1840 = vshrl.u32 %v1839, 7
      %v1841 = vsub.s32 0, %v1840
      %v1842 = vrot.slane %v1838, %v1841
      %v1843 = vmul.f32 %v1806, %v1842
      %v1844 = vmul.f32 %v1807, %v1842
      %v1845 = vmul.f32 %v1808, %v1842
      %v1846 = vmul.f32 %v1809, %v1842
      %v1847 = vmul.f32 %v1810, %v1842
      %v1848 = vmul.f32 %v1811, %v1842
      %v1849 = vmul.f32 %v1812, %v1842
      %v1850 = vmul.f32 %v1813, %v1842
      %v1851 = vmul.f32 %v1814, %v1842
      %v1852 = vmul.f32 %v1815, %v1842
      %v1853 = vmul.f32 %v1816, %v1842
      %v1854 = vmul.f32 %v1817, %v1842
      %v1855 = vmul.f32 %v1818, %v1842
      %v1856 = vmul.f32 %v1819, %v1842
      %v1857 = vmul.f32 %v1820, %v1842
      %v1858 = vmul.f32 %v1821, %v1842
      %v1859 = vmul.f32 %v1822, %v1842
      %v1860 = vmul.f32 %v1823, %v1842
      %v1861 = vmul.f32 %v1824, %v1842
      %v1862 = vmul.f32 %v1825, %v1842
      %v1863 = vmul.f32 %v1826, %v1842
      %v1864 = vmul.f32 %v1827, %v1842
      %v1865 = vmul.f32 %v1828, %v1842
      %v1866 = vmul.f32 %v1829, %v1842
      %v1867 = vmul.f32 %v1830, %v1842
      %v1868 = vmul.f32 %v1831, %v1842
      %v1869 = vmul.f32 %v1832, %v1842
      %v1870 = vmul.f32 %v1833, %v1842
      %v1871 = vmul.f32 %v1834, %v1842
      %v1872 = vmul.f32 %v1835, %v1842
      %v1873 = vmul.f32 %v1836, %v1842
      %v1874 = vmul.f32 %v1837, %v1842
      %v1875 = vadd.f32 %v1773, %v1843
      %v1876 = vadd.f32 %v1774, %v1844
      %v1877 = vadd.f32 %v1775, %v1845
      %v1878 = vadd.f32 %v1776, %v1846
      %v1879 = vadd.f32 %v1777, %v1847
      %v1880 = vadd.f32 %v1778, %v1848
      %v1881 = vadd.f32 %v1779, %v1849
      %v1882 = vadd.f32 %v1780, %v1850
      %v1883 = vadd.f32 %v1781, %v1851
      %v1884 = vadd.f32 %v1782, %v1852
      %v1885 = vadd.f32 %v1783, %v1853
      %v1886 = vadd.f32 %v1784, %v1854
      %v1887 = vadd.f32 %v1785, %v1855
      %v1888 = vadd.f32 %v1786, %v1856
      %v1889 = vadd.f32 %v1787, %v1857
      %v1890 = vadd.f32 %v1788, %v1858
      %v1891 = vadd.f32 %v1789, %v1859
      %v1892 = vadd.f32 %v1790, %v1860
      %v1893 = vadd.f32 %v1791, %v1861
      %v1894 = vadd.f32 %v1792, %v1862
      %v1895 = vadd.f32 %v1793, %v1863
      %v1896 = vadd.f32 %v1794, %v1864
      %v1897 = vadd.f32 %v1795, %v1865
      %v1898 = vadd.f32 %v1796, %v1866
      %v1899 = vadd.f32 %v1797, %v1867
      %v1900 = vadd.f32 %v1798, %v1868
      %v1901 = vadd.f32 %v1799, %v1869
      %v1902 = vadd.f32 %v1800, %v1870
      %v1903 = vadd.f32 %v1801, %v1871
      %v1904 = vadd.f32 %v1802, %v1872
      %v1905 = vadd.f32 %v1803, %v1873
      %v1906 = vadd.f32 %v1804, %v1874
      %1907 = vst.msk [vmem:[%s750 + $0x1] sm:$0xff] %vm334, %v1875
      %1908 = vst.msk [vmem:[%s750 + $0x9] sm:$0xff] %vm334, %v1876
      %1909 = vst.msk [vmem:[%s750 + $0x19] sm:$0xff] %vm334, %v1877
      %1910 = vst.msk [vmem:[%s750 + $0x21] sm:$0xff] %vm334, %v1878
      %1911 = vst.msk [vmem:[%s750 + $0x31] sm:$0xff] %vm334, %v1879
      %1912 = vst.msk [vmem:[%s750 + $0x39] sm:$0xff] %vm334, %v1880
      %1913 = vst.msk [vmem:[%s750 + $0x49] sm:$0xff] %vm334, %v1881
      %1914 = vst.msk [vmem:[%s750 + $0x51] sm:$0xff] %vm334, %v1882
      %1915 = vst.msk [vmem:[%s750 + $0x61] sm:$0xff] %vm334, %v1883
      %1916 = vst.msk [vmem:[%s750 + $0x69] sm:$0xff] %vm334, %v1884
      %1917 = vst.msk [vmem:[%s750 + $0x79] sm:$0xff] %vm334, %v1885
      %1918 = vst.msk [vmem:[%s750 + $0x81] sm:$0xff] %vm334, %v1886
      %1919 = vst.msk [vmem:[%s750 + $0x91] sm:$0xff] %vm334, %v1887
      %1920 = vst.msk [vmem:[%s750 + $0x99] sm:$0xff] %vm334, %v1888
      %1921 = vst.msk [vmem:[%s750 + $0xa9] sm:$0xff] %vm334, %v1889
      %1922 = vst.msk [vmem:[%s750 + $0xb1] sm:$0xff] %vm334, %v1890
      %1923 = vst.msk [vmem:[%s750 + $0xc1] sm:$0xff] %vm334, %v1891
      %1924 = vst.msk [vmem:[%s750 + $0xc9] sm:$0xff] %vm334, %v1892
      %1925 = vst.msk [vmem:[%s750 + $0xd9] sm:$0xff] %vm334, %v1893
      %1926 = vst.msk [vmem:[%s750 + $0xe1] sm:$0xff] %vm334, %v1894
      %1927 = vst.msk [vmem:[%s750 + $0xf1] sm:$0xff] %vm334, %v1895
      %1928 = vst.msk [vmem:[%s750 + $0xf9] sm:$0xff] %vm334, %v1896
      %1929 = vst.msk [vmem:[%s750 + $0x109] sm:$0xff] %vm334, %v1897
      %1930 = vst.msk [vmem:[%s750 + $0x111] sm:$0xff] %vm334, %v1898
      %1931 = vst.msk [vmem:[%s750 + $0x121] sm:$0xff] %vm334, %v1899
      %1932 = vst.msk [vmem:[%s750 + $0x129] sm:$0xff] %vm334, %v1900
      %1933 = vst.msk [vmem:[%s750 + $0x139] sm:$0xff] %vm334, %v1901
      %1934 = vst.msk [vmem:[%s750 + $0x141] sm:$0xff] %vm334, %v1902
      %1935 = vst.msk [vmem:[%s750 + $0x151] sm:$0xff] %vm334, %v1903
      %1936 = vst.msk [vmem:[%s750 + $0x159] sm:$0xff] %vm334, %v1904
      %1937 = vst.msk [vmem:[%s750 + $0x169] sm:$0xff] %vm334, %v1905
      %1938 = vst.msk [vmem:[%s750 + $0x171] sm:$0xff] %vm334, %v1906
      %v1939 = vld [vmem:[%s750 + $0x1] sm:$0xff]
      %v1940 = vld [vmem:[%s750 + $0x9] sm:$0xff]
      %v1941 = vld [vmem:[%s750 + $0x19] sm:$0xff]
      %v1942 = vld [vmem:[%s750 + $0x21] sm:$0xff]
      %v1943 = vld [vmem:[%s750 + $0x31] sm:$0xff]
      %v1944 = vld [vmem:[%s750 + $0x39] sm:$0xff]
      %v1945 = vld [vmem:[%s750 + $0x49] sm:$0xff]
      %v1946 = vld [vmem:[%s750 + $0x51] sm:$0xff]
      %v1947 = vld [vmem:[%s750 + $0x61] sm:$0xff]
      %v1948 = vld [vmem:[%s750 + $0x69] sm:$0xff]
      %v1949 = vld [vmem:[%s750 + $0x79] sm:$0xff]
      %v1950 = vld [vmem:[%s750 + $0x81] sm:$0xff]
      %v1951 = vld [vmem:[%s750 + $0x91] sm:$0xff]
      %v1952 = vld [vmem:[%s750 + $0x99] sm:$0xff]
      %v1953 = vld [vmem:[%s750 + $0xa9] sm:$0xff]
      %v1954 = vld [vmem:[%s750 + $0xb1] sm:$0xff]
      %v1955 = vld [vmem:[%s750 + $0xc1] sm:$0xff]
      %v1956 = vld [vmem:[%s750 + $0xc9] sm:$0xff]
      %v1957 = vld [vmem:[%s750 + $0xd9] sm:$0xff]
      %v1958 = vld [vmem:[%s750 + $0xe1] sm:$0xff]
      %v1959 = vld [vmem:[%s750 + $0xf1] sm:$0xff]
      %v1960 = vld [vmem:[%s750 + $0xf9] sm:$0xff]
      %v1961 = vld [vmem:[%s750 + $0x109] sm:$0xff]
      %v1962 = vld [vmem:[%s750 + $0x111] sm:$0xff]
      %v1963 = vld [vmem:[%s750 + $0x121] sm:$0xff]
      %v1964 = vld [vmem:[%s750 + $0x129] sm:$0xff]
      %v1965 = vld [vmem:[%s750 + $0x139] sm:$0xff]
      %v1966 = vld [vmem:[%s750 + $0x141] sm:$0xff]
      %v1967 = vld [vmem:[%s750 + $0x151] sm:$0xff]
      %v1968 = vld [vmem:[%s750 + $0x159] sm:$0xff]
      %v1969 = vld [vmem:[%s750 + $0x169] sm:$0xff]
      %v1970 = vld [vmem:[%s750 + $0x171] sm:$0xff]
      %v1971 = vld [vmem:[%s1805 + $0x1] sm:$0xff]
      %v1972 = vld [vmem:[%s1805 + $0x9] sm:$0xff]
      %v1973 = vld [vmem:[%s1805 + $0x19] sm:$0xff]
      %v1974 = vld [vmem:[%s1805 + $0x21] sm:$0xff]
      %v1975 = vld [vmem:[%s1805 + $0x31] sm:$0xff]
      %v1976 = vld [vmem:[%s1805 + $0x39] sm:$0xff]
      %v1977 = vld [vmem:[%s1805 + $0x49] sm:$0xff]
      %v1978 = vld [vmem:[%s1805 + $0x51] sm:$0xff]
      %v1979 = vld [vmem:[%s1805 + $0x61] sm:$0xff]
      %v1980 = vld [vmem:[%s1805 + $0x69] sm:$0xff]
      %v1981 = vld [vmem:[%s1805 + $0x79] sm:$0xff]
      %v1982 = vld [vmem:[%s1805 + $0x81] sm:$0xff]
      %v1983 = vld [vmem:[%s1805 + $0x91] sm:$0xff]
      %v1984 = vld [vmem:[%s1805 + $0x99] sm:$0xff]
      %v1985 = vld [vmem:[%s1805 + $0xa9] sm:$0xff]
      %v1986 = vld [vmem:[%s1805 + $0xb1] sm:$0xff]
      %v1987 = vld [vmem:[%s1805 + $0xc1] sm:$0xff]
      %v1988 = vld [vmem:[%s1805 + $0xc9] sm:$0xff]
      %v1989 = vld [vmem:[%s1805 + $0xd9] sm:$0xff]
      %v1990 = vld [vmem:[%s1805 + $0xe1] sm:$0xff]
      %v1991 = vld [vmem:[%s1805 + $0xf1] sm:$0xff]
      %v1992 = vld [vmem:[%s1805 + $0xf9] sm:$0xff]
      %v1993 = vld [vmem:[%s1805 + $0x109] sm:$0xff]
      %v1994 = vld [vmem:[%s1805 + $0x111] sm:$0xff]
      %v1995 = vld [vmem:[%s1805 + $0x121] sm:$0xff]
      %v1996 = vld [vmem:[%s1805 + $0x129] sm:$0xff]
      %v1997 = vld [vmem:[%s1805 + $0x139] sm:$0xff]
      %v1998 = vld [vmem:[%s1805 + $0x141] sm:$0xff]
      %v1999 = vld [vmem:[%s1805 + $0x151] sm:$0xff]
      %v2000 = vld [vmem:[%s1805 + $0x159] sm:$0xff]
      %v2001 = vld [vmem:[%s1805 + $0x169] sm:$0xff]
      %v2002 = vld [vmem:[%s1805 + $0x171] sm:$0xff]
      %v2003 = vld [vmem:[%s1 + $0x7] sm:$0x1]
      %v2004 = vlaneseq
      %v2005 = vshrl.u32 %v2004, 7
      %v2006 = vsub.s32 0, %v2005
      %v2007 = vrot.slane %v2003, %v2006
      %v2008 = vmul.f32 %v1971, %v2007
      %v2009 = vmul.f32 %v1972, %v2007
      %v2010 = vmul.f32 %v1973, %v2007
      %v2011 = vmul.f32 %v1974, %v2007
      %v2012 = vmul.f32 %v1975, %v2007
      %v2013 = vmul.f32 %v1976, %v2007
      %v2014 = vmul.f32 %v1977, %v2007
      %v2015 = vmul.f32 %v1978, %v2007
      %v2016 = vmul.f32 %v1979, %v2007
      %v2017 = vmul.f32 %v1980, %v2007
      %v2018 = vmul.f32 %v1981, %v2007
      %v2019 = vmul.f32 %v1982, %v2007
      %v2020 = vmul.f32 %v1983, %v2007
      %v2021 = vmul.f32 %v1984, %v2007
      %v2022 = vmul.f32 %v1985, %v2007
      %v2023 = vmul.f32 %v1986, %v2007
      %v2024 = vmul.f32 %v1987, %v2007
      %v2025 = vmul.f32 %v1988, %v2007
      %v2026 = vmul.f32 %v1989, %v2007
      %v2027 = vmul.f32 %v1990, %v2007
      %v2028 = vmul.f32 %v1991, %v2007
      %v2029 = vmul.f32 %v1992, %v2007
      %v2030 = vmul.f32 %v1993, %v2007
      %v2031 = vmul.f32 %v1994, %v2007
      %v2032 = vmul.f32 %v1995, %v2007
      %v2033 = vmul.f32 %v1996, %v2007
      %v2034 = vmul.f32 %v1997, %v2007
      %v2035 = vmul.f32 %v1998, %v2007
      %v2036 = vmul.f32 %v1999, %v2007
      %v2037 = vmul.f32 %v2000, %v2007
      %v2038 = vmul.f32 %v2001, %v2007
      %v2039 = vmul.f32 %v2002, %v2007
      %v2040 = vadd.f32 %v1939, %v2008
      %v2041 = vadd.f32 %v1940, %v2009
      %v2042 = vadd.f32 %v1941, %v2010
      %v2043 = vadd.f32 %v1942, %v2011
      %v2044 = vadd.f32 %v1943, %v2012
      %v2045 = vadd.f32 %v1944, %v2013
      %v2046 = vadd.f32 %v1945, %v2014
      %v2047 = vadd.f32 %v1946, %v2015
      %v2048 = vadd.f32 %v1947, %v2016
      %v2049 = vadd.f32 %v1948, %v2017
      %v2050 = vadd.f32 %v1949, %v2018
      %v2051 = vadd.f32 %v1950, %v2019
      %v2052 = vadd.f32 %v1951, %v2020
      %v2053 = vadd.f32 %v1952, %v2021
      %v2054 = vadd.f32 %v1953, %v2022
      %v2055 = vadd.f32 %v1954, %v2023
      %v2056 = vadd.f32 %v1955, %v2024
      %v2057 = vadd.f32 %v1956, %v2025
      %v2058 = vadd.f32 %v1957, %v2026
      %v2059 = vadd.f32 %v1958, %v2027
      %v2060 = vadd.f32 %v1959, %v2028
      %v2061 = vadd.f32 %v1960, %v2029
      %v2062 = vadd.f32 %v1961, %v2030
      %v2063 = vadd.f32 %v1962, %v2031
      %v2064 = vadd.f32 %v1963, %v2032
      %v2065 = vadd.f32 %v1964, %v2033
      %v2066 = vadd.f32 %v1965, %v2034
      %v2067 = vadd.f32 %v1966, %v2035
      %v2068 = vadd.f32 %v1967, %v2036
      %v2069 = vadd.f32 %v1968, %v2037
      %v2070 = vadd.f32 %v1969, %v2038
      %v2071 = vadd.f32 %v1970, %v2039
      %2072 = vst.msk [vmem:[%s750 + $0x1] sm:$0xff] %vm334, %v2040
      %2073 = vst.msk [vmem:[%s750 + $0x9] sm:$0xff] %vm334, %v2041
      %2074 = vst.msk [vmem:[%s750 + $0x19] sm:$0xff] %vm334, %v2042
      %2075 = vst.msk [vmem:[%s750 + $0x21] sm:$0xff] %vm334, %v2043
      %2076 = vst.msk [vmem:[%s750 + $0x31] sm:$0xff] %vm334, %v2044
      %2077 = vst.msk [vmem:[%s750 + $0x39] sm:$0xff] %vm334, %v2045
      %2078 = vst.msk [vmem:[%s750 + $0x49] sm:$0xff] %vm334, %v2046
      %2079 = vst.msk [vmem:[%s750 + $0x51] sm:$0xff] %vm334, %v2047
      %2080 = vst.msk [vmem:[%s750 + $0x61] sm:$0xff] %vm334, %v2048
      %2081 = vst.msk [vmem:[%s750 + $0x69] sm:$0xff] %vm334, %v2049
      %2082 = vst.msk [vmem:[%s750 + $0x79] sm:$0xff] %vm334, %v2050
      %2083 = vst.msk [vmem:[%s750 + $0x81] sm:$0xff] %vm334, %v2051
      %2084 = vst.msk [vmem:[%s750 + $0x91] sm:$0xff] %vm334, %v2052
      %2085 = vst.msk [vmem:[%s750 + $0x99] sm:$0xff] %vm334, %v2053
      %2086 = vst.msk [vmem:[%s750 + $0xa9] sm:$0xff] %vm334, %v2054
      %2087 = vst.msk [vmem:[%s750 + $0xb1] sm:$0xff] %vm334, %v2055
      %2088 = vst.msk [vmem:[%s750 + $0xc1] sm:$0xff] %vm334, %v2056
      %2089 = vst.msk [vmem:[%s750 + $0xc9] sm:$0xff] %vm334, %v2057
      %2090 = vst.msk [vmem:[%s750 + $0xd9] sm:$0xff] %vm334, %v2058
      %2091 = vst.msk [vmem:[%s750 + $0xe1] sm:$0xff] %vm334, %v2059
      %2092 = vst.msk [vmem:[%s750 + $0xf1] sm:$0xff] %vm334, %v2060
      %2093 = vst.msk [vmem:[%s750 + $0xf9] sm:$0xff] %vm334, %v2061
      %2094 = vst.msk [vmem:[%s750 + $0x109] sm:$0xff] %vm334, %v2062
      %2095 = vst.msk [vmem:[%s750 + $0x111] sm:$0xff] %vm334, %v2063
      %2096 = vst.msk [vmem:[%s750 + $0x121] sm:$0xff] %vm334, %v2064
      %2097 = vst.msk [vmem:[%s750 + $0x129] sm:$0xff] %vm334, %v2065
      %2098 = vst.msk [vmem:[%s750 + $0x139] sm:$0xff] %vm334, %v2066
      %2099 = vst.msk [vmem:[%s750 + $0x141] sm:$0xff] %vm334, %v2067
      %2100 = vst.msk [vmem:[%s750 + $0x151] sm:$0xff] %vm334, %v2068
      %2101 = vst.msk [vmem:[%s750 + $0x159] sm:$0xff] %vm334, %v2069
      %2102 = vst.msk [vmem:[%s750 + $0x169] sm:$0xff] %vm334, %v2070
      %2103 = vst.msk [vmem:[%s750 + $0x171] sm:$0xff] %vm334, %v2071
      %v2104 = vld [vmem:[%s750 + $0x1] sm:$0xff]
      %v2105 = vld [vmem:[%s750 + $0x9] sm:$0xff]
      %v2106 = vld [vmem:[%s750 + $0x19] sm:$0xff]
      %v2107 = vld [vmem:[%s750 + $0x21] sm:$0xff]
      %v2108 = vld [vmem:[%s750 + $0x31] sm:$0xff]
      %v2109 = vld [vmem:[%s750 + $0x39] sm:$0xff]
      %v2110 = vld [vmem:[%s750 + $0x49] sm:$0xff]
      %v2111 = vld [vmem:[%s750 + $0x51] sm:$0xff]
      %v2112 = vld [vmem:[%s750 + $0x61] sm:$0xff]
      %v2113 = vld [vmem:[%s750 + $0x69] sm:$0xff]
      %v2114 = vld [vmem:[%s750 + $0x79] sm:$0xff]
      %v2115 = vld [vmem:[%s750 + $0x81] sm:$0xff]
      %v2116 = vld [vmem:[%s750 + $0x91] sm:$0xff]
      %v2117 = vld [vmem:[%s750 + $0x99] sm:$0xff]
      %v2118 = vld [vmem:[%s750 + $0xa9] sm:$0xff]
      %v2119 = vld [vmem:[%s750 + $0xb1] sm:$0xff]
      %v2120 = vld [vmem:[%s750 + $0xc1] sm:$0xff]
      %v2121 = vld [vmem:[%s750 + $0xc9] sm:$0xff]
      %v2122 = vld [vmem:[%s750 + $0xd9] sm:$0xff]
      %v2123 = vld [vmem:[%s750 + $0xe1] sm:$0xff]
      %v2124 = vld [vmem:[%s750 + $0xf1] sm:$0xff]
      %v2125 = vld [vmem:[%s750 + $0xf9] sm:$0xff]
      %v2126 = vld [vmem:[%s750 + $0x109] sm:$0xff]
      %v2127 = vld [vmem:[%s750 + $0x111] sm:$0xff]
      %v2128 = vld [vmem:[%s750 + $0x121] sm:$0xff]
      %v2129 = vld [vmem:[%s750 + $0x129] sm:$0xff]
      %v2130 = vld [vmem:[%s750 + $0x139] sm:$0xff]
      %v2131 = vld [vmem:[%s750 + $0x141] sm:$0xff]
      %v2132 = vld [vmem:[%s750 + $0x151] sm:$0xff]
      %v2133 = vld [vmem:[%s750 + $0x159] sm:$0xff]
      %v2134 = vld [vmem:[%s750 + $0x169] sm:$0xff]
      %v2135 = vld [vmem:[%s750 + $0x171] sm:$0xff]
      %v2136 = vld [vmem:[%s1805 + $0x2] sm:$0xff]
      %v2137 = vld [vmem:[%s1805 + $0xa] sm:$0xff]
      %v2138 = vld [vmem:[%s1805 + $0x1a] sm:$0xff]
      %v2139 = vld [vmem:[%s1805 + $0x22] sm:$0xff]
      %v2140 = vld [vmem:[%s1805 + $0x32] sm:$0xff]
      %v2141 = vld [vmem:[%s1805 + $0x3a] sm:$0xff]
      %v2142 = vld [vmem:[%s1805 + $0x4a] sm:$0xff]
      %v2143 = vld [vmem:[%s1805 + $0x52] sm:$0xff]
      %v2144 = vld [vmem:[%s1805 + $0x62] sm:$0xff]
      %v2145 = vld [vmem:[%s1805 + $0x6a] sm:$0xff]
      %v2146 = vld [vmem:[%s1805 + $0x7a] sm:$0xff]
      %v2147 = vld [vmem:[%s1805 + $0x82] sm:$0xff]
      %v2148 = vld [vmem:[%s1805 + $0x92] sm:$0xff]
      %v2149 = vld [vmem:[%s1805 + $0x9a] sm:$0xff]
      %v2150 = vld [vmem:[%s1805 + $0xaa] sm:$0xff]
      %v2151 = vld [vmem:[%s1805 + $0xb2] sm:$0xff]
      %v2152 = vld [vmem:[%s1805 + $0xc2] sm:$0xff]
      %v2153 = vld [vmem:[%s1805 + $0xca] sm:$0xff]
      %v2154 = vld [vmem:[%s1805 + $0xda] sm:$0xff]
      %v2155 = vld [vmem:[%s1805 + $0xe2] sm:$0xff]
      %v2156 = vld [vmem:[%s1805 + $0xf2] sm:$0xff]
      %v2157 = vld [vmem:[%s1805 + $0xfa] sm:$0xff]
      %v2158 = vld [vmem:[%s1805 + $0x10a] sm:$0xff]
      %v2159 = vld [vmem:[%s1805 + $0x112] sm:$0xff]
      %v2160 = vld [vmem:[%s1805 + $0x122] sm:$0xff]
      %v2161 = vld [vmem:[%s1805 + $0x12a] sm:$0xff]
      %v2162 = vld [vmem:[%s1805 + $0x13a] sm:$0xff]
      %v2163 = vld [vmem:[%s1805 + $0x142] sm:$0xff]
      %v2164 = vld [vmem:[%s1805 + $0x152] sm:$0xff]
      %v2165 = vld [vmem:[%s1805 + $0x15a] sm:$0xff]
      %v2166 = vld [vmem:[%s1805 + $0x16a] sm:$0xff]
      %v2167 = vld [vmem:[%s1805 + $0x172] sm:$0xff]
      %v2168 = vld [vmem:[%s1 + $0x8] sm:$0x1]
      %v2169 = vlaneseq
      %v2170 = vshrl.u32 %v2169, 7
      %v2171 = vsub.s32 0, %v2170
      %v2172 = vrot.slane %v2168, %v2171
      %v2173 = vmul.f32 %v2136, %v2172
      %v2174 = vmul.f32 %v2137, %v2172
      %v2175 = vmul.f32 %v2138, %v2172
      %v2176 = vmul.f32 %v2139, %v2172
      %v2177 = vmul.f32 %v2140, %v2172
      %v2178 = vmul.f32 %v2141, %v2172
      %v2179 = vmul.f32 %v2142, %v2172
      %v2180 = vmul.f32 %v2143, %v2172
      %v2181 = vmul.f32 %v2144, %v2172
      %v2182 = vmul.f32 %v2145, %v2172
      %v2183 = vmul.f32 %v2146, %v2172
      %v2184 = vmul.f32 %v2147, %v2172
      %v2185 = vmul.f32 %v2148, %v2172
      %v2186 = vmul.f32 %v2149, %v2172
      %v2187 = vmul.f32 %v2150, %v2172
      %v2188 = vmul.f32 %v2151, %v2172
      %v2189 = vmul.f32 %v2152, %v2172
      %v2190 = vmul.f32 %v2153, %v2172
      %v2191 = vmul.f32 %v2154, %v2172
      %v2192 = vmul.f32 %v2155, %v2172
      %v2193 = vmul.f32 %v2156, %v2172
      %v2194 = vmul.f32 %v2157, %v2172
      %v2195 = vmul.f32 %v2158, %v2172
      %v2196 = vmul.f32 %v2159, %v2172
      %v2197 = vmul.f32 %v2160, %v2172
      %v2198 = vmul.f32 %v2161, %v2172
      %v2199 = vmul.f32 %v2162, %v2172
      %v2200 = vmul.f32 %v2163, %v2172
      %v2201 = vmul.f32 %v2164, %v2172
      %v2202 = vmul.f32 %v2165, %v2172
      %v2203 = vmul.f32 %v2166, %v2172
      %v2204 = vmul.f32 %v2167, %v2172
      %v2205 = vadd.f32 %v2104, %v2173
      %v2206 = vadd.f32 %v2105, %v2174
      %v2207 = vadd.f32 %v2106, %v2175
      %v2208 = vadd.f32 %v2107, %v2176
      %v2209 = vadd.f32 %v2108, %v2177
      %v2210 = vadd.f32 %v2109, %v2178
      %v2211 = vadd.f32 %v2110, %v2179
      %v2212 = vadd.f32 %v2111, %v2180
      %v2213 = vadd.f32 %v2112, %v2181
      %v2214 = vadd.f32 %v2113, %v2182
      %v2215 = vadd.f32 %v2114, %v2183
      %v2216 = vadd.f32 %v2115, %v2184
      %v2217 = vadd.f32 %v2116, %v2185
      %v2218 = vadd.f32 %v2117, %v2186
      %v2219 = vadd.f32 %v2118, %v2187
      %v2220 = vadd.f32 %v2119, %v2188
      %v2221 = vadd.f32 %v2120, %v2189
      %v2222 = vadd.f32 %v2121, %v2190
      %v2223 = vadd.f32 %v2122, %v2191
      %v2224 = vadd.f32 %v2123, %v2192
      %v2225 = vadd.f32 %v2124, %v2193
      %v2226 = vadd.f32 %v2125, %v2194
      %v2227 = vadd.f32 %v2126, %v2195
      %v2228 = vadd.f32 %v2127, %v2196
      %v2229 = vadd.f32 %v2128, %v2197
      %v2230 = vadd.f32 %v2129, %v2198
      %v2231 = vadd.f32 %v2130, %v2199
      %v2232 = vadd.f32 %v2131, %v2200
      %v2233 = vadd.f32 %v2132, %v2201
      %v2234 = vadd.f32 %v2133, %v2202
      %v2235 = vadd.f32 %v2134, %v2203
      %v2236 = vadd.f32 %v2135, %v2204
      %2237 = vst.msk [vmem:[%s750 + $0x1] sm:$0xff] %vm334, %v2205
      %2238 = vst.msk [vmem:[%s750 + $0x9] sm:$0xff] %vm334, %v2206
      %2239 = vst.msk [vmem:[%s750 + $0x19] sm:$0xff] %vm334, %v2207
      %2240 = vst.msk [vmem:[%s750 + $0x21] sm:$0xff] %vm334, %v2208
      %2241 = vst.msk [vmem:[%s750 + $0x31] sm:$0xff] %vm334, %v2209
      %2242 = vst.msk [vmem:[%s750 + $0x39] sm:$0xff] %vm334, %v2210
      %2243 = vst.msk [vmem:[%s750 + $0x49] sm:$0xff] %vm334, %v2211
      %2244 = vst.msk [vmem:[%s750 + $0x51] sm:$0xff] %vm334, %v2212
      %2245 = vst.msk [vmem:[%s750 + $0x61] sm:$0xff] %vm334, %v2213
      %2246 = vst.msk [vmem:[%s750 + $0x69] sm:$0xff] %vm334, %v2214
      %2247 = vst.msk [vmem:[%s750 + $0x79] sm:$0xff] %vm334, %v2215
      %2248 = vst.msk [vmem:[%s750 + $0x81] sm:$0xff] %vm334, %v2216
      %2249 = vst.msk [vmem:[%s750 + $0x91] sm:$0xff] %vm334, %v2217
      %2250 = vst.msk [vmem:[%s750 + $0x99] sm:$0xff] %vm334, %v2218
      %2251 = vst.msk [vmem:[%s750 + $0xa9] sm:$0xff] %vm334, %v2219
      %2252 = vst.msk [vmem:[%s750 + $0xb1] sm:$0xff] %vm334, %v2220
      %2253 = vst.msk [vmem:[%s750 + $0xc1] sm:$0xff] %vm334, %v2221
      %2254 = vst.msk [vmem:[%s750 + $0xc9] sm:$0xff] %vm334, %v2222
      %2255 = vst.msk [vmem:[%s750 + $0xd9] sm:$0xff] %vm334, %v2223
      %2256 = vst.msk [vmem:[%s750 + $0xe1] sm:$0xff] %vm334, %v2224
      %2257 = vst.msk [vmem:[%s750 + $0xf1] sm:$0xff] %vm334, %v2225
      %2258 = vst.msk [vmem:[%s750 + $0xf9] sm:$0xff] %vm334, %v2226
      %2259 = vst.msk [vmem:[%s750 + $0x109] sm:$0xff] %vm334, %v2227
      %2260 = vst.msk [vmem:[%s750 + $0x111] sm:$0xff] %vm334, %v2228
      %2261 = vst.msk [vmem:[%s750 + $0x121] sm:$0xff] %vm334, %v2229
      %2262 = vst.msk [vmem:[%s750 + $0x129] sm:$0xff] %vm334, %v2230
      %2263 = vst.msk [vmem:[%s750 + $0x139] sm:$0xff] %vm334, %v2231
      %2264 = vst.msk [vmem:[%s750 + $0x141] sm:$0xff] %vm334, %v2232
      %2265 = vst.msk [vmem:[%s750 + $0x151] sm:$0xff] %vm334, %v2233
      %2266 = vst.msk [vmem:[%s750 + $0x159] sm:$0xff] %vm334, %v2234
      %2267 = vst.msk [vmem:[%s750 + $0x169] sm:$0xff] %vm334, %v2235
      %2268 = vst.msk [vmem:[%s750 + $0x171] sm:$0xff] %vm334, %v2236
      %v2269 = vld [vmem:[#allocation3] sm:$0xff]
      %v2270 = vld [vmem:[#allocation3 + $0x8] sm:$0xff]
      %v2271 = vld [vmem:[#allocation3 + $0x18] sm:$0xff]
      %v2272 = vld [vmem:[#allocation3 + $0x20] sm:$0xff]
      %v2273 = vld [vmem:[#allocation3 + $0x30] sm:$0xff]
      %v2274 = vld [vmem:[#allocation3 + $0x38] sm:$0xff]
      %v2275 = vld [vmem:[#allocation3 + $0x48] sm:$0xff]
      %v2276 = vld [vmem:[#allocation3 + $0x50] sm:$0xff]
      %v2277 = vld [vmem:[#allocation3 + $0x60] sm:$0xff]
      %v2278 = vld [vmem:[#allocation3 + $0x68] sm:$0xff]
      %v2279 = vld [vmem:[#allocation3 + $0x78] sm:$0xff]
      %v2280 = vld [vmem:[#allocation3 + $0x80] sm:$0xff]
      %v2281 = vld [vmem:[#allocation3 + $0x90] sm:$0xff]
      %v2282 = vld [vmem:[#allocation3 + $0x98] sm:$0xff]
      %v2283 = vld [vmem:[#allocation3 + $0xa8] sm:$0xff]
      %v2284 = vld [vmem:[#allocation3 + $0xb0] sm:$0xff]
      %v2285 = vld [vmem:[#allocation3 + $0xc0] sm:$0xff]
      %v2286 = vld [vmem:[#allocation3 + $0xc8] sm:$0xff]
      %v2287 = vld [vmem:[#allocation3 + $0xd8] sm:$0xff]
      %v2288 = vld [vmem:[#allocation3 + $0xe0] sm:$0xff]
      %v2289 = vld [vmem:[#allocation3 + $0xf0] sm:$0xff]
      %v2290 = vld [vmem:[#allocation3 + $0xf8] sm:$0xff]
      %v2291 = vld [vmem:[#allocation3 + $0x108] sm:$0xff]
      %v2292 = vld [vmem:[#allocation3 + $0x110] sm:$0xff]
      %v2293 = vld [vmem:[#allocation3 + $0x120] sm:$0xff]
      %v2294 = vld [vmem:[#allocation3 + $0x128] sm:$0xff]
      %v2295 = vld [vmem:[#allocation3 + $0x138] sm:$0xff]
      %v2296 = vld [vmem:[#allocation3 + $0x140] sm:$0xff]
      %v2297 = vld [vmem:[#allocation3 + $0x150] sm:$0xff]
      %v2298 = vld [vmem:[#allocation3 + $0x158] sm:$0xff]
      %v2299 = vld [vmem:[#allocation3 + $0x168] sm:$0xff]
      %v2300 = vld [vmem:[#allocation3 + $0x170] sm:$0xff]
      %v2301 = vmax.f32 %v2269, 0.0
      %v2302 = vmax.f32 %v2270, 0.0
      %v2303 = vmax.f32 %v2271, 0.0
      %v2304 = vmax.f32 %v2272, 0.0
      %v2305 = vmax.f32 %v2273, 0.0
      %v2306 = vmax.f32 %v2274, 0.0
      %v2307 = vmax.f32 %v2275, 0.0
      %v2308 = vmax.f32 %v2276, 0.0
      %v2309 = vmax.f32 %v2277, 0.0
      %v2310 = vmax.f32 %v2278, 0.0
      %v2311 = vmax.f32 %v2279, 0.0
      %v2312 = vmax.f32 %v2280, 0.0
      %v2313 = vmax.f32 %v2281, 0.0
      %v2314 = vmax.f32 %v2282, 0.0
      %v2315 = vmax.f32 %v2283, 0.0
      %v2316 = vmax.f32 %v2284, 0.0
      %v2317 = vmax.f32 %v2285, 0.0
      %v2318 = vmax.f32 %v2286, 0.0
      %v2319 = vmax.f32 %v2287, 0.0
      %v2320 = vmax.f32 %v2288, 0.0
      %v2321 = vmax.f32 %v2289, 0.0
      %v2322 = vmax.f32 %v2290, 0.0
      %v2323 = vmax.f32 %v2291, 0.0
      %v2324 = vmax.f32 %v2292, 0.0
      %v2325 = vmax.f32 %v2293, 0.0
      %v2326 = vmax.f32 %v2294, 0.0
      %v2327 = vmax.f32 %v2295, 0.0
      %v2328 = vmax.f32 %v2296, 0.0
      %v2329 = vmax.f32 %v2297, 0.0
      %v2330 = vmax.f32 %v2298, 0.0
      %v2331 = vmax.f32 %v2299, 0.0
      %v2332 = vmax.f32 %v2300, 0.0
      %v2333 = vld [vmem:[#allocation3 + $0x1] sm:$0xff]
      %v2334 = vld [vmem:[#allocation3 + $0x9] sm:$0xff]
      %v2335 = vld [vmem:[#allocation3 + $0x19] sm:$0xff]
      %v2336 = vld [vmem:[#allocation3 + $0x21] sm:$0xff]
      %v2337 = vld [vmem:[#allocation3 + $0x31] sm:$0xff]
      %v2338 = vld [vmem:[#allocation3 + $0x39] sm:$0xff]
      %v2339 = vld [vmem:[#allocation3 + $0x49] sm:$0xff]
      %v2340 = vld [vmem:[#allocation3 + $0x51] sm:$0xff]
      %v2341 = vld [vmem:[#allocation3 + $0x61] sm:$0xff]
      %v2342 = vld [vmem:[#allocation3 + $0x69] sm:$0xff]
      %v2343 = vld [vmem:[#allocation3 + $0x79] sm:$0xff]
      %v2344 = vld [vmem:[#allocation3 + $0x81] sm:$0xff]
      %v2345 = vld [vmem:[#allocation3 + $0x91] sm:$0xff]
      %v2346 = vld [vmem:[#allocation3 + $0x99] sm:$0xff]
      %v2347 = vld [vmem:[#allocation3 + $0xa9] sm:$0xff]
      %v2348 = vld [vmem:[#allocation3 + $0xb1] sm:$0xff]
      %v2349 = vld [vmem:[#allocation3 + $0xc1] sm:$0xff]
      %v2350 = vld [vmem:[#allocation3 + $0xc9] sm:$0xff]
      %v2351 = vld [vmem:[#allocation3 + $0xd9] sm:$0xff]
      %v2352 = vld [vmem:[#allocation3 + $0xe1] sm:$0xff]
      %v2353 = vld [vmem:[#allocation3 + $0xf1] sm:$0xff]
      %v2354 = vld [vmem:[#allocation3 + $0xf9] sm:$0xff]
      %v2355 = vld [vmem:[#allocation3 + $0x109] sm:$0xff]
      %v2356 = vld [vmem:[#allocation3 + $0x111] sm:$0xff]
      %v2357 = vld [vmem:[#allocation3 + $0x121] sm:$0xff]
      %v2358 = vld [vmem:[#allocation3 + $0x129] sm:$0xff]
      %v2359 = vld [vmem:[#allocation3 + $0x139] sm:$0xff]
      %v2360 = vld [vmem:[#allocation3 + $0x141] sm:$0xff]
      %v2361 = vld [vmem:[#allocation3 + $0x151] sm:$0xff]
      %v2362 = vld [vmem:[#allocation3 + $0x159] sm:$0xff]
      %v2363 = vld [vmem:[#allocation3 + $0x169] sm:$0xff]
      %v2364 = vld [vmem:[#allocation3 + $0x171] sm:$0xff]
      %v2365 = vmax.f32 %v2333, 0.0
      %v2366 = vmax.f32 %v2334, 0.0
      %v2367 = vmax.f32 %v2335, 0.0
      %v2368 = vmax.f32 %v2336, 0.0
      %v2369 = vmax.f32 %v2337, 0.0
      %v2370 = vmax.f32 %v2338, 0.0
      %v2371 = vmax.f32 %v2339, 0.0
      %v2372 = vmax.f32 %v2340, 0.0
      %v2373 = vmax.f32 %v2341, 0.0
      %v2374 = vmax.f32 %v2342, 0.0
      %v2375 = vmax.f32 %v2343, 0.0
      %v2376 = vmax.f32 %v2344, 0.0
      %v2377 = vmax.f32 %v2345, 0.0
      %v2378 = vmax.f32 %v2346, 0.0
      %v2379 = vmax.f32 %v2347, 0.0
      %v2380 = vmax.f32 %v2348, 0.0
      %v2381 = vmax.f32 %v2349, 0.0
      %v2382 = vmax.f32 %v2350, 0.0
      %v2383 = vmax.f32 %v2351, 0.0
      %v2384 = vmax.f32 %v2352, 0.0
      %v2385 = vmax.f32 %v2353, 0.0
      %v2386 = vmax.f32 %v2354, 0.0
      %v2387 = vmax.f32 %v2355, 0.0
      %v2388 = vmax.f32 %v2356, 0.0
      %v2389 = vmax.f32 %v2357, 0.0
      %v2390 = vmax.f32 %v2358, 0.0
      %v2391 = vmax.f32 %v2359, 0.0
      %v2392 = vmax.f32 %v2360, 0.0
      %v2393 = vmax.f32 %v2361, 0.0
      %v2394 = vmax.f32 %v2362, 0.0
      %v2395 = vmax.f32 %v2363, 0.0
      %v2396 = vmax.f32 %v2364, 0.0
      %2429 = vrot.lane.b32.xlu0 %v2365, 64
      %v2430 = vpop.permute.xlu0 %2429
      %2431 = vrot.lane.b32.xlu0 %v2366, 64
      %v2432 = vpop.permute.xlu0 %2431
      %2433 = vrot.lane.b32.xlu0 %v2367, 64
      %v2434 = vpop.permute.xlu0 %2433
      %2435 = vrot.lane.b32.xlu0 %v2368, 64
      %v2436 = vpop.permute.xlu0 %2435
      %2437 = vrot.lane.b32.xlu0 %v2369, 64
      %v2438 = vpop.permute.xlu0 %2437
      %2439 = vrot.lane.b32.xlu0 %v2370, 64
      %v2440 = vpop.permute.xlu0 %2439
      %2441 = vrot.lane.b32.xlu0 %v2371, 64
      %v2442 = vpop.permute.xlu0 %2441
      %2443 = vrot.lane.b32.xlu0 %v2372, 64
      %v2444 = vpop.permute.xlu0 %2443
      %2445 = vrot.lane.b32.xlu0 %v2373, 64
      %v2446 = vpop.permute.xlu0 %2445
      %2447 = vrot.lane.b32.xlu0 %v2374, 64
      %v2448 = vpop.permute.xlu0 %2447
      %2449 = vrot.lane.b32.xlu0 %v2375, 64
      %v2450 = vpop.permute.xlu0 %2449
      %2451 = vrot.lane.b32.xlu0 %v2376, 64
      %v2452 = vpop.permute.xlu0 %2451
      %2453 = vrot.lane.b32.xlu0 %v2377, 64
      %v2454 = vpop.permute.xlu0 %2453
      %2455 = vrot.lane.b32.xlu0 %v2378, 64
      %v2456 = vpop.permute.xlu0 %2455
      %2457 = vrot.lane.b32.xlu0 %v2379, 64
      %v2458 = vpop.permute.xlu0 %2457
      %2459 = vrot.lane.b32.xlu0 %v2380, 64
      %v2460 = vpop.permute.xlu0 %2459
      %2461 = vrot.lane.b32.xlu0 %v2381, 64
      %v2462 = vpop.permute.xlu0 %2461
      %2463 = vrot.lane.b32.xlu0 %v2382, 64
      %v2464 = vpop.permute.xlu0 %2463
      %2465 = vrot.lane.b32.xlu0 %v2383, 64
      %v2466 = vpop.permute.xlu0 %2465
      %2467 = vrot.lane.b32.xlu0 %v2384, 64
      %v2468 = vpop.permute.xlu0 %2467
      %2469 = vrot.lane.b32.xlu0 %v2385, 64
      %v2470 = vpop.permute.xlu0 %2469
      %2471 = vrot.lane.b32.xlu0 %v2386, 64
      %v2472 = vpop.permute.xlu0 %2471
      %2473 = vrot.lane.b32.xlu0 %v2387, 64
      %v2474 = vpop.permute.xlu0 %2473
      %2475 = vrot.lane.b32.xlu0 %v2388, 64
      %v2476 = vpop.permute.xlu0 %2475
      %2477 = vrot.lane.b32.xlu0 %v2389, 64
      %v2478 = vpop.permute.xlu0 %2477
      %2479 = vrot.lane.b32.xlu0 %v2390, 64
      %v2480 = vpop.permute.xlu0 %2479
      %2481 = vrot.lane.b32.xlu0 %v2391, 64
      %v2482 = vpop.permute.xlu0 %2481
      %2483 = vrot.lane.b32.xlu0 %v2392, 64
      %v2484 = vpop.permute.xlu0 %2483
      %2485 = vrot.lane.b32.xlu0 %v2393, 64
      %v2486 = vpop.permute.xlu0 %2485
      %2487 = vrot.lane.b32.xlu0 %v2394, 64
      %v2488 = vpop.permute.xlu0 %2487
      %2489 = vrot.lane.b32.xlu0 %v2395, 64
      %v2490 = vpop.permute.xlu0 %2489
      %2491 = vrot.lane.b32.xlu0 %v2396, 64
      %v2492 = vpop.permute.xlu0 %2491
      %v2525 = vsel %vm334, %v2301, %v2430
      %v2526 = vsel %vm334, %v2302, %v2432
      %v2527 = vsel %vm334, %v2303, %v2434
      %v2528 = vsel %vm334, %v2304, %v2436
      %v2529 = vsel %vm334, %v2305, %v2438
      %v2530 = vsel %vm334, %v2306, %v2440
      %v2531 = vsel %vm334, %v2307, %v2442
      %v2532 = vsel %vm334, %v2308, %v2444
      %v2533 = vsel %vm334, %v2309, %v2446
      %v2534 = vsel %vm334, %v2310, %v2448
      %v2535 = vsel %vm334, %v2311, %v2450
      %v2536 = vsel %vm334, %v2312, %v2452
      %v2537 = vsel %vm334, %v2313, %v2454
      %v2538 = vsel %vm334, %v2314, %v2456
      %v2539 = vsel %vm334, %v2315, %v2458
      %v2540 = vsel %vm334, %v2316, %v2460
      %v2541 = vsel %vm334, %v2317, %v2462
      %v2542 = vsel %vm334, %v2318, %v2464
      %v2543 = vsel %vm334, %v2319, %v2466
      %v2544 = vsel %vm334, %v2320, %v2468
      %v2545 = vsel %vm334, %v2321, %v2470
      %v2546 = vsel %vm334, %v2322, %v2472
      %v2547 = vsel %vm334, %v2323, %v2474
      %v2548 = vsel %vm334, %v2324, %v2476
      %v2549 = vsel %vm334, %v2325, %v2478
      %v2550 = vsel %vm334, %v2326, %v2480
      %v2551 = vsel %vm334, %v2327, %v2482
      %v2552 = vsel %vm334, %v2328, %v2484
      %v2553 = vsel %vm334, %v2329, %v2486
      %v2554 = vsel %vm334, %v2330, %v2488
      %v2555 = vsel %vm334, %v2331, %v2490
      %v2556 = vsel %vm334, %v2332, %v2492
      %v2557 = vpack.c.bf16 %v2526, %v2525
      %v2558 = vpack.c.bf16 %v2528, %v2527
      %v2559 = vpack.c.bf16 %v2530, %v2529
      %v2560 = vpack.c.bf16 %v2532, %v2531
      %v2561 = vpack.c.bf16 %v2534, %v2533
      %v2562 = vpack.c.bf16 %v2536, %v2535
      %v2563 = vpack.c.bf16 %v2538, %v2537
      %v2564 = vpack.c.bf16 %v2540, %v2539
      %v2565 = vpack.c.bf16 %v2542, %v2541
      %v2566 = vpack.c.bf16 %v2544, %v2543
      %v2567 = vpack.c.bf16 %v2546, %v2545
      %v2568 = vpack.c.bf16 %v2548, %v2547
      %v2569 = vpack.c.bf16 %v2550, %v2549
      %v2570 = vpack.c.bf16 %v2552, %v2551
      %v2571 = vpack.c.bf16 %v2554, %v2553
      %v2572 = vpack.c.bf16 %v2556, %v2555
      %2573 = vst [vmem:[#allocation4] sm:$0xff] %v2557
      %2574 = vst [vmem:[#allocation4 + $0x28] sm:$0xff] %v2558
      %2575 = vst [vmem:[#allocation4 + $0x50] sm:$0xff] %v2559
      %2576 = vst [vmem:[#allocation4 + $0x78] sm:$0xff] %v2560
      %2577 = vst [vmem:[#allocation4 + $0xa0] sm:$0xff] %v2561
      %2578 = vst [vmem:[#allocation4 + $0xc8] sm:$0xff] %v2562
      %2579 = vst [vmem:[#allocation4 + $0xf0] sm:$0xff] %v2563
      %2580 = vst [vmem:[#allocation4 + $0x118] sm:$0xff] %v2564
      %2581 = vst [vmem:[#allocation4 + $0x140] sm:$0xff] %v2565
      %2582 = vst [vmem:[#allocation4 + $0x168] sm:$0xff] %v2566
      %2583 = vst [vmem:[#allocation4 + $0x190] sm:$0xff] %v2567
      %2584 = vst [vmem:[#allocation4 + $0x1b8] sm:$0xff] %v2568
      %2585 = vst [vmem:[#allocation4 + $0x1e0] sm:$0xff] %v2569
      %2586 = vst [vmem:[#allocation4 + $0x208] sm:$0xff] %v2570
      %2587 = vst [vmem:[#allocation4 + $0x230] sm:$0xff] %v2571
      %2588 = vst [vmem:[#allocation4 + $0x258] sm:$0xff] %v2572
      %v2589 = vld [vmem:[#allocation3 + $0x2] sm:$0xff]
      %v2590 = vld [vmem:[#allocation3 + $0xa] sm:$0xff]
      %v2591 = vld [vmem:[#allocation3 + $0x1a] sm:$0xff]
      %v2592 = vld [vmem:[#allocation3 + $0x22] sm:$0xff]
      %v2593 = vld [vmem:[#allocation3 + $0x32] sm:$0xff]
      %v2594 = vld [vmem:[#allocation3 + $0x3a] sm:$0xff]
      %v2595 = vld [vmem:[#allocation3 + $0x4a] sm:$0xff]
      %v2596 = vld [vmem:[#allocation3 + $0x52] sm:$0xff]
      %v2597 = vld [vmem:[#allocation3 + $0x62] sm:$0xff]
      %v2598 = vld [vmem:[#allocation3 + $0x6a] sm:$0xff]
      %v2599 = vld [vmem:[#allocation3 + $0x7a] sm:$0xff]
      %v2600 = vld [vmem:[#allocation3 + $0x82] sm:$0xff]
      %v2601 = vld [vmem:[#allocation3 + $0x92] sm:$0xff]
      %v2602 = vld [vmem:[#allocation3 + $0x9a] sm:$0xff]
      %v2603 = vld [vmem:[#allocation3 + $0xaa] sm:$0xff]
      %v2604 = vld [vmem:[#allocation3 + $0xb2] sm:$0xff]
      %v2605 = vld [vmem:[#allocation3 + $0xc2] sm:$0xff]
      %v2606 = vld [vmem:[#allocation3 + $0xca] sm:$0xff]
      %v2607 = vld [vmem:[#allocation3 + $0xda] sm:$0xff]
      %v2608 = vld [vmem:[#allocation3 + $0xe2] sm:$0xff]
      %v2609 = vld [vmem:[#allocation3 + $0xf2] sm:$0xff]
      %v2610 = vld [vmem:[#allocation3 + $0xfa] sm:$0xff]
      %v2611 = vld [vmem:[#allocation3 + $0x10a] sm:$0xff]
      %v2612 = vld [vmem:[#allocation3 + $0x112] sm:$0xff]
      %v2613 = vld [vmem:[#allocation3 + $0x122] sm:$0xff]
      %v2614 = vld [vmem:[#allocation3 + $0x12a] sm:$0xff]
      %v2615 = vld [vmem:[#allocation3 + $0x13a] sm:$0xff]
      %v2616 = vld [vmem:[#allocation3 + $0x142] sm:$0xff]
      %v2617 = vld [vmem:[#allocation3 + $0x152] sm:$0xff]
      %v2618 = vld [vmem:[#allocation3 + $0x15a] sm:$0xff]
      %v2619 = vld [vmem:[#allocation3 + $0x16a] sm:$0xff]
      %v2620 = vld [vmem:[#allocation3 + $0x172] sm:$0xff]
      %v2621 = vmax.f32 %v2589, 0.0
      %v2622 = vmax.f32 %v2590, 0.0
      %v2623 = vmax.f32 %v2591, 0.0
      %v2624 = vmax.f32 %v2592, 0.0
      %v2625 = vmax.f32 %v2593, 0.0
      %v2626 = vmax.f32 %v2594, 0.0
      %v2627 = vmax.f32 %v2595, 0.0
      %v2628 = vmax.f32 %v2596, 0.0
      %v2629 = vmax.f32 %v2597, 0.0
      %v2630 = vmax.f32 %v2598, 0.0
      %v2631 = vmax.f32 %v2599, 0.0
      %v2632 = vmax.f32 %v2600, 0.0
      %v2633 = vmax.f32 %v2601, 0.0
      %v2634 = vmax.f32 %v2602, 0.0
      %v2635 = vmax.f32 %v2603, 0.0
      %v2636 = vmax.f32 %v2604, 0.0
      %v2637 = vmax.f32 %v2605, 0.0
      %v2638 = vmax.f32 %v2606, 0.0
      %v2639 = vmax.f32 %v2607, 0.0
      %v2640 = vmax.f32 %v2608, 0.0
      %v2641 = vmax.f32 %v2609, 0.0
      %v2642 = vmax.f32 %v2610, 0.0
      %v2643 = vmax.f32 %v2611, 0.0
      %v2644 = vmax.f32 %v2612, 0.0
      %v2645 = vmax.f32 %v2613, 0.0
      %v2646 = vmax.f32 %v2614, 0.0
      %v2647 = vmax.f32 %v2615, 0.0
      %v2648 = vmax.f32 %v2616, 0.0
      %v2649 = vmax.f32 %v2617, 0.0
      %v2650 = vmax.f32 %v2618, 0.0
      %v2651 = vmax.f32 %v2619, 0.0
      %v2652 = vmax.f32 %v2620, 0.0
      %v2653 = vld [vmem:[%s750] sm:$0xff]
      %v2654 = vld [vmem:[%s750 + $0x8] sm:$0xff]
      %v2655 = vld [vmem:[%s750 + $0x18] sm:$0xff]
      %v2656 = vld [vmem:[%s750 + $0x20] sm:$0xff]
      %v2657 = vld [vmem:[%s750 + $0x30] sm:$0xff]
      %v2658 = vld [vmem:[%s750 + $0x38] sm:$0xff]
      %v2659 = vld [vmem:[%s750 + $0x48] sm:$0xff]
      %v2660 = vld [vmem:[%s750 + $0x50] sm:$0xff]
      %v2661 = vld [vmem:[%s750 + $0x60] sm:$0xff]
      %v2662 = vld [vmem:[%s750 + $0x68] sm:$0xff]
      %v2663 = vld [vmem:[%s750 + $0x78] sm:$0xff]
      %v2664 = vld [vmem:[%s750 + $0x80] sm:$0xff]
      %v2665 = vld [vmem:[%s750 + $0x90] sm:$0xff]
      %v2666 = vld [vmem:[%s750 + $0x98] sm:$0xff]
      %v2667 = vld [vmem:[%s750 + $0xa8] sm:$0xff]
      %v2668 = vld [vmem:[%s750 + $0xb0] sm:$0xff]
      %v2669 = vld [vmem:[%s750 + $0xc0] sm:$0xff]
      %v2670 = vld [vmem:[%s750 + $0xc8] sm:$0xff]
      %v2671 = vld [vmem:[%s750 + $0xd8] sm:$0xff]
      %v2672 = vld [vmem:[%s750 + $0xe0] sm:$0xff]
      %v2673 = vld [vmem:[%s750 + $0xf0] sm:$0xff]
      %v2674 = vld [vmem:[%s750 + $0xf8] sm:$0xff]
      %v2675 = vld [vmem:[%s750 + $0x108] sm:$0xff]
      %v2676 = vld [vmem:[%s750 + $0x110] sm:$0xff]
      %v2677 = vld [vmem:[%s750 + $0x120] sm:$0xff]
      %v2678 = vld [vmem:[%s750 + $0x128] sm:$0xff]
      %v2679 = vld [vmem:[%s750 + $0x138] sm:$0xff]
      %v2680 = vld [vmem:[%s750 + $0x140] sm:$0xff]
      %v2681 = vld [vmem:[%s750 + $0x150] sm:$0xff]
      %v2682 = vld [vmem:[%s750 + $0x158] sm:$0xff]
      %v2683 = vld [vmem:[%s750 + $0x168] sm:$0xff]
      %v2684 = vld [vmem:[%s750 + $0x170] sm:$0xff]
      %v2685 = vmax.f32 %v2653, 0.0
      %v2686 = vmax.f32 %v2654, 0.0
      %v2687 = vmax.f32 %v2655, 0.0
      %v2688 = vmax.f32 %v2656, 0.0
      %v2689 = vmax.f32 %v2657, 0.0
      %v2690 = vmax.f32 %v2658, 0.0
      %v2691 = vmax.f32 %v2659, 0.0
      %v2692 = vmax.f32 %v2660, 0.0
      %v2693 = vmax.f32 %v2661, 0.0
      %v2694 = vmax.f32 %v2662, 0.0
      %v2695 = vmax.f32 %v2663, 0.0
      %v2696 = vmax.f32 %v2664, 0.0
      %v2697 = vmax.f32 %v2665, 0.0
      %v2698 = vmax.f32 %v2666, 0.0
      %v2699 = vmax.f32 %v2667, 0.0
      %v2700 = vmax.f32 %v2668, 0.0
      %v2701 = vmax.f32 %v2669, 0.0
      %v2702 = vmax.f32 %v2670, 0.0
      %v2703 = vmax.f32 %v2671, 0.0
      %v2704 = vmax.f32 %v2672, 0.0
      %v2705 = vmax.f32 %v2673, 0.0
      %v2706 = vmax.f32 %v2674, 0.0
      %v2707 = vmax.f32 %v2675, 0.0
      %v2708 = vmax.f32 %v2676, 0.0
      %v2709 = vmax.f32 %v2677, 0.0
      %v2710 = vmax.f32 %v2678, 0.0
      %v2711 = vmax.f32 %v2679, 0.0
      %v2712 = vmax.f32 %v2680, 0.0
      %v2713 = vmax.f32 %v2681, 0.0
      %v2714 = vmax.f32 %v2682, 0.0
      %v2715 = vmax.f32 %v2683, 0.0
      %v2716 = vmax.f32 %v2684, 0.0
      %2749 = vrot.lane.b32.xlu0 %v2685, 64
      %v2750 = vpop.permute.xlu0 %2749
      %2751 = vrot.lane.b32.xlu0 %v2686, 64
      %v2752 = vpop.permute.xlu0 %2751
      %2753 = vrot.lane.b32.xlu0 %v2687, 64
      %v2754 = vpop.permute.xlu0 %2753
      %2755 = vrot.lane.b32.xlu0 %v2688, 64
      %v2756 = vpop.permute.xlu0 %2755
      %2757 = vrot.lane.b32.xlu0 %v2689, 64
      %v2758 = vpop.permute.xlu0 %2757
      %2759 = vrot.lane.b32.xlu0 %v2690, 64
      %v2760 = vpop.permute.xlu0 %2759
      %2761 = vrot.lane.b32.xlu0 %v2691, 64
      %v2762 = vpop.permute.xlu0 %2761
      %2763 = vrot.lane.b32.xlu0 %v2692, 64
      %v2764 = vpop.permute.xlu0 %2763
      %2765 = vrot.lane.b32.xlu0 %v2693, 64
      %v2766 = vpop.permute.xlu0 %2765
      %2767 = vrot.lane.b32.xlu0 %v2694, 64
      %v2768 = vpop.permute.xlu0 %2767
      %2769 = vrot.lane.b32.xlu0 %v2695, 64
      %v2770 = vpop.permute.xlu0 %2769
      %2771 = vrot.lane.b32.xlu0 %v2696, 64
      %v2772 = vpop.permute.xlu0 %2771
      %2773 = vrot.lane.b32.xlu0 %v2697, 64
      %v2774 = vpop.permute.xlu0 %2773
      %2775 = vrot.lane.b32.xlu0 %v2698, 64
      %v2776 = vpop.permute.xlu0 %2775
      %2777 = vrot.lane.b32.xlu0 %v2699, 64
      %v2778 = vpop.permute.xlu0 %2777
      %2779 = vrot.lane.b32.xlu0 %v2700, 64
      %v2780 = vpop.permute.xlu0 %2779
      %2781 = vrot.lane.b32.xlu0 %v2701, 64
      %v2782 = vpop.permute.xlu0 %2781
      %2783 = vrot.lane.b32.xlu0 %v2702, 64
      %v2784 = vpop.permute.xlu0 %2783
      %2785 = vrot.lane.b32.xlu0 %v2703, 64
      %v2786 = vpop.permute.xlu0 %2785
      %2787 = vrot.lane.b32.xlu0 %v2704, 64
      %v2788 = vpop.permute.xlu0 %2787
      %2789 = vrot.lane.b32.xlu0 %v2705, 64
      %v2790 = vpop.permute.xlu0 %2789
      %2791 = vrot.lane.b32.xlu0 %v2706, 64
      %v2792 = vpop.permute.xlu0 %2791
      %2793 = vrot.lane.b32.xlu0 %v2707, 64
      %v2794 = vpop.permute.xlu0 %2793
      %2795 = vrot.lane.b32.xlu0 %v2708, 64
      %v2796 = vpop.permute.xlu0 %2795
      %2797 = vrot.lane.b32.xlu0 %v2709, 64
      %v2798 = vpop.permute.xlu0 %2797
      %2799 = vrot.lane.b32.xlu0 %v2710, 64
      %v2800 = vpop.permute.xlu0 %2799
      %2801 = vrot.lane.b32.xlu0 %v2711, 64
      %v2802 = vpop.permute.xlu0 %2801
      %2803 = vrot.lane.b32.xlu0 %v2712, 64
      %v2804 = vpop.permute.xlu0 %2803
      %2805 = vrot.lane.b32.xlu0 %v2713, 64
      %v2806 = vpop.permute.xlu0 %2805
      %2807 = vrot.lane.b32.xlu0 %v2714, 64
      %v2808 = vpop.permute.xlu0 %2807
      %2809 = vrot.lane.b32.xlu0 %v2715, 64
      %v2810 = vpop.permute.xlu0 %2809
      %2811 = vrot.lane.b32.xlu0 %v2716, 64
      %v2812 = vpop.permute.xlu0 %2811
      %v2845 = vsel %vm334, %v2621, %v2750
      %v2846 = vsel %vm334, %v2622, %v2752
      %v2847 = vsel %vm334, %v2623, %v2754
      %v2848 = vsel %vm334, %v2624, %v2756
      %v2849 = vsel %vm334, %v2625, %v2758
      %v2850 = vsel %vm334, %v2626, %v2760
      %v2851 = vsel %vm334, %v2627, %v2762
      %v2852 = vsel %vm334, %v2628, %v2764
      %v2853 = vsel %vm334, %v2629, %v2766
      %v2854 = vsel %vm334, %v2630, %v2768
      %v2855 = vsel %vm334, %v2631, %v2770
      %v2856 = vsel %vm334, %v2632, %v2772
      %v2857 = vsel %vm334, %v2633, %v2774
      %v2858 = vsel %vm334, %v2634, %v2776
      %v2859 = vsel %vm334, %v2635, %v2778
      %v2860 = vsel %vm334, %v2636, %v2780
      %v2861 = vsel %vm334, %v2637, %v2782
      %v2862 = vsel %vm334, %v2638, %v2784
      %v2863 = vsel %vm334, %v2639, %v2786
      %v2864 = vsel %vm334, %v2640, %v2788
      %v2865 = vsel %vm334, %v2641, %v2790
      %v2866 = vsel %vm334, %v2642, %v2792
      %v2867 = vsel %vm334, %v2643, %v2794
      %v2868 = vsel %vm334, %v2644, %v2796
      %v2869 = vsel %vm334, %v2645, %v2798
      %v2870 = vsel %vm334, %v2646, %v2800
      %v2871 = vsel %vm334, %v2647, %v2802
      %v2872 = vsel %vm334, %v2648, %v2804
      %v2873 = vsel %vm334, %v2649, %v2806
      %v2874 = vsel %vm334, %v2650, %v2808
      %v2875 = vsel %vm334, %v2651, %v2810
      %v2876 = vsel %vm334, %v2652, %v2812
      %v2877 = vpack.c.bf16 %v2846, %v2845
      %v2878 = vpack.c.bf16 %v2848, %v2847
      %v2879 = vpack.c.bf16 %v2850, %v2849
      %v2880 = vpack.c.bf16 %v2852, %v2851
      %v2881 = vpack.c.bf16 %v2854, %v2853
      %v2882 = vpack.c.bf16 %v2856, %v2855
      %v2883 = vpack.c.bf16 %v2858, %v2857
      %v2884 = vpack.c.bf16 %v2860, %v2859
      %v2885 = vpack.c.bf16 %v2862, %v2861
      %v2886 = vpack.c.bf16 %v2864, %v2863
      %v2887 = vpack.c.bf16 %v2866, %v2865
      %v2888 = vpack.c.bf16 %v2868, %v2867
      %v2889 = vpack.c.bf16 %v2870, %v2869
      %v2890 = vpack.c.bf16 %v2872, %v2871
      %v2891 = vpack.c.bf16 %v2874, %v2873
      %v2892 = vpack.c.bf16 %v2876, %v2875
      %2893 = vst [vmem:[#allocation4 + $0x8] sm:$0xff] %v2877
      %2894 = vst [vmem:[#allocation4 + $0x30] sm:$0xff] %v2878
      %2895 = vst [vmem:[#allocation4 + $0x58] sm:$0xff] %v2879
      %2896 = vst [vmem:[#allocation4 + $0x80] sm:$0xff] %v2880
      %2897 = vst [vmem:[#allocation4 + $0xa8] sm:$0xff] %v2881
      %2898 = vst [vmem:[#allocation4 + $0xd0] sm:$0xff] %v2882
      %2899 = vst [vmem:[#allocation4 + $0xf8] sm:$0xff] %v2883
      %2900 = vst [vmem:[#allocation4 + $0x120] sm:$0xff] %v2884
      %2901 = vst [vmem:[#allocation4 + $0x148] sm:$0xff] %v2885
      %2902 = vst [vmem:[#allocation4 + $0x170] sm:$0xff] %v2886
      %2903 = vst [vmem:[#allocation4 + $0x198] sm:$0xff] %v2887
      %2904 = vst [vmem:[#allocation4 + $0x1c0] sm:$0xff] %v2888
      %2905 = vst [vmem:[#allocation4 + $0x1e8] sm:$0xff] %v2889
      %2906 = vst [vmem:[#allocation4 + $0x210] sm:$0xff] %v2890
      %2907 = vst [vmem:[#allocation4 + $0x238] sm:$0xff] %v2891
      %2908 = vst [vmem:[#allocation4 + $0x260] sm:$0xff] %v2892
      %v2909 = vld [vmem:[%s750 + $0x1] sm:$0xff]
      %v2910 = vld [vmem:[%s750 + $0x9] sm:$0xff]
      %v2911 = vld [vmem:[%s750 + $0x19] sm:$0xff]
      %v2912 = vld [vmem:[%s750 + $0x21] sm:$0xff]
      %v2913 = vld [vmem:[%s750 + $0x31] sm:$0xff]
      %v2914 = vld [vmem:[%s750 + $0x39] sm:$0xff]
      %v2915 = vld [vmem:[%s750 + $0x49] sm:$0xff]
      %v2916 = vld [vmem:[%s750 + $0x51] sm:$0xff]
      %v2917 = vld [vmem:[%s750 + $0x61] sm:$0xff]
      %v2918 = vld [vmem:[%s750 + $0x69] sm:$0xff]
      %v2919 = vld [vmem:[%s750 + $0x79] sm:$0xff]
      %v2920 = vld [vmem:[%s750 + $0x81] sm:$0xff]
      %v2921 = vld [vmem:[%s750 + $0x91] sm:$0xff]
      %v2922 = vld [vmem:[%s750 + $0x99] sm:$0xff]
      %v2923 = vld [vmem:[%s750 + $0xa9] sm:$0xff]
      %v2924 = vld [vmem:[%s750 + $0xb1] sm:$0xff]
      %v2925 = vld [vmem:[%s750 + $0xc1] sm:$0xff]
      %v2926 = vld [vmem:[%s750 + $0xc9] sm:$0xff]
      %v2927 = vld [vmem:[%s750 + $0xd9] sm:$0xff]
      %v2928 = vld [vmem:[%s750 + $0xe1] sm:$0xff]
      %v2929 = vld [vmem:[%s750 + $0xf1] sm:$0xff]
      %v2930 = vld [vmem:[%s750 + $0xf9] sm:$0xff]
      %v2931 = vld [vmem:[%s750 + $0x109] sm:$0xff]
      %v2932 = vld [vmem:[%s750 + $0x111] sm:$0xff]
      %v2933 = vld [vmem:[%s750 + $0x121] sm:$0xff]
      %v2934 = vld [vmem:[%s750 + $0x129] sm:$0xff]
      %v2935 = vld [vmem:[%s750 + $0x139] sm:$0xff]
      %v2936 = vld [vmem:[%s750 + $0x141] sm:$0xff]
      %v2937 = vld [vmem:[%s750 + $0x151] sm:$0xff]
      %v2938 = vld [vmem:[%s750 + $0x159] sm:$0xff]
      %v2939 = vld [vmem:[%s750 + $0x169] sm:$0xff]
      %v2940 = vld [vmem:[%s750 + $0x171] sm:$0xff]
      %v2941 = vmax.f32 %v2909, 0.0
      %v2942 = vmax.f32 %v2910, 0.0
      %v2943 = vmax.f32 %v2911, 0.0
      %v2944 = vmax.f32 %v2912, 0.0
      %v2945 = vmax.f32 %v2913, 0.0
      %v2946 = vmax.f32 %v2914, 0.0
      %v2947 = vmax.f32 %v2915, 0.0
      %v2948 = vmax.f32 %v2916, 0.0
      %v2949 = vmax.f32 %v2917, 0.0
      %v2950 = vmax.f32 %v2918, 0.0
      %v2951 = vmax.f32 %v2919, 0.0
      %v2952 = vmax.f32 %v2920, 0.0
      %v2953 = vmax.f32 %v2921, 0.0
      %v2954 = vmax.f32 %v2922, 0.0
      %v2955 = vmax.f32 %v2923, 0.0
      %v2956 = vmax.f32 %v2924, 0.0
      %v2957 = vmax.f32 %v2925, 0.0
      %v2958 = vmax.f32 %v2926, 0.0
      %v2959 = vmax.f32 %v2927, 0.0
      %v2960 = vmax.f32 %v2928, 0.0
      %v2961 = vmax.f32 %v2929, 0.0
      %v2962 = vmax.f32 %v2930, 0.0
      %v2963 = vmax.f32 %v2931, 0.0
      %v2964 = vmax.f32 %v2932, 0.0
      %v2965 = vmax.f32 %v2933, 0.0
      %v2966 = vmax.f32 %v2934, 0.0
      %v2967 = vmax.f32 %v2935, 0.0
      %v2968 = vmax.f32 %v2936, 0.0
      %v2969 = vmax.f32 %v2937, 0.0
      %v2970 = vmax.f32 %v2938, 0.0
      %v2971 = vmax.f32 %v2939, 0.0
      %v2972 = vmax.f32 %v2940, 0.0
      %v2973 = vld [vmem:[%s750 + $0x2] sm:$0xff]
      %v2974 = vld [vmem:[%s750 + $0xa] sm:$0xff]
      %v2975 = vld [vmem:[%s750 + $0x1a] sm:$0xff]
      %v2976 = vld [vmem:[%s750 + $0x22] sm:$0xff]
      %v2977 = vld [vmem:[%s750 + $0x32] sm:$0xff]
      %v2978 = vld [vmem:[%s750 + $0x3a] sm:$0xff]
      %v2979 = vld [vmem:[%s750 + $0x4a] sm:$0xff]
      %v2980 = vld [vmem:[%s750 + $0x52] sm:$0xff]
      %v2981 = vld [vmem:[%s750 + $0x62] sm:$0xff]
      %v2982 = vld [vmem:[%s750 + $0x6a] sm:$0xff]
      %v2983 = vld [vmem:[%s750 + $0x7a] sm:$0xff]
      %v2984 = vld [vmem:[%s750 + $0x82] sm:$0xff]
      %v2985 = vld [vmem:[%s750 + $0x92] sm:$0xff]
      %v2986 = vld [vmem:[%s750 + $0x9a] sm:$0xff]
      %v2987 = vld [vmem:[%s750 + $0xaa] sm:$0xff]
      %v2988 = vld [vmem:[%s750 + $0xb2] sm:$0xff]
      %v2989 = vld [vmem:[%s750 + $0xc2] sm:$0xff]
      %v2990 = vld [vmem:[%s750 + $0xca] sm:$0xff]
      %v2991 = vld [vmem:[%s750 + $0xda] sm:$0xff]
      %v2992 = vld [vmem:[%s750 + $0xe2] sm:$0xff]
      %v2993 = vld [vmem:[%s750 + $0xf2] sm:$0xff]
      %v2994 = vld [vmem:[%s750 + $0xfa] sm:$0xff]
      %v2995 = vld [vmem:[%s750 + $0x10a] sm:$0xff]
      %v2996 = vld [vmem:[%s750 + $0x112] sm:$0xff]
      %v2997 = vld [vmem:[%s750 + $0x122] sm:$0xff]
      %v2998 = vld [vmem:[%s750 + $0x12a] sm:$0xff]
      %v2999 = vld [vmem:[%s750 + $0x13a] sm:$0xff]
      %v3000 = vld [vmem:[%s750 + $0x142] sm:$0xff]
      %v3001 = vld [vmem:[%s750 + $0x152] sm:$0xff]
      %v3002 = vld [vmem:[%s750 + $0x15a] sm:$0xff]
      %v3003 = vld [vmem:[%s750 + $0x16a] sm:$0xff]
      %v3004 = vld [vmem:[%s750 + $0x172] sm:$0xff]
      %v3005 = vmax.f32 %v2973, 0.0
      %v3006 = vmax.f32 %v2974, 0.0
      %v3007 = vmax.f32 %v2975, 0.0
      %v3008 = vmax.f32 %v2976, 0.0
      %v3009 = vmax.f32 %v2977, 0.0
      %v3010 = vmax.f32 %v2978, 0.0
      %v3011 = vmax.f32 %v2979, 0.0
      %v3012 = vmax.f32 %v2980, 0.0
      %v3013 = vmax.f32 %v2981, 0.0
      %v3014 = vmax.f32 %v2982, 0.0
      %v3015 = vmax.f32 %v2983, 0.0
      %v3016 = vmax.f32 %v2984, 0.0
      %v3017 = vmax.f32 %v2985, 0.0
      %v3018 = vmax.f32 %v2986, 0.0
      %v3019 = vmax.f32 %v2987, 0.0
      %v3020 = vmax.f32 %v2988, 0.0
      %v3021 = vmax.f32 %v2989, 0.0
      %v3022 = vmax.f32 %v2990, 0.0
      %v3023 = vmax.f32 %v2991, 0.0
      %v3024 = vmax.f32 %v2992, 0.0
      %v3025 = vmax.f32 %v2993, 0.0
      %v3026 = vmax.f32 %v2994, 0.0
      %v3027 = vmax.f32 %v2995, 0.0
      %v3028 = vmax.f32 %v2996, 0.0
      %v3029 = vmax.f32 %v2997, 0.0
      %v3030 = vmax.f32 %v2998, 0.0
      %v3031 = vmax.f32 %v2999, 0.0
      %v3032 = vmax.f32 %v3000, 0.0
      %v3033 = vmax.f32 %v3001, 0.0
      %v3034 = vmax.f32 %v3002, 0.0
      %v3035 = vmax.f32 %v3003, 0.0
      %v3036 = vmax.f32 %v3004, 0.0
      %3069 = vrot.lane.b32.xlu0 %v3005, 64
      %v3070 = vpop.permute.xlu0 %3069
      %3071 = vrot.lane.b32.xlu0 %v3006, 64
      %v3072 = vpop.permute.xlu0 %3071
      %3073 = vrot.lane.b32.xlu0 %v3007, 64
      %v3074 = vpop.permute.xlu0 %3073
      %3075 = vrot.lane.b32.xlu0 %v3008, 64
      %v3076 = vpop.permute.xlu0 %3075
      %3077 = vrot.lane.b32.xlu0 %v3009, 64
      %v3078 = vpop.permute.xlu0 %3077
      %3079 = vrot.lane.b32.xlu0 %v3010, 64
      %v3080 = vpop.permute.xlu0 %3079
      %3081 = vrot.lane.b32.xlu0 %v3011, 64
      %v3082 = vpop.permute.xlu0 %3081
      %3083 = vrot.lane.b32.xlu0 %v3012, 64
      %v3084 = vpop.permute.xlu0 %3083
      %3085 = vrot.lane.b32.xlu0 %v3013, 64
      %v3086 = vpop.permute.xlu0 %3085
      %3087 = vrot.lane.b32.xlu0 %v3014, 64
      %v3088 = vpop.permute.xlu0 %3087
      %3089 = vrot.lane.b32.xlu0 %v3015, 64
      %v3090 = vpop.permute.xlu0 %3089
      %3091 = vrot.lane.b32.xlu0 %v3016, 64
      %v3092 = vpop.permute.xlu0 %3091
      %3093 = vrot.lane.b32.xlu0 %v3017, 64
      %v3094 = vpop.permute.xlu0 %3093
      %3095 = vrot.lane.b32.xlu0 %v3018, 64
      %v3096 = vpop.permute.xlu0 %3095
      %3097 = vrot.lane.b32.xlu0 %v3019, 64
      %v3098 = vpop.permute.xlu0 %3097
      %3099 = vrot.lane.b32.xlu0 %v3020, 64
      %v3100 = vpop.permute.xlu0 %3099
      %3101 = vrot.lane.b32.xlu0 %v3021, 64
      %v3102 = vpop.permute.xlu0 %3101
      %3103 = vrot.lane.b32.xlu0 %v3022, 64
      %v3104 = vpop.permute.xlu0 %3103
      %3105 = vrot.lane.b32.xlu0 %v3023, 64
      %v3106 = vpop.permute.xlu0 %3105
      %3107 = vrot.lane.b32.xlu0 %v3024, 64
      %v3108 = vpop.permute.xlu0 %3107
      %3109 = vrot.lane.b32.xlu0 %v3025, 64
      %v3110 = vpop.permute.xlu0 %3109
      %3111 = vrot.lane.b32.xlu0 %v3026, 64
      %v3112 = vpop.permute.xlu0 %3111
      %3113 = vrot.lane.b32.xlu0 %v3027, 64
      %v3114 = vpop.permute.xlu0 %3113
      %3115 = vrot.lane.b32.xlu0 %v3028, 64
      %v3116 = vpop.permute.xlu0 %3115
      %3117 = vrot.lane.b32.xlu0 %v3029, 64
      %v3118 = vpop.permute.xlu0 %3117
      %3119 = vrot.lane.b32.xlu0 %v3030, 64
      %v3120 = vpop.permute.xlu0 %3119
      %3121 = vrot.lane.b32.xlu0 %v3031, 64
      %v3122 = vpop.permute.xlu0 %3121
      %3123 = vrot.lane.b32.xlu0 %v3032, 64
      %v3124 = vpop.permute.xlu0 %3123
      %3125 = vrot.lane.b32.xlu0 %v3033, 64
      %v3126 = vpop.permute.xlu0 %3125
      %3127 = vrot.lane.b32.xlu0 %v3034, 64
      %v3128 = vpop.permute.xlu0 %3127
      %3129 = vrot.lane.b32.xlu0 %v3035, 64
      %v3130 = vpop.permute.xlu0 %3129
      %3131 = vrot.lane.b32.xlu0 %v3036, 64
      %v3132 = vpop.permute.xlu0 %3131
      %v3165 = vsel %vm334, %v2941, %v3070
      %v3166 = vsel %vm334, %v2942, %v3072
      %v3167 = vsel %vm334, %v2943, %v3074
      %v3168 = vsel %vm334, %v2944, %v3076
      %v3169 = vsel %vm334, %v2945, %v3078
      %v3170 = vsel %vm334, %v2946, %v3080
      %v3171 = vsel %vm334, %v2947, %v3082
      %v3172 = vsel %vm334, %v2948, %v3084
      %v3173 = vsel %vm334, %v2949, %v3086
      %v3174 = vsel %vm334, %v2950, %v3088
      %v3175 = vsel %vm334, %v2951, %v3090
      %v3176 = vsel %vm334, %v2952, %v3092
      %v3177 = vsel %vm334, %v2953, %v3094
      %v3178 = vsel %vm334, %v2954, %v3096
      %v3179 = vsel %vm334, %v2955, %v3098
      %v3180 = vsel %vm334, %v2956, %v3100
      %v3181 = vsel %vm334, %v2957, %v3102
      %v3182 = vsel %vm334, %v2958, %v3104
      %v3183 = vsel %vm334, %v2959, %v3106
      %v3184 = vsel %vm334, %v2960, %v3108
      %v3185 = vsel %vm334, %v2961, %v3110
      %v3186 = vsel %vm334, %v2962, %v3112
      %v3187 = vsel %vm334, %v2963, %v3114
      %v3188 = vsel %vm334, %v2964, %v3116
      %v3189 = vsel %vm334, %v2965, %v3118
      %v3190 = vsel %vm334, %v2966, %v3120
      %v3191 = vsel %vm334, %v2967, %v3122
      %v3192 = vsel %vm334, %v2968, %v3124
      %v3193 = vsel %vm334, %v2969, %v3126
      %v3194 = vsel %vm334, %v2970, %v3128
      %v3195 = vsel %vm334, %v2971, %v3130
      %v3196 = vsel %vm334, %v2972, %v3132
      %v3197 = vpack.c.bf16 %v3166, %v3165
      %v3198 = vpack.c.bf16 %v3168, %v3167
      %v3199 = vpack.c.bf16 %v3170, %v3169
      %v3200 = vpack.c.bf16 %v3172, %v3171
      %v3201 = vpack.c.bf16 %v3174, %v3173
      %v3202 = vpack.c.bf16 %v3176, %v3175
      %v3203 = vpack.c.bf16 %v3178, %v3177
      %v3204 = vpack.c.bf16 %v3180, %v3179
      %v3205 = vpack.c.bf16 %v3182, %v3181
      %v3206 = vpack.c.bf16 %v3184, %v3183
      %v3207 = vpack.c.bf16 %v3186, %v3185
      %v3208 = vpack.c.bf16 %v3188, %v3187
      %v3209 = vpack.c.bf16 %v3190, %v3189
      %v3210 = vpack.c.bf16 %v3192, %v3191
      %v3211 = vpack.c.bf16 %v3194, %v3193
      %v3212 = vpack.c.bf16 %v3196, %v3195
      %3213 = vst [vmem:[#allocation4 + $0x10] sm:$0xff] %v3197
      %3214 = vst [vmem:[#allocation4 + $0x38] sm:$0xff] %v3198
      %3215 = vst [vmem:[#allocation4 + $0x60] sm:$0xff] %v3199
      %3216 = vst [vmem:[#allocation4 + $0x88] sm:$0xff] %v3200
      %3217 = vst [vmem:[#allocation4 + $0xb0] sm:$0xff] %v3201
      %3218 = vst [vmem:[#allocation4 + $0xd8] sm:$0xff] %v3202
      %3219 = vst [vmem:[#allocation4 + $0x100] sm:$0xff] %v3203
      %3220 = vst [vmem:[#allocation4 + $0x128] sm:$0xff] %v3204
      %3221 = vst [vmem:[#allocation4 + $0x150] sm:$0xff] %v3205
      %3222 = vst [vmem:[#allocation4 + $0x178] sm:$0xff] %v3206
      %3223 = vst [vmem:[#allocation4 + $0x1a0] sm:$0xff] %v3207
      %3224 = vst [vmem:[#allocation4 + $0x1c8] sm:$0xff] %v3208
      %3225 = vst [vmem:[#allocation4 + $0x1f0] sm:$0xff] %v3209
      %3226 = vst [vmem:[#allocation4 + $0x218] sm:$0xff] %v3210
      %3227 = vst [vmem:[#allocation4 + $0x240] sm:$0xff] %v3211
      %3228 = vst [vmem:[#allocation4 + $0x268] sm:$0xff] %v3212
      %s3229 = scalar_lea.vmem [#allocation3], 48
      %v3230 = vld [vmem:[%s3229] sm:$0xff]
      %v3231 = vld [vmem:[%s3229 + $0x8] sm:$0xff]
      %v3232 = vld [vmem:[%s3229 + $0x18] sm:$0xff]
      %v3233 = vld [vmem:[%s3229 + $0x20] sm:$0xff]
      %v3234 = vld [vmem:[%s3229 + $0x30] sm:$0xff]
      %v3235 = vld [vmem:[%s3229 + $0x38] sm:$0xff]
      %v3236 = vld [vmem:[%s3229 + $0x48] sm:$0xff]
      %v3237 = vld [vmem:[%s3229 + $0x50] sm:$0xff]
      %v3238 = vld [vmem:[%s3229 + $0x60] sm:$0xff]
      %v3239 = vld [vmem:[%s3229 + $0x68] sm:$0xff]
      %v3240 = vld [vmem:[%s3229 + $0x78] sm:$0xff]
      %v3241 = vld [vmem:[%s3229 + $0x80] sm:$0xff]
      %v3242 = vld [vmem:[%s3229 + $0x90] sm:$0xff]
      %v3243 = vld [vmem:[%s3229 + $0x98] sm:$0xff]
      %v3244 = vld [vmem:[%s3229 + $0xa8] sm:$0xff]
      %v3245 = vld [vmem:[%s3229 + $0xb0] sm:$0xff]
      %v3246 = vld [vmem:[%s3229 + $0xc0] sm:$0xff]
      %v3247 = vld [vmem:[%s3229 + $0xc8] sm:$0xff]
      %v3248 = vld [vmem:[%s3229 + $0xd8] sm:$0xff]
      %v3249 = vld [vmem:[%s3229 + $0xe0] sm:$0xff]
      %v3250 = vld [vmem:[%s3229 + $0xf0] sm:$0xff]
      %v3251 = vld [vmem:[%s3229 + $0xf8] sm:$0xff]
      %v3252 = vld [vmem:[%s3229 + $0x108] sm:$0xff]
      %v3253 = vld [vmem:[%s3229 + $0x110] sm:$0xff]
      %v3254 = vld [vmem:[%s3229 + $0x120] sm:$0xff]
      %v3255 = vld [vmem:[%s3229 + $0x128] sm:$0xff]
      %v3256 = vld [vmem:[%s3229 + $0x138] sm:$0xff]
      %v3257 = vld [vmem:[%s3229 + $0x140] sm:$0xff]
      %v3258 = vld [vmem:[%s3229 + $0x150] sm:$0xff]
      %v3259 = vld [vmem:[%s3229 + $0x158] sm:$0xff]
      %v3260 = vld [vmem:[%s3229 + $0x168] sm:$0xff]
      %v3261 = vld [vmem:[%s3229 + $0x170] sm:$0xff]
      %v3262 = vmax.f32 %v3230, 0.0
      %v3263 = vmax.f32 %v3231, 0.0
      %v3264 = vmax.f32 %v3232, 0.0
      %v3265 = vmax.f32 %v3233, 0.0
      %v3266 = vmax.f32 %v3234, 0.0
      %v3267 = vmax.f32 %v3235, 0.0
      %v3268 = vmax.f32 %v3236, 0.0
      %v3269 = vmax.f32 %v3237, 0.0
      %v3270 = vmax.f32 %v3238, 0.0
      %v3271 = vmax.f32 %v3239, 0.0
      %v3272 = vmax.f32 %v3240, 0.0
      %v3273 = vmax.f32 %v3241, 0.0
      %v3274 = vmax.f32 %v3242, 0.0
      %v3275 = vmax.f32 %v3243, 0.0
      %v3276 = vmax.f32 %v3244, 0.0
      %v3277 = vmax.f32 %v3245, 0.0
      %v3278 = vmax.f32 %v3246, 0.0
      %v3279 = vmax.f32 %v3247, 0.0
      %v3280 = vmax.f32 %v3248, 0.0
      %v3281 = vmax.f32 %v3249, 0.0
      %v3282 = vmax.f32 %v3250, 0.0
      %v3283 = vmax.f32 %v3251, 0.0
      %v3284 = vmax.f32 %v3252, 0.0
      %v3285 = vmax.f32 %v3253, 0.0
      %v3286 = vmax.f32 %v3254, 0.0
      %v3287 = vmax.f32 %v3255, 0.0
      %v3288 = vmax.f32 %v3256, 0.0
      %v3289 = vmax.f32 %v3257, 0.0
      %v3290 = vmax.f32 %v3258, 0.0
      %v3291 = vmax.f32 %v3259, 0.0
      %v3292 = vmax.f32 %v3260, 0.0
      %v3293 = vmax.f32 %v3261, 0.0
      %v3294 = vld [vmem:[%s3229 + $0x1] sm:$0xff]
      %v3295 = vld [vmem:[%s3229 + $0x9] sm:$0xff]
      %v3296 = vld [vmem:[%s3229 + $0x19] sm:$0xff]
      %v3297 = vld [vmem:[%s3229 + $0x21] sm:$0xff]
      %v3298 = vld [vmem:[%s3229 + $0x31] sm:$0xff]
      %v3299 = vld [vmem:[%s3229 + $0x39] sm:$0xff]
      %v3300 = vld [vmem:[%s3229 + $0x49] sm:$0xff]
      %v3301 = vld [vmem:[%s3229 + $0x51] sm:$0xff]
      %v3302 = vld [vmem:[%s3229 + $0x61] sm:$0xff]
      %v3303 = vld [vmem:[%s3229 + $0x69] sm:$0xff]
      %v3304 = vld [vmem:[%s3229 + $0x79] sm:$0xff]
      %v3305 = vld [vmem:[%s3229 + $0x81] sm:$0xff]
      %v3306 = vld [vmem:[%s3229 + $0x91] sm:$0xff]
      %v3307 = vld [vmem:[%s3229 + $0x99] sm:$0xff]
      %v3308 = vld [vmem:[%s3229 + $0xa9] sm:$0xff]
      %v3309 = vld [vmem:[%s3229 + $0xb1] sm:$0xff]
      %v3310 = vld [vmem:[%s3229 + $0xc1] sm:$0xff]
      %v3311 = vld [vmem:[%s3229 + $0xc9] sm:$0xff]
      %v3312 = vld [vmem:[%s3229 + $0xd9] sm:$0xff]
      %v3313 = vld [vmem:[%s3229 + $0xe1] sm:$0xff]
      %v3314 = vld [vmem:[%s3229 + $0xf1] sm:$0xff]
      %v3315 = vld [vmem:[%s3229 + $0xf9] sm:$0xff]
      %v3316 = vld [vmem:[%s3229 + $0x109] sm:$0xff]
      %v3317 = vld [vmem:[%s3229 + $0x111] sm:$0xff]
      %v3318 = vld [vmem:[%s3229 + $0x121] sm:$0xff]
      %v3319 = vld [vmem:[%s3229 + $0x129] sm:$0xff]
      %v3320 = vld [vmem:[%s3229 + $0x139] sm:$0xff]
      %v3321 = vld [vmem:[%s3229 + $0x141] sm:$0xff]
      %v3322 = vld [vmem:[%s3229 + $0x151] sm:$0xff]
      %v3323 = vld [vmem:[%s3229 + $0x159] sm:$0xff]
      %v3324 = vld [vmem:[%s3229 + $0x169] sm:$0xff]
      %v3325 = vld [vmem:[%s3229 + $0x171] sm:$0xff]
      %v3326 = vmax.f32 %v3294, 0.0
      %v3327 = vmax.f32 %v3295, 0.0
      %v3328 = vmax.f32 %v3296, 0.0
      %v3329 = vmax.f32 %v3297, 0.0
      %v3330 = vmax.f32 %v3298, 0.0
      %v3331 = vmax.f32 %v3299, 0.0
      %v3332 = vmax.f32 %v3300, 0.0
      %v3333 = vmax.f32 %v3301, 0.0
      %v3334 = vmax.f32 %v3302, 0.0
      %v3335 = vmax.f32 %v3303, 0.0
      %v3336 = vmax.f32 %v3304, 0.0
      %v3337 = vmax.f32 %v3305, 0.0
      %v3338 = vmax.f32 %v3306, 0.0
      %v3339 = vmax.f32 %v3307, 0.0
      %v3340 = vmax.f32 %v3308, 0.0
      %v3341 = vmax.f32 %v3309, 0.0
      %v3342 = vmax.f32 %v3310, 0.0
      %v3343 = vmax.f32 %v3311, 0.0
      %v3344 = vmax.f32 %v3312, 0.0
      %v3345 = vmax.f32 %v3313, 0.0
      %v3346 = vmax.f32 %v3314, 0.0
      %v3347 = vmax.f32 %v3315, 0.0
      %v3348 = vmax.f32 %v3316, 0.0
      %v3349 = vmax.f32 %v3317, 0.0
      %v3350 = vmax.f32 %v3318, 0.0
      %v3351 = vmax.f32 %v3319, 0.0
      %v3352 = vmax.f32 %v3320, 0.0
      %v3353 = vmax.f32 %v3321, 0.0
      %v3354 = vmax.f32 %v3322, 0.0
      %v3355 = vmax.f32 %v3323, 0.0
      %v3356 = vmax.f32 %v3324, 0.0
      %v3357 = vmax.f32 %v3325, 0.0
      %3390 = vrot.lane.b32.xlu0 %v3326, 64
      %v3391 = vpop.permute.xlu0 %3390
      %3392 = vrot.lane.b32.xlu0 %v3327, 64
      %v3393 = vpop.permute.xlu0 %3392
      %3394 = vrot.lane.b32.xlu0 %v3328, 64
      %v3395 = vpop.permute.xlu0 %3394
      %3396 = vrot.lane.b32.xlu0 %v3329, 64
      %v3397 = vpop.permute.xlu0 %3396
      %3398 = vrot.lane.b32.xlu0 %v3330, 64
      %v3399 = vpop.permute.xlu0 %3398
      %3400 = vrot.lane.b32.xlu0 %v3331, 64
      %v3401 = vpop.permute.xlu0 %3400
      %3402 = vrot.lane.b32.xlu0 %v3332, 64
      %v3403 = vpop.permute.xlu0 %3402
      %3404 = vrot.lane.b32.xlu0 %v3333, 64
      %v3405 = vpop.permute.xlu0 %3404
      %3406 = vrot.lane.b32.xlu0 %v3334, 64
      %v3407 = vpop.permute.xlu0 %3406
      %3408 = vrot.lane.b32.xlu0 %v3335, 64
      %v3409 = vpop.permute.xlu0 %3408
      %3410 = vrot.lane.b32.xlu0 %v3336, 64
      %v3411 = vpop.permute.xlu0 %3410
      %3412 = vrot.lane.b32.xlu0 %v3337, 64
      %v3413 = vpop.permute.xlu0 %3412
      %3414 = vrot.lane.b32.xlu0 %v3338, 64
      %v3415 = vpop.permute.xlu0 %3414
      %3416 = vrot.lane.b32.xlu0 %v3339, 64
      %v3417 = vpop.permute.xlu0 %3416
      %3418 = vrot.lane.b32.xlu0 %v3340, 64
      %v3419 = vpop.permute.xlu0 %3418
      %3420 = vrot.lane.b32.xlu0 %v3341, 64
      %v3421 = vpop.permute.xlu0 %3420
      %3422 = vrot.lane.b32.xlu0 %v3342, 64
      %v3423 = vpop.permute.xlu0 %3422
      %3424 = vrot.lane.b32.xlu0 %v3343, 64
      %v3425 = vpop.permute.xlu0 %3424
      %3426 = vrot.lane.b32.xlu0 %v3344, 64
      %v3427 = vpop.permute.xlu0 %3426
      %3428 = vrot.lane.b32.xlu0 %v3345, 64
      %v3429 = vpop.permute.xlu0 %3428
      %3430 = vrot.lane.b32.xlu0 %v3346, 64
      %v3431 = vpop.permute.xlu0 %3430
      %3432 = vrot.lane.b32.xlu0 %v3347, 64
      %v3433 = vpop.permute.xlu0 %3432
      %3434 = vrot.lane.b32.xlu0 %v3348, 64
      %v3435 = vpop.permute.xlu0 %3434
      %3436 = vrot.lane.b32.xlu0 %v3349, 64
      %v3437 = vpop.permute.xlu0 %3436
      %3438 = vrot.lane.b32.xlu0 %v3350, 64
      %v3439 = vpop.permute.xlu0 %3438
      %3440 = vrot.lane.b32.xlu0 %v3351, 64
      %v3441 = vpop.permute.xlu0 %3440
      %3442 = vrot.lane.b32.xlu0 %v3352, 64
      %v3443 = vpop.permute.xlu0 %3442
      %3444 = vrot.lane.b32.xlu0 %v3353, 64
      %v3445 = vpop.permute.xlu0 %3444
      %3446 = vrot.lane.b32.xlu0 %v3354, 64
      %v3447 = vpop.permute.xlu0 %3446
      %3448 = vrot.lane.b32.xlu0 %v3355, 64
      %v3449 = vpop.permute.xlu0 %3448
      %3450 = vrot.lane.b32.xlu0 %v3356, 64
      %v3451 = vpop.permute.xlu0 %3450
      %3452 = vrot.lane.b32.xlu0 %v3357, 64
      %v3453 = vpop.permute.xlu0 %3452
      %v3486 = vsel %vm334, %v3262, %v3391
      %v3487 = vsel %vm334, %v3263, %v3393
      %v3488 = vsel %vm334, %v3264, %v3395
      %v3489 = vsel %vm334, %v3265, %v3397
      %v3490 = vsel %vm334, %v3266, %v3399
      %v3491 = vsel %vm334, %v3267, %v3401
      %v3492 = vsel %vm334, %v3268, %v3403
      %v3493 = vsel %vm334, %v3269, %v3405
      %v3494 = vsel %vm334, %v3270, %v3407
      %v3495 = vsel %vm334, %v3271, %v3409
      %v3496 = vsel %vm334, %v3272, %v3411
      %v3497 = vsel %vm334, %v3273, %v3413
      %v3498 = vsel %vm334, %v3274, %v3415
      %v3499 = vsel %vm334, %v3275, %v3417
      %v3500 = vsel %vm334, %v3276, %v3419
      %v3501 = vsel %vm334, %v3277, %v3421
      %v3502 = vsel %vm334, %v3278, %v3423
      %v3503 = vsel %vm334, %v3279, %v3425
      %v3504 = vsel %vm334, %v3280, %v3427
      %v3505 = vsel %vm334, %v3281, %v3429
      %v3506 = vsel %vm334, %v3282, %v3431
      %v3507 = vsel %vm334, %v3283, %v3433
      %v3508 = vsel %vm334, %v3284, %v3435
      %v3509 = vsel %vm334, %v3285, %v3437
      %v3510 = vsel %vm334, %v3286, %v3439
      %v3511 = vsel %vm334, %v3287, %v3441
      %v3512 = vsel %vm334, %v3288, %v3443
      %v3513 = vsel %vm334, %v3289, %v3445
      %v3514 = vsel %vm334, %v3290, %v3447
      %v3515 = vsel %vm334, %v3291, %v3449
      %v3516 = vsel %vm334, %v3292, %v3451
      %v3517 = vsel %vm334, %v3293, %v3453
      %v3518 = vpack.c.bf16 %v3487, %v3486
      %v3519 = vpack.c.bf16 %v3489, %v3488
      %v3520 = vpack.c.bf16 %v3491, %v3490
      %v3521 = vpack.c.bf16 %v3493, %v3492
      %v3522 = vpack.c.bf16 %v3495, %v3494
      %v3523 = vpack.c.bf16 %v3497, %v3496
      %v3524 = vpack.c.bf16 %v3499, %v3498
      %v3525 = vpack.c.bf16 %v3501, %v3500
      %v3526 = vpack.c.bf16 %v3503, %v3502
      %v3527 = vpack.c.bf16 %v3505, %v3504
      %v3528 = vpack.c.bf16 %v3507, %v3506
      %v3529 = vpack.c.bf16 %v3509, %v3508
      %v3530 = vpack.c.bf16 %v3511, %v3510
      %v3531 = vpack.c.bf16 %v3513, %v3512
      %v3532 = vpack.c.bf16 %v3515, %v3514
      %v3533 = vpack.c.bf16 %v3517, %v3516
      %3534 = vst [vmem:[#allocation4 + $0x18] sm:$0xff] %v3518
      %3535 = vst [vmem:[#allocation4 + $0x40] sm:$0xff] %v3519
      %3536 = vst [vmem:[#allocation4 + $0x68] sm:$0xff] %v3520
      %3537 = vst [vmem:[#allocation4 + $0x90] sm:$0xff] %v3521
      %3538 = vst [vmem:[#allocation4 + $0xb8] sm:$0xff] %v3522
      %3539 = vst [vmem:[#allocation4 + $0xe0] sm:$0xff] %v3523
      %3540 = vst [vmem:[#allocation4 + $0x108] sm:$0xff] %v3524
      %3541 = vst [vmem:[#allocation4 + $0x130] sm:$0xff] %v3525
      %3542 = vst [vmem:[#allocation4 + $0x158] sm:$0xff] %v3526
      %3543 = vst [vmem:[#allocation4 + $0x180] sm:$0xff] %v3527
      %3544 = vst [vmem:[#allocation4 + $0x1a8] sm:$0xff] %v3528
      %3545 = vst [vmem:[#allocation4 + $0x1d0] sm:$0xff] %v3529
      %3546 = vst [vmem:[#allocation4 + $0x1f8] sm:$0xff] %v3530
      %3547 = vst [vmem:[#allocation4 + $0x220] sm:$0xff] %v3531
      %3548 = vst [vmem:[#allocation4 + $0x248] sm:$0xff] %v3532
      %3549 = vst [vmem:[#allocation4 + $0x270] sm:$0xff] %v3533
      %v3550 = vld [vmem:[%s3229 + $0x2] sm:$0xff]
      %v3551 = vld [vmem:[%s3229 + $0xa] sm:$0xff]
      %v3552 = vld [vmem:[%s3229 + $0x1a] sm:$0xff]
      %v3553 = vld [vmem:[%s3229 + $0x22] sm:$0xff]
      %v3554 = vld [vmem:[%s3229 + $0x32] sm:$0xff]
      %v3555 = vld [vmem:[%s3229 + $0x3a] sm:$0xff]
      %v3556 = vld [vmem:[%s3229 + $0x4a] sm:$0xff]
      %v3557 = vld [vmem:[%s3229 + $0x52] sm:$0xff]
      %v3558 = vld [vmem:[%s3229 + $0x62] sm:$0xff]
      %v3559 = vld [vmem:[%s3229 + $0x6a] sm:$0xff]
      %v3560 = vld [vmem:[%s3229 + $0x7a] sm:$0xff]
      %v3561 = vld [vmem:[%s3229 + $0x82] sm:$0xff]
      %v3562 = vld [vmem:[%s3229 + $0x92] sm:$0xff]
      %v3563 = vld [vmem:[%s3229 + $0x9a] sm:$0xff]
      %v3564 = vld [vmem:[%s3229 + $0xaa] sm:$0xff]
      %v3565 = vld [vmem:[%s3229 + $0xb2] sm:$0xff]
      %v3566 = vld [vmem:[%s3229 + $0xc2] sm:$0xff]
      %v3567 = vld [vmem:[%s3229 + $0xca] sm:$0xff]
      %v3568 = vld [vmem:[%s3229 + $0xda] sm:$0xff]
      %v3569 = vld [vmem:[%s3229 + $0xe2] sm:$0xff]
      %v3570 = vld [vmem:[%s3229 + $0xf2] sm:$0xff]
      %v3571 = vld [vmem:[%s3229 + $0xfa] sm:$0xff]
      %v3572 = vld [vmem:[%s3229 + $0x10a] sm:$0xff]
      %v3573 = vld [vmem:[%s3229 + $0x112] sm:$0xff]
      %v3574 = vld [vmem:[%s3229 + $0x122] sm:$0xff]
      %v3575 = vld [vmem:[%s3229 + $0x12a] sm:$0xff]
      %v3576 = vld [vmem:[%s3229 + $0x13a] sm:$0xff]
      %v3577 = vld [vmem:[%s3229 + $0x142] sm:$0xff]
      %v3578 = vld [vmem:[%s3229 + $0x152] sm:$0xff]
      %v3579 = vld [vmem:[%s3229 + $0x15a] sm:$0xff]
      %v3580 = vld [vmem:[%s3229 + $0x16a] sm:$0xff]
      %v3581 = vld [vmem:[%s3229 + $0x172] sm:$0xff]
      %v3582 = vmax.f32 %v3550, 0.0
      %v3583 = vmax.f32 %v3551, 0.0
      %v3584 = vmax.f32 %v3552, 0.0
      %v3585 = vmax.f32 %v3553, 0.0
      %v3586 = vmax.f32 %v3554, 0.0
      %v3587 = vmax.f32 %v3555, 0.0
      %v3588 = vmax.f32 %v3556, 0.0
      %v3589 = vmax.f32 %v3557, 0.0
      %v3590 = vmax.f32 %v3558, 0.0
      %v3591 = vmax.f32 %v3559, 0.0
      %v3592 = vmax.f32 %v3560, 0.0
      %v3593 = vmax.f32 %v3561, 0.0
      %v3594 = vmax.f32 %v3562, 0.0
      %v3595 = vmax.f32 %v3563, 0.0
      %v3596 = vmax.f32 %v3564, 0.0
      %v3597 = vmax.f32 %v3565, 0.0
      %v3598 = vmax.f32 %v3566, 0.0
      %v3599 = vmax.f32 %v3567, 0.0
      %v3600 = vmax.f32 %v3568, 0.0
      %v3601 = vmax.f32 %v3569, 0.0
      %v3602 = vmax.f32 %v3570, 0.0
      %v3603 = vmax.f32 %v3571, 0.0
      %v3604 = vmax.f32 %v3572, 0.0
      %v3605 = vmax.f32 %v3573, 0.0
      %v3606 = vmax.f32 %v3574, 0.0
      %v3607 = vmax.f32 %v3575, 0.0
      %v3608 = vmax.f32 %v3576, 0.0
      %v3609 = vmax.f32 %v3577, 0.0
      %v3610 = vmax.f32 %v3578, 0.0
      %v3611 = vmax.f32 %v3579, 0.0
      %v3612 = vmax.f32 %v3580, 0.0
      %v3613 = vmax.f32 %v3581, 0.0
      %v3614 = vpack.c.bf16 %v3583, %v3582
      %v3615 = vpack.c.bf16 %v3585, %v3584
      %v3616 = vpack.c.bf16 %v3587, %v3586
      %v3617 = vpack.c.bf16 %v3589, %v3588
      %v3618 = vpack.c.bf16 %v3591, %v3590
      %v3619 = vpack.c.bf16 %v3593, %v3592
      %v3620 = vpack.c.bf16 %v3595, %v3594
      %v3621 = vpack.c.bf16 %v3597, %v3596
      %v3622 = vpack.c.bf16 %v3599, %v3598
      %v3623 = vpack.c.bf16 %v3601, %v3600
      %v3624 = vpack.c.bf16 %v3603, %v3602
      %v3625 = vpack.c.bf16 %v3605, %v3604
      %v3626 = vpack.c.bf16 %v3607, %v3606
      %v3627 = vpack.c.bf16 %v3609, %v3608
      %v3628 = vpack.c.bf16 %v3611, %v3610
      %v3629 = vpack.c.bf16 %v3613, %v3612
      %3630 = vst.msk [vmem:[#allocation4 + $0x20] sm:$0xff] %vm334, %v3614
      %3631 = vst.msk [vmem:[#allocation4 + $0x48] sm:$0xff] %vm334, %v3615
      %3632 = vst.msk [vmem:[#allocation4 + $0x70] sm:$0xff] %vm334, %v3616
      %3633 = vst.msk [vmem:[#allocation4 + $0x98] sm:$0xff] %vm334, %v3617
      %3634 = vst.msk [vmem:[#allocation4 + $0xc0] sm:$0xff] %vm334, %v3618
      %3635 = vst.msk [vmem:[#allocation4 + $0xe8] sm:$0xff] %vm334, %v3619
      %3636 = vst.msk [vmem:[#allocation4 + $0x110] sm:$0xff] %vm334, %v3620
      %3637 = vst.msk [vmem:[#allocation4 + $0x138] sm:$0xff] %vm334, %v3621
      %3638 = vst.msk [vmem:[#allocation4 + $0x160] sm:$0xff] %vm334, %v3622
      %3639 = vst.msk [vmem:[#allocation4 + $0x188] sm:$0xff] %vm334, %v3623
      %3640 = vst.msk [vmem:[#allocation4 + $0x1b0] sm:$0xff] %vm334, %v3624
      %3641 = vst.msk [vmem:[#allocation4 + $0x1d8] sm:$0xff] %vm334, %v3625
      %3642 = vst.msk [vmem:[#allocation4 + $0x200] sm:$0xff] %vm334, %v3626
      %3643 = vst.msk [vmem:[#allocation4 + $0x228] sm:$0xff] %vm334, %v3627
      %3644 = vst.msk [vmem:[#allocation4 + $0x250] sm:$0xff] %vm334, %v3628
      %3645 = vst.msk [vmem:[#allocation4 + $0x278] sm:$0xff] %vm334, %v3629
      %v3646 = vld [vmem:[#allocation4] sm:$0xff]
      %v3647 = vld [vmem:[#allocation4 + $0x8] sm:$0xff]
      %v3648 = vld [vmem:[#allocation4 + $0x10] sm:$0xff]
      %v3649 = vld [vmem:[#allocation4 + $0x18] sm:$0xff]
      %v3650 = vld [vmem:[#allocation4 + $0x20] sm:$0xff]
      %v3651 = vld [vmem:[#allocation4 + $0x28] sm:$0xff]
      %v3652 = vld [vmem:[#allocation4 + $0x30] sm:$0xff]
      %v3653 = vld [vmem:[#allocation4 + $0x38] sm:$0xff]
      %v3654 = vld [vmem:[#allocation4 + $0x40] sm:$0xff]
      %v3655 = vld [vmem:[#allocation4 + $0x48] sm:$0xff]
      %v3656 = vld [vmem:[#allocation4 + $0x50] sm:$0xff]
      %v3657 = vld [vmem:[#allocation4 + $0x58] sm:$0xff]
      %v3658 = vld [vmem:[#allocation4 + $0x60] sm:$0xff]
      %v3659 = vld [vmem:[#allocation4 + $0x68] sm:$0xff]
      %v3660 = vld [vmem:[#allocation4 + $0x70] sm:$0xff]
      %v3661 = vld [vmem:[#allocation4 + $0x78] sm:$0xff]
      %v3662 = vld [vmem:[#allocation4 + $0x80] sm:$0xff]
      %v3663 = vld [vmem:[#allocation4 + $0x88] sm:$0xff]
      %v3664 = vld [vmem:[#allocation4 + $0x90] sm:$0xff]
      %v3665 = vld [vmem:[#allocation4 + $0x98] sm:$0xff]
      %v3666 = vld [vmem:[#allocation4 + $0xa0] sm:$0xff]
      %v3667 = vld [vmem:[#allocation4 + $0xa8] sm:$0xff]
      %v3668 = vld [vmem:[#allocation4 + $0xb0] sm:$0xff]
      %v3669 = vld [vmem:[#allocation4 + $0xb8] sm:$0xff]
      %v3670 = vld [vmem:[#allocation4 + $0xc0] sm:$0xff]
      %v3671 = vld [vmem:[#allocation4 + $0xc8] sm:$0xff]
      %v3672 = vld [vmem:[#allocation4 + $0xd0] sm:$0xff]
      %v3673 = vld [vmem:[#allocation4 + $0xd8] sm:$0xff]
      %v3674 = vld [vmem:[#allocation4 + $0xe0] sm:$0xff]
      %v3675 = vld [vmem:[#allocation4 + $0xe8] sm:$0xff]
      %v3676 = vld [vmem:[#allocation4 + $0xf0] sm:$0xff]
      %v3677 = vld [vmem:[#allocation4 + $0xf8] sm:$0xff]
      %v3678 = vld [vmem:[#allocation4 + $0x100] sm:$0xff]
      %v3679 = vld [vmem:[#allocation4 + $0x108] sm:$0xff]
      %v3680 = vld [vmem:[#allocation4 + $0x110] sm:$0xff]
      %v3681 = vld [vmem:[#allocation4 + $0x118] sm:$0xff]
      %v3682 = vld [vmem:[#allocation4 + $0x120] sm:$0xff]
      %v3683 = vld [vmem:[#allocation4 + $0x128] sm:$0xff]
      %v3684 = vld [vmem:[#allocation4 + $0x130] sm:$0xff]
      %v3685 = vld [vmem:[#allocation4 + $0x138] sm:$0xff]
      %v3686 = vld [vmem:[#allocation4 + $0x140] sm:$0xff]
      %v3687 = vld [vmem:[#allocation4 + $0x148] sm:$0xff]
      %v3688 = vld [vmem:[#allocation4 + $0x150] sm:$0xff]
      %v3689 = vld [vmem:[#allocation4 + $0x158] sm:$0xff]
      %v3690 = vld [vmem:[#allocation4 + $0x160] sm:$0xff]
      %v3691 = vld [vmem:[#allocation4 + $0x168] sm:$0xff]
      %v3692 = vld [vmem:[#allocation4 + $0x170] sm:$0xff]
      %v3693 = vld [vmem:[#allocation4 + $0x178] sm:$0xff]
      %v3694 = vld [vmem:[#allocation4 + $0x180] sm:$0xff]
      %v3695 = vld [vmem:[#allocation4 + $0x188] sm:$0xff]
      %v3696 = vld [vmem:[#allocation4 + $0x190] sm:$0xff]
      %v3697 = vld [vmem:[#allocation4 + $0x198] sm:$0xff]
      %v3698 = vld [vmem:[#allocation4 + $0x1a0] sm:$0xff]
      %v3699 = vld [vmem:[#allocation4 + $0x1a8] sm:$0xff]
      %v3700 = vld [vmem:[#allocation4 + $0x1b0] sm:$0xff]
      %v3701 = vld [vmem:[#allocation4 + $0x1b8] sm:$0xff]
      %v3702 = vld [vmem:[#allocation4 + $0x1c0] sm:$0xff]
      %v3703 = vld [vmem:[#allocation4 + $0x1c8] sm:$0xff]
      %v3704 = vld [vmem:[#allocation4 + $0x1d0] sm:$0xff]
      %v3705 = vld [vmem:[#allocation4 + $0x1d8] sm:$0xff]
      %v3706 = vld [vmem:[#allocation4 + $0x1e0] sm:$0xff]
      %v3707 = vld [vmem:[#allocation4 + $0x1e8] sm:$0xff]
      %v3708 = vld [vmem:[#allocation4 + $0x1f0] sm:$0xff]
      %v3709 = vld [vmem:[#allocation4 + $0x1f8] sm:$0xff]
      %v3710 = vld [vmem:[#allocation4 + $0x200] sm:$0xff]
      %v3711 = vld [vmem:[#allocation4 + $0x208] sm:$0xff]
      %v3712 = vld [vmem:[#allocation4 + $0x210] sm:$0xff]
      %v3713 = vld [vmem:[#allocation4 + $0x218] sm:$0xff]
      %v3714 = vld [vmem:[#allocation4 + $0x220] sm:$0xff]
      %v3715 = vld [vmem:[#allocation4 + $0x228] sm:$0xff]
      %v3716 = vld [vmem:[#allocation4 + $0x230] sm:$0xff]
      %v3717 = vld [vmem:[#allocation4 + $0x238] sm:$0xff]
      %v3718 = vld [vmem:[#allocation4 + $0x240] sm:$0xff]
      %v3719 = vld [vmem:[#allocation4 + $0x248] sm:$0xff]
      %v3720 = vld [vmem:[#allocation4 + $0x250] sm:$0xff]
      %v3721 = vld [vmem:[#allocation4 + $0x258] sm:$0xff]
      %v3722 = vld [vmem:[#allocation4 + $0x260] sm:$0xff]
      %v3723 = vld [vmem:[#allocation4 + $0x268] sm:$0xff]
      %v3724 = vld [vmem:[#allocation4 + $0x270] sm:$0xff]
      %v3725 = vld [vmem:[#allocation4 + $0x278] sm:$0xff]
      %v3726 = vld [vmem:[%s3] sm:$0xf]
      %v3727 = vld [vmem:[%s3 + $0x4] sm:$0xf]
      %v3728 = vld [vmem:[%s3 + $0x8] sm:$0xf]
      %v3729 = vld [vmem:[%s3 + $0xc] sm:$0xf]
      %v3730 = vld [vmem:[%s3 + $0x10] sm:$0xf]
      %v3731 = vld [vmem:[%s3 + $0x14] sm:$0xf]
      %v3732 = vld [vmem:[%s3 + $0x18] sm:$0xf]
      %v3733 = vld [vmem:[%s3 + $0x1c] sm:$0xf]
      %v3734 = vld [vmem:[%s3 + $0x20] sm:$0xf]
      %v3735 = vld [vmem:[%s3 + $0x24] sm:$0xf]
      %v3736 = vld [vmem:[%s3 + $0x28] sm:$0xf]
      %v3737 = vld [vmem:[%s3 + $0x2c] sm:$0xf]
      %v3738 = vld [vmem:[%s3 + $0x30] sm:$0xf]
      %v3739 = vld [vmem:[%s3 + $0x34] sm:$0xf]
      %v3740 = vld [vmem:[%s3 + $0x38] sm:$0xf]
      %v3741 = vld [vmem:[%s3 + $0x3c] sm:$0xf]
      %v3742 = vld [vmem:[%s3 + $0x40] sm:$0xf]
      %v3743 = vld [vmem:[%s3 + $0x44] sm:$0xf]
      %v3744 = vld [vmem:[%s3 + $0x48] sm:$0xf]
      %v3745 = vld [vmem:[%s3 + $0x4c] sm:$0xf]
      %v3746 = vld [vmem:[%s3 + $0x50] sm:$0xf]
      %v3747 = vld [vmem:[%s3 + $0x54] sm:$0xf]
      %v3748 = vld [vmem:[%s3 + $0x58] sm:$0xf]
      %v3749 = vld [vmem:[%s3 + $0x5c] sm:$0xf]
      %v3750 = vld [vmem:[%s3 + $0x60] sm:$0xf]
      %v3751 = vld [vmem:[%s3 + $0x64] sm:$0xf]
      %v3752 = vld [vmem:[%s3 + $0x68] sm:$0xf]
      %v3753 = vld [vmem:[%s3 + $0x6c] sm:$0xf]
      %v3754 = vld [vmem:[%s3 + $0x70] sm:$0xf]
      %v3755 = vld [vmem:[%s3 + $0x74] sm:$0xf]
      %v3756 = vld [vmem:[%s3 + $0x78] sm:$0xf]
      %v3757 = vld [vmem:[%s3 + $0x7c] sm:$0xf]
      %v3758 = vld [vmem:[%s3 + $0x80] sm:$0xf]
      %v3759 = vld [vmem:[%s3 + $0x84] sm:$0xf]
      %v3760 = vld [vmem:[%s3 + $0x88] sm:$0xf]
      %v3761 = vld [vmem:[%s3 + $0x8c] sm:$0xf]
      %v3762 = vld [vmem:[%s3 + $0x90] sm:$0xf]
      %v3763 = vld [vmem:[%s3 + $0x94] sm:$0xf]
      %v3764 = vld [vmem:[%s3 + $0x98] sm:$0xf]
      %v3765 = vld [vmem:[%s3 + $0x9c] sm:$0xf]
      %v3766 = vld [vmem:[%s3 + $0xa0] sm:$0xf]
      %v3767 = vld [vmem:[%s3 + $0xa4] sm:$0xf]
      %v3768 = vld [vmem:[%s3 + $0xa8] sm:$0xf]
      %v3769 = vld [vmem:[%s3 + $0xac] sm:$0xf]
      %v3770 = vld [vmem:[%s3 + $0xb0] sm:$0xf]
      %v3771 = vld [vmem:[%s3 + $0xb4] sm:$0xf]
      %v3772 = vld [vmem:[%s3 + $0xb8] sm:$0xf]
      %v3773 = vld [vmem:[%s3 + $0xbc] sm:$0xf]
      %v3774 = vld [vmem:[%s3 + $0xc0] sm:$0xf]
      %v3775 = vld [vmem:[%s3 + $0xc4] sm:$0xf]
      %v3776 = vld [vmem:[%s3 + $0xc8] sm:$0xf]
      %v3777 = vld [vmem:[%s3 + $0xcc] sm:$0xf]
      %v3778 = vld [vmem:[%s3 + $0xd0] sm:$0xf]
      %v3779 = vld [vmem:[%s3 + $0xd4] sm:$0xf]
      %v3780 = vld [vmem:[%s3 + $0xd8] sm:$0xf]
      %v3781 = vld [vmem:[%s3 + $0xdc] sm:$0xf]
      %v3782 = vld [vmem:[%s3 + $0xe0] sm:$0xf]
      %v3783 = vld [vmem:[%s3 + $0xe4] sm:$0xf]
      %v3784 = vld [vmem:[%s3 + $0xe8] sm:$0xf]
      %v3785 = vld [vmem:[%s3 + $0xec] sm:$0xf]
      %v3786 = vld [vmem:[%s3 + $0xf0] sm:$0xf]
      %v3787 = vld [vmem:[%s3 + $0xf4] sm:$0xf]
      %v3788 = vld [vmem:[%s3 + $0xf8] sm:$0xf]
      %v3789 = vld [vmem:[%s3 + $0xfc] sm:$0xf]
      %v3790 = vld [vmem:[%s3 + $0x100] sm:$0xf]
      %v3791 = vld [vmem:[%s3 + $0x104] sm:$0xf]
      %v3792 = vld [vmem:[%s3 + $0x108] sm:$0xf]
      %v3793 = vld [vmem:[%s3 + $0x10c] sm:$0xf]
      %v3794 = vld [vmem:[%s3 + $0x110] sm:$0xf]
      %v3795 = vld [vmem:[%s3 + $0x114] sm:$0xf]
      %v3796 = vld [vmem:[%s3 + $0x118] sm:$0xf]
      %v3797 = vld [vmem:[%s3 + $0x11c] sm:$0xf]
      %v3798 = vld [vmem:[%s4] sm:$0x1]
      %v3800 = vlaneseq
      %v3801 = vshrl.u32 %v3800, 7
      %v3802 = vsub.s32 0, %v3801
      %v3803 = vrot.slane %v3798, %v3802
      %v3877 = vunpack.c.l.b16 %v3726
      %v3878 = vunpack.c.l.b16 %v3727
      %v3879 = vunpack.c.l.b16 %v3728
      %v3880 = vunpack.c.l.b16 %v3729
      %v3881 = vunpack.c.l.b16 %v3730
      %v3882 = vunpack.c.l.b16 %v3731
      %v3883 = vunpack.c.l.b16 %v3732
      %v3884 = vunpack.c.l.b16 %v3733
      %v3885 = vunpack.c.l.b16 %v3734
      %v3886 = vunpack.c.l.b16 %v3735
      %v3887 = vunpack.c.l.b16 %v3736
      %v3888 = vunpack.c.l.b16 %v3737
      %v3889 = vunpack.c.l.b16 %v3738
      %v3890 = vunpack.c.l.b16 %v3739
      %v3891 = vunpack.c.l.b16 %v3740
      %v3892 = vunpack.c.l.b16 %v3741
      %v3893 = vunpack.c.l.b16 %v3742
      %v3894 = vunpack.c.l.b16 %v3743
      %v3895 = vunpack.c.l.b16 %v3744
      %v3896 = vunpack.c.l.b16 %v3745
      %v3897 = vunpack.c.l.b16 %v3746
      %v3898 = vunpack.c.l.b16 %v3747
      %v3899 = vunpack.c.l.b16 %v3748
      %v3900 = vunpack.c.l.b16 %v3749
      %v3901 = vunpack.c.l.b16 %v3750
      %v3902 = vunpack.c.l.b16 %v3751
      %v3903 = vunpack.c.l.b16 %v3752
      %v3904 = vunpack.c.l.b16 %v3753
      %v3905 = vunpack.c.l.b16 %v3754
      %v3906 = vunpack.c.l.b16 %v3755
      %v3907 = vunpack.c.l.b16 %v3756
      %v3908 = vunpack.c.l.b16 %v3757
      %v3909 = vunpack.c.l.b16 %v3758
      %v3910 = vunpack.c.l.b16 %v3759
      %v3911 = vunpack.c.l.b16 %v3760
      %v3912 = vunpack.c.l.b16 %v3761
      %v3913 = vunpack.c.l.b16 %v3762
      %v3914 = vunpack.c.l.b16 %v3763
      %v3915 = vunpack.c.l.b16 %v3764
      %v3916 = vunpack.c.l.b16 %v3765
      %v3917 = vunpack.c.l.b16 %v3766
      %v3918 = vunpack.c.l.b16 %v3767
      %v3919 = vunpack.c.l.b16 %v3768
      %v3920 = vunpack.c.l.b16 %v3769
      %v3921 = vunpack.c.l.b16 %v3770
      %v3922 = vunpack.c.l.b16 %v3771
      %v3923 = vunpack.c.l.b16 %v3772
      %v3924 = vunpack.c.l.b16 %v3773
      %v3925 = vunpack.c.l.b16 %v3774
      %v3926 = vunpack.c.l.b16 %v3775
      %v3927 = vunpack.c.l.b16 %v3776
      %v3928 = vunpack.c.l.b16 %v3777
      %v3929 = vunpack.c.l.b16 %v3778
      %v3930 = vunpack.c.l.b16 %v3779
      %v3931 = vunpack.c.l.b16 %v3780
      %v3932 = vunpack.c.l.b16 %v3781
      %v3933 = vunpack.c.l.b16 %v3782
      %v3934 = vunpack.c.l.b16 %v3783
      %v3935 = vunpack.c.l.b16 %v3784
      %v3936 = vunpack.c.l.b16 %v3785
      %v3937 = vunpack.c.l.b16 %v3786
      %v3938 = vunpack.c.l.b16 %v3787
      %v3939 = vunpack.c.l.b16 %v3788
      %v3940 = vunpack.c.l.b16 %v3789
      %v3941 = vunpack.c.l.b16 %v3790
      %v3942 = vunpack.c.l.b16 %v3791
      %v3943 = vunpack.c.l.b16 %v3792
      %v3944 = vunpack.c.l.b16 %v3793
      %v3945 = vunpack.c.l.b16 %v3794
      %v3946 = vunpack.c.l.b16 %v3795
      %v3947 = vunpack.c.l.b16 %v3796
      %v3948 = vunpack.c.l.b16 %v3797
      %v3949 = vpack.c.b16 %v3878, %v3877
      %v3950 = vpack.c.b16 %v3880, %v3879
      %v3951 = vpack.c.b16 %v3882, %v3881
      %v3952 = vpack.c.b16 %v3884, %v3883
      %v3953 = vpack.c.b16 %v3886, %v3885
      %v3954 = vpack.c.b16 %v3888, %v3887
      %v3955 = vpack.c.b16 %v3890, %v3889
      %v3956 = vpack.c.b16 %v3892, %v3891
      %v3957 = vpack.c.b16 %v3894, %v3893
      %v3958 = vpack.c.b16 %v3896, %v3895
      %v3959 = vpack.c.b16 %v3898, %v3897
      %v3960 = vpack.c.b16 %v3900, %v3899
      %v3961 = vpack.c.b16 %v3902, %v3901
      %v3962 = vpack.c.b16 %v3904, %v3903
      %v3963 = vpack.c.b16 %v3906, %v3905
      %v3964 = vpack.c.b16 %v3908, %v3907
      %v3965 = vpack.c.b16 %v3910, %v3909
      %v3966 = vpack.c.b16 %v3912, %v3911
      %v3967 = vpack.c.b16 %v3914, %v3913
      %v3968 = vpack.c.b16 %v3916, %v3915
      %v3969 = vpack.c.b16 %v3918, %v3917
      %v3970 = vpack.c.b16 %v3920, %v3919
      %v3971 = vpack.c.b16 %v3922, %v3921
      %v3972 = vpack.c.b16 %v3924, %v3923
      %v3973 = vpack.c.b16 %v3926, %v3925
      %v3974 = vpack.c.b16 %v3928, %v3927
      %v3975 = vpack.c.b16 %v3930, %v3929
      %v3976 = vpack.c.b16 %v3932, %v3931
      %v3977 = vpack.c.b16 %v3934, %v3933
      %v3978 = vpack.c.b16 %v3936, %v3935
      %v3979 = vpack.c.b16 %v3938, %v3937
      %v3980 = vpack.c.b16 %v3940, %v3939
      %v3981 = vpack.c.b16 %v3942, %v3941
      %v3982 = vpack.c.b16 %v3944, %v3943
      %v3983 = vpack.c.b16 %v3946, %v3945
      %v3984 = vpack.c.b16 %v3948, %v3947
      %v4022 = vsel %vm334, %v3650, 0
      %v4025 = vsel %vm334, %v3655, 0
      %v4028 = vsel %vm334, %v3660, 0
      %v4031 = vsel %vm334, %v3665, 0
      %v4034 = vsel %vm334, %v3670, 0
      %v4037 = vsel %vm334, %v3675, 0
      %v4040 = vsel %vm334, %v3680, 0
      %v4043 = vsel %vm334, %v3685, 0
      %v4046 = vsel %vm334, %v3690, 0
      %v4049 = vsel %vm334, %v3695, 0
      %v4052 = vsel %vm334, %v3700, 0
      %v4055 = vsel %vm334, %v3705, 0
      %v4058 = vsel %vm334, %v3710, 0
      %v4061 = vsel %vm334, %v3715, 0
      %v4064 = vsel %vm334, %v3720, 0
      %v4067 = vsel %vm334, %v3725, 0
      %4069 = vmatprep.subr.bf16.mxu0 0
      %4070 = vmatpush1.bf16.msra.mxu0 %v3949
      %4071 = vmatprep.subr.bf16.mxu0 0
      %4072 = vmatpush1.bf16.msra.mxu0 %v3950
      %4073 = vmatprep.subr.bf16.mxu0 0
      %4074 = vmatpush1.bf16.msra.mxu0 %v3951
      %4075 = vmatprep.subr.bf16.mxu0 0
      %4076 = vmatpush1.bf16.msra.mxu0 %v3952
      %4077 = vmatprep.subr.bf16.mxu0 0
      %4078 = vmatpush1.bf16.msra.mxu0 %v3953
      %4079 = vmatprep.subr.bf16.mxu0 0
      %4080 = vmatpush1.bf16.msra.mxu0 %v3954
      %4081 = vmatprep.subr.bf16.mxu0 0
      %4082 = vmatpush1.bf16.msra.mxu0 %v3955
      %4083 = vmatprep.subr.bf16.mxu0 0
      %4084 = vmatpush1.bf16.msra.mxu0 %v3956
      %4085 = vmatprep.subr.bf16.mxu0 0
      %4086 = vmatpush1.bf16.msra.mxu0 %v3957
      %4087 = vmatprep.subr.bf16.mxu0 0
      %4088 = vmatpush1.bf16.msra.mxu0 %v3958
      %4089 = vmatprep.subr.bf16.mxu0 0
      %4090 = vmatpush1.bf16.msra.mxu0 %v3959
      %4091 = vmatprep.subr.bf16.mxu0 0
      %4092 = vmatpush1.bf16.msra.mxu0 %v3960
      %4093 = vmatprep.subr.bf16.mxu0 0
      %4094 = vmatpush1.bf16.msra.mxu0 %v3961
      %4095 = vmatprep.subr.bf16.mxu0 0
      %4096 = vmatpush1.bf16.msra.mxu0 %v3962
      %4097 = vmatprep.subr.bf16.mxu0 0
      %4098 = vmatpush1.bf16.msra.mxu0 %v3963
      %4099 = vmatprep.subr.bf16.mxu0 0
      %4100 = vmatpush1.bf16.msra.mxu0 %v3964
      %4101 = vmatprep.mubr.bf16.mxu0 %v3647
      %4102 = vmatmul.mubr.bf16.gmra.mrb[0].mxu0 %v3646
      %v4103 = vpop.f32.mrb[0].mxu0
      %v4104 = vadd.f32 %v3803, %v4103
      %v4105 = vpop.f32.mrb[0].mxu0
      %v4106 = vpop.f32.mrb[0].mxu0
      %v4107 = vadd.f32 %v3803, %v4106
      %v4108 = vpop.f32.mrb[0].mxu0
      %4109 = vmatprep.mubr.bf16.mxu0 %v3652
      %4110 = vmatmul.mubr.bf16.gmra.mrb[0].mxu0 %v3651
      %v4111 = vpop.f32.mrb[0].mxu0
      %v4112 = vadd.f32 %v3803, %v4111
      %v4113 = vpop.f32.mrb[0].mxu0
      %v4114 = vpop.f32.mrb[0].mxu0
      %v4115 = vadd.f32 %v3803, %v4114
      %v4116 = vpop.f32.mrb[0].mxu0
      %4117 = vmatprep.mubr.bf16.mxu0 %v3657
      %4118 = vmatmul.mubr.bf16.gmra.mrb[0].mxu0 %v3656
      %v4119 = vpop.f32.mrb[0].mxu0
      %v4120 = vadd.f32 %v3803, %v4119
      %v4121 = vpop.f32.mrb[0].mxu0
      %v4122 = vpop.f32.mrb[0].mxu0
      %v4123 = vadd.f32 %v3803, %v4122
      %v4124 = vpop.f32.mrb[0].mxu0
      %4125 = vmatprep.mubr.bf16.mxu0 %v3662
      %4126 = vmatmul.mubr.bf16.gmra.mrb[0].mxu0 %v3661
      %v4127 = vpop.f32.mrb[0].mxu0
      %v4128 = vadd.f32 %v3803, %v4127
      %v4129 = vpop.f32.mrb[0].mxu0
      %v4130 = vpop.f32.mrb[0].mxu0
      %v4131 = vadd.f32 %v3803, %v4130
      %v4132 = vpop.f32.mrb[0].mxu0
      %4133 = vmatprep.mubr.bf16.mxu0 %v3667
      %4134 = vmatmul.mubr.bf16.gmra.mrb[0].mxu0 %v3666
      %v4135 = vpop.f32.mrb[0].mxu0
      %v4136 = vadd.f32 %v3803, %v4135
      %v4137 = vpop.f32.mrb[0].mxu0
      %v4138 = vpop.f32.mrb[0].mxu0
      %v4139 = vadd.f32 %v3803, %v4138
      %v4140 = vpop.f32.mrb[0].mxu0
      %4141 = vmatprep.mubr.bf16.mxu0 %v3672
      %4142 = vmatmul.mubr.bf16.gmra.mrb[0].mxu0 %v3671
      %v4143 = vpop.f32.mrb[0].mxu0
      %v4144 = vadd.f32 %v3803, %v4143
      %v4145 = vpop.f32.mrb[0].mxu0
      %v4146 = vpop.f32.mrb[0].mxu0
      %v4147 = vadd.f32 %v3803, %v4146
      %v4148 = vpop.f32.mrb[0].mxu0
      %4149 = vmatprep.mubr.bf16.mxu0 %v3677
      %4150 = vmatmul.mubr.bf16.gmra.mrb[0].mxu0 %v3676
      %v4151 = vpop.f32.mrb[0].mxu0
      %v4152 = vadd.f32 %v3803, %v4151
      %v4153 = vpop.f32.mrb[0].mxu0
      %v4154 = vpop.f32.mrb[0].mxu0
      %v4155 = vadd.f32 %v3803, %v4154
      %v4156 = vpop.f32.mrb[0].mxu0
      %4157 = vmatprep.mubr.bf16.mxu0 %v3682
      %4158 = vmatmul.mubr.bf16.gmra.mrb[0].mxu0 %v3681
      %v4159 = vpop.f32.mrb[0].mxu0
      %v4160 = vadd.f32 %v3803, %v4159
      %v4161 = vpop.f32.mrb[0].mxu0
      %v4162 = vpop.f32.mrb[0].mxu0
      %v4163 = vadd.f32 %v3803, %v4162
      %v4164 = vpop.f32.mrb[0].mxu0
      %4165 = vmatprep.mubr.bf16.mxu0 %v3687
      %4166 = vmatmul.mubr.bf16.gmra.mrb[0].mxu0 %v3686
      %v4167 = vpop.f32.mrb[0].mxu0
      %v4168 = vadd.f32 %v3803, %v4167
      %v4169 = vpop.f32.mrb[0].mxu0
      %v4170 = vpop.f32.mrb[0].mxu0
      %v4171 = vadd.f32 %v3803, %v4170
      %v4172 = vpop.f32.mrb[0].mxu0
      %4173 = vmatprep.mubr.bf16.mxu0 %v3692
      %4174 = vmatmul.mubr.bf16.gmra.mrb[0].mxu0 %v3691
      %v4175 = vpop.f32.mrb[0].mxu0
      %v4176 = vadd.f32 %v3803, %v4175
      %v4177 = vpop.f32.mrb[0].mxu0
      %v4178 = vpop.f32.mrb[0].mxu0
      %v4179 = vadd.f32 %v3803, %v4178
      %v4180 = vpop.f32.mrb[0].mxu0
      %4181 = vmatprep.mubr.bf16.mxu0 %v3697
      %4182 = vmatmul.mubr.bf16.gmra.mrb[0].mxu0 %v3696
      %v4183 = vpop.f32.mrb[0].mxu0
      %v4184 = vadd.f32 %v3803, %v4183
      %v4185 = vpop.f32.mrb[0].mxu0
      %v4186 = vpop.f32.mrb[0].mxu0
      %v4187 = vadd.f32 %v3803, %v4186
      %v4188 = vpop.f32.mrb[0].mxu0
      %4189 = vmatprep.mubr.bf16.mxu0 %v3702
      %4190 = vmatmul.mubr.bf16.gmra.mrb[0].mxu0 %v3701
      %v4191 = vpop.f32.mrb[0].mxu0
      %v4192 = vadd.f32 %v3803, %v4191
      %v4193 = vpop.f32.mrb[0].mxu0
      %v4194 = vpop.f32.mrb[0].mxu0
      %v4195 = vadd.f32 %v3803, %v4194
      %v4196 = vpop.f32.mrb[0].mxu0
      %4197 = vmatprep.mubr.bf16.mxu0 %v3707
      %4198 = vmatmul.mubr.bf16.gmra.mrb[0].mxu0 %v3706
      %v4199 = vpop.f32.mrb[0].mxu0
      %v4200 = vadd.f32 %v3803, %v4199
      %v4201 = vpop.f32.mrb[0].mxu0
      %v4202 = vpop.f32.mrb[0].mxu0
      %v4203 = vadd.f32 %v3803, %v4202
      %v4204 = vpop.f32.mrb[0].mxu0
      %4205 = vmatprep.mubr.bf16.mxu0 %v3712
      %4206 = vmatmul.mubr.bf16.gmra.mrb[0].mxu0 %v3711
      %v4207 = vpop.f32.mrb[0].mxu0
      %v4208 = vadd.f32 %v3803, %v4207
      %v4209 = vpop.f32.mrb[0].mxu0
      %v4210 = vpop.f32.mrb[0].mxu0
      %v4211 = vadd.f32 %v3803, %v4210
      %v4212 = vpop.f32.mrb[0].mxu0
      %4213 = vmatprep.mubr.bf16.mxu0 %v3717
      %4214 = vmatmul.mubr.bf16.gmra.mrb[0].mxu0 %v3716
      %v4215 = vpop.f32.mrb[0].mxu0
      %v4216 = vadd.f32 %v3803, %v4215
      %v4217 = vpop.f32.mrb[0].mxu0
      %v4218 = vpop.f32.mrb[0].mxu0
      %v4219 = vadd.f32 %v3803, %v4218
      %v4220 = vpop.f32.mrb[0].mxu0
      %4221 = vmatprep.mubr.bf16.mxu0 %v3722
      %4222 = vmatmul.mubr.bf16.gmra.mrb[0].mxu0 %v3721
      %v4223 = vpop.f32.mrb[0].mxu0
      %v4224 = vadd.f32 %v3803, %v4223
      %v4225 = vpop.f32.mrb[0].mxu0
      %v4226 = vpop.f32.mrb[0].mxu0
      %v4227 = vadd.f32 %v3803, %v4226
      %v4228 = vpop.f32.mrb[0].mxu0
      %4229 = vdwg.mxu0
      %4230 = vmatprep.subr.bf16.mxu0 0
      %4231 = vmatpush1.bf16.msra.mxu0 %v3965
      %4232 = vmatprep.subr.bf16.mxu0 0
      %4233 = vmatpush1.bf16.msra.mxu0 %v3966
      %4234 = vmatprep.subr.bf16.mxu0 0
      %4235 = vmatpush1.bf16.msra.mxu0 %v3967
      %4236 = vmatprep.subr.bf16.mxu0 0
      %4237 = vmatpush1.bf16.msra.mxu0 %v3968
      %4238 = vmatprep.subr.bf16.mxu0 0
      %4239 = vmatpush1.bf16.msra.mxu0 %v3969
      %4240 = vmatprep.subr.bf16.mxu0 0
      %4241 = vmatpush1.bf16.msra.mxu0 %v3970
      %4242 = vmatprep.subr.bf16.mxu0 0
      %4243 = vmatpush1.bf16.msra.mxu0 %v3971
      %4244 = vmatprep.subr.bf16.mxu0 0
      %4245 = vmatpush1.bf16.msra.mxu0 %v3972
      %4246 = vmatprep.subr.bf16.mxu0 0
      %4247 = vmatpush1.bf16.msra.mxu0 %v3973
      %4248 = vmatprep.subr.bf16.mxu0 0
      %4249 = vmatpush1.bf16.msra.mxu0 %v3974
      %4250 = vmatprep.subr.bf16.mxu0 0
      %4251 = vmatpush1.bf16.msra.mxu0 %v3975
      %4252 = vmatprep.subr.bf16.mxu0 0
      %4253 = vmatpush1.bf16.msra.mxu0 %v3976
      %4254 = vmatprep.subr.bf16.mxu0 0
      %4255 = vmatpush1.bf16.msra.mxu0 %v3977
      %4256 = vmatprep.subr.bf16.mxu0 0
      %4257 = vmatpush1.bf16.msra.mxu0 %v3978
      %4258 = vmatprep.subr.bf16.mxu0 0
      %4259 = vmatpush1.bf16.msra.mxu0 %v3979
      %4260 = vmatprep.subr.bf16.mxu0 0
      %4261 = vmatpush1.bf16.msra.mxu0 %v3980
      %4262 = vmatprep.mubr.bf16.mxu0 %v3649
      %4263 = vmatmul.mubr.bf16.gmra.mrb[0].mxu0 %v3648
      %v4264 = vpop.f32.mrb[0].mxu0
      %v4265 = vadd.f32 %v4104, %v4264
      %v4266 = vpop.f32.mrb[0].mxu0
      %v4267 = vpop.f32.mrb[0].mxu0
      %v4268 = vadd.f32 %v4107, %v4267
      %v4269 = vpop.f32.mrb[0].mxu0
      %4270 = vmatprep.mubr.bf16.mxu0 %v3654
      %4271 = vmatmul.mubr.bf16.gmra.mrb[0].mxu0 %v3653
      %v4272 = vpop.f32.mrb[0].mxu0
      %v4273 = vadd.f32 %v4112, %v4272
      %v4274 = vpop.f32.mrb[0].mxu0
      %v4275 = vpop.f32.mrb[0].mxu0
      %v4276 = vadd.f32 %v4115, %v4275
      %v4277 = vpop.f32.mrb[0].mxu0
      %4278 = vmatprep.mubr.bf16.mxu0 %v3659
      %4279 = vmatmul.mubr.bf16.gmra.mrb[0].mxu0 %v3658
      %v4280 = vpop.f32.mrb[0].mxu0
      %v4281 = vadd.f32 %v4120, %v4280
      %v4282 = vpop.f32.mrb[0].mxu0
      %v4283 = vpop.f32.mrb[0].mxu0
      %v4284 = vadd.f32 %v4123, %v4283
      %v4285 = vpop.f32.mrb[0].mxu0
      %4286 = vmatprep.mubr.bf16.mxu0 %v3664
      %4287 = vmatmul.mubr.bf16.gmra.mrb[0].mxu0 %v3663
      %v4288 = vpop.f32.mrb[0].mxu0
      %v4289 = vadd.f32 %v4128, %v4288
      %v4290 = vpop.f32.mrb[0].mxu0
      %v4291 = vpop.f32.mrb[0].mxu0
      %v4292 = vadd.f32 %v4131, %v4291
      %v4293 = vpop.f32.mrb[0].mxu0
      %4294 = vmatprep.mubr.bf16.mxu0 %v3669
      %4295 = vmatmul.mubr.bf16.gmra.mrb[0].mxu0 %v3668
      %v4296 = vpop.f32.mrb[0].mxu0
      %v4297 = vadd.f32 %v4136, %v4296
      %v4298 = vpop.f32.mrb[0].mxu0
      %v4299 = vpop.f32.mrb[0].mxu0
      %v4300 = vadd.f32 %v4139, %v4299
      %v4301 = vpop.f32.mrb[0].mxu0
      %4302 = vmatprep.mubr.bf16.mxu0 %v3674
      %4303 = vmatmul.mubr.bf16.gmra.mrb[0].mxu0 %v3673
      %v4304 = vpop.f32.mrb[0].mxu0
      %v4305 = vadd.f32 %v4144, %v4304
      %v4306 = vpop.f32.mrb[0].mxu0
      %v4307 = vpop.f32.mrb[0].mxu0
      %v4308 = vadd.f32 %v4147, %v4307
      %v4309 = vpop.f32.mrb[0].mxu0
      %4310 = vmatprep.mubr.bf16.mxu0 %v3679
      %4311 = vmatmul.mubr.bf16.gmra.mrb[0].mxu0 %v3678
      %v4312 = vpop.f32.mrb[0].mxu0
      %v4313 = vadd.f32 %v4152, %v4312
      %v4314 = vpop.f32.mrb[0].mxu0
      %v4315 = vpop.f32.mrb[0].mxu0
      %v4316 = vadd.f32 %v4155, %v4315
      %v4317 = vpop.f32.mrb[0].mxu0
      %4318 = vmatprep.mubr.bf16.mxu0 %v3684
      %4319 = vmatmul.mubr.bf16.gmra.mrb[0].mxu0 %v3683
      %v4320 = vpop.f32.mrb[0].mxu0
      %v4321 = vadd.f32 %v4160, %v4320
      %v4322 = vpop.f32.mrb[0].mxu0
      %v4323 = vpop.f32.mrb[0].mxu0
      %v4324 = vadd.f32 %v4163, %v4323
      %v4325 = vpop.f32.mrb[0].mxu0
      %4326 = vmatprep.mubr.bf16.mxu0 %v3689
      %4327 = vmatmul.mubr.bf16.gmra.mrb[0].mxu0 %v3688
      %v4328 = vpop.f32.mrb[0].mxu0
      %v4329 = vadd.f32 %v4168, %v4328
      %v4330 = vpop.f32.mrb[0].mxu0
      %v4331 = vpop.f32.mrb[0].mxu0
      %v4332 = vadd.f32 %v4171, %v4331
      %v4333 = vpop.f32.mrb[0].mxu0
      %4334 = vmatprep.mubr.bf16.mxu0 %v3694
      %4335 = vmatmul.mubr.bf16.gmra.mrb[0].mxu0 %v3693
      %v4336 = vpop.f32.mrb[0].mxu0
      %v4337 = vadd.f32 %v4176, %v4336
      %v4338 = vpop.f32.mrb[0].mxu0
      %v4339 = vpop.f32.mrb[0].mxu0
      %v4340 = vadd.f32 %v4179, %v4339
      %v4341 = vpop.f32.mrb[0].mxu0
      %4342 = vmatprep.mubr.bf16.mxu0 %v3699
      %4343 = vmatmul.mubr.bf16.gmra.mrb[0].mxu0 %v3698
      %v4344 = vpop.f32.mrb[0].mxu0
      %v4345 = vadd.f32 %v4184, %v4344
      %v4346 = vpop.f32.mrb[0].mxu0
      %v4347 = vpop.f32.mrb[0].mxu0
      %v4348 = vadd.f32 %v4187, %v4347
      %v4349 = vpop.f32.mrb[0].mxu0
      %4350 = vmatprep.mubr.bf16.mxu0 %v3704
      %4351 = vmatmul.mubr.bf16.gmra.mrb[0].mxu0 %v3703
      %v4352 = vpop.f32.mrb[0].mxu0
      %v4353 = vadd.f32 %v4192, %v4352
      %v4354 = vpop.f32.mrb[0].mxu0
      %v4355 = vpop.f32.mrb[0].mxu0
      %v4356 = vadd.f32 %v4195, %v4355
      %v4357 = vpop.f32.mrb[0].mxu0
      %4358 = vmatprep.mubr.bf16.mxu0 %v3709
      %4359 = vmatmul.mubr.bf16.gmra.mrb[0].mxu0 %v3708
      %v4360 = vpop.f32.mrb[0].mxu0
      %v4361 = vadd.f32 %v4200, %v4360
      %v4362 = vpop.f32.mrb[0].mxu0
      %v4363 = vpop.f32.mrb[0].mxu0
      %v4364 = vadd.f32 %v4203, %v4363
      %v4365 = vpop.f32.mrb[0].mxu0
      %4366 = vmatprep.mubr.bf16.mxu0 %v3714
      %4367 = vmatmul.mubr.bf16.gmra.mrb[0].mxu0 %v3713
      %v4368 = vpop.f32.mrb[0].mxu0
      %v4369 = vadd.f32 %v4208, %v4368
      %v4370 = vpop.f32.mrb[0].mxu0
      %v4371 = vpop.f32.mrb[0].mxu0
      %v4372 = vadd.f32 %v4211, %v4371
      %v4373 = vpop.f32.mrb[0].mxu0
      %4374 = vmatprep.mubr.bf16.mxu0 %v3719
      %4375 = vmatmul.mubr.bf16.gmra.mrb[0].mxu0 %v3718
      %v4376 = vpop.f32.mrb[0].mxu0
      %v4377 = vadd.f32 %v4216, %v4376
      %v4378 = vpop.f32.mrb[0].mxu0
      %v4379 = vpop.f32.mrb[0].mxu0
      %v4380 = vadd.f32 %v4219, %v4379
      %v4381 = vpop.f32.mrb[0].mxu0
      %4382 = vmatprep.mubr.bf16.mxu0 %v3724
      %4383 = vmatmul.mubr.bf16.gmra.mrb[0].mxu0 %v3723
      %v4384 = vpop.f32.mrb[0].mxu0
      %v4385 = vadd.f32 %v4224, %v4384
      %v4386 = vpop.f32.mrb[0].mxu0
      %v4387 = vpop.f32.mrb[0].mxu0
      %v4388 = vadd.f32 %v4227, %v4387
      %v4389 = vpop.f32.mrb[0].mxu0
      %4390 = vdwg.mxu0
      %4391 = vmatprep.subr.bf16.mxu0 0
      %4392 = vmatpush1.bf16.msra.mxu0 %v3981
      %4393 = vmatprep.subr.bf16.mxu0 0
      %4394 = vmatpush1.bf16.msra.mxu0 %v3982
      %4395 = vmatprep.subr.bf16.mxu0 0
      %4396 = vmatpush1.bf16.msra.mxu0 %v3983
      %4397 = vmatprep.subr.bf16.mxu0 0
      %4398 = vmatpush1.bf16.msra.mxu0 %v3984
      %4399 = vmatprep.subr.bf16.mxu0 0
      %4400 = vmatpush1.bf16.msra.mxu0 0
      %4401 = vmatprep.subr.bf16.mxu0 0
      %4402 = vmatpush1.bf16.msra.mxu0 0
      %4403 = vmatprep.subr.bf16.mxu0 0
      %4404 = vmatpush1.bf16.msra.mxu0 0
      %4405 = vmatprep.subr.bf16.mxu0 0
      %4406 = vmatpush1.bf16.msra.mxu0 0
      %4407 = vmatprep.subr.bf16.mxu0 0
      %4408 = vmatpush1.bf16.msra.mxu0 0
      %4409 = vmatprep.subr.bf16.mxu0 0
      %4410 = vmatpush1.bf16.msra.mxu0 0
      %4411 = vmatprep.subr.bf16.mxu0 0
      %4412 = vmatpush1.bf16.msra.mxu0 0
      %4413 = vmatprep.subr.bf16.mxu0 0
      %4414 = vmatpush1.bf16.msra.mxu0 0
      %4415 = vmatprep.subr.bf16.mxu0 0
      %4416 = vmatpush1.bf16.msra.mxu0 0
      %4417 = vmatprep.subr.bf16.mxu0 0
      %4418 = vmatpush1.bf16.msra.mxu0 0
      %4419 = vmatprep.subr.bf16.mxu0 0
      %4420 = vmatpush1.bf16.msra.mxu0 0
      %4421 = vmatprep.subr.bf16.mxu0 0
      %4422 = vmatpush1.bf16.msra.mxu0 0
      %4423 = vmatprep.mubr.bf16.mxu0 0
      %4424 = vmatmul.mubr.bf16.gmra.mrb[0].mxu0 %v4022
      %v4425 = vpop.f32.mrb[0].mxu0
      %v4426 = vadd.f32 %v4265, %v4425
      %v4427 = vpop.f32.mrb[0].mxu0
      %v4428 = vpop.f32.mrb[0].mxu0
      %v4429 = vadd.f32 %v4268, %v4428
      %v4430 = vpop.f32.mrb[0].mxu0
      %4431 = vmatprep.mubr.bf16.mxu0 0
      %4432 = vmatmul.mubr.bf16.gmra.mrb[0].mxu0 %v4025
      %v4433 = vpop.f32.mrb[0].mxu0
      %v4434 = vadd.f32 %v4273, %v4433
      %v4435 = vpop.f32.mrb[0].mxu0
      %v4436 = vpop.f32.mrb[0].mxu0
      %v4437 = vadd.f32 %v4276, %v4436
      %v4438 = vpop.f32.mrb[0].mxu0
      %4439 = vmatprep.mubr.bf16.mxu0 0
      %4440 = vmatmul.mubr.bf16.gmra.mrb[0].mxu0 %v4028
      %v4441 = vpop.f32.mrb[0].mxu0
      %v4442 = vadd.f32 %v4281, %v4441
      %v4443 = vpop.f32.mrb[0].mxu0
      %v4444 = vpop.f32.mrb[0].mxu0
      %v4445 = vadd.f32 %v4284, %v4444
      %v4446 = vpop.f32.mrb[0].mxu0
      %4447 = vmatprep.mubr.bf16.mxu0 0
      %4448 = vmatmul.mubr.bf16.gmra.mrb[0].mxu0 %v4031
      %v4449 = vpop.f32.mrb[0].mxu0
      %v4450 = vadd.f32 %v4289, %v4449
      %v4451 = vpop.f32.mrb[0].mxu0
      %v4452 = vpop.f32.mrb[0].mxu0
      %v4453 = vadd.f32 %v4292, %v4452
      %v4454 = vpop.f32.mrb[0].mxu0
      %4455 = vmatprep.mubr.bf16.mxu0 0
      %4456 = vmatmul.mubr.bf16.gmra.mrb[0].mxu0 %v4034
      %v4457 = vpop.f32.mrb[0].mxu0
      %v4458 = vadd.f32 %v4297, %v4457
      %v4459 = vpop.f32.mrb[0].mxu0
      %v4460 = vpop.f32.mrb[0].mxu0
      %v4461 = vadd.f32 %v4300, %v4460
      %v4462 = vpop.f32.mrb[0].mxu0
      %4463 = vmatprep.mubr.bf16.mxu0 0
      %4464 = vmatmul.mubr.bf16.gmra.mrb[0].mxu0 %v4037
      %v4465 = vpop.f32.mrb[0].mxu0
      %v4466 = vadd.f32 %v4305, %v4465
      %v4467 = vpop.f32.mrb[0].mxu0
      %v4468 = vpop.f32.mrb[0].mxu0
      %v4469 = vadd.f32 %v4308, %v4468
      %v4470 = vpop.f32.mrb[0].mxu0
      %4471 = vmatprep.mubr.bf16.mxu0 0
      %4472 = vmatmul.mubr.bf16.gmra.mrb[0].mxu0 %v4040
      %v4473 = vpop.f32.mrb[0].mxu0
      %v4474 = vadd.f32 %v4313, %v4473
      %v4475 = vpop.f32.mrb[0].mxu0
      %v4476 = vpop.f32.mrb[0].mxu0
      %v4477 = vadd.f32 %v4316, %v4476
      %v4478 = vpop.f32.mrb[0].mxu0
      %4479 = vmatprep.mubr.bf16.mxu0 0
      %4480 = vmatmul.mubr.bf16.gmra.mrb[0].mxu0 %v4043
      %v4481 = vpop.f32.mrb[0].mxu0
      %v4482 = vadd.f32 %v4321, %v4481
      %v4483 = vpop.f32.mrb[0].mxu0
      %v4484 = vpop.f32.mrb[0].mxu0
      %v4485 = vadd.f32 %v4324, %v4484
      %v4486 = vpop.f32.mrb[0].mxu0
      %4487 = vmatprep.mubr.bf16.mxu0 0
      %4488 = vmatmul.mubr.bf16.gmra.mrb[0].mxu0 %v4046
      %v4489 = vpop.f32.mrb[0].mxu0
      %v4490 = vadd.f32 %v4329, %v4489
      %v4491 = vpop.f32.mrb[0].mxu0
      %v4492 = vpop.f32.mrb[0].mxu0
      %v4493 = vadd.f32 %v4332, %v4492
      %v4494 = vpop.f32.mrb[0].mxu0
      %4495 = vmatprep.mubr.bf16.mxu0 0
      %4496 = vmatmul.mubr.bf16.gmra.mrb[0].mxu0 %v4049
      %v4497 = vpop.f32.mrb[0].mxu0
      %v4498 = vadd.f32 %v4337, %v4497
      %v4499 = vpop.f32.mrb[0].mxu0
      %v4500 = vpop.f32.mrb[0].mxu0
      %v4501 = vadd.f32 %v4340, %v4500
      %v4502 = vpop.f32.mrb[0].mxu0
      %4503 = vmatprep.mubr.bf16.mxu0 0
      %4504 = vmatmul.mubr.bf16.gmra.mrb[0].mxu0 %v4052
      %v4505 = vpop.f32.mrb[0].mxu0
      %v4506 = vadd.f32 %v4345, %v4505
      %v4507 = vpop.f32.mrb[0].mxu0
      %v4508 = vpop.f32.mrb[0].mxu0
      %v4509 = vadd.f32 %v4348, %v4508
      %v4510 = vpop.f32.mrb[0].mxu0
      %4511 = vmatprep.mubr.bf16.mxu0 0
      %4512 = vmatmul.mubr.bf16.gmra.mrb[0].mxu0 %v4055
      %v4513 = vpop.f32.mrb[0].mxu0
      %v4514 = vadd.f32 %v4353, %v4513
      %v4515 = vpop.f32.mrb[0].mxu0
      %v4516 = vpop.f32.mrb[0].mxu0
      %v4517 = vadd.f32 %v4356, %v4516
      %v4518 = vpop.f32.mrb[0].mxu0
      %4519 = vmatprep.mubr.bf16.mxu0 0
      %4520 = vmatmul.mubr.bf16.gmra.mrb[0].mxu0 %v4058
      %v4521 = vpop.f32.mrb[0].mxu0
      %v4522 = vadd.f32 %v4361, %v4521
      %v4523 = vpop.f32.mrb[0].mxu0
      %v4524 = vpop.f32.mrb[0].mxu0
      %v4525 = vadd.f32 %v4364, %v4524
      %v4526 = vpop.f32.mrb[0].mxu0
      %4527 = vmatprep.mubr.bf16.mxu0 0
      %4528 = vmatmul.mubr.bf16.gmra.mrb[0].mxu0 %v4061
      %v4529 = vpop.f32.mrb[0].mxu0
      %v4530 = vadd.f32 %v4369, %v4529
      %v4531 = vpop.f32.mrb[0].mxu0
      %v4532 = vpop.f32.mrb[0].mxu0
      %v4533 = vadd.f32 %v4372, %v4532
      %v4534 = vpop.f32.mrb[0].mxu0
      %4535 = vmatprep.mubr.bf16.mxu0 0
      %4536 = vmatmul.mubr.bf16.gmra.mrb[0].mxu0 %v4064
      %v4537 = vpop.f32.mrb[0].mxu0
      %v4538 = vadd.f32 %v4377, %v4537
      %v4539 = vpop.f32.mrb[0].mxu0
      %v4540 = vpop.f32.mrb[0].mxu0
      %v4541 = vadd.f32 %v4380, %v4540
      %v4542 = vpop.f32.mrb[0].mxu0
      %4543 = vmatprep.mubr.bf16.mxu0 0
      %4544 = vmatmul.mubr.bf16.gmra.mrb[0].mxu0 %v4067
      %v4545 = vpop.f32.mrb[0].mxu0
      %v4546 = vadd.f32 %v4385, %v4545
      %v4547 = vpop.f32.mrb[0].mxu0
      %v4548 = vpop.f32.mrb[0].mxu0
      %v4549 = vadd.f32 %v4388, %v4548
      %v4550 = vpop.f32.mrb[0].mxu0
      %4551 = vdwg.mxu0
      %v4552 = vmax.f32 %v4426, 0.0
      %v4553 = vmax.f32 %v4429, 0.0
      %v4554 = vmax.f32 %v4434, 0.0
      %v4555 = vmax.f32 %v4437, 0.0
      %v4556 = vmax.f32 %v4442, 0.0
      %v4557 = vmax.f32 %v4445, 0.0
      %v4558 = vmax.f32 %v4450, 0.0
      %v4559 = vmax.f32 %v4453, 0.0
      %v4560 = vmax.f32 %v4458, 0.0
      %v4561 = vmax.f32 %v4461, 0.0
      %v4562 = vmax.f32 %v4466, 0.0
      %v4563 = vmax.f32 %v4469, 0.0
      %v4564 = vmax.f32 %v4474, 0.0
      %v4565 = vmax.f32 %v4477, 0.0
      %v4566 = vmax.f32 %v4482, 0.0
      %v4567 = vmax.f32 %v4485, 0.0
      %v4568 = vmax.f32 %v4490, 0.0
      %v4569 = vmax.f32 %v4493, 0.0
      %v4570 = vmax.f32 %v4498, 0.0
      %v4571 = vmax.f32 %v4501, 0.0
      %v4572 = vmax.f32 %v4506, 0.0
      %v4573 = vmax.f32 %v4509, 0.0
      %v4574 = vmax.f32 %v4514, 0.0
      %v4575 = vmax.f32 %v4517, 0.0
      %v4576 = vmax.f32 %v4522, 0.0
      %v4577 = vmax.f32 %v4525, 0.0
      %v4578 = vmax.f32 %v4530, 0.0
      %v4579 = vmax.f32 %v4533, 0.0
      %v4580 = vmax.f32 %v4538, 0.0
      %v4581 = vmax.f32 %v4541, 0.0
      %v4582 = vmax.f32 %v4546, 0.0
      %v4583 = vmax.f32 %v4549, 0.0
      %v4616 = vcombine.high %v4552, %v4552
      %v4618 = vunpack.c.l.s4 1983009808
      %v4619 = vunpack.c.0.s8 %v4618
      %v4620 = vlaneseq
      %v4621 = vshrl.u32 %v4620, 7
      %v4622 = vsub.s32 %v4619, %v4621
      %v4623 = vrot.slane %v4552, %v4622
      %v4625 = vunpack.c.l.s4 1983009808
      %v4626 = vunpack.c.0.s8 %v4625
      %v4627 = vlaneseq
      %v4628 = vshrl.u32 %v4627, 7
      %v4629 = vsub.s32 %v4626, %v4628
      %v4630 = vrot.slane %v4616, %v4629
      %v4631 = vcombine.high %v4623, %v4623
      %v4632 = vcombine.high %v4630, %v4630
      %v4633 = vcombine.high %v4553, %v4553
      %v4635 = vunpack.c.l.s4 1983009808
      %v4636 = vunpack.c.0.s8 %v4635
      %v4637 = vlaneseq
      %v4638 = vshrl.u32 %v4637, 7
      %v4639 = vsub.s32 %v4636, %v4638
      %v4640 = vrot.slane %v4553, %v4639
      %v4642 = vunpack.c.l.s4 1983009808
      %v4643 = vunpack.c.0.s8 %v4642
      %v4644 = vlaneseq
      %v4645 = vshrl.u32 %v4644, 7
      %v4646 = vsub.s32 %v4643, %v4645
      %v4647 = vrot.slane %v4633, %v4646
      %v4648 = vcombine.high %v4640, %v4640
      %v4649 = vcombine.high %v4647, %v4647
      %v4650 = vcombine.high %v4554, %v4554
      %v4652 = vunpack.c.l.s4 1983009808
      %v4653 = vunpack.c.0.s8 %v4652
      %v4654 = vlaneseq
      %v4655 = vshrl.u32 %v4654, 7
      %v4656 = vsub.s32 %v4653, %v4655
      %v4657 = vrot.slane %v4554, %v4656
      %v4659 = vunpack.c.l.s4 1983009808
      %v4660 = vunpack.c.0.s8 %v4659
      %v4661 = vlaneseq
      %v4662 = vshrl.u32 %v4661, 7
      %v4663 = vsub.s32 %v4660, %v4662
      %v4664 = vrot.slane %v4650, %v4663
      %v4665 = vcombine.high %v4657, %v4657
      %v4666 = vcombine.high %v4664, %v4664
      %v4667 = vcombine.high %v4555, %v4555
      %v4669 = vunpack.c.l.s4 1983009808
      %v4670 = vunpack.c.0.s8 %v4669
      %v4671 = vlaneseq
      %v4672 = vshrl.u32 %v4671, 7
      %v4673 = vsub.s32 %v4670, %v4672
      %v4674 = vrot.slane %v4555, %v4673
      %v4676 = vunpack.c.l.s4 1983009808
      %v4677 = vunpack.c.0.s8 %v4676
      %v4678 = vlaneseq
      %v4679 = vshrl.u32 %v4678, 7
      %v4680 = vsub.s32 %v4677, %v4679
      %v4681 = vrot.slane %v4667, %v4680
      %v4682 = vcombine.high %v4674, %v4674
      %v4683 = vcombine.high %v4681, %v4681
      %v4684 = vcombine.high %v4556, %v4556
      %v4686 = vunpack.c.l.s4 1983009808
      %v4687 = vunpack.c.0.s8 %v4686
      %v4688 = vlaneseq
      %v4689 = vshrl.u32 %v4688, 7
      %v4690 = vsub.s32 %v4687, %v4689
      %v4691 = vrot.slane %v4556, %v4690
      %v4693 = vunpack.c.l.s4 1983009808
      %v4694 = vunpack.c.0.s8 %v4693
      %v4695 = vlaneseq
      %v4696 = vshrl.u32 %v4695, 7
      %v4697 = vsub.s32 %v4694, %v4696
      %v4698 = vrot.slane %v4684, %v4697
      %v4699 = vcombine.high %v4691, %v4691
      %v4700 = vcombine.high %v4698, %v4698
      %v4701 = vcombine.high %v4557, %v4557
      %v4703 = vunpack.c.l.s4 1983009808
      %v4704 = vunpack.c.0.s8 %v4703
      %v4705 = vlaneseq
      %v4706 = vshrl.u32 %v4705, 7
      %v4707 = vsub.s32 %v4704, %v4706
      %v4708 = vrot.slane %v4557, %v4707
      %v4710 = vunpack.c.l.s4 1983009808
      %v4711 = vunpack.c.0.s8 %v4710
      %v4712 = vlaneseq
      %v4713 = vshrl.u32 %v4712, 7
      %v4714 = vsub.s32 %v4711, %v4713
      %v4715 = vrot.slane %v4701, %v4714
      %v4716 = vcombine.high %v4708, %v4708
      %v4717 = vcombine.high %v4715, %v4715
      %v4718 = vcombine.high %v4558, %v4558
      %v4720 = vunpack.c.l.s4 1983009808
      %v4721 = vunpack.c.0.s8 %v4720
      %v4722 = vlaneseq
      %v4723 = vshrl.u32 %v4722, 7
      %v4724 = vsub.s32 %v4721, %v4723
      %v4725 = vrot.slane %v4558, %v4724
      %v4727 = vunpack.c.l.s4 1983009808
      %v4728 = vunpack.c.0.s8 %v4727
      %v4729 = vlaneseq
      %v4730 = vshrl.u32 %v4729, 7
      %v4731 = vsub.s32 %v4728, %v4730
      %v4732 = vrot.slane %v4718, %v4731
      %v4733 = vcombine.high %v4725, %v4725
      %v4734 = vcombine.high %v4732, %v4732
      %v4735 = vcombine.high %v4559, %v4559
      %v4737 = vunpack.c.l.s4 1983009808
      %v4738 = vunpack.c.0.s8 %v4737
      %v4739 = vlaneseq
      %v4740 = vshrl.u32 %v4739, 7
      %v4741 = vsub.s32 %v4738, %v4740
      %v4742 = vrot.slane %v4559, %v4741
      %v4744 = vunpack.c.l.s4 1983009808
      %v4745 = vunpack.c.0.s8 %v4744
      %v4746 = vlaneseq
      %v4747 = vshrl.u32 %v4746, 7
      %v4748 = vsub.s32 %v4745, %v4747
      %v4749 = vrot.slane %v4735, %v4748
      %v4750 = vcombine.high %v4742, %v4742
      %v4751 = vcombine.high %v4749, %v4749
      %v4752 = vcombine.high %v4560, %v4560
      %v4754 = vunpack.c.l.s4 1983009808
      %v4755 = vunpack.c.0.s8 %v4754
      %v4756 = vlaneseq
      %v4757 = vshrl.u32 %v4756, 7
      %v4758 = vsub.s32 %v4755, %v4757
      %v4759 = vrot.slane %v4560, %v4758
      %v4761 = vunpack.c.l.s4 1983009808
      %v4762 = vunpack.c.0.s8 %v4761
      %v4763 = vlaneseq
      %v4764 = vshrl.u32 %v4763, 7
      %v4765 = vsub.s32 %v4762, %v4764
      %v4766 = vrot.slane %v4752, %v4765
      %v4767 = vcombine.high %v4759, %v4759
      %v4768 = vcombine.high %v4766, %v4766
      %v4769 = vcombine.high %v4561, %v4561
      %v4771 = vunpack.c.l.s4 1983009808
      %v4772 = vunpack.c.0.s8 %v4771
      %v4773 = vlaneseq
      %v4774 = vshrl.u32 %v4773, 7
      %v4775 = vsub.s32 %v4772, %v4774
      %v4776 = vrot.slane %v4561, %v4775
      %v4778 = vunpack.c.l.s4 1983009808
      %v4779 = vunpack.c.0.s8 %v4778
      %v4780 = vlaneseq
      %v4781 = vshrl.u32 %v4780, 7
      %v4782 = vsub.s32 %v4779, %v4781
      %v4783 = vrot.slane %v4769, %v4782
      %v4784 = vcombine.high %v4776, %v4776
      %v4785 = vcombine.high %v4783, %v4783
      %v4786 = vcombine.high %v4562, %v4562
      %v4788 = vunpack.c.l.s4 1983009808
      %v4789 = vunpack.c.0.s8 %v4788
      %v4790 = vlaneseq
      %v4791 = vshrl.u32 %v4790, 7
      %v4792 = vsub.s32 %v4789, %v4791
      %v4793 = vrot.slane %v4562, %v4792
      %v4795 = vunpack.c.l.s4 1983009808
      %v4796 = vunpack.c.0.s8 %v4795
      %v4797 = vlaneseq
      %v4798 = vshrl.u32 %v4797, 7
      %v4799 = vsub.s32 %v4796, %v4798
      %v4800 = vrot.slane %v4786, %v4799
      %v4801 = vcombine.high %v4793, %v4793
      %v4802 = vcombine.high %v4800, %v4800
      %v4803 = vcombine.high %v4563, %v4563
      %v4805 = vunpack.c.l.s4 1983009808
      %v4806 = vunpack.c.0.s8 %v4805
      %v4807 = vlaneseq
      %v4808 = vshrl.u32 %v4807, 7
      %v4809 = vsub.s32 %v4806, %v4808
      %v4810 = vrot.slane %v4563, %v4809
      %v4812 = vunpack.c.l.s4 1983009808
      %v4813 = vunpack.c.0.s8 %v4812
      %v4814 = vlaneseq
      %v4815 = vshrl.u32 %v4814, 7
      %v4816 = vsub.s32 %v4813, %v4815
      %v4817 = vrot.slane %v4803, %v4816
      %v4818 = vcombine.high %v4810, %v4810
      %v4819 = vcombine.high %v4817, %v4817
      %v4820 = vcombine.high %v4564, %v4564
      %v4822 = vunpack.c.l.s4 1983009808
      %v4823 = vunpack.c.0.s8 %v4822
      %v4824 = vlaneseq
      %v4825 = vshrl.u32 %v4824, 7
      %v4826 = vsub.s32 %v4823, %v4825
      %v4827 = vrot.slane %v4564, %v4826
      %v4829 = vunpack.c.l.s4 1983009808
      %v4830 = vunpack.c.0.s8 %v4829
      %v4831 = vlaneseq
      %v4832 = vshrl.u32 %v4831, 7
      %v4833 = vsub.s32 %v4830, %v4832
      %v4834 = vrot.slane %v4820, %v4833
      %v4835 = vcombine.high %v4827, %v4827
      %v4836 = vcombine.high %v4834, %v4834
      %v4837 = vcombine.high %v4565, %v4565
      %v4839 = vunpack.c.l.s4 1983009808
      %v4840 = vunpack.c.0.s8 %v4839
      %v4841 = vlaneseq
      %v4842 = vshrl.u32 %v4841, 7
      %v4843 = vsub.s32 %v4840, %v4842
      %v4844 = vrot.slane %v4565, %v4843
      %v4846 = vunpack.c.l.s4 1983009808
      %v4847 = vunpack.c.0.s8 %v4846
      %v4848 = vlaneseq
      %v4849 = vshrl.u32 %v4848, 7
      %v4850 = vsub.s32 %v4847, %v4849
      %v4851 = vrot.slane %v4837, %v4850
      %v4852 = vcombine.high %v4844, %v4844
      %v4853 = vcombine.high %v4851, %v4851
      %v4854 = vcombine.high %v4566, %v4566
      %v4856 = vunpack.c.l.s4 1983009808
      %v4857 = vunpack.c.0.s8 %v4856
      %v4858 = vlaneseq
      %v4859 = vshrl.u32 %v4858, 7
      %v4860 = vsub.s32 %v4857, %v4859
      %v4861 = vrot.slane %v4566, %v4860
      %v4863 = vunpack.c.l.s4 1983009808
      %v4864 = vunpack.c.0.s8 %v4863
      %v4865 = vlaneseq
      %v4866 = vshrl.u32 %v4865, 7
      %v4867 = vsub.s32 %v4864, %v4866
      %v4868 = vrot.slane %v4854, %v4867
      %v4869 = vcombine.high %v4861, %v4861
      %v4870 = vcombine.high %v4868, %v4868
      %v4871 = vcombine.high %v4567, %v4567
      %v4873 = vunpack.c.l.s4 1983009808
      %v4874 = vunpack.c.0.s8 %v4873
      %v4875 = vlaneseq
      %v4876 = vshrl.u32 %v4875, 7
      %v4877 = vsub.s32 %v4874, %v4876
      %v4878 = vrot.slane %v4567, %v4877
      %v4880 = vunpack.c.l.s4 1983009808
      %v4881 = vunpack.c.0.s8 %v4880
      %v4882 = vlaneseq
      %v4883 = vshrl.u32 %v4882, 7
      %v4884 = vsub.s32 %v4881, %v4883
      %v4885 = vrot.slane %v4871, %v4884
      %v4886 = vcombine.high %v4878, %v4878
      %v4887 = vcombine.high %v4885, %v4885
      %v4888 = vcombine.high %v4568, %v4568
      %v4890 = vunpack.c.l.s4 1983009808
      %v4891 = vunpack.c.0.s8 %v4890
      %v4892 = vlaneseq
      %v4893 = vshrl.u32 %v4892, 7
      %v4894 = vsub.s32 %v4891, %v4893
      %v4895 = vrot.slane %v4568, %v4894
      %v4897 = vunpack.c.l.s4 1983009808
      %v4898 = vunpack.c.0.s8 %v4897
      %v4899 = vlaneseq
      %v4900 = vshrl.u32 %v4899, 7
      %v4901 = vsub.s32 %v4898, %v4900
      %v4902 = vrot.slane %v4888, %v4901
      %v4903 = vcombine.high %v4895, %v4895
      %v4904 = vcombine.high %v4902, %v4902
      %v4905 = vcombine.high %v4569, %v4569
      %v4907 = vunpack.c.l.s4 1983009808
      %v4908 = vunpack.c.0.s8 %v4907
      %v4909 = vlaneseq
      %v4910 = vshrl.u32 %v4909, 7
      %v4911 = vsub.s32 %v4908, %v4910
      %v4912 = vrot.slane %v4569, %v4911
      %v4914 = vunpack.c.l.s4 1983009808
      %v4915 = vunpack.c.0.s8 %v4914
      %v4916 = vlaneseq
      %v4917 = vshrl.u32 %v4916, 7
      %v4918 = vsub.s32 %v4915, %v4917
      %v4919 = vrot.slane %v4905, %v4918
      %v4920 = vcombine.high %v4912, %v4912
      %v4921 = vcombine.high %v4919, %v4919
      %v4922 = vcombine.high %v4570, %v4570
      %v4924 = vunpack.c.l.s4 1983009808
      %v4925 = vunpack.c.0.s8 %v4924
      %v4926 = vlaneseq
      %v4927 = vshrl.u32 %v4926, 7
      %v4928 = vsub.s32 %v4925, %v4927
      %v4929 = vrot.slane %v4570, %v4928
      %v4931 = vunpack.c.l.s4 1983009808
      %v4932 = vunpack.c.0.s8 %v4931
      %v4933 = vlaneseq
      %v4934 = vshrl.u32 %v4933, 7
      %v4935 = vsub.s32 %v4932, %v4934
      %v4936 = vrot.slane %v4922, %v4935
      %v4937 = vcombine.high %v4929, %v4929
      %v4938 = vcombine.high %v4936, %v4936
      %v4939 = vcombine.high %v4571, %v4571
      %v4941 = vunpack.c.l.s4 1983009808
      %v4942 = vunpack.c.0.s8 %v4941
      %v4943 = vlaneseq
      %v4944 = vshrl.u32 %v4943, 7
      %v4945 = vsub.s32 %v4942, %v4944
      %v4946 = vrot.slane %v4571, %v4945
      %v4948 = vunpack.c.l.s4 1983009808
      %v4949 = vunpack.c.0.s8 %v4948
      %v4950 = vlaneseq
      %v4951 = vshrl.u32 %v4950, 7
      %v4952 = vsub.s32 %v4949, %v4951
      %v4953 = vrot.slane %v4939, %v4952
      %v4954 = vcombine.high %v4946, %v4946
      %v4955 = vcombine.high %v4953, %v4953
      %v4956 = vcombine.high %v4572, %v4572
      %v4958 = vunpack.c.l.s4 1983009808
      %v4959 = vunpack.c.0.s8 %v4958
      %v4960 = vlaneseq
      %v4961 = vshrl.u32 %v4960, 7
      %v4962 = vsub.s32 %v4959, %v4961
      %v4963 = vrot.slane %v4572, %v4962
      %v4965 = vunpack.c.l.s4 1983009808
      %v4966 = vunpack.c.0.s8 %v4965
      %v4967 = vlaneseq
      %v4968 = vshrl.u32 %v4967, 7
      %v4969 = vsub.s32 %v4966, %v4968
      %v4970 = vrot.slane %v4956, %v4969
      %v4971 = vcombine.high %v4963, %v4963
      %v4972 = vcombine.high %v4970, %v4970
      %v4973 = vcombine.high %v4573, %v4573
      %v4975 = vunpack.c.l.s4 1983009808
      %v4976 = vunpack.c.0.s8 %v4975
      %v4977 = vlaneseq
      %v4978 = vshrl.u32 %v4977, 7
      %v4979 = vsub.s32 %v4976, %v4978
      %v4980 = vrot.slane %v4573, %v4979
      %v4982 = vunpack.c.l.s4 1983009808
      %v4983 = vunpack.c.0.s8 %v4982
      %v4984 = vlaneseq
      %v4985 = vshrl.u32 %v4984, 7
      %v4986 = vsub.s32 %v4983, %v4985
      %v4987 = vrot.slane %v4973, %v4986
      %v4988 = vcombine.high %v4980, %v4980
      %v4989 = vcombine.high %v4987, %v4987
      %v4990 = vcombine.high %v4574, %v4574
      %v4992 = vunpack.c.l.s4 1983009808
      %v4993 = vunpack.c.0.s8 %v4992
      %v4994 = vlaneseq
      %v4995 = vshrl.u32 %v4994, 7
      %v4996 = vsub.s32 %v4993, %v4995
      %v4997 = vrot.slane %v4574, %v4996
      %v4999 = vunpack.c.l.s4 1983009808
      %v5000 = vunpack.c.0.s8 %v4999
      %v5001 = vlaneseq
      %v5002 = vshrl.u32 %v5001, 7
      %v5003 = vsub.s32 %v5000, %v5002
      %v5004 = vrot.slane %v4990, %v5003
      %v5005 = vcombine.high %v4997, %v4997
      %v5006 = vcombine.high %v5004, %v5004
      %v5007 = vcombine.high %v4575, %v4575
      %v5009 = vunpack.c.l.s4 1983009808
      %v5010 = vunpack.c.0.s8 %v5009
      %v5011 = vlaneseq
      %v5012 = vshrl.u32 %v5011, 7
      %v5013 = vsub.s32 %v5010, %v5012
      %v5014 = vrot.slane %v4575, %v5013
      %v5016 = vunpack.c.l.s4 1983009808
      %v5017 = vunpack.c.0.s8 %v5016
      %v5018 = vlaneseq
      %v5019 = vshrl.u32 %v5018, 7
      %v5020 = vsub.s32 %v5017, %v5019
      %v5021 = vrot.slane %v5007, %v5020
      %v5022 = vcombine.high %v5014, %v5014
      %v5023 = vcombine.high %v5021, %v5021
      %v5024 = vcombine.high %v4576, %v4576
      %v5026 = vunpack.c.l.s4 1983009808
      %v5027 = vunpack.c.0.s8 %v5026
      %v5028 = vlaneseq
      %v5029 = vshrl.u32 %v5028, 7
      %v5030 = vsub.s32 %v5027, %v5029
      %v5031 = vrot.slane %v4576, %v5030
      %v5033 = vunpack.c.l.s4 1983009808
      %v5034 = vunpack.c.0.s8 %v5033
      %v5035 = vlaneseq
      %v5036 = vshrl.u32 %v5035, 7
      %v5037 = vsub.s32 %v5034, %v5036
      %v5038 = vrot.slane %v5024, %v5037
      %v5039 = vcombine.high %v5031, %v5031
      %v5040 = vcombine.high %v5038, %v5038
      %v5041 = vcombine.high %v4577, %v4577
      %v5043 = vunpack.c.l.s4 1983009808
      %v5044 = vunpack.c.0.s8 %v5043
      %v5045 = vlaneseq
      %v5046 = vshrl.u32 %v5045, 7
      %v5047 = vsub.s32 %v5044, %v5046
      %v5048 = vrot.slane %v4577, %v5047
      %v5050 = vunpack.c.l.s4 1983009808
      %v5051 = vunpack.c.0.s8 %v5050
      %v5052 = vlaneseq
      %v5053 = vshrl.u32 %v5052, 7
      %v5054 = vsub.s32 %v5051, %v5053
      %v5055 = vrot.slane %v5041, %v5054
      %v5056 = vcombine.high %v5048, %v5048
      %v5057 = vcombine.high %v5055, %v5055
      %v5058 = vcombine.high %v4578, %v4578
      %v5060 = vunpack.c.l.s4 1983009808
      %v5061 = vunpack.c.0.s8 %v5060
      %v5062 = vlaneseq
      %v5063 = vshrl.u32 %v5062, 7
      %v5064 = vsub.s32 %v5061, %v5063
      %v5065 = vrot.slane %v4578, %v5064
      %v5067 = vunpack.c.l.s4 1983009808
      %v5068 = vunpack.c.0.s8 %v5067
      %v5069 = vlaneseq
      %v5070 = vshrl.u32 %v5069, 7
      %v5071 = vsub.s32 %v5068, %v5070
      %v5072 = vrot.slane %v5058, %v5071
      %v5073 = vcombine.high %v5065, %v5065
      %v5074 = vcombine.high %v5072, %v5072
      %v5075 = vcombine.high %v4579, %v4579
      %v5077 = vunpack.c.l.s4 1983009808
      %v5078 = vunpack.c.0.s8 %v5077
      %v5079 = vlaneseq
      %v5080 = vshrl.u32 %v5079, 7
      %v5081 = vsub.s32 %v5078, %v5080
      %v5082 = vrot.slane %v4579, %v5081
      %v5084 = vunpack.c.l.s4 1983009808
      %v5085 = vunpack.c.0.s8 %v5084
      %v5086 = vlaneseq
      %v5087 = vshrl.u32 %v5086, 7
      %v5088 = vsub.s32 %v5085, %v5087
      %v5089 = vrot.slane %v5075, %v5088
      %v5090 = vcombine.high %v5082, %v5082
      %v5091 = vcombine.high %v5089, %v5089
      %v5092 = vcombine.high %v4580, %v4580
      %v5094 = vunpack.c.l.s4 1983009808
      %v5095 = vunpack.c.0.s8 %v5094
      %v5096 = vlaneseq
      %v5097 = vshrl.u32 %v5096, 7
      %v5098 = vsub.s32 %v5095, %v5097
      %v5099 = vrot.slane %v4580, %v5098
      %v5101 = vunpack.c.l.s4 1983009808
      %v5102 = vunpack.c.0.s8 %v5101
      %v5103 = vlaneseq
      %v5104 = vshrl.u32 %v5103, 7
      %v5105 = vsub.s32 %v5102, %v5104
      %v5106 = vrot.slane %v5092, %v5105
      %v5107 = vcombine.high %v5099, %v5099
      %v5108 = vcombine.high %v5106, %v5106
      %v5109 = vcombine.high %v4581, %v4581
      %v5111 = vunpack.c.l.s4 1983009808
      %v5112 = vunpack.c.0.s8 %v5111
      %v5113 = vlaneseq
      %v5114 = vshrl.u32 %v5113, 7
      %v5115 = vsub.s32 %v5112, %v5114
      %v5116 = vrot.slane %v4581, %v5115
      %v5118 = vunpack.c.l.s4 1983009808
      %v5119 = vunpack.c.0.s8 %v5118
      %v5120 = vlaneseq
      %v5121 = vshrl.u32 %v5120, 7
      %v5122 = vsub.s32 %v5119, %v5121
      %v5123 = vrot.slane %v5109, %v5122
      %v5124 = vcombine.high %v5116, %v5116
      %v5125 = vcombine.high %v5123, %v5123
      %v5126 = vcombine.high %v4582, %v4582
      %v5128 = vunpack.c.l.s4 1983009808
      %v5129 = vunpack.c.0.s8 %v5128
      %v5130 = vlaneseq
      %v5131 = vshrl.u32 %v5130, 7
      %v5132 = vsub.s32 %v5129, %v5131
      %v5133 = vrot.slane %v4582, %v5132
      %v5135 = vunpack.c.l.s4 1983009808
      %v5136 = vunpack.c.0.s8 %v5135
      %v5137 = vlaneseq
      %v5138 = vshrl.u32 %v5137, 7
      %v5139 = vsub.s32 %v5136, %v5138
      %v5140 = vrot.slane %v5126, %v5139
      %v5141 = vcombine.high %v5133, %v5133
      %v5142 = vcombine.high %v5140, %v5140
      %v5143 = vcombine.high %v4583, %v4583
      %v5145 = vunpack.c.l.s4 1983009808
      %v5146 = vunpack.c.0.s8 %v5145
      %v5147 = vlaneseq
      %v5148 = vshrl.u32 %v5147, 7
      %v5149 = vsub.s32 %v5146, %v5148
      %v5150 = vrot.slane %v4583, %v5149
      %v5152 = vunpack.c.l.s4 1983009808
      %v5153 = vunpack.c.0.s8 %v5152
      %v5154 = vlaneseq
      %v5155 = vshrl.u32 %v5154, 7
      %v5156 = vsub.s32 %v5153, %v5155
      %v5157 = vrot.slane %v5143, %v5156
      %v5158 = vcombine.high %v5150, %v5150
      %v5159 = vcombine.high %v5157, %v5157
      %v5288 = vmax.f32 %v4623, %v4657
      %v5289 = vmax.f32 %v4631, %v4665
      %v5290 = vmax.f32 %v4630, %v4664
      %v5291 = vmax.f32 %v4632, %v4666
      %v5292 = vmax.f32 %v4640, %v4674
      %v5293 = vmax.f32 %v4648, %v4682
      %v5294 = vmax.f32 %v4647, %v4681
      %v5295 = vmax.f32 %v4649, %v4683
      %v5296 = vmax.f32 %v4691, %v4725
      %v5297 = vmax.f32 %v4699, %v4733
      %v5298 = vmax.f32 %v4698, %v4732
      %v5299 = vmax.f32 %v4700, %v4734
      %v5300 = vmax.f32 %v4708, %v4742
      %v5301 = vmax.f32 %v4716, %v4750
      %v5302 = vmax.f32 %v4715, %v4749
      %v5303 = vmax.f32 %v4717, %v4751
      %v5304 = vmax.f32 %v4759, %v4793
      %v5305 = vmax.f32 %v4767, %v4801
      %v5306 = vmax.f32 %v4766, %v4800
      %v5307 = vmax.f32 %v4768, %v4802
      %v5308 = vmax.f32 %v4776, %v4810
      %v5309 = vmax.f32 %v4784, %v4818
      %v5310 = vmax.f32 %v4783, %v4817
      %v5311 = vmax.f32 %v4785, %v4819
      %v5312 = vmax.f32 %v4827, %v4861
      %v5313 = vmax.f32 %v4835, %v4869
      %v5314 = vmax.f32 %v4834, %v4868
      %v5315 = vmax.f32 %v4836, %v4870
      %v5316 = vmax.f32 %v4844, %v4878
      %v5317 = vmax.f32 %v4852, %v4886
      %v5318 = vmax.f32 %v4851, %v4885
      %v5319 = vmax.f32 %v4853, %v4887
      %v5320 = vmax.f32 %v4895, %v4929
      %v5321 = vmax.f32 %v4903, %v4937
      %v5322 = vmax.f32 %v4902, %v4936
      %v5323 = vmax.f32 %v4904, %v4938
      %v5324 = vmax.f32 %v4912, %v4946
      %v5325 = vmax.f32 %v4920, %v4954
      %v5326 = vmax.f32 %v4919, %v4953
      %v5327 = vmax.f32 %v4921, %v4955
      %v5328 = vmax.f32 %v4963, %v4997
      %v5329 = vmax.f32 %v4971, %v5005
      %v5330 = vmax.f32 %v4970, %v5004
      %v5331 = vmax.f32 %v4972, %v5006
      %v5332 = vmax.f32 %v4980, %v5014
      %v5333 = vmax.f32 %v4988, %v5022
      %v5334 = vmax.f32 %v4987, %v5021
      %v5335 = vmax.f32 %v4989, %v5023
      %v5336 = vmax.f32 %v5031, %v5065
      %v5337 = vmax.f32 %v5039, %v5073
      %v5338 = vmax.f32 %v5038, %v5072
      %v5339 = vmax.f32 %v5040, %v5074
      %v5340 = vmax.f32 %v5048, %v5082
      %v5341 = vmax.f32 %v5056, %v5090
      %v5342 = vmax.f32 %v5055, %v5089
      %v5343 = vmax.f32 %v5057, %v5091
      %v5344 = vmax.f32 %v5099, %v5133
      %v5345 = vmax.f32 %v5107, %v5141
      %v5346 = vmax.f32 %v5106, %v5140
      %v5347 = vmax.f32 %v5108, %v5142
      %v5348 = vmax.f32 %v5116, %v5150
      %v5349 = vmax.f32 %v5124, %v5158
      %v5350 = vmax.f32 %v5123, %v5157
      %v5351 = vmax.f32 %v5125, %v5159
      %v5416 = vrot.slane %v5288, 7
      %v5417 = vrot.slane %v5416, 2
      %v5418 = vrot.slane %v5289, 7
      %v5419 = vrot.slane %v5418, 2
      %v5420 = vrot.slane %v5290, 7
      %v5421 = vrot.slane %v5420, 2
      %v5422 = vrot.slane %v5291, 7
      %v5423 = vrot.slane %v5422, 2
      %v5424 = vrot.slane %v5292, 7
      %v5425 = vrot.slane %v5424, 2
      %v5426 = vrot.slane %v5293, 7
      %v5427 = vrot.slane %v5426, 2
      %v5428 = vrot.slane %v5294, 7
      %v5429 = vrot.slane %v5428, 2
      %v5430 = vrot.slane %v5295, 7
      %v5431 = vrot.slane %v5430, 2
      %v5432 = vrot.slane %v5296, 7
      %v5433 = vrot.slane %v5432, 2
      %v5434 = vrot.slane %v5297, 7
      %v5435 = vrot.slane %v5434, 2
      %v5436 = vrot.slane %v5298, 7
      %v5437 = vrot.slane %v5436, 2
      %v5438 = vrot.slane %v5299, 7
      %v5439 = vrot.slane %v5438, 2
      %v5440 = vrot.slane %v5300, 7
      %v5441 = vrot.slane %v5440, 2
      %v5442 = vrot.slane %v5301, 7
      %v5443 = vrot.slane %v5442, 2
      %v5444 = vrot.slane %v5302, 7
      %v5445 = vrot.slane %v5444, 2
      %v5446 = vrot.slane %v5303, 7
      %v5447 = vrot.slane %v5446, 2
      %v5448 = vrot.slane %v5304, 7
      %v5449 = vrot.slane %v5448, 2
      %v5450 = vrot.slane %v5305, 7
      %v5451 = vrot.slane %v5450, 2
      %v5452 = vrot.slane %v5306, 7
      %v5453 = vrot.slane %v5452, 2
      %v5454 = vrot.slane %v5307, 7
      %v5455 = vrot.slane %v5454, 2
      %v5456 = vrot.slane %v5308, 7
      %v5457 = vrot.slane %v5456, 2
      %v5458 = vrot.slane %v5309, 7
      %v5459 = vrot.slane %v5458, 2
      %v5460 = vrot.slane %v5310, 7
      %v5461 = vrot.slane %v5460, 2
      %v5462 = vrot.slane %v5311, 7
      %v5463 = vrot.slane %v5462, 2
      %v5464 = vrot.slane %v5312, 7
      %v5465 = vrot.slane %v5464, 2
      %v5466 = vrot.slane %v5313, 7
      %v5467 = vrot.slane %v5466, 2
      %v5468 = vrot.slane %v5314, 7
      %v5469 = vrot.slane %v5468, 2
      %v5470 = vrot.slane %v5315, 7
      %v5471 = vrot.slane %v5470, 2
      %v5472 = vrot.slane %v5316, 7
      %v5473 = vrot.slane %v5472, 2
      %v5474 = vrot.slane %v5317, 7
      %v5475 = vrot.slane %v5474, 2
      %v5476 = vrot.slane %v5318, 7
      %v5477 = vrot.slane %v5476, 2
      %v5478 = vrot.slane %v5319, 7
      %v5479 = vrot.slane %v5478, 2
      %v5480 = vrot.slane %v5320, 7
      %v5481 = vrot.slane %v5480, 2
      %v5482 = vrot.slane %v5321, 7
      %v5483 = vrot.slane %v5482, 2
      %v5484 = vrot.slane %v5322, 7
      %v5485 = vrot.slane %v5484, 2
      %v5486 = vrot.slane %v5323, 7
      %v5487 = vrot.slane %v5486, 2
      %v5488 = vrot.slane %v5324, 7
      %v5489 = vrot.slane %v5488, 2
      %v5490 = vrot.slane %v5325, 7
      %v5491 = vrot.slane %v5490, 2
      %v5492 = vrot.slane %v5326, 7
      %v5493 = vrot.slane %v5492, 2
      %v5494 = vrot.slane %v5327, 7
      %v5495 = vrot.slane %v5494, 2
      %v5496 = vrot.slane %v5328, 7
      %v5497 = vrot.slane %v5496, 2
      %v5498 = vrot.slane %v5329, 7
      %v5499 = vrot.slane %v5498, 2
      %v5500 = vrot.slane %v5330, 7
      %v5501 = vrot.slane %v5500, 2
      %v5502 = vrot.slane %v5331, 7
      %v5503 = vrot.slane %v5502, 2
      %v5504 = vrot.slane %v5332, 7
      %v5505 = vrot.slane %v5504, 2
      %v5506 = vrot.slane %v5333, 7
      %v5507 = vrot.slane %v5506, 2
      %v5508 = vrot.slane %v5334, 7
      %v5509 = vrot.slane %v5508, 2
      %v5510 = vrot.slane %v5335, 7
      %v5511 = vrot.slane %v5510, 2
      %v5512 = vrot.slane %v5336, 7
      %v5513 = vrot.slane %v5512, 2
      %v5514 = vrot.slane %v5337, 7
      %v5515 = vrot.slane %v5514, 2
      %v5516 = vrot.slane %v5338, 7
      %v5517 = vrot.slane %v5516, 2
      %v5518 = vrot.slane %v5339, 7
      %v5519 = vrot.slane %v5518, 2
      %v5520 = vrot.slane %v5340, 7
      %v5521 = vrot.slane %v5520, 2
      %v5522 = vrot.slane %v5341, 7
      %v5523 = vrot.slane %v5522, 2
      %v5524 = vrot.slane %v5342, 7
      %v5525 = vrot.slane %v5524, 2
      %v5526 = vrot.slane %v5343, 7
      %v5527 = vrot.slane %v5526, 2
      %v5528 = vrot.slane %v5344, 7
      %v5529 = vrot.slane %v5528, 2
      %v5530 = vrot.slane %v5345, 7
      %v5531 = vrot.slane %v5530, 2
      %v5532 = vrot.slane %v5346, 7
      %v5533 = vrot.slane %v5532, 2
      %v5534 = vrot.slane %v5347, 7
      %v5535 = vrot.slane %v5534, 2
      %v5536 = vrot.slane %v5348, 7
      %v5537 = vrot.slane %v5536, 2
      %v5538 = vrot.slane %v5349, 7
      %v5539 = vrot.slane %v5538, 2
      %v5540 = vrot.slane %v5350, 7
      %v5541 = vrot.slane %v5540, 2
      %v5542 = vrot.slane %v5351, 7
      %v5543 = vrot.slane %v5542, 2
      %v5608 = vmax.f32 %v5288, %v5417
      %v5609 = vmax.f32 %v5289, %v5419
      %v5610 = vmax.f32 %v5290, %v5421
      %v5611 = vmax.f32 %v5291, %v5423
      %v5612 = vmax.f32 %v5292, %v5425
      %v5613 = vmax.f32 %v5293, %v5427
      %v5614 = vmax.f32 %v5294, %v5429
      %v5615 = vmax.f32 %v5295, %v5431
      %v5616 = vmax.f32 %v5296, %v5433
      %v5617 = vmax.f32 %v5297, %v5435
      %v5618 = vmax.f32 %v5298, %v5437
      %v5619 = vmax.f32 %v5299, %v5439
      %v5620 = vmax.f32 %v5300, %v5441
      %v5621 = vmax.f32 %v5301, %v5443
      %v5622 = vmax.f32 %v5302, %v5445
      %v5623 = vmax.f32 %v5303, %v5447
      %v5624 = vmax.f32 %v5304, %v5449
      %v5625 = vmax.f32 %v5305, %v5451
      %v5626 = vmax.f32 %v5306, %v5453
      %v5627 = vmax.f32 %v5307, %v5455
      %v5628 = vmax.f32 %v5308, %v5457
      %v5629 = vmax.f32 %v5309, %v5459
      %v5630 = vmax.f32 %v5310, %v5461
      %v5631 = vmax.f32 %v5311, %v5463
      %v5632 = vmax.f32 %v5312, %v5465
      %v5633 = vmax.f32 %v5313, %v5467
      %v5634 = vmax.f32 %v5314, %v5469
      %v5635 = vmax.f32 %v5315, %v5471
      %v5636 = vmax.f32 %v5316, %v5473
      %v5637 = vmax.f32 %v5317, %v5475
      %v5638 = vmax.f32 %v5318, %v5477
      %v5639 = vmax.f32 %v5319, %v5479
      %v5640 = vmax.f32 %v5320, %v5481
      %v5641 = vmax.f32 %v5321, %v5483
      %v5642 = vmax.f32 %v5322, %v5485
      %v5643 = vmax.f32 %v5323, %v5487
      %v5644 = vmax.f32 %v5324, %v5489
      %v5645 = vmax.f32 %v5325, %v5491
      %v5646 = vmax.f32 %v5326, %v5493
      %v5647 = vmax.f32 %v5327, %v5495
      %v5648 = vmax.f32 %v5328, %v5497
      %v5649 = vmax.f32 %v5329, %v5499
      %v5650 = vmax.f32 %v5330, %v5501
      %v5651 = vmax.f32 %v5331, %v5503
      %v5652 = vmax.f32 %v5332, %v5505
      %v5653 = vmax.f32 %v5333, %v5507
      %v5654 = vmax.f32 %v5334, %v5509
      %v5655 = vmax.f32 %v5335, %v5511
      %v5656 = vmax.f32 %v5336, %v5513
      %v5657 = vmax.f32 %v5337, %v5515
      %v5658 = vmax.f32 %v5338, %v5517
      %v5659 = vmax.f32 %v5339, %v5519
      %v5660 = vmax.f32 %v5340, %v5521
      %v5661 = vmax.f32 %v5341, %v5523
      %v5662 = vmax.f32 %v5342, %v5525
      %v5663 = vmax.f32 %v5343, %v5527
      %v5664 = vmax.f32 %v5344, %v5529
      %v5665 = vmax.f32 %v5345, %v5531
      %v5666 = vmax.f32 %v5346, %v5533
      %v5667 = vmax.f32 %v5347, %v5535
      %v5668 = vmax.f32 %v5348, %v5537
      %v5669 = vmax.f32 %v5349, %v5539
      %v5670 = vmax.f32 %v5350, %v5541
      %v5671 = vmax.f32 %v5351, %v5543
      %v5736 = vlaneseq
      %v5737 = vshrl.u32 %v5736, 7
      %v5738 = vsub.s32 0, %v5737
      %v5739 = vrot.slane %v5608, %v5738
      %v5740 = vlaneseq
      %v5741 = vshrl.u32 %v5740, 7
      %v5742 = vsub.s32 0, %v5741
      %v5743 = vrot.slane %v5609, %v5742
      %v5744 = vlaneseq
      %v5745 = vshrl.u32 %v5744, 7
      %v5746 = vsub.s32 0, %v5745
      %v5747 = vrot.slane %v5610, %v5746
      %v5748 = vlaneseq
      %v5749 = vshrl.u32 %v5748, 7
      %v5750 = vsub.s32 0, %v5749
      %v5751 = vrot.slane %v5611, %v5750
      %v5752 = vlaneseq
      %v5753 = vshrl.u32 %v5752, 7
      %v5754 = vsub.s32 0, %v5753
      %v5755 = vrot.slane %v5612, %v5754
      %v5756 = vlaneseq
      %v5757 = vshrl.u32 %v5756, 7
      %v5758 = vsub.s32 0, %v5757
      %v5759 = vrot.slane %v5613, %v5758
      %v5760 = vlaneseq
      %v5761 = vshrl.u32 %v5760, 7
      %v5762 = vsub.s32 0, %v5761
      %v5763 = vrot.slane %v5614, %v5762
      %v5764 = vlaneseq
      %v5765 = vshrl.u32 %v5764, 7
      %v5766 = vsub.s32 0, %v5765
      %v5767 = vrot.slane %v5615, %v5766
      %v5768 = vlaneseq
      %v5769 = vshrl.u32 %v5768, 7
      %v5770 = vsub.s32 0, %v5769
      %v5771 = vrot.slane %v5616, %v5770
      %v5772 = vlaneseq
      %v5773 = vshrl.u32 %v5772, 7
      %v5774 = vsub.s32 0, %v5773
      %v5775 = vrot.slane %v5617, %v5774
      %v5776 = vlaneseq
      %v5777 = vshrl.u32 %v5776, 7
      %v5778 = vsub.s32 0, %v5777
      %v5779 = vrot.slane %v5618, %v5778
      %v5780 = vlaneseq
      %v5781 = vshrl.u32 %v5780, 7
      %v5782 = vsub.s32 0, %v5781
      %v5783 = vrot.slane %v5619, %v5782
      %v5784 = vlaneseq
      %v5785 = vshrl.u32 %v5784, 7
      %v5786 = vsub.s32 0, %v5785
      %v5787 = vrot.slane %v5620, %v5786
      %v5788 = vlaneseq
      %v5789 = vshrl.u32 %v5788, 7
      %v5790 = vsub.s32 0, %v5789
      %v5791 = vrot.slane %v5621, %v5790
      %v5792 = vlaneseq
      %v5793 = vshrl.u32 %v5792, 7
      %v5794 = vsub.s32 0, %v5793
      %v5795 = vrot.slane %v5622, %v5794
      %v5796 = vlaneseq
      %v5797 = vshrl.u32 %v5796, 7
      %v5798 = vsub.s32 0, %v5797
      %v5799 = vrot.slane %v5623, %v5798
      %v5800 = vlaneseq
      %v5801 = vshrl.u32 %v5800, 7
      %v5802 = vsub.s32 0, %v5801
      %v5803 = vrot.slane %v5624, %v5802
      %v5804 = vlaneseq
      %v5805 = vshrl.u32 %v5804, 7
      %v5806 = vsub.s32 0, %v5805
      %v5807 = vrot.slane %v5625, %v5806
      %v5808 = vlaneseq
      %v5809 = vshrl.u32 %v5808, 7
      %v5810 = vsub.s32 0, %v5809
      %v5811 = vrot.slane %v5626, %v5810
      %v5812 = vlaneseq
      %v5813 = vshrl.u32 %v5812, 7
      %v5814 = vsub.s32 0, %v5813
      %v5815 = vrot.slane %v5627, %v5814
      %v5816 = vlaneseq
      %v5817 = vshrl.u32 %v5816, 7
      %v5818 = vsub.s32 0, %v5817
      %v5819 = vrot.slane %v5628, %v5818
      %v5820 = vlaneseq
      %v5821 = vshrl.u32 %v5820, 7
      %v5822 = vsub.s32 0, %v5821
      %v5823 = vrot.slane %v5629, %v5822
      %v5824 = vlaneseq
      %v5825 = vshrl.u32 %v5824, 7
      %v5826 = vsub.s32 0, %v5825
      %v5827 = vrot.slane %v5630, %v5826
      %v5828 = vlaneseq
      %v5829 = vshrl.u32 %v5828, 7
      %v5830 = vsub.s32 0, %v5829
      %v5831 = vrot.slane %v5631, %v5830
      %v5832 = vlaneseq
      %v5833 = vshrl.u32 %v5832, 7
      %v5834 = vsub.s32 0, %v5833
      %v5835 = vrot.slane %v5632, %v5834
      %v5836 = vlaneseq
      %v5837 = vshrl.u32 %v5836, 7
      %v5838 = vsub.s32 0, %v5837
      %v5839 = vrot.slane %v5633, %v5838
      %v5840 = vlaneseq
      %v5841 = vshrl.u32 %v5840, 7
      %v5842 = vsub.s32 0, %v5841
      %v5843 = vrot.slane %v5634, %v5842
      %v5844 = vlaneseq
      %v5845 = vshrl.u32 %v5844, 7
      %v5846 = vsub.s32 0, %v5845
      %v5847 = vrot.slane %v5635, %v5846
      %v5848 = vlaneseq
      %v5849 = vshrl.u32 %v5848, 7
      %v5850 = vsub.s32 0, %v5849
      %v5851 = vrot.slane %v5636, %v5850
      %v5852 = vlaneseq
      %v5853 = vshrl.u32 %v5852, 7
      %v5854 = vsub.s32 0, %v5853
      %v5855 = vrot.slane %v5637, %v5854
      %v5856 = vlaneseq
      %v5857 = vshrl.u32 %v5856, 7
      %v5858 = vsub.s32 0, %v5857
      %v5859 = vrot.slane %v5638, %v5858
      %v5860 = vlaneseq
      %v5861 = vshrl.u32 %v5860, 7
      %v5862 = vsub.s32 0, %v5861
      %v5863 = vrot.slane %v5639, %v5862
      %v5864 = vlaneseq
      %v5865 = vshrl.u32 %v5864, 7
      %v5866 = vsub.s32 0, %v5865
      %v5867 = vrot.slane %v5640, %v5866
      %v5868 = vlaneseq
      %v5869 = vshrl.u32 %v5868, 7
      %v5870 = vsub.s32 0, %v5869
      %v5871 = vrot.slane %v5641, %v5870
      %v5872 = vlaneseq
      %v5873 = vshrl.u32 %v5872, 7
      %v5874 = vsub.s32 0, %v5873
      %v5875 = vrot.slane %v5642, %v5874
      %v5876 = vlaneseq
      %v5877 = vshrl.u32 %v5876, 7
      %v5878 = vsub.s32 0, %v5877
      %v5879 = vrot.slane %v5643, %v5878
      %v5880 = vlaneseq
      %v5881 = vshrl.u32 %v5880, 7
      %v5882 = vsub.s32 0, %v5881
      %v5883 = vrot.slane %v5644, %v5882
      %v5884 = vlaneseq
      %v5885 = vshrl.u32 %v5884, 7
      %v5886 = vsub.s32 0, %v5885
      %v5887 = vrot.slane %v5645, %v5886
      %v5888 = vlaneseq
      %v5889 = vshrl.u32 %v5888, 7
      %v5890 = vsub.s32 0, %v5889
      %v5891 = vrot.slane %v5646, %v5890
      %v5892 = vlaneseq
      %v5893 = vshrl.u32 %v5892, 7
      %v5894 = vsub.s32 0, %v5893
      %v5895 = vrot.slane %v5647, %v5894
      %v5896 = vlaneseq
      %v5897 = vshrl.u32 %v5896, 7
      %v5898 = vsub.s32 0, %v5897
      %v5899 = vrot.slane %v5648, %v5898
      %v5900 = vlaneseq
      %v5901 = vshrl.u32 %v5900, 7
      %v5902 = vsub.s32 0, %v5901
      %v5903 = vrot.slane %v5649, %v5902
      %v5904 = vlaneseq
      %v5905 = vshrl.u32 %v5904, 7
      %v5906 = vsub.s32 0, %v5905
      %v5907 = vrot.slane %v5650, %v5906
      %v5908 = vlaneseq
      %v5909 = vshrl.u32 %v5908, 7
      %v5910 = vsub.s32 0, %v5909
      %v5911 = vrot.slane %v5651, %v5910
      %v5912 = vlaneseq
      %v5913 = vshrl.u32 %v5912, 7
      %v5914 = vsub.s32 0, %v5913
      %v5915 = vrot.slane %v5652, %v5914
      %v5916 = vlaneseq
      %v5917 = vshrl.u32 %v5916, 7
      %v5918 = vsub.s32 0, %v5917
      %v5919 = vrot.slane %v5653, %v5918
      %v5920 = vlaneseq
      %v5921 = vshrl.u32 %v5920, 7
      %v5922 = vsub.s32 0, %v5921
      %v5923 = vrot.slane %v5654, %v5922
      %v5924 = vlaneseq
      %v5925 = vshrl.u32 %v5924, 7
      %v5926 = vsub.s32 0, %v5925
      %v5927 = vrot.slane %v5655, %v5926
      %v5928 = vlaneseq
      %v5929 = vshrl.u32 %v5928, 7
      %v5930 = vsub.s32 0, %v5929
      %v5931 = vrot.slane %v5656, %v5930
      %v5932 = vlaneseq
      %v5933 = vshrl.u32 %v5932, 7
      %v5934 = vsub.s32 0, %v5933
      %v5935 = vrot.slane %v5657, %v5934
      %v5936 = vlaneseq
      %v5937 = vshrl.u32 %v5936, 7
      %v5938 = vsub.s32 0, %v5937
      %v5939 = vrot.slane %v5658, %v5938
      %v5940 = vlaneseq
      %v5941 = vshrl.u32 %v5940, 7
      %v5942 = vsub.s32 0, %v5941
      %v5943 = vrot.slane %v5659, %v5942
      %v5944 = vlaneseq
      %v5945 = vshrl.u32 %v5944, 7
      %v5946 = vsub.s32 0, %v5945
      %v5947 = vrot.slane %v5660, %v5946
      %v5948 = vlaneseq
      %v5949 = vshrl.u32 %v5948, 7
      %v5950 = vsub.s32 0, %v5949
      %v5951 = vrot.slane %v5661, %v5950
      %v5952 = vlaneseq
      %v5953 = vshrl.u32 %v5952, 7
      %v5954 = vsub.s32 0, %v5953
      %v5955 = vrot.slane %v5662, %v5954
      %v5956 = vlaneseq
      %v5957 = vshrl.u32 %v5956, 7
      %v5958 = vsub.s32 0, %v5957
      %v5959 = vrot.slane %v5663, %v5958
      %v5960 = vlaneseq
      %v5961 = vshrl.u32 %v5960, 7
      %v5962 = vsub.s32 0, %v5961
      %v5963 = vrot.slane %v5664, %v5962
      %v5964 = vlaneseq
      %v5965 = vshrl.u32 %v5964, 7
      %v5966 = vsub.s32 0, %v5965
      %v5967 = vrot.slane %v5665, %v5966
      %v5968 = vlaneseq
      %v5969 = vshrl.u32 %v5968, 7
      %v5970 = vsub.s32 0, %v5969
      %v5971 = vrot.slane %v5666, %v5970
      %v5972 = vlaneseq
      %v5973 = vshrl.u32 %v5972, 7
      %v5974 = vsub.s32 0, %v5973
      %v5975 = vrot.slane %v5667, %v5974
      %v5976 = vlaneseq
      %v5977 = vshrl.u32 %v5976, 7
      %v5978 = vsub.s32 0, %v5977
      %v5979 = vrot.slane %v5668, %v5978
      %v5980 = vlaneseq
      %v5981 = vshrl.u32 %v5980, 7
      %v5982 = vsub.s32 0, %v5981
      %v5983 = vrot.slane %v5669, %v5982
      %v5984 = vlaneseq
      %v5985 = vshrl.u32 %v5984, 7
      %v5986 = vsub.s32 0, %v5985
      %v5987 = vrot.slane %v5670, %v5986
      %v5988 = vlaneseq
      %v5989 = vshrl.u32 %v5988, 7
      %v5990 = vsub.s32 0, %v5989
      %v5991 = vrot.slane %v5671, %v5990
      %vm5992 = vcmask 1041409
      %v5993 = vsel %vm5992, %v5743, %v5739
      %vm5994 = vcmask 1042434
      %v5995 = vsel %vm5994, %v5747, %v5993
      %vm5996 = vcmask 1043459
      %v5997 = vsel %vm5996, %v5751, %v5995
      %vm5998 = vcmask 1044484
      %v5999 = vsel %vm5998, %v5755, %v5997
      %vm6000 = vcmask 1045509
      %v6001 = vsel %vm6000, %v5759, %v5999
      %vm6002 = vcmask 1046534
      %v6003 = vsel %vm6002, %v5763, %v6001
      %vm6004 = vcmask 1047559
      %v6005 = vsel %vm6004, %v5767, %v6003
      %v6006 = vsel %vm5992, %v5775, %v5771
      %v6007 = vsel %vm5994, %v5779, %v6006
      %v6008 = vsel %vm5996, %v5783, %v6007
      %v6009 = vsel %vm5998, %v5787, %v6008
      %v6010 = vsel %vm6000, %v5791, %v6009
      %v6011 = vsel %vm6002, %v5795, %v6010
      %v6012 = vsel %vm6004, %v5799, %v6011
      %v6013 = vsel %vm5992, %v5807, %v5803
      %v6014 = vsel %vm5994, %v5811, %v6013
      %v6015 = vsel %vm5996, %v5815, %v6014
      %v6016 = vsel %vm5998, %v5819, %v6015
      %v6017 = vsel %vm6000, %v5823, %v6016
      %v6018 = vsel %vm6002, %v5827, %v6017
      %v6019 = vsel %vm6004, %v5831, %v6018
      %v6020 = vsel %vm5992, %v5839, %v5835
      %v6021 = vsel %vm5994, %v5843, %v6020
      %v6022 = vsel %vm5996, %v5847, %v6021
      %v6023 = vsel %vm5998, %v5851, %v6022
      %v6024 = vsel %vm6000, %v5855, %v6023
      %v6025 = vsel %vm6002, %v5859, %v6024
      %v6026 = vsel %vm6004, %v5863, %v6025
      %v6027 = vsel %vm5992, %v5871, %v5867
      %v6028 = vsel %vm5994, %v5875, %v6027
      %v6029 = vsel %vm5996, %v5879, %v6028
      %v6030 = vsel %vm5998, %v5883, %v6029
      %v6031 = vsel %vm6000, %v5887, %v6030
      %v6032 = vsel %vm6002, %v5891, %v6031
      %v6033 = vsel %vm6004, %v5895, %v6032
      %v6034 = vsel %vm5992, %v5903, %v5899
      %v6035 = vsel %vm5994, %v5907, %v6034
      %v6036 = vsel %vm5996, %v5911, %v6035
      %v6037 = vsel %vm5998, %v5915, %v6036
      %v6038 = vsel %vm6000, %v5919, %v6037
      %v6039 = vsel %vm6002, %v5923, %v6038
      %v6040 = vsel %vm6004, %v5927, %v6039
      %v6041 = vsel %vm5992, %v5935, %v5931
      %v6042 = vsel %vm5994, %v5939, %v6041
      %v6043 = vsel %vm5996, %v5943, %v6042
      %v6044 = vsel %vm5998, %v5947, %v6043
      %v6045 = vsel %vm6000, %v5951, %v6044
      %v6046 = vsel %vm6002, %v5955, %v6045
      %v6047 = vsel %vm6004, %v5959, %v6046
      %v6048 = vsel %vm5992, %v5967, %v5963
      %v6049 = vsel %vm5994, %v5971, %v6048
      %v6050 = vsel %vm5996, %v5975, %v6049
      %v6051 = vsel %vm5998, %v5979, %v6050
      %v6052 = vsel %vm6000, %v5983, %v6051
      %v6053 = vsel %vm6002, %v5987, %v6052
      %v6054 = vsel %vm6004, %v5991, %v6053
      %6063 = vst [vmem:[#allocation5] sm:$0xff] %v6005
      %6064 = vst [vmem:[#allocation5 + $0x10] sm:$0xff] %v6012
      %6065 = vst [vmem:[#allocation5 + $0x20] sm:$0xff] %v6019
      %6066 = vst [vmem:[#allocation5 + $0x30] sm:$0xff] %v6026
      %6067 = vst [vmem:[#allocation5 + $0x40] sm:$0xff] %v6033
      %6068 = vst [vmem:[#allocation5 + $0x50] sm:$0xff] %v6040
      %6069 = vst [vmem:[#allocation5 + $0x60] sm:$0xff] %v6047
      %6070 = vst [vmem:[#allocation5 + $0x70] sm:$0xff] %v6054
      %v6071 = vld [vmem:[#allocation5] sm:$0xff]
      %v6072 = vld [vmem:[#allocation5 + $0x10] sm:$0xff]
      %v6073 = vld [vmem:[#allocation5 + $0x20] sm:$0xff]
      %v6074 = vld [vmem:[#allocation5 + $0x30] sm:$0xff]
      %v6075 = vld [vmem:[#allocation5 + $0x40] sm:$0xff]
      %v6076 = vld [vmem:[#allocation5 + $0x50] sm:$0xff]
      %v6077 = vld [vmem:[#allocation5 + $0x60] sm:$0xff]
      %v6078 = vld [vmem:[#allocation5 + $0x70] sm:$0xff]
      %v6079 = vpack.c.bf16 %v6072, %v6071
      %v6080 = vpack.c.bf16 %v6074, %v6073
      %v6081 = vpack.c.bf16 %v6076, %v6075
      %v6082 = vpack.c.bf16 %v6078, %v6077
      %6083 = vst [vmem:[#allocation4] sm:$0xff] %v6079
      %6084 = vst [vmem:[#allocation4 + $0x28] sm:$0xff] %v6080
      %6085 = vst [vmem:[#allocation4 + $0x50] sm:$0xff] %v6081
      %6086 = vst [vmem:[#allocation4 + $0x78] sm:$0xff] %v6082
      %v6087 = vld [vmem:[#allocation5 + $0x1] sm:$0xff]
      %v6088 = vld [vmem:[#allocation5 + $0x11] sm:$0xff]
      %v6089 = vld [vmem:[#allocation5 + $0x21] sm:$0xff]
      %v6090 = vld [vmem:[#allocation5 + $0x31] sm:$0xff]
      %v6091 = vld [vmem:[#allocation5 + $0x41] sm:$0xff]
      %v6092 = vld [vmem:[#allocation5 + $0x51] sm:$0xff]
      %v6093 = vld [vmem:[#allocation5 + $0x61] sm:$0xff]
      %v6094 = vld [vmem:[#allocation5 + $0x71] sm:$0xff]
      %v6095 = vpack.c.bf16 %v6088, %v6087
      %v6096 = vpack.c.bf16 %v6090, %v6089
      %v6097 = vpack.c.bf16 %v6092, %v6091
      %v6098 = vpack.c.bf16 %v6094, %v6093
      %6099 = vst [vmem:[#allocation4 + $0x8] sm:$0xff] %v6095
      %6100 = vst [vmem:[#allocation4 + $0x30] sm:$0xff] %v6096
      %6101 = vst [vmem:[#allocation4 + $0x58] sm:$0xff] %v6097
      %6102 = vst [vmem:[#allocation4 + $0x80] sm:$0xff] %v6098
      %s6103 = scalar_lea.vmem [#allocation5], 16
      %v6104 = vld [vmem:[%s6103] sm:$0xff]
      %v6105 = vld [vmem:[%s6103 + $0x10] sm:$0xff]
      %v6106 = vld [vmem:[%s6103 + $0x20] sm:$0xff]
      %v6107 = vld [vmem:[%s6103 + $0x30] sm:$0xff]
      %v6108 = vld [vmem:[%s6103 + $0x40] sm:$0xff]
      %v6109 = vld [vmem:[%s6103 + $0x50] sm:$0xff]
      %v6110 = vld [vmem:[%s6103 + $0x60] sm:$0xff]
      %v6111 = vld [vmem:[%s6103 + $0x70] sm:$0xff]
      %v6112 = vpack.c.bf16 %v6105, %v6104
      %v6113 = vpack.c.bf16 %v6107, %v6106
      %v6114 = vpack.c.bf16 %v6109, %v6108
      %v6115 = vpack.c.bf16 %v6111, %v6110
      %6116 = vst [vmem:[#allocation4 + $0x10] sm:$0xff] %v6112
      %6117 = vst [vmem:[#allocation4 + $0x38] sm:$0xff] %v6113
      %6118 = vst [vmem:[#allocation4 + $0x60] sm:$0xff] %v6114
      %6119 = vst [vmem:[#allocation4 + $0x88] sm:$0xff] %v6115
      %v6120 = vld [vmem:[%s6103 + $0x1] sm:$0xff]
      %v6121 = vld [vmem:[%s6103 + $0x11] sm:$0xff]
      %v6122 = vld [vmem:[%s6103 + $0x21] sm:$0xff]
      %v6123 = vld [vmem:[%s6103 + $0x31] sm:$0xff]
      %v6124 = vld [vmem:[%s6103 + $0x41] sm:$0xff]
      %v6125 = vld [vmem:[%s6103 + $0x51] sm:$0xff]
      %v6126 = vld [vmem:[%s6103 + $0x61] sm:$0xff]
      %v6127 = vld [vmem:[%s6103 + $0x71] sm:$0xff]
      %v6128 = vpack.c.bf16 %v6121, %v6120
      %v6129 = vpack.c.bf16 %v6123, %v6122
      %v6130 = vpack.c.bf16 %v6125, %v6124
      %v6131 = vpack.c.bf16 %v6127, %v6126
      %6132 = vst [vmem:[#allocation4 + $0x18] sm:$0xff] %v6128
      %6133 = vst [vmem:[#allocation4 + $0x40] sm:$0xff] %v6129
      %6134 = vst [vmem:[#allocation4 + $0x68] sm:$0xff] %v6130
      %6135 = vst [vmem:[#allocation4 + $0x90] sm:$0xff] %v6131
      %v6136 = vld [vmem:[#allocation4] sm:$0xff]
      %v6137 = vld [vmem:[#allocation4 + $0x8] sm:$0xff]
      %v6138 = vld [vmem:[#allocation4 + $0x10] sm:$0xff]
      %v6139 = vld [vmem:[#allocation4 + $0x18] sm:$0xff]
      %v6140 = vld [vmem:[#allocation4 + $0x28] sm:$0xff]
      %v6141 = vld [vmem:[#allocation4 + $0x30] sm:$0xff]
      %v6142 = vld [vmem:[#allocation4 + $0x38] sm:$0xff]
      %v6143 = vld [vmem:[#allocation4 + $0x40] sm:$0xff]
      %v6144 = vld [vmem:[#allocation4 + $0x50] sm:$0xff]
      %v6145 = vld [vmem:[#allocation4 + $0x58] sm:$0xff]
      %v6146 = vld [vmem:[#allocation4 + $0x60] sm:$0xff]
      %v6147 = vld [vmem:[#allocation4 + $0x68] sm:$0xff]
      %v6148 = vld [vmem:[#allocation4 + $0x78] sm:$0xff]
      %v6149 = vld [vmem:[#allocation4 + $0x80] sm:$0xff]
      %v6150 = vld [vmem:[#allocation4 + $0x88] sm:$0xff]
      %v6151 = vld [vmem:[#allocation4 + $0x90] sm:$0xff]
      %v6152 = vld [vmem:[%s5] sm:$0xff]
      %v6153 = vld [vmem:[%s5 + $0x8] sm:$0xff]
      %v6154 = vld [vmem:[%s5 + $0x10] sm:$0xff]
      %v6155 = vld [vmem:[%s5 + $0x18] sm:$0xff]
      %v6156 = vld [vmem:[%s5 + $0x20] sm:$0xff]
      %v6157 = vld [vmem:[%s5 + $0x28] sm:$0xff]
      %v6158 = vld [vmem:[%s5 + $0x30] sm:$0xff]
      %v6159 = vld [vmem:[%s5 + $0x38] sm:$0xff]
      %v6160 = vld [vmem:[%s5 + $0x40] sm:$0xff]
      %v6161 = vld [vmem:[%s5 + $0x48] sm:$0xff]
      %v6162 = vld [vmem:[%s5 + $0x50] sm:$0xff]
      %v6163 = vld [vmem:[%s5 + $0x58] sm:$0xff]
      %v6164 = vld [vmem:[%s5 + $0x60] sm:$0xff]
      %v6165 = vld [vmem:[%s5 + $0x68] sm:$0xff]
      %v6166 = vld [vmem:[%s5 + $0x70] sm:$0xff]
      %v6167 = vld [vmem:[%s5 + $0x78] sm:$0xff]
      %v6168 = vld [vmem:[%s5 + $0x80] sm:$0xff]
      %v6169 = vld [vmem:[%s5 + $0x88] sm:$0xff]
      %v6170 = vld [vmem:[%s5 + $0x90] sm:$0xff]
      %v6171 = vld [vmem:[%s5 + $0x98] sm:$0xff]
      %v6172 = vld [vmem:[%s5 + $0xa0] sm:$0xff]
      %v6173 = vld [vmem:[%s5 + $0xa8] sm:$0xff]
      %v6174 = vld [vmem:[%s5 + $0xb0] sm:$0xff]
      %v6175 = vld [vmem:[%s5 + $0xb8] sm:$0xff]
      %v6176 = vld [vmem:[%s5 + $0xc0] sm:$0xff]
      %v6177 = vld [vmem:[%s5 + $0xc8] sm:$0xff]
      %v6178 = vld [vmem:[%s5 + $0xd0] sm:$0xff]
      %v6179 = vld [vmem:[%s5 + $0xd8] sm:$0xff]
      %v6180 = vld [vmem:[%s5 + $0xe0] sm:$0xff]
      %v6181 = vld [vmem:[%s5 + $0xe8] sm:$0xff]
      %v6182 = vld [vmem:[%s5 + $0xf0] sm:$0xff]
      %v6183 = vld [vmem:[%s5 + $0xf8] sm:$0xff]
      %v6184 = vld [vmem:[%s5 + $0x100] sm:$0xff]
      %v6185 = vld [vmem:[%s5 + $0x108] sm:$0xff]
      %v6186 = vld [vmem:[%s5 + $0x110] sm:$0xff]
      %v6187 = vld [vmem:[%s5 + $0x118] sm:$0xff]
      %v6188 = vld [vmem:[%s5 + $0x120] sm:$0xff]
      %v6189 = vld [vmem:[%s5 + $0x128] sm:$0xff]
      %v6190 = vld [vmem:[%s5 + $0x130] sm:$0xff]
      %v6191 = vld [vmem:[%s5 + $0x138] sm:$0xff]
      %v6192 = vld [vmem:[%s5 + $0x140] sm:$0xff]
      %v6193 = vld [vmem:[%s5 + $0x148] sm:$0xff]
      %v6194 = vld [vmem:[%s5 + $0x150] sm:$0xff]
      %v6195 = vld [vmem:[%s5 + $0x158] sm:$0xff]
      %v6196 = vld [vmem:[%s5 + $0x160] sm:$0xff]
      %v6197 = vld [vmem:[%s5 + $0x168] sm:$0xff]
      %v6198 = vld [vmem:[%s5 + $0x170] sm:$0xff]
      %v6199 = vld [vmem:[%s5 + $0x178] sm:$0xff]
      %v6200 = vld [vmem:[%s5 + $0x180] sm:$0xff]
      %v6201 = vld [vmem:[%s5 + $0x188] sm:$0xff]
      %v6202 = vld [vmem:[%s5 + $0x190] sm:$0xff]
      %v6203 = vld [vmem:[%s5 + $0x198] sm:$0xff]
      %v6204 = vld [vmem:[%s5 + $0x1a0] sm:$0xff]
      %v6205 = vld [vmem:[%s5 + $0x1a8] sm:$0xff]
      %v6206 = vld [vmem:[%s5 + $0x1b0] sm:$0xff]
      %v6207 = vld [vmem:[%s5 + $0x1b8] sm:$0xff]
      %v6208 = vld [vmem:[%s5 + $0x1c0] sm:$0xff]
      %v6209 = vld [vmem:[%s5 + $0x1c8] sm:$0xff]
      %v6210 = vld [vmem:[%s5 + $0x1d0] sm:$0xff]
      %v6211 = vld [vmem:[%s5 + $0x1d8] sm:$0xff]
      %v6212 = vld [vmem:[%s5 + $0x1e0] sm:$0xff]
      %v6213 = vld [vmem:[%s5 + $0x1e8] sm:$0xff]
      %v6214 = vld [vmem:[%s5 + $0x1f0] sm:$0xff]
      %v6215 = vld [vmem:[%s5 + $0x1f8] sm:$0xff]
      %v6216 = vld [vmem:[%s6] sm:$0x3]
      %v6218 = vlaneseq
      %v6219 = vshrl.u32 %v6218, 7
      %v6220 = vsub.s32 0, %v6219
      %v6221 = vrot.slane %v6216, %v6220
      %v6222 = vlaneseq
      %v6223 = vshrl.u32 %v6222, 7
      %v6224 = vsub.s32 1, %v6223
      %v6225 = vrot.slane %v6216, %v6224
      %v6292 = vunpack.c.l.b16 %v6152
      %v6293 = vunpack.c.h.b16 %v6152
      %v6294 = vunpack.c.l.b16 %v6153
      %v6295 = vunpack.c.h.b16 %v6153
      %v6296 = vunpack.c.l.b16 %v6154
      %v6297 = vunpack.c.h.b16 %v6154
      %v6298 = vunpack.c.l.b16 %v6155
      %v6299 = vunpack.c.h.b16 %v6155
      %v6300 = vunpack.c.l.b16 %v6156
      %v6301 = vunpack.c.h.b16 %v6156
      %v6302 = vunpack.c.l.b16 %v6157
      %v6303 = vunpack.c.h.b16 %v6157
      %v6304 = vunpack.c.l.b16 %v6158
      %v6305 = vunpack.c.h.b16 %v6158
      %v6306 = vunpack.c.l.b16 %v6159
      %v6307 = vunpack.c.h.b16 %v6159
      %v6308 = vunpack.c.l.b16 %v6160
      %v6309 = vunpack.c.h.b16 %v6160
      %v6310 = vunpack.c.l.b16 %v6161
      %v6311 = vunpack.c.h.b16 %v6161
      %v6312 = vunpack.c.l.b16 %v6162
      %v6313 = vunpack.c.h.b16 %v6162
      %v6314 = vunpack.c.l.b16 %v6163
      %v6315 = vunpack.c.h.b16 %v6163
      %v6316 = vunpack.c.l.b16 %v6164
      %v6317 = vunpack.c.h.b16 %v6164
      %v6318 = vunpack.c.l.b16 %v6165
      %v6319 = vunpack.c.h.b16 %v6165
      %v6320 = vunpack.c.l.b16 %v6166
      %v6321 = vunpack.c.h.b16 %v6166
      %v6322 = vunpack.c.l.b16 %v6167
      %v6323 = vunpack.c.h.b16 %v6167
      %v6324 = vunpack.c.l.b16 %v6168
      %v6325 = vunpack.c.h.b16 %v6168
      %v6326 = vunpack.c.l.b16 %v6169
      %v6327 = vunpack.c.h.b16 %v6169
      %v6328 = vunpack.c.l.b16 %v6170
      %v6329 = vunpack.c.h.b16 %v6170
      %v6330 = vunpack.c.l.b16 %v6171
      %v6331 = vunpack.c.h.b16 %v6171
      %v6332 = vunpack.c.l.b16 %v6172
      %v6333 = vunpack.c.h.b16 %v6172
      %v6334 = vunpack.c.l.b16 %v6173
      %v6335 = vunpack.c.h.b16 %v6173
      %v6336 = vunpack.c.l.b16 %v6174
      %v6337 = vunpack.c.h.b16 %v6174
      %v6338 = vunpack.c.l.b16 %v6175
      %v6339 = vunpack.c.h.b16 %v6175
      %v6340 = vunpack.c.l.b16 %v6176
      %v6341 = vunpack.c.h.b16 %v6176
      %v6342 = vunpack.c.l.b16 %v6177
      %v6343 = vunpack.c.h.b16 %v6177
      %v6344 = vunpack.c.l.b16 %v6178
      %v6345 = vunpack.c.h.b16 %v6178
      %v6346 = vunpack.c.l.b16 %v6179
      %v6347 = vunpack.c.h.b16 %v6179
      %v6348 = vunpack.c.l.b16 %v6180
      %v6349 = vunpack.c.h.b16 %v6180
      %v6350 = vunpack.c.l.b16 %v6181
      %v6351 = vunpack.c.h.b16 %v6181
      %v6352 = vunpack.c.l.b16 %v6182
      %v6353 = vunpack.c.h.b16 %v6182
      %v6354 = vunpack.c.l.b16 %v6183
      %v6355 = vunpack.c.h.b16 %v6183
      %v6356 = vunpack.c.l.b16 %v6184
      %v6357 = vunpack.c.h.b16 %v6184
      %v6358 = vunpack.c.l.b16 %v6185
      %v6359 = vunpack.c.h.b16 %v6185
      %v6360 = vunpack.c.l.b16 %v6186
      %v6361 = vunpack.c.h.b16 %v6186
      %v6362 = vunpack.c.l.b16 %v6187
      %v6363 = vunpack.c.h.b16 %v6187
      %v6364 = vunpack.c.l.b16 %v6188
      %v6365 = vunpack.c.h.b16 %v6188
      %v6366 = vunpack.c.l.b16 %v6189
      %v6367 = vunpack.c.h.b16 %v6189
      %v6368 = vunpack.c.l.b16 %v6190
      %v6369 = vunpack.c.h.b16 %v6190
      %v6370 = vunpack.c.l.b16 %v6191
      %v6371 = vunpack.c.h.b16 %v6191
      %v6372 = vunpack.c.l.b16 %v6192
      %v6373 = vunpack.c.h.b16 %v6192
      %v6374 = vunpack.c.l.b16 %v6193
      %v6375 = vunpack.c.h.b16 %v6193
      %v6376 = vunpack.c.l.b16 %v6194
      %v6377 = vunpack.c.h.b16 %v6194
      %v6378 = vunpack.c.l.b16 %v6195
      %v6379 = vunpack.c.h.b16 %v6195
      %v6380 = vunpack.c.l.b16 %v6196
      %v6381 = vunpack.c.h.b16 %v6196
      %v6382 = vunpack.c.l.b16 %v6197
      %v6383 = vunpack.c.h.b16 %v6197
      %v6384 = vunpack.c.l.b16 %v6198
      %v6385 = vunpack.c.h.b16 %v6198
      %v6386 = vunpack.c.l.b16 %v6199
      %v6387 = vunpack.c.h.b16 %v6199
      %v6388 = vunpack.c.l.b16 %v6200
      %v6389 = vunpack.c.h.b16 %v6200
      %v6390 = vunpack.c.l.b16 %v6201
      %v6391 = vunpack.c.h.b16 %v6201
      %v6392 = vunpack.c.l.b16 %v6202
      %v6393 = vunpack.c.h.b16 %v6202
      %v6394 = vunpack.c.l.b16 %v6203
      %v6395 = vunpack.c.h.b16 %v6203
      %v6396 = vunpack.c.l.b16 %v6204
      %v6397 = vunpack.c.h.b16 %v6204
      %v6398 = vunpack.c.l.b16 %v6205
      %v6399 = vunpack.c.h.b16 %v6205
      %v6400 = vunpack.c.l.b16 %v6206
      %v6401 = vunpack.c.h.b16 %v6206
      %v6402 = vunpack.c.l.b16 %v6207
      %v6403 = vunpack.c.h.b16 %v6207
      %v6404 = vunpack.c.l.b16 %v6208
      %v6405 = vunpack.c.h.b16 %v6208
      %v6406 = vunpack.c.l.b16 %v6209
      %v6407 = vunpack.c.h.b16 %v6209
      %v6408 = vunpack.c.l.b16 %v6210
      %v6409 = vunpack.c.h.b16 %v6210
      %v6410 = vunpack.c.l.b16 %v6211
      %v6411 = vunpack.c.h.b16 %v6211
      %v6412 = vunpack.c.l.b16 %v6212
      %v6413 = vunpack.c.h.b16 %v6212
      %v6414 = vunpack.c.l.b16 %v6213
      %v6415 = vunpack.c.h.b16 %v6213
      %v6416 = vunpack.c.l.b16 %v6214
      %v6417 = vunpack.c.h.b16 %v6214
      %v6418 = vunpack.c.l.b16 %v6215
      %v6419 = vunpack.c.h.b16 %v6215
      %v6420 = vpack.c.b16 %v6294, %v6292
      %v6421 = vpack.c.b16 %v6295, %v6293
      %v6422 = vpack.c.b16 %v6298, %v6296
      %v6423 = vpack.c.b16 %v6299, %v6297
      %v6424 = vpack.c.b16 %v6302, %v6300
      %v6425 = vpack.c.b16 %v6303, %v6301
      %v6426 = vpack.c.b16 %v6306, %v6304
      %v6427 = vpack.c.b16 %v6307, %v6305
      %v6428 = vpack.c.b16 %v6310, %v6308
      %v6429 = vpack.c.b16 %v6311, %v6309
      %v6430 = vpack.c.b16 %v6314, %v6312
      %v6431 = vpack.c.b16 %v6315, %v6313
      %v6432 = vpack.c.b16 %v6318, %v6316
      %v6433 = vpack.c.b16 %v6319, %v6317
      %v6434 = vpack.c.b16 %v6322, %v6320
      %v6435 = vpack.c.b16 %v6323, %v6321
      %v6436 = vpack.c.b16 %v6326, %v6324
      %v6437 = vpack.c.b16 %v6327, %v6325
      %v6438 = vpack.c.b16 %v6330, %v6328
      %v6439 = vpack.c.b16 %v6331, %v6329
      %v6440 = vpack.c.b16 %v6334, %v6332
      %v6441 = vpack.c.b16 %v6335, %v6333
      %v6442 = vpack.c.b16 %v6338, %v6336
      %v6443 = vpack.c.b16 %v6339, %v6337
      %v6444 = vpack.c.b16 %v6342, %v6340
      %v6445 = vpack.c.b16 %v6343, %v6341
      %v6446 = vpack.c.b16 %v6346, %v6344
      %v6447 = vpack.c.b16 %v6347, %v6345
      %v6448 = vpack.c.b16 %v6350, %v6348
      %v6449 = vpack.c.b16 %v6351, %v6349
      %v6450 = vpack.c.b16 %v6354, %v6352
      %v6451 = vpack.c.b16 %v6355, %v6353
      %v6452 = vpack.c.b16 %v6358, %v6356
      %v6453 = vpack.c.b16 %v6359, %v6357
      %v6454 = vpack.c.b16 %v6362, %v6360
      %v6455 = vpack.c.b16 %v6363, %v6361
      %v6456 = vpack.c.b16 %v6366, %v6364
      %v6457 = vpack.c.b16 %v6367, %v6365
      %v6458 = vpack.c.b16 %v6370, %v6368
      %v6459 = vpack.c.b16 %v6371, %v6369
      %v6460 = vpack.c.b16 %v6374, %v6372
      %v6461 = vpack.c.b16 %v6375, %v6373
      %v6462 = vpack.c.b16 %v6378, %v6376
      %v6463 = vpack.c.b16 %v6379, %v6377
      %v6464 = vpack.c.b16 %v6382, %v6380
      %v6465 = vpack.c.b16 %v6383, %v6381
      %v6466 = vpack.c.b16 %v6386, %v6384
      %v6467 = vpack.c.b16 %v6387, %v6385
      %v6468 = vpack.c.b16 %v6390, %v6388
      %v6469 = vpack.c.b16 %v6391, %v6389
      %v6470 = vpack.c.b16 %v6394, %v6392
      %v6471 = vpack.c.b16 %v6395, %v6393
      %v6472 = vpack.c.b16 %v6398, %v6396
      %v6473 = vpack.c.b16 %v6399, %v6397
      %v6474 = vpack.c.b16 %v6402, %v6400
      %v6475 = vpack.c.b16 %v6403, %v6401
      %v6476 = vpack.c.b16 %v6406, %v6404
      %v6477 = vpack.c.b16 %v6407, %v6405
      %v6478 = vpack.c.b16 %v6410, %v6408
      %v6479 = vpack.c.b16 %v6411, %v6409
      %v6480 = vpack.c.b16 %v6414, %v6412
      %v6481 = vpack.c.b16 %v6415, %v6413
      %v6482 = vpack.c.b16 %v6418, %v6416
      %v6483 = vpack.c.b16 %v6419, %v6417
      %6548 = vmatprep.subr.bf16.mxu0 %v6421
      %6549 = vmatpush1.bf16.msra.mxu0 %v6420
      %6550 = vmatprep.subr.bf16.mxu0 %v6423
      %6551 = vmatpush1.bf16.msra.mxu0 %v6422
      %6552 = vmatprep.subr.bf16.mxu0 %v6425
      %6553 = vmatpush1.bf16.msra.mxu0 %v6424
      %6554 = vmatprep.subr.bf16.mxu0 %v6427
      %6555 = vmatpush1.bf16.msra.mxu0 %v6426
      %6556 = vmatprep.subr.bf16.mxu0 %v6429
      %6557 = vmatpush1.bf16.msra.mxu0 %v6428
      %6558 = vmatprep.subr.bf16.mxu0 %v6431
      %6559 = vmatpush1.bf16.msra.mxu0 %v6430
      %6560 = vmatprep.subr.bf16.mxu0 %v6433
      %6561 = vmatpush1.bf16.msra.mxu0 %v6432
      %6562 = vmatprep.subr.bf16.mxu0 %v6435
      %6563 = vmatpush1.bf16.msra.mxu0 %v6434
      %6564 = vmatprep.subr.bf16.mxu0 %v6437
      %6565 = vmatpush1.bf16.msra.mxu0 %v6436
      %6566 = vmatprep.subr.bf16.mxu0 %v6439
      %6567 = vmatpush1.bf16.msra.mxu0 %v6438
      %6568 = vmatprep.subr.bf16.mxu0 %v6441
      %6569 = vmatpush1.bf16.msra.mxu0 %v6440
      %6570 = vmatprep.subr.bf16.mxu0 %v6443
      %6571 = vmatpush1.bf16.msra.mxu0 %v6442
      %6572 = vmatprep.subr.bf16.mxu0 %v6445
      %6573 = vmatpush1.bf16.msra.mxu0 %v6444
      %6574 = vmatprep.subr.bf16.mxu0 %v6447
      %6575 = vmatpush1.bf16.msra.mxu0 %v6446
      %6576 = vmatprep.subr.bf16.mxu0 %v6449
      %6577 = vmatpush1.bf16.msra.mxu0 %v6448
      %6578 = vmatprep.subr.bf16.mxu0 %v6451
      %6579 = vmatpush1.bf16.msra.mxu0 %v6450
      %6580 = vmatprep.mubr.bf16.mxu0 %v6137
      %6581 = vmatmul.mubr.bf16.gmra.mrb[0].mxu0 %v6136
      %v6582 = vpop.f32.mrb[0].mxu0
      %v6583 = vadd.f32 %v6221, %v6582
      %v6584 = vpop.f32.mrb[0].mxu0
      %v6585 = vadd.f32 %v6225, %v6584
      %v6586 = vpop.f32.mrb[0].mxu0
      %v6587 = vadd.f32 %v6221, %v6586
      %v6588 = vpop.f32.mrb[0].mxu0
      %v6589 = vadd.f32 %v6225, %v6588
      %6590 = vmatprep.mubr.bf16.mxu0 %v6141
      %6591 = vmatmul.mubr.bf16.gmra.mrb[0].mxu0 %v6140
      %v6592 = vpop.f32.mrb[0].mxu0
      %v6593 = vadd.f32 %v6221, %v6592
      %v6594 = vpop.f32.mrb[0].mxu0
      %v6595 = vadd.f32 %v6225, %v6594
      %v6596 = vpop.f32.mrb[0].mxu0
      %v6597 = vadd.f32 %v6221, %v6596
      %v6598 = vpop.f32.mrb[0].mxu0
      %v6599 = vadd.f32 %v6225, %v6598
      %6600 = vmatprep.mubr.bf16.mxu0 %v6145
      %6601 = vmatmul.mubr.bf16.gmra.mrb[0].mxu0 %v6144
      %v6602 = vpop.f32.mrb[0].mxu0
      %v6603 = vadd.f32 %v6221, %v6602
      %v6604 = vpop.f32.mrb[0].mxu0
      %v6605 = vadd.f32 %v6225, %v6604
      %v6606 = vpop.f32.mrb[0].mxu0
      %v6607 = vadd.f32 %v6221, %v6606
      %v6608 = vpop.f32.mrb[0].mxu0
      %v6609 = vadd.f32 %v6225, %v6608
      %6610 = vmatprep.mubr.bf16.mxu0 %v6149
      %6611 = vmatmul.mubr.bf16.gmra.mrb[0].mxu0 %v6148
      %v6612 = vpop.f32.mrb[0].mxu0
      %v6613 = vadd.f32 %v6221, %v6612
      %v6614 = vpop.f32.mrb[0].mxu0
      %v6615 = vadd.f32 %v6225, %v6614
      %v6616 = vpop.f32.mrb[0].mxu0
      %v6617 = vadd.f32 %v6221, %v6616
      %v6618 = vpop.f32.mrb[0].mxu0
      %v6619 = vadd.f32 %v6225, %v6618
      %6620 = vdwg.mxu0
      %6621 = vmatprep.subr.bf16.mxu0 %v6453
      %6622 = vmatpush1.bf16.msra.mxu0 %v6452
      %6623 = vmatprep.subr.bf16.mxu0 %v6455
      %6624 = vmatpush1.bf16.msra.mxu0 %v6454
      %6625 = vmatprep.subr.bf16.mxu0 %v6457
      %6626 = vmatpush1.bf16.msra.mxu0 %v6456
      %6627 = vmatprep.subr.bf16.mxu0 %v6459
      %6628 = vmatpush1.bf16.msra.mxu0 %v6458
      %6629 = vmatprep.subr.bf16.mxu0 %v6461
      %6630 = vmatpush1.bf16.msra.mxu0 %v6460
      %6631 = vmatprep.subr.bf16.mxu0 %v6463
      %6632 = vmatpush1.bf16.msra.mxu0 %v6462
      %6633 = vmatprep.subr.bf16.mxu0 %v6465
      %6634 = vmatpush1.bf16.msra.mxu0 %v6464
      %6635 = vmatprep.subr.bf16.mxu0 %v6467
      %6636 = vmatpush1.bf16.msra.mxu0 %v6466
      %6637 = vmatprep.subr.bf16.mxu0 %v6469
      %6638 = vmatpush1.bf16.msra.mxu0 %v6468
      %6639 = vmatprep.subr.bf16.mxu0 %v6471
      %6640 = vmatpush1.bf16.msra.mxu0 %v6470
      %6641 = vmatprep.subr.bf16.mxu0 %v6473
      %6642 = vmatpush1.bf16.msra.mxu0 %v6472
      %6643 = vmatprep.subr.bf16.mxu0 %v6475
      %6644 = vmatpush1.bf16.msra.mxu0 %v6474
      %6645 = vmatprep.subr.bf16.mxu0 %v6477
      %6646 = vmatpush1.bf16.msra.mxu0 %v6476
      %6647 = vmatprep.subr.bf16.mxu0 %v6479
      %6648 = vmatpush1.bf16.msra.mxu0 %v6478
      %6649 = vmatprep.subr.bf16.mxu0 %v6481
      %6650 = vmatpush1.bf16.msra.mxu0 %v6480
      %6651 = vmatprep.subr.bf16.mxu0 %v6483
      %6652 = vmatpush1.bf16.msra.mxu0 %v6482
      %6653 = vmatprep.mubr.bf16.mxu0 %v6139
      %6654 = vmatmul.mubr.bf16.gmra.mrb[0].mxu0 %v6138
      %v6655 = vpop.f32.mrb[0].mxu0
      %v6656 = vadd.f32 %v6583, %v6655
      %v6657 = vpop.f32.mrb[0].mxu0
      %v6658 = vadd.f32 %v6585, %v6657
      %v6659 = vpop.f32.mrb[0].mxu0
      %v6660 = vadd.f32 %v6587, %v6659
      %v6661 = vpop.f32.mrb[0].mxu0
      %v6662 = vadd.f32 %v6589, %v6661
      %6663 = vmatprep.mubr.bf16.mxu0 %v6143
      %6664 = vmatmul.mubr.bf16.gmra.mrb[0].mxu0 %v6142
      %v6665 = vpop.f32.mrb[0].mxu0
      %v6666 = vadd.f32 %v6593, %v6665
      %v6667 = vpop.f32.mrb[0].mxu0
      %v6668 = vadd.f32 %v6595, %v6667
      %v6669 = vpop.f32.mrb[0].mxu0
      %v6670 = vadd.f32 %v6597, %v6669
      %v6671 = vpop.f32.mrb[0].mxu0
      %v6672 = vadd.f32 %v6599, %v6671
      %6673 = vmatprep.mubr.bf16.mxu0 %v6147
      %6674 = vmatmul.mubr.bf16.gmra.mrb[0].mxu0 %v6146
      %v6675 = vpop.f32.mrb[0].mxu0
      %v6676 = vadd.f32 %v6603, %v6675
      %v6677 = vpop.f32.mrb[0].mxu0
      %v6678 = vadd.f32 %v6605, %v6677
      %v6679 = vpop.f32.mrb[0].mxu0
      %v6680 = vadd.f32 %v6607, %v6679
      %v6681 = vpop.f32.mrb[0].mxu0
      %v6682 = vadd.f32 %v6609, %v6681
      %6683 = vmatprep.mubr.bf16.mxu0 %v6151
      %6684 = vmatmul.mubr.bf16.gmra.mrb[0].mxu0 %v6150
      %v6685 = vpop.f32.mrb[0].mxu0
      %v6686 = vadd.f32 %v6613, %v6685
      %v6687 = vpop.f32.mrb[0].mxu0
      %v6688 = vadd.f32 %v6615, %v6687
      %v6689 = vpop.f32.mrb[0].mxu0
      %v6690 = vadd.f32 %v6617, %v6689
      %v6691 = vpop.f32.mrb[0].mxu0
      %v6692 = vadd.f32 %v6619, %v6691
      %6693 = vdwg.mxu0
      %v6694 = vmax.f32 %v6656, 0.0
      %v6695 = vmax.f32 %v6658, 0.0
      %v6696 = vmax.f32 %v6660, 0.0
      %v6697 = vmax.f32 %v6662, 0.0
      %v6698 = vmax.f32 %v6666, 0.0
      %v6699 = vmax.f32 %v6668, 0.0
      %v6700 = vmax.f32 %v6670, 0.0
      %v6701 = vmax.f32 %v6672, 0.0
      %v6702 = vmax.f32 %v6676, 0.0
      %v6703 = vmax.f32 %v6678, 0.0
      %v6704 = vmax.f32 %v6680, 0.0
      %v6705 = vmax.f32 %v6682, 0.0
      %v6706 = vmax.f32 %v6686, 0.0
      %v6707 = vmax.f32 %v6688, 0.0
      %v6708 = vmax.f32 %v6690, 0.0
      %v6709 = vmax.f32 %v6692, 0.0
      %s6710 = scalar_lea.vmem [#allocation6], 16
      %6711 = vst.msk [vmem:[%s6710 + $0x1] sm:$0xff] %vm334, %v6694
      %6712 = vst.msk [vmem:[%s6710 + $0x11] sm:$0xff] %vm334, %v6696
      %6713 = vst.msk [vmem:[%s6710 + $0x21] sm:$0xff] %vm334, %v6698
      %6714 = vst.msk [vmem:[%s6710 + $0x31] sm:$0xff] %vm334, %v6700
      %6715 = vst.msk [vmem:[%s6710 + $0x41] sm:$0xff] %vm334, %v6702
      %6716 = vst.msk [vmem:[%s6710 + $0x51] sm:$0xff] %vm334, %v6704
      %6717 = vst.msk [vmem:[%s6710 + $0x61] sm:$0xff] %vm334, %v6706
      %6718 = vst.msk [vmem:[%s6710 + $0x71] sm:$0xff] %vm334, %v6708
      %6727 = vrot.lane.b32.xlu0 %v6694, 64
      %v6728 = vpop.permute.xlu0 %6727
      %6729 = vrot.lane.b32.xlu0 %v6696, 64
      %v6730 = vpop.permute.xlu0 %6729
      %6731 = vrot.lane.b32.xlu0 %v6698, 64
      %v6732 = vpop.permute.xlu0 %6731
      %6733 = vrot.lane.b32.xlu0 %v6700, 64
      %v6734 = vpop.permute.xlu0 %6733
      %6735 = vrot.lane.b32.xlu0 %v6702, 64
      %v6736 = vpop.permute.xlu0 %6735
      %6737 = vrot.lane.b32.xlu0 %v6704, 64
      %v6738 = vpop.permute.xlu0 %6737
      %6739 = vrot.lane.b32.xlu0 %v6706, 64
      %v6740 = vpop.permute.xlu0 %6739
      %6741 = vrot.lane.b32.xlu0 %v6708, 64
      %v6742 = vpop.permute.xlu0 %6741
      %s6751 = scalar_lea.vmem [#allocation6], 176
      %6752 = vst.msk [vmem:[%s6751 + $0x1] sm:$0xff] %vm334, %v6728
      %6753 = vst.msk [vmem:[%s6751 + $0x11] sm:$0xff] %vm334, %v6730
      %6754 = vst.msk [vmem:[%s6751 + $0x21] sm:$0xff] %vm334, %v6732
      %6755 = vst.msk [vmem:[%s6751 + $0x31] sm:$0xff] %vm334, %v6734
      %6756 = vst.msk [vmem:[%s6751 + $0x41] sm:$0xff] %vm334, %v6736
      %6757 = vst.msk [vmem:[%s6751 + $0x51] sm:$0xff] %vm334, %v6738
      %6758 = vst.msk [vmem:[%s6751 + $0x61] sm:$0xff] %vm334, %v6740
      %6759 = vst.msk [vmem:[%s6751 + $0x71] sm:$0xff] %vm334, %v6742
      %s6760 = scalar_lea.vmem [#allocation6], 336
      %6761 = vst.msk [vmem:[%s6760 + $0x1] sm:$0xff] %vm334, %v6695
      %6762 = vst.msk [vmem:[%s6760 + $0x11] sm:$0xff] %vm334, %v6697
      %6763 = vst.msk [vmem:[%s6760 + $0x21] sm:$0xff] %vm334, %v6699
      %6764 = vst.msk [vmem:[%s6760 + $0x31] sm:$0xff] %vm334, %v6701
      %6765 = vst.msk [vmem:[%s6760 + $0x41] sm:$0xff] %vm334, %v6703
      %6766 = vst.msk [vmem:[%s6760 + $0x51] sm:$0xff] %vm334, %v6705
      %6767 = vst.msk [vmem:[%s6760 + $0x61] sm:$0xff] %vm334, %v6707
      %6768 = vst.msk [vmem:[%s6760 + $0x71] sm:$0xff] %vm334, %v6709
      %6777 = vrot.lane.b32.xlu0 %v6695, 64
      %v6778 = vpop.permute.xlu0 %6777
      %6779 = vrot.lane.b32.xlu0 %v6697, 64
      %v6780 = vpop.permute.xlu0 %6779
      %6781 = vrot.lane.b32.xlu0 %v6699, 64
      %v6782 = vpop.permute.xlu0 %6781
      %6783 = vrot.lane.b32.xlu0 %v6701, 64
      %v6784 = vpop.permute.xlu0 %6783
      %6785 = vrot.lane.b32.xlu0 %v6703, 64
      %v6786 = vpop.permute.xlu0 %6785
      %6787 = vrot.lane.b32.xlu0 %v6705, 64
      %v6788 = vpop.permute.xlu0 %6787
      %6789 = vrot.lane.b32.xlu0 %v6707, 64
      %v6790 = vpop.permute.xlu0 %6789
      %6791 = vrot.lane.b32.xlu0 %v6709, 64
      %v6792 = vpop.permute.xlu0 %6791
      %s6801 = scalar_lea.vmem [#allocation6], 496
      %6802 = vst.msk [vmem:[%s6801 + $0x1] sm:$0xff] %vm334, %v6778
      %6803 = vst.msk [vmem:[%s6801 + $0x11] sm:$0xff] %vm334, %v6780
      %6804 = vst.msk [vmem:[%s6801 + $0x21] sm:$0xff] %vm334, %v6782
      %6805 = vst.msk [vmem:[%s6801 + $0x31] sm:$0xff] %vm334, %v6784
      %6806 = vst.msk [vmem:[%s6801 + $0x41] sm:$0xff] %vm334, %v6786
      %6807 = vst.msk [vmem:[%s6801 + $0x51] sm:$0xff] %vm334, %v6788
      %6808 = vst.msk [vmem:[%s6801 + $0x61] sm:$0xff] %vm334, %v6790
      %6809 = vst.msk [vmem:[%s6801 + $0x71] sm:$0xff] %vm334, %v6792
      %s6810 = scalar_lea.vmem [#allocation6], 480
      %v6811 = vld [vmem:[%s6810] sm:$0xff]
      %v6812 = vld [vmem:[%s6810 + $0x10] sm:$0xff]
      %v6813 = vld [vmem:[%s6810 + $0x20] sm:$0xff]
      %v6814 = vld [vmem:[%s6810 + $0x30] sm:$0xff]
      %v6815 = vld [vmem:[%s6810 + $0x40] sm:$0xff]
      %v6816 = vld [vmem:[%s6810 + $0x50] sm:$0xff]
      %v6817 = vld [vmem:[%s6810 + $0x60] sm:$0xff]
      %v6818 = vld [vmem:[%s6810 + $0x70] sm:$0xff]
      %s6819 = scalar_lea.vmem [#allocation6], 320
      %v6820 = vld [vmem:[%s6819 + $0x1] sm:$0xff]
      %v6821 = vld [vmem:[%s6819 + $0x11] sm:$0xff]
      %v6822 = vld [vmem:[%s6819 + $0x21] sm:$0xff]
      %v6823 = vld [vmem:[%s6819 + $0x31] sm:$0xff]
      %v6824 = vld [vmem:[%s6819 + $0x41] sm:$0xff]
      %v6825 = vld [vmem:[%s6819 + $0x51] sm:$0xff]
      %v6826 = vld [vmem:[%s6819 + $0x61] sm:$0xff]
      %v6827 = vld [vmem:[%s6819 + $0x71] sm:$0xff]
      %6836 = vrot.lane.b32.xlu0 %v6820, 64
      %v6837 = vpop.permute.xlu0 %6836
      %6838 = vrot.lane.b32.xlu0 %v6821, 64
      %v6839 = vpop.permute.xlu0 %6838
      %6840 = vrot.lane.b32.xlu0 %v6822, 64
      %v6841 = vpop.permute.xlu0 %6840
      %6842 = vrot.lane.b32.xlu0 %v6823, 64
      %v6843 = vpop.permute.xlu0 %6842
      %6844 = vrot.lane.b32.xlu0 %v6824, 64
      %v6845 = vpop.permute.xlu0 %6844
      %6846 = vrot.lane.b32.xlu0 %v6825, 64
      %v6847 = vpop.permute.xlu0 %6846
      %6848 = vrot.lane.b32.xlu0 %v6826, 64
      %v6849 = vpop.permute.xlu0 %6848
      %6850 = vrot.lane.b32.xlu0 %v6827, 64
      %v6851 = vpop.permute.xlu0 %6850
      %v6860 = vsel %vm334, %v6811, %v6837
      %v6861 = vsel %vm334, %v6812, %v6839
      %v6862 = vsel %vm334, %v6813, %v6841
      %v6863 = vsel %vm334, %v6814, %v6843
      %v6864 = vsel %vm334, %v6815, %v6845
      %v6865 = vsel %vm334, %v6816, %v6847
      %v6866 = vsel %vm334, %v6817, %v6849
      %v6867 = vsel %vm334, %v6818, %v6851
      %v6868 = vpack.c.bf16 %v6861, %v6860
      %v6869 = vpack.c.bf16 %v6863, %v6862
      %v6870 = vpack.c.bf16 %v6865, %v6864
      %v6871 = vpack.c.bf16 %v6867, %v6866
      %6872 = vst [vmem:[#allocation4] sm:$0xff] %v6868
      %6873 = vst [vmem:[#allocation4 + $0x28] sm:$0xff] %v6869
      %6874 = vst [vmem:[#allocation4 + $0x50] sm:$0xff] %v6870
      %6875 = vst [vmem:[#allocation4 + $0x78] sm:$0xff] %v6871
      %v6876 = vld [vmem:[%s6810 + $0x1] sm:$0xff]
      %v6877 = vld [vmem:[%s6810 + $0x11] sm:$0xff]
      %v6878 = vld [vmem:[%s6810 + $0x21] sm:$0xff]
      %v6879 = vld [vmem:[%s6810 + $0x31] sm:$0xff]
      %v6880 = vld [vmem:[%s6810 + $0x41] sm:$0xff]
      %v6881 = vld [vmem:[%s6810 + $0x51] sm:$0xff]
      %v6882 = vld [vmem:[%s6810 + $0x61] sm:$0xff]
      %v6883 = vld [vmem:[%s6810 + $0x71] sm:$0xff]
      %v6884 = vld [vmem:[%s6751] sm:$0xff]
      %v6885 = vld [vmem:[%s6751 + $0x10] sm:$0xff]
      %v6886 = vld [vmem:[%s6751 + $0x20] sm:$0xff]
      %v6887 = vld [vmem:[%s6751 + $0x30] sm:$0xff]
      %v6888 = vld [vmem:[%s6751 + $0x40] sm:$0xff]
      %v6889 = vld [vmem:[%s6751 + $0x50] sm:$0xff]
      %v6890 = vld [vmem:[%s6751 + $0x60] sm:$0xff]
      %v6891 = vld [vmem:[%s6751 + $0x70] sm:$0xff]
      %6900 = vrot.lane.b32.xlu0 %v6884, 64
      %v6901 = vpop.permute.xlu0 %6900
      %6902 = vrot.lane.b32.xlu0 %v6885, 64
      %v6903 = vpop.permute.xlu0 %6902
      %6904 = vrot.lane.b32.xlu0 %v6886, 64
      %v6905 = vpop.permute.xlu0 %6904
      %6906 = vrot.lane.b32.xlu0 %v6887, 64
      %v6907 = vpop.permute.xlu0 %6906
      %6908 = vrot.lane.b32.xlu0 %v6888, 64
      %v6909 = vpop.permute.xlu0 %6908
      %6910 = vrot.lane.b32.xlu0 %v6889, 64
      %v6911 = vpop.permute.xlu0 %6910
      %6912 = vrot.lane.b32.xlu0 %v6890, 64
      %v6913 = vpop.permute.xlu0 %6912
      %6914 = vrot.lane.b32.xlu0 %v6891, 64
      %v6915 = vpop.permute.xlu0 %6914
      %v6924 = vsel %vm334, %v6876, %v6901
      %v6925 = vsel %vm334, %v6877, %v6903
      %v6926 = vsel %vm334, %v6878, %v6905
      %v6927 = vsel %vm334, %v6879, %v6907
      %v6928 = vsel %vm334, %v6880, %v6909
      %v6929 = vsel %vm334, %v6881, %v6911
      %v6930 = vsel %vm334, %v6882, %v6913
      %v6931 = vsel %vm334, %v6883, %v6915
      %v6932 = vpack.c.bf16 %v6925, %v6924
      %v6933 = vpack.c.bf16 %v6927, %v6926
      %v6934 = vpack.c.bf16 %v6929, %v6928
      %v6935 = vpack.c.bf16 %v6931, %v6930
      %6936 = vst [vmem:[#allocation4 + $0x8] sm:$0xff] %v6932
      %6937 = vst [vmem:[#allocation4 + $0x30] sm:$0xff] %v6933
      %6938 = vst [vmem:[#allocation4 + $0x58] sm:$0xff] %v6934
      %6939 = vst [vmem:[#allocation4 + $0x80] sm:$0xff] %v6935
      %v6940 = vld [vmem:[%s6710 + $0x1] sm:$0xff]
      %v6941 = vld [vmem:[%s6710 + $0x11] sm:$0xff]
      %v6942 = vld [vmem:[%s6710 + $0x21] sm:$0xff]
      %v6943 = vld [vmem:[%s6710 + $0x31] sm:$0xff]
      %v6944 = vld [vmem:[%s6710 + $0x41] sm:$0xff]
      %v6945 = vld [vmem:[%s6710 + $0x51] sm:$0xff]
      %v6946 = vld [vmem:[%s6710 + $0x61] sm:$0xff]
      %v6947 = vld [vmem:[%s6710 + $0x71] sm:$0xff]
      %v6948 = vld [vmem:[%s6751 + $0x1] sm:$0xff]
      %v6949 = vld [vmem:[%s6751 + $0x11] sm:$0xff]
      %v6950 = vld [vmem:[%s6751 + $0x21] sm:$0xff]
      %v6951 = vld [vmem:[%s6751 + $0x31] sm:$0xff]
      %v6952 = vld [vmem:[%s6751 + $0x41] sm:$0xff]
      %v6953 = vld [vmem:[%s6751 + $0x51] sm:$0xff]
      %v6954 = vld [vmem:[%s6751 + $0x61] sm:$0xff]
      %v6955 = vld [vmem:[%s6751 + $0x71] sm:$0xff]
      %6964 = vrot.lane.b32.xlu0 %v6948, 64
      %v6965 = vpop.permute.xlu0 %6964
      %6966 = vrot.lane.b32.xlu0 %v6949, 64
      %v6967 = vpop.permute.xlu0 %6966
      %6968 = vrot.lane.b32.xlu0 %v6950, 64
      %v6969 = vpop.permute.xlu0 %6968
      %6970 = vrot.lane.b32.xlu0 %v6951, 64
      %v6971 = vpop.permute.xlu0 %6970
      %6972 = vrot.lane.b32.xlu0 %v6952, 64
      %v6973 = vpop.permute.xlu0 %6972
      %6974 = vrot.lane.b32.xlu0 %v6953, 64
      %v6975 = vpop.permute.xlu0 %6974
      %6976 = vrot.lane.b32.xlu0 %v6954, 64
      %v6977 = vpop.permute.xlu0 %6976
      %6978 = vrot.lane.b32.xlu0 %v6955, 64
      %v6979 = vpop.permute.xlu0 %6978
      %v6988 = vsel %vm334, %v6940, %v6965
      %v6989 = vsel %vm334, %v6941, %v6967
      %v6990 = vsel %vm334, %v6942, %v6969
      %v6991 = vsel %vm334, %v6943, %v6971
      %v6992 = vsel %vm334, %v6944, %v6973
      %v6993 = vsel %vm334, %v6945, %v6975
      %v6994 = vsel %vm334, %v6946, %v6977
      %v6995 = vsel %vm334, %v6947, %v6979
      %v6996 = vpack.c.bf16 %v6989, %v6988
      %v6997 = vpack.c.bf16 %v6991, %v6990
      %v6998 = vpack.c.bf16 %v6993, %v6992
      %v6999 = vpack.c.bf16 %v6995, %v6994
      %7000 = vst [vmem:[#allocation4 + $0x10] sm:$0xff] %v6996
      %7001 = vst [vmem:[#allocation4 + $0x38] sm:$0xff] %v6997
      %7002 = vst [vmem:[#allocation4 + $0x60] sm:$0xff] %v6998
      %7003 = vst [vmem:[#allocation4 + $0x88] sm:$0xff] %v6999
      %v7004 = vld [vmem:[%s6801] sm:$0xff]
      %v7005 = vld [vmem:[%s6801 + $0x10] sm:$0xff]
      %v7006 = vld [vmem:[%s6801 + $0x20] sm:$0xff]
      %v7007 = vld [vmem:[%s6801 + $0x30] sm:$0xff]
      %v7008 = vld [vmem:[%s6801 + $0x40] sm:$0xff]
      %v7009 = vld [vmem:[%s6801 + $0x50] sm:$0xff]
      %v7010 = vld [vmem:[%s6801 + $0x60] sm:$0xff]
      %v7011 = vld [vmem:[%s6801 + $0x70] sm:$0xff]
      %v7012 = vld [vmem:[%s6760 + $0x1] sm:$0xff]
      %v7013 = vld [vmem:[%s6760 + $0x11] sm:$0xff]
      %v7014 = vld [vmem:[%s6760 + $0x21] sm:$0xff]
      %v7015 = vld [vmem:[%s6760 + $0x31] sm:$0xff]
      %v7016 = vld [vmem:[%s6760 + $0x41] sm:$0xff]
      %v7017 = vld [vmem:[%s6760 + $0x51] sm:$0xff]
      %v7018 = vld [vmem:[%s6760 + $0x61] sm:$0xff]
      %v7019 = vld [vmem:[%s6760 + $0x71] sm:$0xff]
      %7028 = vrot.lane.b32.xlu0 %v7012, 64
      %v7029 = vpop.permute.xlu0 %7028
      %7030 = vrot.lane.b32.xlu0 %v7013, 64
      %v7031 = vpop.permute.xlu0 %7030
      %7032 = vrot.lane.b32.xlu0 %v7014, 64
      %v7033 = vpop.permute.xlu0 %7032
      %7034 = vrot.lane.b32.xlu0 %v7015, 64
      %v7035 = vpop.permute.xlu0 %7034
      %7036 = vrot.lane.b32.xlu0 %v7016, 64
      %v7037 = vpop.permute.xlu0 %7036
      %7038 = vrot.lane.b32.xlu0 %v7017, 64
      %v7039 = vpop.permute.xlu0 %7038
      %7040 = vrot.lane.b32.xlu0 %v7018, 64
      %v7041 = vpop.permute.xlu0 %7040
      %7042 = vrot.lane.b32.xlu0 %v7019, 64
      %v7043 = vpop.permute.xlu0 %7042
      %v7052 = vsel %vm334, %v7004, %v7029
      %v7053 = vsel %vm334, %v7005, %v7031
      %v7054 = vsel %vm334, %v7006, %v7033
      %v7055 = vsel %vm334, %v7007, %v7035
      %v7056 = vsel %vm334, %v7008, %v7037
      %v7057 = vsel %vm334, %v7009, %v7039
      %v7058 = vsel %vm334, %v7010, %v7041
      %v7059 = vsel %vm334, %v7011, %v7043
      %v7060 = vpack.c.bf16 %v7053, %v7052
      %v7061 = vpack.c.bf16 %v7055, %v7054
      %v7062 = vpack.c.bf16 %v7057, %v7056
      %v7063 = vpack.c.bf16 %v7059, %v7058
      %7064 = vst [vmem:[#allocation4 + $0x18] sm:$0xff] %v7060
      %7065 = vst [vmem:[#allocation4 + $0x40] sm:$0xff] %v7061
      %7066 = vst [vmem:[#allocation4 + $0x68] sm:$0xff] %v7062
      %7067 = vst [vmem:[#allocation4 + $0x90] sm:$0xff] %v7063
      %v7068 = vld [vmem:[%s6801 + $0x1] sm:$0xff]
      %v7069 = vld [vmem:[%s6801 + $0x11] sm:$0xff]
      %v7070 = vld [vmem:[%s6801 + $0x21] sm:$0xff]
      %v7071 = vld [vmem:[%s6801 + $0x31] sm:$0xff]
      %v7072 = vld [vmem:[%s6801 + $0x41] sm:$0xff]
      %v7073 = vld [vmem:[%s6801 + $0x51] sm:$0xff]
      %v7074 = vld [vmem:[%s6801 + $0x61] sm:$0xff]
      %v7075 = vld [vmem:[%s6801 + $0x71] sm:$0xff]
      %v7076 = vpack.c.bf16 %v7069, %v7068
      %v7077 = vpack.c.bf16 %v7071, %v7070
      %v7078 = vpack.c.bf16 %v7073, %v7072
      %v7079 = vpack.c.bf16 %v7075, %v7074
      %7080 = vst.msk [vmem:[#allocation4 + $0x20] sm:$0xff] %vm334, %v7076
      %7081 = vst.msk [vmem:[#allocation4 + $0x48] sm:$0xff] %vm334, %v7077
      %7082 = vst.msk [vmem:[#allocation4 + $0x70] sm:$0xff] %vm334, %v7078
      %7083 = vst.msk [vmem:[#allocation4 + $0x98] sm:$0xff] %vm334, %v7079
      %v7084 = vld [vmem:[%s6819 + $0x1] sm:$0xff]
      %v7085 = vld [vmem:[%s6819 + $0x11] sm:$0xff]
      %v7086 = vld [vmem:[%s6819 + $0x21] sm:$0xff]
      %v7087 = vld [vmem:[%s6819 + $0x31] sm:$0xff]
      %v7088 = vld [vmem:[%s6819 + $0x41] sm:$0xff]
      %v7089 = vld [vmem:[%s6819 + $0x51] sm:$0xff]
      %v7090 = vld [vmem:[%s6819 + $0x61] sm:$0xff]
      %v7091 = vld [vmem:[%s6819 + $0x71] sm:$0xff]
      %v7092 = vld [vmem:[%s6810 + $0x1] sm:$0xff]
      %v7093 = vld [vmem:[%s6810 + $0x11] sm:$0xff]
      %v7094 = vld [vmem:[%s6810 + $0x21] sm:$0xff]
      %v7095 = vld [vmem:[%s6810 + $0x31] sm:$0xff]
      %v7096 = vld [vmem:[%s6810 + $0x41] sm:$0xff]
      %v7097 = vld [vmem:[%s6810 + $0x51] sm:$0xff]
      %v7098 = vld [vmem:[%s6810 + $0x61] sm:$0xff]
      %v7099 = vld [vmem:[%s6810 + $0x71] sm:$0xff]
      %7108 = vrot.lane.b32.xlu0 %v7092, 64
      %v7109 = vpop.permute.xlu0 %7108
      %7110 = vrot.lane.b32.xlu0 %v7093, 64
      %v7111 = vpop.permute.xlu0 %7110
      %7112 = vrot.lane.b32.xlu0 %v7094, 64
      %v7113 = vpop.permute.xlu0 %7112
      %7114 = vrot.lane.b32.xlu0 %v7095, 64
      %v7115 = vpop.permute.xlu0 %7114
      %7116 = vrot.lane.b32.xlu0 %v7096, 64
      %v7117 = vpop.permute.xlu0 %7116
      %7118 = vrot.lane.b32.xlu0 %v7097, 64
      %v7119 = vpop.permute.xlu0 %7118
      %7120 = vrot.lane.b32.xlu0 %v7098, 64
      %v7121 = vpop.permute.xlu0 %7120
      %7122 = vrot.lane.b32.xlu0 %v7099, 64
      %v7123 = vpop.permute.xlu0 %7122
      %v7132 = vsel %vm334, %v7084, %v7109
      %v7133 = vsel %vm334, %v7085, %v7111
      %v7134 = vsel %vm334, %v7086, %v7113
      %v7135 = vsel %vm334, %v7087, %v7115
      %v7136 = vsel %vm334, %v7088, %v7117
      %v7137 = vsel %vm334, %v7089, %v7119
      %v7138 = vsel %vm334, %v7090, %v7121
      %v7139 = vsel %vm334, %v7091, %v7123
      %v7140 = vpack.c.bf16 %v7133, %v7132
      %v7141 = vpack.c.bf16 %v7135, %v7134
      %v7142 = vpack.c.bf16 %v7137, %v7136
      %v7143 = vpack.c.bf16 %v7139, %v7138
      %7144 = vst [vmem:[#allocation4 + $0xa0] sm:$0xff] %v7140
      %7145 = vst [vmem:[#allocation4 + $0xc8] sm:$0xff] %v7141
      %7146 = vst [vmem:[#allocation4 + $0xf0] sm:$0xff] %v7142
      %7147 = vst [vmem:[#allocation4 + $0x118] sm:$0xff] %v7143
      %v7148 = vld [vmem:[%s6819 + $0x2] sm:$0xff]
      %v7149 = vld [vmem:[%s6819 + $0x12] sm:$0xff]
      %v7150 = vld [vmem:[%s6819 + $0x22] sm:$0xff]
      %v7151 = vld [vmem:[%s6819 + $0x32] sm:$0xff]
      %v7152 = vld [vmem:[%s6819 + $0x42] sm:$0xff]
      %v7153 = vld [vmem:[%s6819 + $0x52] sm:$0xff]
      %v7154 = vld [vmem:[%s6819 + $0x62] sm:$0xff]
      %v7155 = vld [vmem:[%s6819 + $0x72] sm:$0xff]
      %v7156 = vld [vmem:[%s6710 + $0x1] sm:$0xff]
      %v7157 = vld [vmem:[%s6710 + $0x11] sm:$0xff]
      %v7158 = vld [vmem:[%s6710 + $0x21] sm:$0xff]
      %v7159 = vld [vmem:[%s6710 + $0x31] sm:$0xff]
      %v7160 = vld [vmem:[%s6710 + $0x41] sm:$0xff]
      %v7161 = vld [vmem:[%s6710 + $0x51] sm:$0xff]
      %v7162 = vld [vmem:[%s6710 + $0x61] sm:$0xff]
      %v7163 = vld [vmem:[%s6710 + $0x71] sm:$0xff]
      %7172 = vrot.lane.b32.xlu0 %v7156, 64
      %v7173 = vpop.permute.xlu0 %7172
      %7174 = vrot.lane.b32.xlu0 %v7157, 64
      %v7175 = vpop.permute.xlu0 %7174
      %7176 = vrot.lane.b32.xlu0 %v7158, 64
      %v7177 = vpop.permute.xlu0 %7176
      %7178 = vrot.lane.b32.xlu0 %v7159, 64
      %v7179 = vpop.permute.xlu0 %7178
      %7180 = vrot.lane.b32.xlu0 %v7160, 64
      %v7181 = vpop.permute.xlu0 %7180
      %7182 = vrot.lane.b32.xlu0 %v7161, 64
      %v7183 = vpop.permute.xlu0 %7182
      %7184 = vrot.lane.b32.xlu0 %v7162, 64
      %v7185 = vpop.permute.xlu0 %7184
      %7186 = vrot.lane.b32.xlu0 %v7163, 64
      %v7187 = vpop.permute.xlu0 %7186
      %v7196 = vsel %vm334, %v7148, %v7173
      %v7197 = vsel %vm334, %v7149, %v7175
      %v7198 = vsel %vm334, %v7150, %v7177
      %v7199 = vsel %vm334, %v7151, %v7179
      %v7200 = vsel %vm334, %v7152, %v7181
      %v7201 = vsel %vm334, %v7153, %v7183
      %v7202 = vsel %vm334, %v7154, %v7185
      %v7203 = vsel %vm334, %v7155, %v7187
      %v7204 = vpack.c.bf16 %v7197, %v7196
      %v7205 = vpack.c.bf16 %v7199, %v7198
      %v7206 = vpack.c.bf16 %v7201, %v7200
      %v7207 = vpack.c.bf16 %v7203, %v7202
      %7208 = vst [vmem:[#allocation4 + $0xa8] sm:$0xff] %v7204
      %7209 = vst [vmem:[#allocation4 + $0xd0] sm:$0xff] %v7205
      %7210 = vst [vmem:[#allocation4 + $0xf8] sm:$0xff] %v7206
      %7211 = vst [vmem:[#allocation4 + $0x120] sm:$0xff] %v7207
      %v7212 = vld [vmem:[%s6751 + $0x1] sm:$0xff]
      %v7213 = vld [vmem:[%s6751 + $0x11] sm:$0xff]
      %v7214 = vld [vmem:[%s6751 + $0x21] sm:$0xff]
      %v7215 = vld [vmem:[%s6751 + $0x31] sm:$0xff]
      %v7216 = vld [vmem:[%s6751 + $0x41] sm:$0xff]
      %v7217 = vld [vmem:[%s6751 + $0x51] sm:$0xff]
      %v7218 = vld [vmem:[%s6751 + $0x61] sm:$0xff]
      %v7219 = vld [vmem:[%s6751 + $0x71] sm:$0xff]
      %v7220 = vld [vmem:[%s6710 + $0x2] sm:$0xff]
      %v7221 = vld [vmem:[%s6710 + $0x12] sm:$0xff]
      %v7222 = vld [vmem:[%s6710 + $0x22] sm:$0xff]
      %v7223 = vld [vmem:[%s6710 + $0x32] sm:$0xff]
      %v7224 = vld [vmem:[%s6710 + $0x42] sm:$0xff]
      %v7225 = vld [vmem:[%s6710 + $0x52] sm:$0xff]
      %v7226 = vld [vmem:[%s6710 + $0x62] sm:$0xff]
      %v7227 = vld [vmem:[%s6710 + $0x72] sm:$0xff]
      %7236 = vrot.lane.b32.xlu0 %v7220, 64
      %v7237 = vpop.permute.xlu0 %7236
      %7238 = vrot.lane.b32.xlu0 %v7221, 64
      %v7239 = vpop.permute.xlu0 %7238
      %7240 = vrot.lane.b32.xlu0 %v7222, 64
      %v7241 = vpop.permute.xlu0 %7240
      %7242 = vrot.lane.b32.xlu0 %v7223, 64
      %v7243 = vpop.permute.xlu0 %7242
      %7244 = vrot.lane.b32.xlu0 %v7224, 64
      %v7245 = vpop.permute.xlu0 %7244
      %7246 = vrot.lane.b32.xlu0 %v7225, 64
      %v7247 = vpop.permute.xlu0 %7246
      %7248 = vrot.lane.b32.xlu0 %v7226, 64
      %v7249 = vpop.permute.xlu0 %7248
      %7250 = vrot.lane.b32.xlu0 %v7227, 64
      %v7251 = vpop.permute.xlu0 %7250
      %v7260 = vsel %vm334, %v7212, %v7237
      %v7261 = vsel %vm334, %v7213, %v7239
      %v7262 = vsel %vm334, %v7214, %v7241
      %v7263 = vsel %vm334, %v7215, %v7243
      %v7264 = vsel %vm334, %v7216, %v7245
      %v7265 = vsel %vm334, %v7217, %v7247
      %v7266 = vsel %vm334, %v7218, %v7249
      %v7267 = vsel %vm334, %v7219, %v7251
      %v7268 = vpack.c.bf16 %v7261, %v7260
      %v7269 = vpack.c.bf16 %v7263, %v7262
      %v7270 = vpack.c.bf16 %v7265, %v7264
      %v7271 = vpack.c.bf16 %v7267, %v7266
      %7272 = vst [vmem:[#allocation4 + $0xb0] sm:$0xff] %v7268
      %7273 = vst [vmem:[#allocation4 + $0xd8] sm:$0xff] %v7269
      %7274 = vst [vmem:[#allocation4 + $0x100] sm:$0xff] %v7270
      %7275 = vst [vmem:[#allocation4 + $0x128] sm:$0xff] %v7271
      %v7276 = vld [vmem:[%s6760 + $0x1] sm:$0xff]
      %v7277 = vld [vmem:[%s6760 + $0x11] sm:$0xff]
      %v7278 = vld [vmem:[%s6760 + $0x21] sm:$0xff]
      %v7279 = vld [vmem:[%s6760 + $0x31] sm:$0xff]
      %v7280 = vld [vmem:[%s6760 + $0x41] sm:$0xff]
      %v7281 = vld [vmem:[%s6760 + $0x51] sm:$0xff]
      %v7282 = vld [vmem:[%s6760 + $0x61] sm:$0xff]
      %v7283 = vld [vmem:[%s6760 + $0x71] sm:$0xff]
      %v7284 = vld [vmem:[%s6801 + $0x1] sm:$0xff]
      %v7285 = vld [vmem:[%s6801 + $0x11] sm:$0xff]
      %v7286 = vld [vmem:[%s6801 + $0x21] sm:$0xff]
      %v7287 = vld [vmem:[%s6801 + $0x31] sm:$0xff]
      %v7288 = vld [vmem:[%s6801 + $0x41] sm:$0xff]
      %v7289 = vld [vmem:[%s6801 + $0x51] sm:$0xff]
      %v7290 = vld [vmem:[%s6801 + $0x61] sm:$0xff]
      %v7291 = vld [vmem:[%s6801 + $0x71] sm:$0xff]
      %7300 = vrot.lane.b32.xlu0 %v7284, 64
      %v7301 = vpop.permute.xlu0 %7300
      %7302 = vrot.lane.b32.xlu0 %v7285, 64
      %v7303 = vpop.permute.xlu0 %7302
      %7304 = vrot.lane.b32.xlu0 %v7286, 64
      %v7305 = vpop.permute.xlu0 %7304
      %7306 = vrot.lane.b32.xlu0 %v7287, 64
      %v7307 = vpop.permute.xlu0 %7306
      %7308 = vrot.lane.b32.xlu0 %v7288, 64
      %v7309 = vpop.permute.xlu0 %7308
      %7310 = vrot.lane.b32.xlu0 %v7289, 64
      %v7311 = vpop.permute.xlu0 %7310
      %7312 = vrot.lane.b32.xlu0 %v7290, 64
      %v7313 = vpop.permute.xlu0 %7312
      %7314 = vrot.lane.b32.xlu0 %v7291, 64
      %v7315 = vpop.permute.xlu0 %7314
      %v7324 = vsel %vm334, %v7276, %v7301
      %v7325 = vsel %vm334, %v7277, %v7303
      %v7326 = vsel %vm334, %v7278, %v7305
      %v7327 = vsel %vm334, %v7279, %v7307
      %v7328 = vsel %vm334, %v7280, %v7309
      %v7329 = vsel %vm334, %v7281, %v7311
      %v7330 = vsel %vm334, %v7282, %v7313
      %v7331 = vsel %vm334, %v7283, %v7315
      %v7332 = vpack.c.bf16 %v7325, %v7324
      %v7333 = vpack.c.bf16 %v7327, %v7326
      %v7334 = vpack.c.bf16 %v7329, %v7328
      %v7335 = vpack.c.bf16 %v7331, %v7330
      %7336 = vst [vmem:[#allocation4 + $0xb8] sm:$0xff] %v7332
      %7337 = vst [vmem:[#allocation4 + $0xe0] sm:$0xff] %v7333
      %7338 = vst [vmem:[#allocation4 + $0x108] sm:$0xff] %v7334
      %7339 = vst [vmem:[#allocation4 + $0x130] sm:$0xff] %v7335
      %v7340 = vld [vmem:[%s6760 + $0x2] sm:$0xff]
      %v7341 = vld [vmem:[%s6760 + $0x12] sm:$0xff]
      %v7342 = vld [vmem:[%s6760 + $0x22] sm:$0xff]
      %v7343 = vld [vmem:[%s6760 + $0x32] sm:$0xff]
      %v7344 = vld [vmem:[%s6760 + $0x42] sm:$0xff]
      %v7345 = vld [vmem:[%s6760 + $0x52] sm:$0xff]
      %v7346 = vld [vmem:[%s6760 + $0x62] sm:$0xff]
      %v7347 = vld [vmem:[%s6760 + $0x72] sm:$0xff]
      %v7348 = vpack.c.bf16 %v7341, %v7340
      %v7349 = vpack.c.bf16 %v7343, %v7342
      %v7350 = vpack.c.bf16 %v7345, %v7344
      %v7351 = vpack.c.bf16 %v7347, %v7346
      %7352 = vst.msk [vmem:[#allocation4 + $0xc0] sm:$0xff] %vm334, %v7348
      %7353 = vst.msk [vmem:[#allocation4 + $0xe8] sm:$0xff] %vm334, %v7349
      %7354 = vst.msk [vmem:[#allocation4 + $0x110] sm:$0xff] %vm334, %v7350
      %7355 = vst.msk [vmem:[#allocation4 + $0x138] sm:$0xff] %vm334, %v7351
      %v7356 = vld [vmem:[%s6751] sm:$0xff]
      %v7357 = vld [vmem:[%s6751 + $0x10] sm:$0xff]
      %v7358 = vld [vmem:[%s6751 + $0x20] sm:$0xff]
      %v7359 = vld [vmem:[%s6751 + $0x30] sm:$0xff]
      %v7360 = vld [vmem:[%s6751 + $0x40] sm:$0xff]
      %v7361 = vld [vmem:[%s6751 + $0x50] sm:$0xff]
      %v7362 = vld [vmem:[%s6751 + $0x60] sm:$0xff]
      %v7363 = vld [vmem:[%s6751 + $0x70] sm:$0xff]
      %v7364 = vld [vmem:[%s6710 + $0x1] sm:$0xff]
      %v7365 = vld [vmem:[%s6710 + $0x11] sm:$0xff]
      %v7366 = vld [vmem:[%s6710 + $0x21] sm:$0xff]
      %v7367 = vld [vmem:[%s6710 + $0x31] sm:$0xff]
      %v7368 = vld [vmem:[%s6710 + $0x41] sm:$0xff]
      %v7369 = vld [vmem:[%s6710 + $0x51] sm:$0xff]
      %v7370 = vld [vmem:[%s6710 + $0x61] sm:$0xff]
      %v7371 = vld [vmem:[%s6710 + $0x71] sm:$0xff]
      %7380 = vrot.lane.b32.xlu0 %v7364, 64
      %v7381 = vpop.permute.xlu0 %7380
      %7382 = vrot.lane.b32.xlu0 %v7365, 64
      %v7383 = vpop.permute.xlu0 %7382
      %7384 = vrot.lane.b32.xlu0 %v7366, 64
      %v7385 = vpop.permute.xlu0 %7384
      %7386 = vrot.lane.b32.xlu0 %v7367, 64
      %v7387 = vpop.permute.xlu0 %7386
      %7388 = vrot.lane.b32.xlu0 %v7368, 64
      %v7389 = vpop.permute.xlu0 %7388
      %7390 = vrot.lane.b32.xlu0 %v7369, 64
      %v7391 = vpop.permute.xlu0 %7390
      %7392 = vrot.lane.b32.xlu0 %v7370, 64
      %v7393 = vpop.permute.xlu0 %7392
      %7394 = vrot.lane.b32.xlu0 %v7371, 64
      %v7395 = vpop.permute.xlu0 %7394
      %v7404 = vsel %vm334, %v7356, %v7381
      %v7405 = vsel %vm334, %v7357, %v7383
      %v7406 = vsel %vm334, %v7358, %v7385
      %v7407 = vsel %vm334, %v7359, %v7387
      %v7408 = vsel %vm334, %v7360, %v7389
      %v7409 = vsel %vm334, %v7361, %v7391
      %v7410 = vsel %vm334, %v7362, %v7393
      %v7411 = vsel %vm334, %v7363, %v7395
      %v7412 = vpack.c.bf16 %v7405, %v7404
      %v7413 = vpack.c.bf16 %v7407, %v7406
      %v7414 = vpack.c.bf16 %v7409, %v7408
      %v7415 = vpack.c.bf16 %v7411, %v7410
      %7416 = vst [vmem:[#allocation4 + $0x140] sm:$0xff] %v7412
      %7417 = vst [vmem:[#allocation4 + $0x168] sm:$0xff] %v7413
      %7418 = vst [vmem:[#allocation4 + $0x190] sm:$0xff] %v7414
      %7419 = vst [vmem:[#allocation4 + $0x1b8] sm:$0xff] %v7415
      %v7420 = vld [vmem:[%s6751 + $0x1] sm:$0xff]
      %v7421 = vld [vmem:[%s6751 + $0x11] sm:$0xff]
      %v7422 = vld [vmem:[%s6751 + $0x21] sm:$0xff]
      %v7423 = vld [vmem:[%s6751 + $0x31] sm:$0xff]
      %v7424 = vld [vmem:[%s6751 + $0x41] sm:$0xff]
      %v7425 = vld [vmem:[%s6751 + $0x51] sm:$0xff]
      %v7426 = vld [vmem:[%s6751 + $0x61] sm:$0xff]
      %v7427 = vld [vmem:[%s6751 + $0x71] sm:$0xff]
      %v7428 = vld [vmem:[%s6801] sm:$0xff]
      %v7429 = vld [vmem:[%s6801 + $0x10] sm:$0xff]
      %v7430 = vld [vmem:[%s6801 + $0x20] sm:$0xff]
      %v7431 = vld [vmem:[%s6801 + $0x30] sm:$0xff]
      %v7432 = vld [vmem:[%s6801 + $0x40] sm:$0xff]
      %v7433 = vld [vmem:[%s6801 + $0x50] sm:$0xff]
      %v7434 = vld [vmem:[%s6801 + $0x60] sm:$0xff]
      %v7435 = vld [vmem:[%s6801 + $0x70] sm:$0xff]
      %7444 = vrot.lane.b32.xlu0 %v7428, 64
      %v7445 = vpop.permute.xlu0 %7444
      %7446 = vrot.lane.b32.xlu0 %v7429, 64
      %v7447 = vpop.permute.xlu0 %7446
      %7448 = vrot.lane.b32.xlu0 %v7430, 64
      %v7449 = vpop.permute.xlu0 %7448
      %7450 = vrot.lane.b32.xlu0 %v7431, 64
      %v7451 = vpop.permute.xlu0 %7450
      %7452 = vrot.lane.b32.xlu0 %v7432, 64
      %v7453 = vpop.permute.xlu0 %7452
      %7454 = vrot.lane.b32.xlu0 %v7433, 64
      %v7455 = vpop.permute.xlu0 %7454
      %7456 = vrot.lane.b32.xlu0 %v7434, 64
      %v7457 = vpop.permute.xlu0 %7456
      %7458 = vrot.lane.b32.xlu0 %v7435, 64
      %v7459 = vpop.permute.xlu0 %7458
      %v7468 = vsel %vm334, %v7420, %v7445
      %v7469 = vsel %vm334, %v7421, %v7447
      %v7470 = vsel %vm334, %v7422, %v7449
      %v7471 = vsel %vm334, %v7423, %v7451
      %v7472 = vsel %vm334, %v7424, %v7453
      %v7473 = vsel %vm334, %v7425, %v7455
      %v7474 = vsel %vm334, %v7426, %v7457
      %v7475 = vsel %vm334, %v7427, %v7459
      %v7476 = vpack.c.bf16 %v7469, %v7468
      %v7477 = vpack.c.bf16 %v7471, %v7470
      %v7478 = vpack.c.bf16 %v7473, %v7472
      %v7479 = vpack.c.bf16 %v7475, %v7474
      %7480 = vst [vmem:[#allocation4 + $0x148] sm:$0xff] %v7476
      %7481 = vst [vmem:[#allocation4 + $0x170] sm:$0xff] %v7477
      %7482 = vst [vmem:[#allocation4 + $0x198] sm:$0xff] %v7478
      %7483 = vst [vmem:[#allocation4 + $0x1c0] sm:$0xff] %v7479
      %v7484 = vld [vmem:[%s6760 + $0x1] sm:$0xff]
      %v7485 = vld [vmem:[%s6760 + $0x11] sm:$0xff]
      %v7486 = vld [vmem:[%s6760 + $0x21] sm:$0xff]
      %v7487 = vld [vmem:[%s6760 + $0x31] sm:$0xff]
      %v7488 = vld [vmem:[%s6760 + $0x41] sm:$0xff]
      %v7489 = vld [vmem:[%s6760 + $0x51] sm:$0xff]
      %v7490 = vld [vmem:[%s6760 + $0x61] sm:$0xff]
      %v7491 = vld [vmem:[%s6760 + $0x71] sm:$0xff]
      %v7492 = vld [vmem:[%s6801 + $0x1] sm:$0xff]
      %v7493 = vld [vmem:[%s6801 + $0x11] sm:$0xff]
      %v7494 = vld [vmem:[%s6801 + $0x21] sm:$0xff]
      %v7495 = vld [vmem:[%s6801 + $0x31] sm:$0xff]
      %v7496 = vld [vmem:[%s6801 + $0x41] sm:$0xff]
      %v7497 = vld [vmem:[%s6801 + $0x51] sm:$0xff]
      %v7498 = vld [vmem:[%s6801 + $0x61] sm:$0xff]
      %v7499 = vld [vmem:[%s6801 + $0x71] sm:$0xff]
      %7508 = vrot.lane.b32.xlu0 %v7492, 64
      %v7509 = vpop.permute.xlu0 %7508
      %7510 = vrot.lane.b32.xlu0 %v7493, 64
      %v7511 = vpop.permute.xlu0 %7510
      %7512 = vrot.lane.b32.xlu0 %v7494, 64
      %v7513 = vpop.permute.xlu0 %7512
      %7514 = vrot.lane.b32.xlu0 %v7495, 64
      %v7515 = vpop.permute.xlu0 %7514
      %7516 = vrot.lane.b32.xlu0 %v7496, 64
      %v7517 = vpop.permute.xlu0 %7516
      %7518 = vrot.lane.b32.xlu0 %v7497, 64
      %v7519 = vpop.permute.xlu0 %7518
      %7520 = vrot.lane.b32.xlu0 %v7498, 64
      %v7521 = vpop.permute.xlu0 %7520
      %7522 = vrot.lane.b32.xlu0 %v7499, 64
      %v7523 = vpop.permute.xlu0 %7522
      %v7532 = vsel %vm334, %v7484, %v7509
      %v7533 = vsel %vm334, %v7485, %v7511
      %v7534 = vsel %vm334, %v7486, %v7513
      %v7535 = vsel %vm334, %v7487, %v7515
      %v7536 = vsel %vm334, %v7488, %v7517
      %v7537 = vsel %vm334, %v7489, %v7519
      %v7538 = vsel %vm334, %v7490, %v7521
      %v7539 = vsel %vm334, %v7491, %v7523
      %v7540 = vpack.c.bf16 %v7533, %v7532
      %v7541 = vpack.c.bf16 %v7535, %v7534
      %v7542 = vpack.c.bf16 %v7537, %v7536
      %v7543 = vpack.c.bf16 %v7539, %v7538
      %7544 = vst [vmem:[#allocation4 + $0x150] sm:$0xff] %v7540
      %7545 = vst [vmem:[#allocation4 + $0x178] sm:$0xff] %v7541
      %7546 = vst [vmem:[#allocation4 + $0x1a0] sm:$0xff] %v7542
      %7547 = vst [vmem:[#allocation4 + $0x1c8] sm:$0xff] %v7543
      %s7548 = scalar_lea.vmem [#allocation6], 192
      %v7549 = vld [vmem:[%s7548] sm:$0xff]
      %v7550 = vld [vmem:[%s7548 + $0x10] sm:$0xff]
      %v7551 = vld [vmem:[%s7548 + $0x20] sm:$0xff]
      %v7552 = vld [vmem:[%s7548 + $0x30] sm:$0xff]
      %v7553 = vld [vmem:[%s7548 + $0x40] sm:$0xff]
      %v7554 = vld [vmem:[%s7548 + $0x50] sm:$0xff]
      %v7555 = vld [vmem:[%s7548 + $0x60] sm:$0xff]
      %v7556 = vld [vmem:[%s7548 + $0x70] sm:$0xff]
      %s7557 = scalar_lea.vmem [#allocation6], 32
      %v7558 = vld [vmem:[%s7557 + $0x1] sm:$0xff]
      %v7559 = vld [vmem:[%s7557 + $0x11] sm:$0xff]
      %v7560 = vld [vmem:[%s7557 + $0x21] sm:$0xff]
      %v7561 = vld [vmem:[%s7557 + $0x31] sm:$0xff]
      %v7562 = vld [vmem:[%s7557 + $0x41] sm:$0xff]
      %v7563 = vld [vmem:[%s7557 + $0x51] sm:$0xff]
      %v7564 = vld [vmem:[%s7557 + $0x61] sm:$0xff]
      %v7565 = vld [vmem:[%s7557 + $0x71] sm:$0xff]
      %7574 = vrot.lane.b32.xlu0 %v7558, 64
      %v7575 = vpop.permute.xlu0 %7574
      %7576 = vrot.lane.b32.xlu0 %v7559, 64
      %v7577 = vpop.permute.xlu0 %7576
      %7578 = vrot.lane.b32.xlu0 %v7560, 64
      %v7579 = vpop.permute.xlu0 %7578
      %7580 = vrot.lane.b32.xlu0 %v7561, 64
      %v7581 = vpop.permute.xlu0 %7580
      %7582 = vrot.lane.b32.xlu0 %v7562, 64
      %v7583 = vpop.permute.xlu0 %7582
      %7584 = vrot.lane.b32.xlu0 %v7563, 64
      %v7585 = vpop.permute.xlu0 %7584
      %7586 = vrot.lane.b32.xlu0 %v7564, 64
      %v7587 = vpop.permute.xlu0 %7586
      %7588 = vrot.lane.b32.xlu0 %v7565, 64
      %v7589 = vpop.permute.xlu0 %7588
      %v7598 = vsel %vm334, %v7549, %v7575
      %v7599 = vsel %vm334, %v7550, %v7577
      %v7600 = vsel %vm334, %v7551, %v7579
      %v7601 = vsel %vm334, %v7552, %v7581
      %v7602 = vsel %vm334, %v7553, %v7583
      %v7603 = vsel %vm334, %v7554, %v7585
      %v7604 = vsel %vm334, %v7555, %v7587
      %v7605 = vsel %vm334, %v7556, %v7589
      %v7606 = vpack.c.bf16 %v7599, %v7598
      %v7607 = vpack.c.bf16 %v7601, %v7600
      %v7608 = vpack.c.bf16 %v7603, %v7602
      %v7609 = vpack.c.bf16 %v7605, %v7604
      %7610 = vst [vmem:[#allocation4 + $0x158] sm:$0xff] %v7606
      %7611 = vst [vmem:[#allocation4 + $0x180] sm:$0xff] %v7607
      %7612 = vst [vmem:[#allocation4 + $0x1a8] sm:$0xff] %v7608
      %7613 = vst [vmem:[#allocation4 + $0x1d0] sm:$0xff] %v7609
      %v7614 = vld [vmem:[%s7548 + $0x1] sm:$0xff]
      %v7615 = vld [vmem:[%s7548 + $0x11] sm:$0xff]
      %v7616 = vld [vmem:[%s7548 + $0x21] sm:$0xff]
      %v7617 = vld [vmem:[%s7548 + $0x31] sm:$0xff]
      %v7618 = vld [vmem:[%s7548 + $0x41] sm:$0xff]
      %v7619 = vld [vmem:[%s7548 + $0x51] sm:$0xff]
      %v7620 = vld [vmem:[%s7548 + $0x61] sm:$0xff]
      %v7621 = vld [vmem:[%s7548 + $0x71] sm:$0xff]
      %v7622 = vpack.c.bf16 %v7615, %v7614
      %v7623 = vpack.c.bf16 %v7617, %v7616
      %v7624 = vpack.c.bf16 %v7619, %v7618
      %v7625 = vpack.c.bf16 %v7621, %v7620
      %7626 = vst.msk [vmem:[#allocation4 + $0x160] sm:$0xff] %vm334, %v7622
      %7627 = vst.msk [vmem:[#allocation4 + $0x188] sm:$0xff] %vm334, %v7623
      %7628 = vst.msk [vmem:[#allocation4 + $0x1b0] sm:$0xff] %vm334, %v7624
      %7629 = vst.msk [vmem:[#allocation4 + $0x1d8] sm:$0xff] %vm334, %v7625
      %v7630 = vld [vmem:[%s6710 + $0x1] sm:$0xff]
      %v7631 = vld [vmem:[%s6710 + $0x11] sm:$0xff]
      %v7632 = vld [vmem:[%s6710 + $0x21] sm:$0xff]
      %v7633 = vld [vmem:[%s6710 + $0x31] sm:$0xff]
      %v7634 = vld [vmem:[%s6710 + $0x41] sm:$0xff]
      %v7635 = vld [vmem:[%s6710 + $0x51] sm:$0xff]
      %v7636 = vld [vmem:[%s6710 + $0x61] sm:$0xff]
      %v7637 = vld [vmem:[%s6710 + $0x71] sm:$0xff]
      %v7638 = vld [vmem:[%s6751 + $0x1] sm:$0xff]
      %v7639 = vld [vmem:[%s6751 + $0x11] sm:$0xff]
      %v7640 = vld [vmem:[%s6751 + $0x21] sm:$0xff]
      %v7641 = vld [vmem:[%s6751 + $0x31] sm:$0xff]
      %v7642 = vld [vmem:[%s6751 + $0x41] sm:$0xff]
      %v7643 = vld [vmem:[%s6751 + $0x51] sm:$0xff]
      %v7644 = vld [vmem:[%s6751 + $0x61] sm:$0xff]
      %v7645 = vld [vmem:[%s6751 + $0x71] sm:$0xff]
      %7654 = vrot.lane.b32.xlu0 %v7638, 64
      %v7655 = vpop.permute.xlu0 %7654
      %7656 = vrot.lane.b32.xlu0 %v7639, 64
      %v7657 = vpop.permute.xlu0 %7656
      %7658 = vrot.lane.b32.xlu0 %v7640, 64
      %v7659 = vpop.permute.xlu0 %7658
      %7660 = vrot.lane.b32.xlu0 %v7641, 64
      %v7661 = vpop.permute.xlu0 %7660
      %7662 = vrot.lane.b32.xlu0 %v7642, 64
      %v7663 = vpop.permute.xlu0 %7662
      %7664 = vrot.lane.b32.xlu0 %v7643, 64
      %v7665 = vpop.permute.xlu0 %7664
      %7666 = vrot.lane.b32.xlu0 %v7644, 64
      %v7667 = vpop.permute.xlu0 %7666
      %7668 = vrot.lane.b32.xlu0 %v7645, 64
      %v7669 = vpop.permute.xlu0 %7668
      %v7678 = vsel %vm334, %v7630, %v7655
      %v7679 = vsel %vm334, %v7631, %v7657
      %v7680 = vsel %vm334, %v7632, %v7659
      %v7681 = vsel %vm334, %v7633, %v7661
      %v7682 = vsel %vm334, %v7634, %v7663
      %v7683 = vsel %vm334, %v7635, %v7665
      %v7684 = vsel %vm334, %v7636, %v7667
      %v7685 = vsel %vm334, %v7637, %v7669
      %v7686 = vpack.c.bf16 %v7679, %v7678
      %v7687 = vpack.c.bf16 %v7681, %v7680
      %v7688 = vpack.c.bf16 %v7683, %v7682
      %v7689 = vpack.c.bf16 %v7685, %v7684
      %7690 = vst [vmem:[#allocation4 + $0x1e0] sm:$0xff] %v7686
      %7691 = vst [vmem:[#allocation4 + $0x208] sm:$0xff] %v7687
      %7692 = vst [vmem:[#allocation4 + $0x230] sm:$0xff] %v7688
      %7693 = vst [vmem:[#allocation4 + $0x258] sm:$0xff] %v7689
      %v7694 = vld [vmem:[%s6710 + $0x2] sm:$0xff]
      %v7695 = vld [vmem:[%s6710 + $0x12] sm:$0xff]
      %v7696 = vld [vmem:[%s6710 + $0x22] sm:$0xff]
      %v7697 = vld [vmem:[%s6710 + $0x32] sm:$0xff]
      %v7698 = vld [vmem:[%s6710 + $0x42] sm:$0xff]
      %v7699 = vld [vmem:[%s6710 + $0x52] sm:$0xff]
      %v7700 = vld [vmem:[%s6710 + $0x62] sm:$0xff]
      %v7701 = vld [vmem:[%s6710 + $0x72] sm:$0xff]
      %v7702 = vld [vmem:[%s6760 + $0x1] sm:$0xff]
      %v7703 = vld [vmem:[%s6760 + $0x11] sm:$0xff]
      %v7704 = vld [vmem:[%s6760 + $0x21] sm:$0xff]
      %v7705 = vld [vmem:[%s6760 + $0x31] sm:$0xff]
      %v7706 = vld [vmem:[%s6760 + $0x41] sm:$0xff]
      %v7707 = vld [vmem:[%s6760 + $0x51] sm:$0xff]
      %v7708 = vld [vmem:[%s6760 + $0x61] sm:$0xff]
      %v7709 = vld [vmem:[%s6760 + $0x71] sm:$0xff]
      %7718 = vrot.lane.b32.xlu0 %v7702, 64
      %v7719 = vpop.permute.xlu0 %7718
      %7720 = vrot.lane.b32.xlu0 %v7703, 64
      %v7721 = vpop.permute.xlu0 %7720
      %7722 = vrot.lane.b32.xlu0 %v7704, 64
      %v7723 = vpop.permute.xlu0 %7722
      %7724 = vrot.lane.b32.xlu0 %v7705, 64
      %v7725 = vpop.permute.xlu0 %7724
      %7726 = vrot.lane.b32.xlu0 %v7706, 64
      %v7727 = vpop.permute.xlu0 %7726
      %7728 = vrot.lane.b32.xlu0 %v7707, 64
      %v7729 = vpop.permute.xlu0 %7728
      %7730 = vrot.lane.b32.xlu0 %v7708, 64
      %v7731 = vpop.permute.xlu0 %7730
      %7732 = vrot.lane.b32.xlu0 %v7709, 64
      %v7733 = vpop.permute.xlu0 %7732
      %v7742 = vsel %vm334, %v7694, %v7719
      %v7743 = vsel %vm334, %v7695, %v7721
      %v7744 = vsel %vm334, %v7696, %v7723
      %v7745 = vsel %vm334, %v7697, %v7725
      %v7746 = vsel %vm334, %v7698, %v7727
      %v7747 = vsel %vm334, %v7699, %v7729
      %v7748 = vsel %vm334, %v7700, %v7731
      %v7749 = vsel %vm334, %v7701, %v7733
      %v7750 = vpack.c.bf16 %v7743, %v7742
      %v7751 = vpack.c.bf16 %v7745, %v7744
      %v7752 = vpack.c.bf16 %v7747, %v7746
      %v7753 = vpack.c.bf16 %v7749, %v7748
      %7754 = vst [vmem:[#allocation4 + $0x1e8] sm:$0xff] %v7750
      %7755 = vst [vmem:[#allocation4 + $0x210] sm:$0xff] %v7751
      %7756 = vst [vmem:[#allocation4 + $0x238] sm:$0xff] %v7752
      %7757 = vst [vmem:[#allocation4 + $0x260] sm:$0xff] %v7753
      %v7758 = vld [vmem:[%s6801 + $0x1] sm:$0xff]
      %v7759 = vld [vmem:[%s6801 + $0x11] sm:$0xff]
      %v7760 = vld [vmem:[%s6801 + $0x21] sm:$0xff]
      %v7761 = vld [vmem:[%s6801 + $0x31] sm:$0xff]
      %v7762 = vld [vmem:[%s6801 + $0x41] sm:$0xff]
      %v7763 = vld [vmem:[%s6801 + $0x51] sm:$0xff]
      %v7764 = vld [vmem:[%s6801 + $0x61] sm:$0xff]
      %v7765 = vld [vmem:[%s6801 + $0x71] sm:$0xff]
      %v7766 = vld [vmem:[%s6760 + $0x2] sm:$0xff]
      %v7767 = vld [vmem:[%s6760 + $0x12] sm:$0xff]
      %v7768 = vld [vmem:[%s6760 + $0x22] sm:$0xff]
      %v7769 = vld [vmem:[%s6760 + $0x32] sm:$0xff]
      %v7770 = vld [vmem:[%s6760 + $0x42] sm:$0xff]
      %v7771 = vld [vmem:[%s6760 + $0x52] sm:$0xff]
      %v7772 = vld [vmem:[%s6760 + $0x62] sm:$0xff]
      %v7773 = vld [vmem:[%s6760 + $0x72] sm:$0xff]
      %7782 = vrot.lane.b32.xlu0 %v7766, 64
      %v7783 = vpop.permute.xlu0 %7782
      %7784 = vrot.lane.b32.xlu0 %v7767, 64
      %v7785 = vpop.permute.xlu0 %7784
      %7786 = vrot.lane.b32.xlu0 %v7768, 64
      %v7787 = vpop.permute.xlu0 %7786
      %7788 = vrot.lane.b32.xlu0 %v7769, 64
      %v7789 = vpop.permute.xlu0 %7788
      %7790 = vrot.lane.b32.xlu0 %v7770, 64
      %v7791 = vpop.permute.xlu0 %7790
      %7792 = vrot.lane.b32.xlu0 %v7771, 64
      %v7793 = vpop.permute.xlu0 %7792
      %7794 = vrot.lane.b32.xlu0 %v7772, 64
      %v7795 = vpop.permute.xlu0 %7794
      %7796 = vrot.lane.b32.xlu0 %v7773, 64
      %v7797 = vpop.permute.xlu0 %7796
      %v7806 = vsel %vm334, %v7758, %v7783
      %v7807 = vsel %vm334, %v7759, %v7785
      %v7808 = vsel %vm334, %v7760, %v7787
      %v7809 = vsel %vm334, %v7761, %v7789
      %v7810 = vsel %vm334, %v7762, %v7791
      %v7811 = vsel %vm334, %v7763, %v7793
      %v7812 = vsel %vm334, %v7764, %v7795
      %v7813 = vsel %vm334, %v7765, %v7797
      %v7814 = vpack.c.bf16 %v7807, %v7806
      %v7815 = vpack.c.bf16 %v7809, %v7808
      %v7816 = vpack.c.bf16 %v7811, %v7810
      %v7817 = vpack.c.bf16 %v7813, %v7812
      %7818 = vst [vmem:[#allocation4 + $0x1f0] sm:$0xff] %v7814
      %7819 = vst [vmem:[#allocation4 + $0x218] sm:$0xff] %v7815
      %7820 = vst [vmem:[#allocation4 + $0x240] sm:$0xff] %v7816
      %7821 = vst [vmem:[#allocation4 + $0x268] sm:$0xff] %v7817
      %v7822 = vld [vmem:[%s7557 + $0x1] sm:$0xff]
      %v7823 = vld [vmem:[%s7557 + $0x11] sm:$0xff]
      %v7824 = vld [vmem:[%s7557 + $0x21] sm:$0xff]
      %v7825 = vld [vmem:[%s7557 + $0x31] sm:$0xff]
      %v7826 = vld [vmem:[%s7557 + $0x41] sm:$0xff]
      %v7827 = vld [vmem:[%s7557 + $0x51] sm:$0xff]
      %v7828 = vld [vmem:[%s7557 + $0x61] sm:$0xff]
      %v7829 = vld [vmem:[%s7557 + $0x71] sm:$0xff]
      %v7830 = vld [vmem:[%s7548 + $0x1] sm:$0xff]
      %v7831 = vld [vmem:[%s7548 + $0x11] sm:$0xff]
      %v7832 = vld [vmem:[%s7548 + $0x21] sm:$0xff]
      %v7833 = vld [vmem:[%s7548 + $0x31] sm:$0xff]
      %v7834 = vld [vmem:[%s7548 + $0x41] sm:$0xff]
      %v7835 = vld [vmem:[%s7548 + $0x51] sm:$0xff]
      %v7836 = vld [vmem:[%s7548 + $0x61] sm:$0xff]
      %v7837 = vld [vmem:[%s7548 + $0x71] sm:$0xff]
      %7846 = vrot.lane.b32.xlu0 %v7830, 64
      %v7847 = vpop.permute.xlu0 %7846
      %7848 = vrot.lane.b32.xlu0 %v7831, 64
      %v7849 = vpop.permute.xlu0 %7848
      %7850 = vrot.lane.b32.xlu0 %v7832, 64
      %v7851 = vpop.permute.xlu0 %7850
      %7852 = vrot.lane.b32.xlu0 %v7833, 64
      %v7853 = vpop.permute.xlu0 %7852
      %7854 = vrot.lane.b32.xlu0 %v7834, 64
      %v7855 = vpop.permute.xlu0 %7854
      %7856 = vrot.lane.b32.xlu0 %v7835, 64
      %v7857 = vpop.permute.xlu0 %7856
      %7858 = vrot.lane.b32.xlu0 %v7836, 64
      %v7859 = vpop.permute.xlu0 %7858
      %7860 = vrot.lane.b32.xlu0 %v7837, 64
      %v7861 = vpop.permute.xlu0 %7860
      %v7870 = vsel %vm334, %v7822, %v7847
      %v7871 = vsel %vm334, %v7823, %v7849
      %v7872 = vsel %vm334, %v7824, %v7851
      %v7873 = vsel %vm334, %v7825, %v7853
      %v7874 = vsel %vm334, %v7826, %v7855
      %v7875 = vsel %vm334, %v7827, %v7857
      %v7876 = vsel %vm334, %v7828, %v7859
      %v7877 = vsel %vm334, %v7829, %v7861
      %v7878 = vpack.c.bf16 %v7871, %v7870
      %v7879 = vpack.c.bf16 %v7873, %v7872
      %v7880 = vpack.c.bf16 %v7875, %v7874
      %v7881 = vpack.c.bf16 %v7877, %v7876
      %7882 = vst [vmem:[#allocation4 + $0x1f8] sm:$0xff] %v7878
      %7883 = vst [vmem:[#allocation4 + $0x220] sm:$0xff] %v7879
      %7884 = vst [vmem:[#allocation4 + $0x248] sm:$0xff] %v7880
      %7885 = vst [vmem:[#allocation4 + $0x270] sm:$0xff] %v7881
      %v7886 = vld [vmem:[%s7557 + $0x2] sm:$0xff]
      %v7887 = vld [vmem:[%s7557 + $0x12] sm:$0xff]
      %v7888 = vld [vmem:[%s7557 + $0x22] sm:$0xff]
      %v7889 = vld [vmem:[%s7557 + $0x32] sm:$0xff]
      %v7890 = vld [vmem:[%s7557 + $0x42] sm:$0xff]
      %v7891 = vld [vmem:[%s7557 + $0x52] sm:$0xff]
      %v7892 = vld [vmem:[%s7557 + $0x62] sm:$0xff]
      %v7893 = vld [vmem:[%s7557 + $0x72] sm:$0xff]
      %v7894 = vpack.c.bf16 %v7887, %v7886
      %v7895 = vpack.c.bf16 %v7889, %v7888
      %v7896 = vpack.c.bf16 %v7891, %v7890
      %v7897 = vpack.c.bf16 %v7893, %v7892
      %7898 = vst.msk [vmem:[#allocation4 + $0x200] sm:$0xff] %vm334, %v7894
      %7899 = vst.msk [vmem:[#allocation4 + $0x228] sm:$0xff] %vm334, %v7895
      %7900 = vst.msk [vmem:[#allocation4 + $0x250] sm:$0xff] %vm334, %v7896
      %7901 = vst.msk [vmem:[#allocation4 + $0x278] sm:$0xff] %vm334, %v7897
      %v7902 = vld [vmem:[%s7] sm:$0x1f]
      %v7903 = vld [vmem:[#allocation4] sm:$0xff]
      %v7904 = vld [vmem:[#allocation4 + $0x8] sm:$0xff]
      %v7905 = vld [vmem:[#allocation4 + $0x10] sm:$0xff]
      %v7906 = vld [vmem:[#allocation4 + $0x18] sm:$0xff]
      %v7907 = vld [vmem:[#allocation4 + $0x20] sm:$0xff]
      %v7908 = vld [vmem:[#allocation4 + $0x28] sm:$0xff]
      %v7909 = vld [vmem:[#allocation4 + $0x30] sm:$0xff]
      %v7910 = vld [vmem:[#allocation4 + $0x38] sm:$0xff]
      %v7911 = vld [vmem:[#allocation4 + $0x40] sm:$0xff]
      %v7912 = vld [vmem:[#allocation4 + $0x48] sm:$0xff]
      %v7913 = vld [vmem:[#allocation4 + $0x50] sm:$0xff]
      %v7914 = vld [vmem:[#allocation4 + $0x58] sm:$0xff]
      %v7915 = vld [vmem:[#allocation4 + $0x60] sm:$0xff]
      %v7916 = vld [vmem:[#allocation4 + $0x68] sm:$0xff]
      %v7917 = vld [vmem:[#allocation4 + $0x70] sm:$0xff]
      %v7918 = vld [vmem:[#allocation4 + $0x78] sm:$0xff]
      %v7919 = vld [vmem:[#allocation4 + $0x80] sm:$0xff]
      %v7920 = vld [vmem:[#allocation4 + $0x88] sm:$0xff]
      %v7921 = vld [vmem:[#allocation4 + $0x90] sm:$0xff]
      %v7922 = vld [vmem:[#allocation4 + $0x98] sm:$0xff]
      %v7923 = vld [vmem:[#allocation4 + $0xa0] sm:$0xff]
      %v7924 = vld [vmem:[#allocation4 + $0xa8] sm:$0xff]
      %v7925 = vld [vmem:[#allocation4 + $0xb0] sm:$0xff]
      %v7926 = vld [vmem:[#allocation4 + $0xb8] sm:$0xff]
      %v7927 = vld [vmem:[#allocation4 + $0xc0] sm:$0xff]
      %v7928 = vld [vmem:[#allocation4 + $0xc8] sm:$0xff]
      %v7929 = vld [vmem:[#allocation4 + $0xd0] sm:$0xff]
      %v7930 = vld [vmem:[#allocation4 + $0xd8] sm:$0xff]
      %v7931 = vld [vmem:[#allocation4 + $0xe0] sm:$0xff]
      %v7932 = vld [vmem:[#allocation4 + $0xe8] sm:$0xff]
      %v7933 = vld [vmem:[#allocation4 + $0xf0] sm:$0xff]
      %v7934 = vld [vmem:[#allocation4 + $0xf8] sm:$0xff]
      %v7935 = vld [vmem:[#allocation4 + $0x100] sm:$0xff]
      %v7936 = vld [vmem:[#allocation4 + $0x108] sm:$0xff]
      %v7937 = vld [vmem:[#allocation4 + $0x110] sm:$0xff]
      %v7938 = vld [vmem:[#allocation4 + $0x118] sm:$0xff]
      %v7939 = vld [vmem:[#allocation4 + $0x120] sm:$0xff]
      %v7940 = vld [vmem:[#allocation4 + $0x128] sm:$0xff]
      %v7941 = vld [vmem:[#allocation4 + $0x130] sm:$0xff]
      %v7942 = vld [vmem:[#allocation4 + $0x138] sm:$0xff]
      %v7943 = vld [vmem:[#allocation4 + $0x140] sm:$0xff]
      %v7944 = vld [vmem:[#allocation4 + $0x148] sm:$0xff]
      %v7945 = vld [vmem:[#allocation4 + $0x150] sm:$0xff]
      %v7946 = vld [vmem:[#allocation4 + $0x158] sm:$0xff]
      %v7947 = vld [vmem:[#allocation4 + $0x160] sm:$0xff]
      %v7948 = vld [vmem:[#allocation4 + $0x168] sm:$0xff]
      %v7949 = vld [vmem:[#allocation4 + $0x170] sm:$0xff]
      %v7950 = vld [vmem:[#allocation4 + $0x178] sm:$0xff]
      %v7951 = vld [vmem:[#allocation4 + $0x180] sm:$0xff]
      %v7952 = vld [vmem:[#allocation4 + $0x188] sm:$0xff]
      %v7953 = vld [vmem:[#allocation4 + $0x190] sm:$0xff]
      %v7954 = vld [vmem:[#allocation4 + $0x198] sm:$0xff]
      %v7955 = vld [vmem:[#allocation4 + $0x1a0] sm:$0xff]
      %v7956 = vld [vmem:[#allocation4 + $0x1a8] sm:$0xff]
      %v7957 = vld [vmem:[#allocation4 + $0x1b0] sm:$0xff]
      %v7958 = vld [vmem:[#allocation4 + $0x1b8] sm:$0xff]
      %v7959 = vld [vmem:[#allocation4 + $0x1c0] sm:$0xff]
      %v7960 = vld [vmem:[#allocation4 + $0x1c8] sm:$0xff]
      %v7961 = vld [vmem:[#allocation4 + $0x1d0] sm:$0xff]
      %v7962 = vld [vmem:[#allocation4 + $0x1d8] sm:$0xff]
      %v7963 = vld [vmem:[#allocation4 + $0x1e0] sm:$0xff]
      %v7964 = vld [vmem:[#allocation4 + $0x1e8] sm:$0xff]
      %v7965 = vld [vmem:[#allocation4 + $0x1f0] sm:$0xff]
      %v7966 = vld [vmem:[#allocation4 + $0x1f8] sm:$0xff]
      %v7967 = vld [vmem:[#allocation4 + $0x200] sm:$0xff]
      %v7968 = vld [vmem:[#allocation4 + $0x208] sm:$0xff]
      %v7969 = vld [vmem:[#allocation4 + $0x210] sm:$0xff]
      %v7970 = vld [vmem:[#allocation4 + $0x218] sm:$0xff]
      %v7971 = vld [vmem:[#allocation4 + $0x220] sm:$0xff]
      %v7972 = vld [vmem:[#allocation4 + $0x228] sm:$0xff]
      %v7973 = vld [vmem:[#allocation4 + $0x230] sm:$0xff]
      %v7974 = vld [vmem:[#allocation4 + $0x238] sm:$0xff]
      %v7975 = vld [vmem:[#allocation4 + $0x240] sm:$0xff]
      %v7976 = vld [vmem:[#allocation4 + $0x248] sm:$0xff]
      %v7977 = vld [vmem:[#allocation4 + $0x250] sm:$0xff]
      %v7978 = vld [vmem:[#allocation4 + $0x258] sm:$0xff]
      %v7979 = vld [vmem:[#allocation4 + $0x260] sm:$0xff]
      %v7980 = vld [vmem:[#allocation4 + $0x268] sm:$0xff]
      %v7981 = vld [vmem:[#allocation4 + $0x270] sm:$0xff]
      %v7982 = vld [vmem:[#allocation4 + $0x278] sm:$0xff]
      %v7983 = vld [vmem:[%s8] sm:$0x3]
      %7985 = vset.pattern.permute.xlu0 0
      %7986 = vperm.xlu0 %7985, %v7983
      %v7987 = vpop.permute.xlu0 %7986
      %v7990 = vcombine.high %v7902, %v7902
      %v7992 = vunpack.c.l.s4 1966171168
      %v7993 = vunpack.c.0.s8 %v7992
      %v7994 = vlaneseq
      %v7995 = vshrl.u32 %v7994, 7
      %v7996 = vsub.s32 %v7993, %v7995
      %v7997 = vrot.slane %v7902, %v7996
      %v7999 = vunpack.c.l.s4 1966171168
      %v8000 = vunpack.c.0.s8 %v7999
      %v8001 = vlaneseq
      %v8002 = vshrl.u32 %v8001, 7
      %v8003 = vsub.s32 %v8000, %v8002
      %v8004 = vrot.slane %v7990, %v8003
      %v8005 = vcombine.high %v7997, %v7997
      %v8007 = vunpack.c.l.s4 1966171168
      %v8008 = vunpack.c.0.s8 %v8007
      %v8009 = vlaneseq
      %v8010 = vshrl.u32 %v8009, 7
      %v8011 = vsub.s32 %v8008, %v8010
      %v8012 = vrot.slane %v7997, %v8011
      %v8014 = vunpack.c.l.s4 1966171168
      %v8015 = vunpack.c.0.s8 %v8014
      %v8016 = vlaneseq
      %v8017 = vshrl.u32 %v8016, 7
      %v8018 = vsub.s32 %v8015, %v8017
      %v8019 = vrot.slane %v8004, %v8018
      %v8021 = vunpack.c.l.s4 1966171168
      %v8022 = vunpack.c.0.s8 %v8021
      %v8023 = vlaneseq
      %v8024 = vshrl.u32 %v8023, 7
      %v8025 = vsub.s32 %v8022, %v8024
      %v8026 = vrot.slane %v8005, %v8025
      %v8027 = vcombine.high %v8012, %v8012
      %v8028 = vcombine.high %v8026, %v8026
      %v8034 = vsel %vm334, %v8019, 0
      %v8037 = vsel %vm334, %v7907, 0
      %v8040 = vsel %vm334, %v7912, 0
      %v8043 = vsel %vm334, %v7917, 0
      %v8046 = vsel %vm334, %v7922, 0
      %v8049 = vsel %vm334, %v7927, 0
      %v8052 = vsel %vm334, %v7932, 0
      %v8055 = vsel %vm334, %v7937, 0
      %v8058 = vsel %vm334, %v7942, 0
      %v8061 = vsel %vm334, %v7947, 0
      %v8064 = vsel %vm334, %v7952, 0
      %v8067 = vsel %vm334, %v7957, 0
      %v8070 = vsel %vm334, %v7962, 0
      %v8073 = vsel %vm334, %v7967, 0
      %v8076 = vsel %vm334, %v7972, 0
      %v8079 = vsel %vm334, %v7977, 0
      %v8082 = vsel %vm334, %v7982, 0
      %8084 = vmatprep.subr.bf16.mxu0 %v7904
      %8085 = vmatpush1.bf16.xpose.msra.mxu0 %v7903
      %8086 = vmatprep.subr.bf16.mxu0 %v7909
      %8087 = vmatpush1.bf16.xpose.msra.mxu0 %v7908
      %8088 = vmatprep.subr.bf16.mxu0 %v7914
      %8089 = vmatpush1.bf16.xpose.msra.mxu0 %v7913
      %8090 = vmatprep.subr.bf16.mxu0 %v7919
      %8091 = vmatpush1.bf16.xpose.msra.mxu0 %v7918
      %8092 = vmatprep.subr.bf16.mxu0 %v7924
      %8093 = vmatpush1.bf16.xpose.msra.mxu0 %v7923
      %8094 = vmatprep.subr.bf16.mxu0 %v7929
      %8095 = vmatpush1.bf16.xpose.msra.mxu0 %v7928
      %8096 = vmatprep.subr.bf16.mxu0 %v7934
      %8097 = vmatpush1.bf16.xpose.msra.mxu0 %v7933
      %8098 = vmatprep.subr.bf16.mxu0 %v7939
      %8099 = vmatpush1.bf16.xpose.msra.mxu0 %v7938
      %8100 = vmatprep.subr.bf16.mxu0 %v7944
      %8101 = vmatpush1.bf16.xpose.msra.mxu0 %v7943
      %8102 = vmatprep.subr.bf16.mxu0 %v7949
      %8103 = vmatpush1.bf16.xpose.msra.mxu0 %v7948
      %8104 = vmatprep.subr.bf16.mxu0 %v7954
      %8105 = vmatpush1.bf16.xpose.msra.mxu0 %v7953
      %8106 = vmatprep.subr.bf16.mxu0 %v7959
      %8107 = vmatpush1.bf16.xpose.msra.mxu0 %v7958
      %8108 = vmatprep.subr.bf16.mxu0 %v7964
      %8109 = vmatpush1.bf16.xpose.msra.mxu0 %v7963
      %8110 = vmatprep.subr.bf16.mxu0 %v7969
      %8111 = vmatpush1.bf16.xpose.msra.mxu0 %v7968
      %8112 = vmatprep.subr.bf16.mxu0 %v7974
      %8113 = vmatpush1.bf16.xpose.msra.mxu0 %v7973
      %8114 = vmatprep.subr.bf16.mxu0 %v7979
      %8115 = vmatpush1.bf16.xpose.msra.mxu0 %v7978
      %8116 = vmatprep.mubr.bf16.mxu0 %v8026
      %8117 = vmatmul.mubr.bf16.gmra.mrb[0].mxu0 %v8012
      %v8118 = vpop.f32.mrb[0].mxu0
      %v8119 = vadd.f32 %v7987, %v8118
      %v8120 = vpop.f32.mrb[0].mxu0
      %v8121 = vadd.f32 %v7987, %v8120
      %v8122 = vpop.f32.mrb[0].mxu0
      %v8123 = vpop.f32.mrb[0].mxu0
      %8124 = vdwg.mxu0
      %8125 = vmatprep.subr.bf16.mxu0 %v7906
      %8126 = vmatpush1.bf16.xpose.msra.mxu0 %v7905
      %8127 = vmatprep.subr.bf16.mxu0 %v7911
      %8128 = vmatpush1.bf16.xpose.msra.mxu0 %v7910
      %8129 = vmatprep.subr.bf16.mxu0 %v7916
      %8130 = vmatpush1.bf16.xpose.msra.mxu0 %v7915
      %8131 = vmatprep.subr.bf16.mxu0 %v7921
      %8132 = vmatpush1.bf16.xpose.msra.mxu0 %v7920
      %8133 = vmatprep.subr.bf16.mxu0 %v7926
      %8134 = vmatpush1.bf16.xpose.msra.mxu0 %v7925
      %8135 = vmatprep.subr.bf16.mxu0 %v7931
      %8136 = vmatpush1.bf16.xpose.msra.mxu0 %v7930
      %8137 = vmatprep.subr.bf16.mxu0 %v7936
      %8138 = vmatpush1.bf16.xpose.msra.mxu0 %v7935
      %8139 = vmatprep.subr.bf16.mxu0 %v7941
      %8140 = vmatpush1.bf16.xpose.msra.mxu0 %v7940
      %8141 = vmatprep.subr.bf16.mxu0 %v7946
      %8142 = vmatpush1.bf16.xpose.msra.mxu0 %v7945
      %8143 = vmatprep.subr.bf16.mxu0 %v7951
      %8144 = vmatpush1.bf16.xpose.msra.mxu0 %v7950
      %8145 = vmatprep.subr.bf16.mxu0 %v7956
      %8146 = vmatpush1.bf16.xpose.msra.mxu0 %v7955
      %8147 = vmatprep.subr.bf16.mxu0 %v7961
      %8148 = vmatpush1.bf16.xpose.msra.mxu0 %v7960
      %8149 = vmatprep.subr.bf16.mxu0 %v7966
      %8150 = vmatpush1.bf16.xpose.msra.mxu0 %v7965
      %8151 = vmatprep.subr.bf16.mxu0 %v7971
      %8152 = vmatpush1.bf16.xpose.msra.mxu0 %v7970
      %8153 = vmatprep.subr.bf16.mxu0 %v7976
      %8154 = vmatpush1.bf16.xpose.msra.mxu0 %v7975
      %8155 = vmatprep.subr.bf16.mxu0 %v7981
      %8156 = vmatpush1.bf16.xpose.msra.mxu0 %v7980
      %8157 = vmatprep.mubr.bf16.mxu0 %v8028
      %8158 = vmatmul.mubr.bf16.gmra.mrb[0].mxu0 %v8027
      %v8159 = vpop.f32.mrb[0].mxu0
      %v8160 = vadd.f32 %v8119, %v8159
      %v8161 = vpop.f32.mrb[0].mxu0
      %v8162 = vadd.f32 %v8121, %v8161
      %v8163 = vpop.f32.mrb[0].mxu0
      %v8164 = vpop.f32.mrb[0].mxu0
      %8165 = vdwg.mxu0
      %8166 = vmatprep.subr.bf16.mxu0 0
      %8167 = vmatpush1.bf16.xpose.msra.mxu0 %v8037
      %8168 = vmatprep.subr.bf16.mxu0 0
      %8169 = vmatpush1.bf16.xpose.msra.mxu0 %v8040
      %8170 = vmatprep.subr.bf16.mxu0 0
      %8171 = vmatpush1.bf16.xpose.msra.mxu0 %v8043
      %8172 = vmatprep.subr.bf16.mxu0 0
      %8173 = vmatpush1.bf16.xpose.msra.mxu0 %v8046
      %8174 = vmatprep.subr.bf16.mxu0 0
      %8175 = vmatpush1.bf16.xpose.msra.mxu0 %v8049
      %8176 = vmatprep.subr.bf16.mxu0 0
      %8177 = vmatpush1.bf16.xpose.msra.mxu0 %v8052
      %8178 = vmatprep.subr.bf16.mxu0 0
      %8179 = vmatpush1.bf16.xpose.msra.mxu0 %v8055
      %8180 = vmatprep.subr.bf16.mxu0 0
      %8181 = vmatpush1.bf16.xpose.msra.mxu0 %v8058
      %8182 = vmatprep.subr.bf16.mxu0 0
      %8183 = vmatpush1.bf16.xpose.msra.mxu0 %v8061
      %8184 = vmatprep.subr.bf16.mxu0 0
      %8185 = vmatpush1.bf16.xpose.msra.mxu0 %v8064
      %8186 = vmatprep.subr.bf16.mxu0 0
      %8187 = vmatpush1.bf16.xpose.msra.mxu0 %v8067
      %8188 = vmatprep.subr.bf16.mxu0 0
      %8189 = vmatpush1.bf16.xpose.msra.mxu0 %v8070
      %8190 = vmatprep.subr.bf16.mxu0 0
      %8191 = vmatpush1.bf16.xpose.msra.mxu0 %v8073
      %8192 = vmatprep.subr.bf16.mxu0 0
      %8193 = vmatpush1.bf16.xpose.msra.mxu0 %v8076
      %8194 = vmatprep.subr.bf16.mxu0 0
      %8195 = vmatpush1.bf16.xpose.msra.mxu0 %v8079
      %8196 = vmatprep.subr.bf16.mxu0 0
      %8197 = vmatpush1.bf16.xpose.msra.mxu0 %v8082
      %8198 = vmatprep.mubr.bf16.mxu0 0
      %8199 = vmatmul.mubr.bf16.gmra.mrb[0].mxu0 %v8034
      %v8200 = vpop.f32.mrb[0].mxu0
      %v8201 = vadd.f32 %v8160, %v8200
      %v8202 = vpop.f32.mrb[0].mxu0
      %v8203 = vadd.f32 %v8162, %v8202
      %v8204 = vpop.f32.mrb[0].mxu0
      %v8205 = vpop.f32.mrb[0].mxu0
      %8206 = vdwg.mxu0
      %v8207 = vtanh.pop %v8201
      %v8208 = vtanh.pop %v8203
      %v8211 = vcombine.low %v8207, %v8208
      %v8213 = vunpack.c.l.s4 1983009808
      %v8214 = vunpack.c.0.s8 %v8213
      %v8215 = vlaneseq
      %v8216 = vshrl.u32 %v8215, 7
      %v8217 = vsub.s32 %v8214, %v8216
      %v8218 = vrot.slane %v8211, %v8217
      %8220 = vst [vmem:[%s332] sm:$0xf] %v8218
      %p8221 = scmp.lt.s32.totalorder %s20, 1
      %s8222 = scalar_select %p8221, %s20, 1
      %s8223 = smul.addr %s8222, 2
      %s8224 = smul.addr %s8223, 2
      %s8225 = scalar_lea.vmem %s9, %s8224
      // Predicated region
      $region57: #{colorization_net.1} parent=55 // pred_check
        %p8226 = pneg %p232
      $region58: #{colorization_net.1} parent=55 // pred_check_branch
        %8228 = sbr.rel (%p8226) target = $region60
      $region59: #{colorization_net.1} parent=55 // pred_region
        _
      $region60: #{colorization_net.1} parent=55 // pred_fallthru
        _
    $region56: #{colorization_net.1} parent=5 // pred_fallthru
      _
    %p8229 = scmp.le.s32.totalorder 2, %s15
    // Predicated region
    $region61: #{colorization_net.1} parent=5 // pred_check
      %p8230 = pneg %p8229
    $region62: #{colorization_net.1} parent=5 // pred_check_branch
      %8232 = sbr.rel (%p8230) target = $region64
    $region63: #{colorization_net.1} parent=5 // pred_region
      %s8233 = ssub.s32 %s15, 2
      // Predicated region
      $region65: #{colorization_net.1} parent=63 // pred_check
        %p8234 = pneg %p238
      $region66: #{colorization_net.1} parent=63 // pred_check_branch
        %8236 = sbr.rel (%p8234) target = $region68
      $region67: #{colorization_net.1} parent=63 // pred_region
        %p8237 = scmp.lt.s32.totalorder %s21, 1
        %s8238 = scalar_select %p8237, %s21, 1
        %s8239 = smul.addr %s8238, 2
        %s8240 = smul.addr %s8239, 2
        %s8241 = scalar_lea.vmem %s9, %s8240
      $region68: #{colorization_net.1} parent=63 // pred_fallthru
        _
    $region64: #{colorization_net.1} parent=5 // pred_fallthru
      _
  $region6: #{colorization_net.1} parent=0 // loop_footer
    %s19 = sadd.s32 1, %s15
  $region7: #{colorization_net.1} parent=0 // loop_footer_branch
    %14 = sbr.rel target = $region3
  $region8: #{colorization_net.1} parent=0 // loop_exit
    _

</llo_original>
